<compile_context>
chip_gen: v5e
topology: v5e:2x2
jax: 0.10.0
libtpu: 0.0.40
codegen_flags: <defaults>
</compile_context>

<pallas_src>
import jax
import jax.numpy as jnp
import numpy as np
from jax.experimental import pallas as pl
from jax.experimental.pallas import tpu as pltpu


def _silu(x):
    return x * jax.nn.sigmoid(x)


def _round_up(x, m):
    return ((x + m - 1) // m) * m


# ----------------------------- Pallas kernel --------------------------------
def egnn_fused_kernel(feats_ref,
                      w1ij_ref, w1d_ref, b1_ref, w2_ref, b2_ref,
                      wn1_ref, bn1_ref, wn2_ref, bn2_ref,
                      out_ref):
    """All EGNN layers for one batch element, fully resident in VMEM."""
    f = feats_ref[0].astype(jnp.float32)          # (N, D)
    n, _ = f.shape
    num_layers = w1ij_ref.shape[0]
    h_pad = w1d_ref.shape[-1]                     # padded edge-hidden width (mult of 128)
    m_pad = w2_ref.shape[-1]                      # padded message width (mult of 128)

    # TODO(synk): for large N, i-tile the (N, N, h_pad) edge tensor flash-style with an
    # m_i accumulator (mandatory once N^2*h_pad*4B nears v7x's 64 MiB VMEM), and use
    # bf16 edge math on v6e/v7x; kept f32 + fully materialized here for N=16 exactness.
    for l in range(num_layers):                   # static unroll over layers
        W1 = w1ij_ref[l]                          # (D, 2*h_pad)        [w1i | w1j]
        w1d = w1d_ref[l]                          # (1, h_pad)
        b1 = b1_ref[l]                            # (1, h_pad)
        W2 = w2_ref[l]                            # (h_pad, m_pad)
        b2 = b2_ref[l]                            # (1, m_pad)
        Wn1 = wn1_ref[l]                          # (m_pad + D, u_pad)  [wn1m ; wn1f]
        bn1 = bn1_ref[l]                          # (1, u_pad)
        Wn2 = wn2_ref[l]                          # (u_pad, D)
        bn2 = bn2_ref[l]                          # (1, D)

        # pairwise squared distances (coors == feats), clamped against cancellation
        sq = jnp.sum(f * f, axis=-1, keepdims=True)                       # (N, 1)
        gram = jnp.dot(f, f.T, preferred_element_type=jnp.float32)        # (N, N)
        rel = jnp.maximum(sq + sq.T - 2.0 * gram, 0.0)                    # (N, N)

        # edge MLP layer 1: concat [f_i | f_j | rel] folded into ONE MXU pass
        a = jnp.dot(f, W1, preferred_element_type=jnp.float32)            # (N, 2*h_pad)
        a_i = a[:, :h_pad]                                                # 128-aligned slices
        a_j = a[:, h_pad:]
        h = (a_i[:, None, :] + a_j[None, :, :]
             + rel[:, :, None] * w1d[None, :, :]
             + b1[None, :, :])                                            # (N, N, h_pad)
        h = _silu(h)

        # edge MLP layer 2 + SiLU -> messages; pool (sum over j)
        h2 = h.reshape(n * n, h_pad)       # layout-preserving: N % 8 == 0, lane dim kept
        m_ij = _silu(jnp.dot(h2, W2, preferred_element_type=jnp.float32) + b2)
        m_i = jnp.sum(m_ij.reshape(n, n, m_pad), axis=1)                  # (N, m_pad)

        # node MLP on [m_i | f] (concat exactly at a 128-lane boundary) + residual
        fm = jnp.concatenate([m_i, f], axis=-1)                           # (N, m_pad + D)
        u = _silu(jnp.dot(fm, Wn1, preferred_element_type=jnp.float32) + bn1)
        f = jnp.dot(u, Wn2, preferred_element_type=jnp.float32) + bn2 + f  # (N, D)

    out_ref[0] = f.astype(out_ref.dtype)


# --------------------------- weight packing ----------------------------------
_PARAM_ORDER = ("w1ij", "w1d", "b1", "w2", "b2", "wn1", "bn1", "wn2", "bn2")


def _pack_layer(p, h_pad, m_pad, u_pad):
    """Pad to 128-multiples and merge same-LHS weight blocks (numerically exact)."""
    hid = p["w1i"].shape[1]
    m_dim = p["w2"].shape[1]
    u_dim = p["wn1f"].shape[1]

    w1i = jnp.pad(p["w1i"], ((0, 0), (0, h_pad - hid)))
    w1j = jnp.pad(p["w1j"], ((0, 0), (0, h_pad - hid)))
    w1ij = jnp.concatenate([w1i, w1j], axis=1)                        # (D, 2*h_pad)
    w1d = jnp.pad(p["w1d"], ((0, 0), (0, h_pad - hid)))               # (1, h_pad)
    b1 = jnp.pad(p["b1"], ((0, 0), (0, h_pad - hid)))                 # (1, h_pad)

    w2 = jnp.pad(p["w2"], ((0, h_pad - hid), (0, m_pad - m_dim)))     # (h_pad, m_pad)
    b2 = jnp.pad(p["b2"], ((0, 0), (0, m_pad - m_dim)))               # (1, m_pad)

    wn1m = jnp.pad(p["wn1m"], ((0, m_pad - m_dim), (0, u_pad - u_dim)))
    wn1f = jnp.pad(p["wn1f"], ((0, 0), (0, u_pad - u_dim)))
    wn1 = jnp.concatenate([wn1m, wn1f], axis=0)                       # (m_pad + D, u_pad)
    bn1 = jnp.pad(p["bn1"], ((0, 0), (0, u_pad - u_dim)))             # (1, u_pad)

    wn2 = jnp.pad(p["wn2"], ((0, u_pad - u_dim), (0, 0)))             # (u_pad, D)
    bn2 = p["bn2"]                                                    # (1, D)
    return dict(w1ij=w1ij, w1d=w1d, b1=b1, w2=w2, b2=b2,
                wn1=wn1, bn1=bn1, wn2=wn2, bn2=bn2)


def _stack_layers(packed_list):
    return {k: jnp.stack([p[k] for p in packed_list], axis=0) for k in packed_list[0]}


# ------------------------------ wrapper --------------------------------------
def egnn_forward(x, layer_params):
    """Fused forward pass of EGNN_ : one pallas_call for all layers, grid over batch."""
    B, N, D = x.shape
    assert N % 8 == 0, "N must be a multiple of 8 for layout-preserving reshapes"

    hid = layer_params[0]["w1i"].shape[1]         # 2*(2*D+1)
    m_dim = layer_params[0]["w2"].shape[1]
    u_dim = layer_params[0]["wn1f"].shape[1]      # 2*D
    h_pad = _round_up(hid, 128)
    m_pad = _round_up(m_dim, 128)
    u_pad = _round_up(u_dim, 128)

    packed = _stack_layers([_pack_layer(p, h_pad, m_pad, u_pad) for p in layer_params])
    weights = [packed[k] for k in _PARAM_ORDER]

    def full_spec(w):
        nd = w.ndim
        return pl.BlockSpec(w.shape, lambda b, _nd=nd: (0,) * _nd)

    in_specs = [pl.BlockSpec((1, N, D), lambda b: (b, 0, 0))] + [full_spec(w) for w in weights]
    out_spec = pl.BlockSpec((1, N, D), lambda b: (b, 0, 0))

    return pl.pallas_call(
        egnn_fused_kernel,
        out_shape=jax.ShapeDtypeStruct((B, N, D), x.dtype),
        grid_spec=pltpu.PrefetchScalarGridSpec(
            num_scalar_prefetch=0,
            grid=(B,),
            in_specs=in_specs,
            out_specs=out_spec,
        ),
        compiler_params=pltpu.CompilerParams(
            dimension_semantics=("parallel",),      # 2 TCs on v7x each take a batch
            vmem_limit_bytes=64 * 1024 * 1024,
        ),
    )(x, *weights)


# --------------------------- parameter init ----------------------------------
def init_egnn_params(key, dim, m_dim):
    edge_in = 2 * dim + 1
    hidden = edge_in * 2
    ks = jax.random.split(key, 12)
    w_std, b_std = 0.05, 0.01
    return {
        # edge_mlp Linear(edge_in -> hidden), split by input block [f_i | f_j | rel]
        "w1i": w_std * jax.random.normal(ks[0], (dim, hidden), jnp.float32),
        "w1j": w_std * jax.random.normal(ks[1], (dim, hidden), jnp.float32),
        "w1d": w_std * jax.random.normal(ks[2], (1, hidden), jnp.float32),
        "b1":  b_std * jax.random.normal(ks[3], (1, hidden), jnp.float32),
        # edge_mlp Linear(hidden -> m_dim)
        "w2":  w_std * jax.random.normal(ks[4], (hidden, m_dim), jnp.float32),
        "b2":  b_std * jax.random.normal(ks[5], (1, m_dim), jnp.float32),
        # node_mlp Linear(dim+m_dim -> 2*dim), split by input block [f | m_i]
        "wn1f": w_std * jax.random.normal(ks[6], (dim, 2 * dim), jnp.float32),
        "wn1m": w_std * jax.random.normal(ks[7], (m_dim, 2 * dim), jnp.float32),
        "bn1":  b_std * jax.random.normal(ks[8], (1, 2 * dim), jnp.float32),
        # node_mlp Linear(2*dim -> dim)
        "wn2":  w_std * jax.random.normal(ks[9], (2 * dim, dim), jnp.float32),
        "bn2":  b_std * jax.random.normal(ks[10], (1, dim), jnp.float32),
    }


# --------------------------- pure-JAX reference -------------------------------
def egnn_layer_ref(feats, p):
    B, N, D = feats.shape
    f_i = jnp.broadcast_to(feats[:, :, None, :], (B, N, N, D))
    f_j = jnp.broadcast_to(feats[:, None, :, :], (B, N, N, D))
    rel = jnp.sum((feats[:, :, None, :] - feats[:, None, :, :]) ** 2,
                  axis=-1, keepdims=True)
    edge_input = jnp.concatenate([f_i, f_j, rel], axis=-1)
    W1 = jnp.concatenate([p["w1i"], p["w1j"], p["w1d"]], axis=0)
    h = _silu(edge_input @ W1 + p["b1"][0])
    m_ij = _silu(h @ p["w2"] + p["b2"][0])
    m_i = m_ij.sum(axis=2)
    Wn1 = jnp.concatenate([p["wn1f"], p["wn1m"]], axis=0)
    u = _silu(jnp.concatenate([feats, m_i], axis=-1) @ Wn1 + p["bn1"][0])
    return u @ p["wn2"] + p["bn2"][0] + feats


# ---------------------------------- main --------------------------------------
if __name__ == "__main__":
    B, N, D = 2, 16, 32          # batch, nodes, feature dim
    M_DIM, GNN_SIZE = 64, 2

    key = jax.random.PRNGKey(0)
    kx, kp = jax.random.split(key)
    x = jax.random.normal(kx, (B, N, D), dtype=jnp.float32)
    layer_keys = jax.random.split(kp, GNN_SIZE)
    params = [init_egnn_params(k, D, M_DIM) for k in layer_keys]

    out = jax.block_until_ready(egnn_forward(x, params))

    ref = x
    for p in params:             # EGNN_.forward: feats, _ = egnn(feats, feats)
        ref = egnn_layer_ref(ref, p)

    np.testing.assert_allclose(np.asarray(out), np.asarray(ref), rtol=1e-4, atol=1e-4)
    print("KERNEL_OK")
</pallas_src>

<mosaic_0001>
module attributes {stable_mosaic.version = 11 : i64} {
  func.func @egnn_fused_kernel(%arg0: i32, %arg1: memref<1x16x32xf32, #tpu.memory_space<vmem>>, %arg2: memref<2x32x512xf32, #tpu.memory_space<vmem>>, %arg3: memref<2x1x256xf32, #tpu.memory_space<vmem>>, %arg4: memref<2x1x256xf32, #tpu.memory_space<vmem>>, %arg5: memref<2x256x128xf32, #tpu.memory_space<vmem>>, %arg6: memref<2x1x128xf32, #tpu.memory_space<vmem>>, %arg7: memref<2x160x128xf32, #tpu.memory_space<vmem>>, %arg8: memref<2x1x128xf32, #tpu.memory_space<vmem>>, %arg9: memref<2x128x32xf32, #tpu.memory_space<vmem>>, %arg10: memref<2x1x32xf32, #tpu.memory_space<vmem>>, %arg11: memref<1x16x32xf32, #tpu.memory_space<vmem>>) attributes {dimension_semantics = [#tpu.dimension_semantics<parallel>], iteration_bounds = array<i64: 2>, scalar_prefetch = 0 : i64, scratch_operands = 0 : i64, tpu.core_type = #tpu.core_type<tc>, window_params = [{transform_indices = @transform_0, window_bounds = array<i64: 1, 16, 32>}, {pipeline_mode = #tpu.pipeline_mode<synchronous>, transform_indices = @transform_1, window_bounds = array<i64: 2, 32, 512>}, {pipeline_mode = #tpu.pipeline_mode<synchronous>, transform_indices = @transform_2, window_bounds = array<i64: 2, 1, 256>}, {pipeline_mode = #tpu.pipeline_mode<synchronous>, transform_indices = @transform_3, window_bounds = array<i64: 2, 1, 256>}, {pipeline_mode = #tpu.pipeline_mode<synchronous>, transform_indices = @transform_4, window_bounds = array<i64: 2, 256, 128>}, {pipeline_mode = #tpu.pipeline_mode<synchronous>, transform_indices = @transform_5, window_bounds = array<i64: 2, 1, 128>}, {pipeline_mode = #tpu.pipeline_mode<synchronous>, transform_indices = @transform_6, window_bounds = array<i64: 2, 160, 128>}, {pipeline_mode = #tpu.pipeline_mode<synchronous>, transform_indices = @transform_7, window_bounds = array<i64: 2, 1, 128>}, {pipeline_mode = #tpu.pipeline_mode<synchronous>, transform_indices = @transform_8, window_bounds = array<i64: 2, 128, 32>}, {pipeline_mode = #tpu.pipeline_mode<synchronous>, transform_indices = @transform_9, window_bounds = array<i64: 2, 1, 32>}, {transform_indices = @transform_10, window_bounds = array<i64: 1, 16, 32>}]} {
    %c0 = arith.constant 0 : index
    %c0_0 = arith.constant 0 : index
    %c0_1 = arith.constant 0 : index
    %0 = vector.load %arg1[%c0, %c0_0, %c0_1] : memref<1x16x32xf32, #tpu.memory_space<vmem>>, vector<1x16x32xf32>
    %1 = vector.shape_cast %0 : vector<1x16x32xf32> to vector<16x32xf32>
    %c0_2 = arith.constant 0 : index
    %c0_3 = arith.constant 0 : index
    %c0_4 = arith.constant 0 : index
    %2 = vector.load %arg2[%c0_2, %c0_3, %c0_4] : memref<2x32x512xf32, #tpu.memory_space<vmem>>, vector<1x32x512xf32>
    %3 = vector.shape_cast %2 : vector<1x32x512xf32> to vector<32x512xf32>
    %c0_5 = arith.constant 0 : index
    %c0_6 = arith.constant 0 : index
    %c0_7 = arith.constant 0 : index
    %4 = vector.load %arg3[%c0_5, %c0_6, %c0_7] : memref<2x1x256xf32, #tpu.memory_space<vmem>>, vector<1x1x256xf32>
    %5 = vector.shape_cast %4 : vector<1x1x256xf32> to vector<1x256xf32>
    %c0_8 = arith.constant 0 : index
    %c0_9 = arith.constant 0 : index
    %c0_10 = arith.constant 0 : index
    %6 = vector.load %arg4[%c0_8, %c0_9, %c0_10] : memref<2x1x256xf32, #tpu.memory_space<vmem>>, vector<1x1x256xf32>
    %7 = vector.shape_cast %6 : vector<1x1x256xf32> to vector<1x256xf32>
    %c0_11 = arith.constant 0 : index
    %c0_12 = arith.constant 0 : index
    %c0_13 = arith.constant 0 : index
    %8 = vector.load %arg5[%c0_11, %c0_12, %c0_13] : memref<2x256x128xf32, #tpu.memory_space<vmem>>, vector<1x256x128xf32>
    %9 = vector.shape_cast %8 : vector<1x256x128xf32> to vector<256x128xf32>
    %c0_14 = arith.constant 0 : index
    %c0_15 = arith.constant 0 : index
    %c0_16 = arith.constant 0 : index
    %10 = vector.load %arg6[%c0_14, %c0_15, %c0_16] : memref<2x1x128xf32, #tpu.memory_space<vmem>>, vector<1x1x128xf32>
    %11 = vector.shape_cast %10 : vector<1x1x128xf32> to vector<1x128xf32>
    %c0_17 = arith.constant 0 : index
    %c0_18 = arith.constant 0 : index
    %c0_19 = arith.constant 0 : index
    %12 = vector.load %arg7[%c0_17, %c0_18, %c0_19] : memref<2x160x128xf32, #tpu.memory_space<vmem>>, vector<1x160x128xf32>
    %13 = vector.shape_cast %12 : vector<1x160x128xf32> to vector<160x128xf32>
    %c0_20 = arith.constant 0 : index
    %c0_21 = arith.constant 0 : index
    %c0_22 = arith.constant 0 : index
    %14 = vector.load %arg8[%c0_20, %c0_21, %c0_22] : memref<2x1x128xf32, #tpu.memory_space<vmem>>, vector<1x1x128xf32>
    %15 = vector.shape_cast %14 : vector<1x1x128xf32> to vector<1x128xf32>
    %c0_23 = arith.constant 0 : index
    %c0_24 = arith.constant 0 : index
    %c0_25 = arith.constant 0 : index
    %16 = vector.load %arg9[%c0_23, %c0_24, %c0_25] : memref<2x128x32xf32, #tpu.memory_space<vmem>>, vector<1x128x32xf32>
    %17 = vector.shape_cast %16 : vector<1x128x32xf32> to vector<128x32xf32>
    %c0_26 = arith.constant 0 : index
    %c0_27 = arith.constant 0 : index
    %c0_28 = arith.constant 0 : index
    %18 = vector.load %arg10[%c0_26, %c0_27, %c0_28] : memref<2x1x32xf32, #tpu.memory_space<vmem>>, vector<1x1x32xf32>
    %19 = vector.shape_cast %18 : vector<1x1x32xf32> to vector<1x32xf32>
    %20 = arith.mulf %1, %1 : vector<16x32xf32>
    %cst = arith.constant dense<0.000000e+00> : vector<16xf32>
    %21 = vector.multi_reduction <add>, %20, %cst [1] : vector<16x32xf32> to vector<16xf32>
    %22 = vector.shape_cast %21 : vector<16xf32> to vector<16x1xf32>
    %23 = tpu.transpose %1, [1, 0] : vector<16x32xf32> -> vector<32x16xf32>
    %cst_29 = arith.constant dense<0.000000e+00> : vector<16x16xf32>
    %24 = tpu.matmul %1, %23, %cst_29 {dimension_numbers = #tpu.dot_dimension_numbers<[1], [0], [0], [1], [0, 0, 1, 1], [], []>} : vector<16x32xf32>, vector<32x16xf32>, vector<16x16xf32> -> vector<16x16xf32>
    %25 = tpu.transpose %22, [1, 0] : vector<16x1xf32> -> vector<1x16xf32>
    %26 = vector.broadcast %22 : vector<16x1xf32> to vector<16x16xf32>
    %27 = vector.broadcast %25 : vector<1x16xf32> to vector<16x16xf32>
    %28 = arith.addf %26, %27 : vector<16x16xf32>
    %cst_30 = arith.constant 2.000000e+00 : f32
    %29 = vector.broadcast %cst_30 : f32 to vector<16x16xf32>
    %30 = arith.mulf %29, %24 : vector<16x16xf32>
    %31 = arith.subf %28, %30 : vector<16x16xf32>
    %cst_31 = arith.constant 0.000000e+00 : f32
    %32 = vector.broadcast %cst_31 : f32 to vector<16x16xf32>
    %33 = arith.maximumf %31, %32 : vector<16x16xf32>
    %cst_32 = arith.constant dense<0.000000e+00> : vector<16x512xf32>
    %34 = tpu.matmul %1, %3, %cst_32 {dimension_numbers = #tpu.dot_dimension_numbers<[1], [0], [0], [1], [0, 0, 1, 1], [], []>} : vector<16x32xf32>, vector<32x512xf32>, vector<16x512xf32> -> vector<16x512xf32>
    %35 = vector.extract_strided_slice %34 {offsets = [0, 0], sizes = [16, 256], strides = [1, 1]} : vector<16x512xf32> to vector<16x256xf32>
    %36 = vector.extract_strided_slice %34 {offsets = [0, 256], sizes = [16, 256], strides = [1, 1]} : vector<16x512xf32> to vector<16x256xf32>
    %37 = vector.shape_cast %35 : vector<16x256xf32> to vector<16x1x256xf32>
    %38 = vector.shape_cast %36 : vector<16x256xf32> to vector<1x16x256xf32>
    %39 = vector.broadcast %37 : vector<16x1x256xf32> to vector<16x16x256xf32>
    %40 = vector.broadcast %38 : vector<1x16x256xf32> to vector<16x16x256xf32>
    %41 = arith.addf %39, %40 : vector<16x16x256xf32>
    %42 = vector.shape_cast %33 : vector<16x16xf32> to vector<16x16x1xf32>
    %43 = vector.shape_cast %5 : vector<1x256xf32> to vector<1x1x256xf32>
    %44 = vector.broadcast %42 : vector<16x16x1xf32> to vector<16x16x256xf32>
    %45 = vector.broadcast %43 : vector<1x1x256xf32> to vector<16x16x256xf32>
    %46 = arith.mulf %44, %45 : vector<16x16x256xf32>
    %47 = arith.addf %41, %46 : vector<16x16x256xf32>
    %48 = vector.shape_cast %7 : vector<1x256xf32> to vector<1x1x256xf32>
    %49 = vector.broadcast %48 : vector<1x1x256xf32> to vector<16x16x256xf32>
    %50 = arith.addf %47, %49 : vector<16x16x256xf32>
    %51 = arith.negf %50 : vector<16x16x256xf32>
    %52 = math.exp %51 : vector<16x16x256xf32>
    %cst_33 = arith.constant 1.000000e+00 : f32
    %53 = vector.broadcast %cst_33 : f32 to vector<16x16x256xf32>
    %54 = arith.addf %53, %52 : vector<16x16x256xf32>
    %55 = arith.divf %53, %54 : vector<16x16x256xf32>
    %56 = arith.mulf %50, %55 : vector<16x16x256xf32>
    %57 = vector.shape_cast %56 : vector<16x16x256xf32> to vector<256x256xf32>
    %cst_34 = arith.constant dense<0.000000e+00> : vector<256x128xf32>
    %58 = tpu.matmul %57, %9, %cst_34 {dimension_numbers = #tpu.dot_dimension_numbers<[1], [0], [0], [1], [0, 0, 1, 1], [], []>} : vector<256x256xf32>, vector<256x128xf32>, vector<256x128xf32> -> vector<256x128xf32>
    %59 = vector.broadcast %11 : vector<1x128xf32> to vector<256x128xf32>
    %60 = arith.addf %58, %59 : vector<256x128xf32>
    %61 = arith.negf %60 : vector<256x128xf32>
    %62 = math.exp %61 : vector<256x128xf32>
    %cst_35 = arith.constant 1.000000e+00 : f32
    %63 = vector.broadcast %cst_35 : f32 to vector<256x128xf32>
    %64 = arith.addf %63, %62 : vector<256x128xf32>
    %65 = arith.divf %63, %64 : vector<256x128xf32>
    %66 = arith.mulf %60, %65 : vector<256x128xf32>
    %67 = vector.shape_cast %66 : vector<256x128xf32> to vector<16x16x128xf32>
    %cst_36 = arith.constant dense<0.000000e+00> : vector<16x128xf32>
    %68 = vector.multi_reduction <add>, %67, %cst_36 [1] : vector<16x16x128xf32> to vector<16x128xf32>
    %69 = tpu.concatenate %68, %1 in 1 : vector<16x128xf32>, vector<16x32xf32> -> vector<16x160xf32>
    %cst_37 = arith.constant dense<0.000000e+00> : vector<16x128xf32>
    %70 = tpu.matmul %69, %13, %cst_37 {dimension_numbers = #tpu.dot_dimension_numbers<[1], [0], [0], [1], [0, 0, 1, 1], [], []>} : vector<16x160xf32>, vector<160x128xf32>, vector<16x128xf32> -> vector<16x128xf32>
    %71 = vector.broadcast %15 : vector<1x128xf32> to vector<16x128xf32>
    %72 = arith.addf %70, %71 : vector<16x128xf32>
    %73 = arith.negf %72 : vector<16x128xf32>
    %74 = math.exp %73 : vector<16x128xf32>
    %cst_38 = arith.constant 1.000000e+00 : f32
    %75 = vector.broadcast %cst_38 : f32 to vector<16x128xf32>
    %76 = arith.addf %75, %74 : vector<16x128xf32>
    %77 = arith.divf %75, %76 : vector<16x128xf32>
    %78 = arith.mulf %72, %77 : vector<16x128xf32>
    %cst_39 = arith.constant dense<0.000000e+00> : vector<16x32xf32>
    %79 = tpu.matmul %78, %17, %cst_39 {dimension_numbers = #tpu.dot_dimension_numbers<[1], [0], [0], [1], [0, 0, 1, 1], [], []>} : vector<16x128xf32>, vector<128x32xf32>, vector<16x32xf32> -> vector<16x32xf32>
    %80 = vector.broadcast %19 : vector<1x32xf32> to vector<16x32xf32>
    %81 = arith.addf %79, %80 : vector<16x32xf32>
    %82 = arith.addf %81, %1 : vector<16x32xf32>
    %c1 = arith.constant 1 : index
    %c0_40 = arith.constant 0 : index
    %c0_41 = arith.constant 0 : index
    %83 = vector.load %arg2[%c1, %c0_40, %c0_41] : memref<2x32x512xf32, #tpu.memory_space<vmem>>, vector<1x32x512xf32>
    %84 = vector.shape_cast %83 : vector<1x32x512xf32> to vector<32x512xf32>
    %c1_42 = arith.constant 1 : index
    %c0_43 = arith.constant 0 : index
    %c0_44 = arith.constant 0 : index
    %85 = vector.load %arg3[%c1_42, %c0_43, %c0_44] : memref<2x1x256xf32, #tpu.memory_space<vmem>>, vector<1x1x256xf32>
    %86 = vector.shape_cast %85 : vector<1x1x256xf32> to vector<1x256xf32>
    %c1_45 = arith.constant 1 : index
    %c0_46 = arith.constant 0 : index
    %c0_47 = arith.constant 0 : index
    %87 = vector.load %arg4[%c1_45, %c0_46, %c0_47] : memref<2x1x256xf32, #tpu.memory_space<vmem>>, vector<1x1x256xf32>
    %88 = vector.shape_cast %87 : vector<1x1x256xf32> to vector<1x256xf32>
    %c1_48 = arith.constant 1 : index
    %c0_49 = arith.constant 0 : index
    %c0_50 = arith.constant 0 : index
    %89 = vector.load %arg5[%c1_48, %c0_49, %c0_50] : memref<2x256x128xf32, #tpu.memory_space<vmem>>, vector<1x256x128xf32>
    %90 = vector.shape_cast %89 : vector<1x256x128xf32> to vector<256x128xf32>
    %c1_51 = arith.constant 1 : index
    %c0_52 = arith.constant 0 : index
    %c0_53 = arith.constant 0 : index
    %91 = vector.load %arg6[%c1_51, %c0_52, %c0_53] : memref<2x1x128xf32, #tpu.memory_space<vmem>>, vector<1x1x128xf32>
    %92 = vector.shape_cast %91 : vector<1x1x128xf32> to vector<1x128xf32>
    %c1_54 = arith.constant 1 : index
    %c0_55 = arith.constant 0 : index
    %c0_56 = arith.constant 0 : index
    %93 = vector.load %arg7[%c1_54, %c0_55, %c0_56] : memref<2x160x128xf32, #tpu.memory_space<vmem>>, vector<1x160x128xf32>
    %94 = vector.shape_cast %93 : vector<1x160x128xf32> to vector<160x128xf32>
    %c1_57 = arith.constant 1 : index
    %c0_58 = arith.constant 0 : index
    %c0_59 = arith.constant 0 : index
    %95 = vector.load %arg8[%c1_57, %c0_58, %c0_59] : memref<2x1x128xf32, #tpu.memory_space<vmem>>, vector<1x1x128xf32>
    %96 = vector.shape_cast %95 : vector<1x1x128xf32> to vector<1x128xf32>
    %c1_60 = arith.constant 1 : index
    %c0_61 = arith.constant 0 : index
    %c0_62 = arith.constant 0 : index
    %97 = vector.load %arg9[%c1_60, %c0_61, %c0_62] : memref<2x128x32xf32, #tpu.memory_space<vmem>>, vector<1x128x32xf32>
    %98 = vector.shape_cast %97 : vector<1x128x32xf32> to vector<128x32xf32>
    %c1_63 = arith.constant 1 : index
    %c0_64 = arith.constant 0 : index
    %c0_65 = arith.constant 0 : index
    %99 = vector.load %arg10[%c1_63, %c0_64, %c0_65] : memref<2x1x32xf32, #tpu.memory_space<vmem>>, vector<1x1x32xf32>
    %100 = vector.shape_cast %99 : vector<1x1x32xf32> to vector<1x32xf32>
    %101 = arith.mulf %82, %82 : vector<16x32xf32>
    %cst_66 = arith.constant dense<0.000000e+00> : vector<16xf32>
    %102 = vector.multi_reduction <add>, %101, %cst_66 [1] : vector<16x32xf32> to vector<16xf32>
    %103 = vector.shape_cast %102 : vector<16xf32> to vector<16x1xf32>
    %104 = tpu.transpose %82, [1, 0] : vector<16x32xf32> -> vector<32x16xf32>
    %cst_67 = arith.constant dense<0.000000e+00> : vector<16x16xf32>
    %105 = tpu.matmul %82, %104, %cst_67 {dimension_numbers = #tpu.dot_dimension_numbers<[1], [0], [0], [1], [0, 0, 1, 1], [], []>} : vector<16x32xf32>, vector<32x16xf32>, vector<16x16xf32> -> vector<16x16xf32>
    %106 = tpu.transpose %103, [1, 0] : vector<16x1xf32> -> vector<1x16xf32>
    %107 = vector.broadcast %103 : vector<16x1xf32> to vector<16x16xf32>
    %108 = vector.broadcast %106 : vector<1x16xf32> to vector<16x16xf32>
    %109 = arith.addf %107, %108 : vector<16x16xf32>
    %cst_68 = arith.constant 2.000000e+00 : f32
    %110 = vector.broadcast %cst_68 : f32 to vector<16x16xf32>
    %111 = arith.mulf %110, %105 : vector<16x16xf32>
    %112 = arith.subf %109, %111 : vector<16x16xf32>
    %cst_69 = arith.constant 0.000000e+00 : f32
    %113 = vector.broadcast %cst_69 : f32 to vector<16x16xf32>
    %114 = arith.maximumf %112, %113 : vector<16x16xf32>
    %cst_70 = arith.constant dense<0.000000e+00> : vector<16x512xf32>
    %115 = tpu.matmul %82, %84, %cst_70 {dimension_numbers = #tpu.dot_dimension_numbers<[1], [0], [0], [1], [0, 0, 1, 1], [], []>} : vector<16x32xf32>, vector<32x512xf32>, vector<16x512xf32> -> vector<16x512xf32>
    %116 = vector.extract_strided_slice %115 {offsets = [0, 0], sizes = [16, 256], strides = [1, 1]} : vector<16x512xf32> to vector<16x256xf32>
    %117 = vector.extract_strided_slice %115 {offsets = [0, 256], sizes = [16, 256], strides = [1, 1]} : vector<16x512xf32> to vector<16x256xf32>
    %118 = vector.shape_cast %116 : vector<16x256xf32> to vector<16x1x256xf32>
    %119 = vector.shape_cast %117 : vector<16x256xf32> to vector<1x16x256xf32>
    %120 = vector.broadcast %118 : vector<16x1x256xf32> to vector<16x16x256xf32>
    %121 = vector.broadcast %119 : vector<1x16x256xf32> to vector<16x16x256xf32>
    %122 = arith.addf %120, %121 : vector<16x16x256xf32>
    %123 = vector.shape_cast %114 : vector<16x16xf32> to vector<16x16x1xf32>
    %124 = vector.shape_cast %86 : vector<1x256xf32> to vector<1x1x256xf32>
    %125 = vector.broadcast %123 : vector<16x16x1xf32> to vector<16x16x256xf32>
    %126 = vector.broadcast %124 : vector<1x1x256xf32> to vector<16x16x256xf32>
    %127 = arith.mulf %125, %126 : vector<16x16x256xf32>
    %128 = arith.addf %122, %127 : vector<16x16x256xf32>
    %129 = vector.shape_cast %88 : vector<1x256xf32> to vector<1x1x256xf32>
    %130 = vector.broadcast %129 : vector<1x1x256xf32> to vector<16x16x256xf32>
    %131 = arith.addf %128, %130 : vector<16x16x256xf32>
    %132 = arith.negf %131 : vector<16x16x256xf32>
    %133 = math.exp %132 : vector<16x16x256xf32>
    %cst_71 = arith.constant 1.000000e+00 : f32
    %134 = vector.broadcast %cst_71 : f32 to vector<16x16x256xf32>
    %135 = arith.addf %134, %133 : vector<16x16x256xf32>
    %136 = arith.divf %134, %135 : vector<16x16x256xf32>
    %137 = arith.mulf %131, %136 : vector<16x16x256xf32>
    %138 = vector.shape_cast %137 : vector<16x16x256xf32> to vector<256x256xf32>
    %cst_72 = arith.constant dense<0.000000e+00> : vector<256x128xf32>
    %139 = tpu.matmul %138, %90, %cst_72 {dimension_numbers = #tpu.dot_dimension_numbers<[1], [0], [0], [1], [0, 0, 1, 1], [], []>} : vector<256x256xf32>, vector<256x128xf32>, vector<256x128xf32> -> vector<256x128xf32>
    %140 = vector.broadcast %92 : vector<1x128xf32> to vector<256x128xf32>
    %141 = arith.addf %139, %140 : vector<256x128xf32>
    %142 = arith.negf %141 : vector<256x128xf32>
    %143 = math.exp %142 : vector<256x128xf32>
    %cst_73 = arith.constant 1.000000e+00 : f32
    %144 = vector.broadcast %cst_73 : f32 to vector<256x128xf32>
    %145 = arith.addf %144, %143 : vector<256x128xf32>
    %146 = arith.divf %144, %145 : vector<256x128xf32>
    %147 = arith.mulf %141, %146 : vector<256x128xf32>
    %148 = vector.shape_cast %147 : vector<256x128xf32> to vector<16x16x128xf32>
    %cst_74 = arith.constant dense<0.000000e+00> : vector<16x128xf32>
    %149 = vector.multi_reduction <add>, %148, %cst_74 [1] : vector<16x16x128xf32> to vector<16x128xf32>
    %150 = tpu.concatenate %149, %82 in 1 : vector<16x128xf32>, vector<16x32xf32> -> vector<16x160xf32>
    %cst_75 = arith.constant dense<0.000000e+00> : vector<16x128xf32>
    %151 = tpu.matmul %150, %94, %cst_75 {dimension_numbers = #tpu.dot_dimension_numbers<[1], [0], [0], [1], [0, 0, 1, 1], [], []>} : vector<16x160xf32>, vector<160x128xf32>, vector<16x128xf32> -> vector<16x128xf32>
    %152 = vector.broadcast %96 : vector<1x128xf32> to vector<16x128xf32>
    %153 = arith.addf %151, %152 : vector<16x128xf32>
    %154 = arith.negf %153 : vector<16x128xf32>
    %155 = math.exp %154 : vector<16x128xf32>
    %cst_76 = arith.constant 1.000000e+00 : f32
    %156 = vector.broadcast %cst_76 : f32 to vector<16x128xf32>
    %157 = arith.addf %156, %155 : vector<16x128xf32>
    %158 = arith.divf %156, %157 : vector<16x128xf32>
    %159 = arith.mulf %153, %158 : vector<16x128xf32>
    %cst_77 = arith.constant dense<0.000000e+00> : vector<16x32xf32>
    %160 = tpu.matmul %159, %98, %cst_77 {dimension_numbers = #tpu.dot_dimension_numbers<[1], [0], [0], [1], [0, 0, 1, 1], [], []>} : vector<16x128xf32>, vector<128x32xf32>, vector<16x32xf32> -> vector<16x32xf32>
    %161 = vector.broadcast %100 : vector<1x32xf32> to vector<16x32xf32>
    %162 = arith.addf %160, %161 : vector<16x32xf32>
    %163 = arith.addf %162, %82 : vector<16x32xf32>
    %c0_78 = arith.constant 0 : index
    %c0_79 = arith.constant 0 : index
    %c0_80 = arith.constant 0 : index
    %164 = vector.load %arg11[%c0_78, %c0_79, %c0_80] : memref<1x16x32xf32, #tpu.memory_space<vmem>>, vector<1x16x32xf32>
    %165 = vector.shape_cast %164 : vector<1x16x32xf32> to vector<16x32xf32>
    %166 = vector.shape_cast %163 : vector<16x32xf32> to vector<1x16x32xf32>
    tpu.vector_store %arg11[%c0_78, %c0_79, %c0_80], %166 {strides = array<i32>} : memref<1x16x32xf32, #tpu.memory_space<vmem>>, vector<1x16x32xf32>,
    return
  }
  func.func @transform_0(%arg0: i32) -> (i32, i32, i32) {
    %c0_i32 = arith.constant 0 : i32
    %c0_i32_0 = arith.constant 0 : i32
    %c0_i32_1 = arith.constant 0 : i32
    return %arg0, %c0_i32, %c0_i32_0 : i32, i32, i32
  }
  func.func @transform_1(%arg0: i32) -> (i32, i32, i32) {
    %c0_i32 = arith.constant 0 : i32
    %c0_i32_0 = arith.constant 0 : i32
    %c0_i32_1 = arith.constant 0 : i32
    %c0_i32_2 = arith.constant 0 : i32
    return %c0_i32, %c0_i32_0, %c0_i32_1 : i32, i32, i32
  }
  func.func @transform_2(%arg0: i32) -> (i32, i32, i32) {
    %c0_i32 = arith.constant 0 : i32
    %c0_i32_0 = arith.constant 0 : i32
    %c0_i32_1 = arith.constant 0 : i32
    %c0_i32_2 = arith.constant 0 : i32
    return %c0_i32, %c0_i32_0, %c0_i32_1 : i32, i32, i32
  }
  func.func @transform_3(%arg0: i32) -> (i32, i32, i32) {
    %c0_i32 = arith.constant 0 : i32
    %c0_i32_0 = arith.constant 0 : i32
    %c0_i32_1 = arith.constant 0 : i32
    %c0_i32_2 = arith.constant 0 : i32
    return %c0_i32, %c0_i32_0, %c0_i32_1 : i32, i32, i32
  }
  func.func @transform_4(%arg0: i32) -> (i32, i32, i32) {
    %c0_i32 = arith.constant 0 : i32
    %c0_i32_0 = arith.constant 0 : i32
    %c0_i32_1 = arith.constant 0 : i32
    %c0_i32_2 = arith.constant 0 : i32
    return %c0_i32, %c0_i32_0, %c0_i32_1 : i32, i32, i32
  }
  func.func @transform_5(%arg0: i32) -> (i32, i32, i32) {
    %c0_i32 = arith.constant 0 : i32
    %c0_i32_0 = arith.constant 0 : i32
    %c0_i32_1 = arith.constant 0 : i32
    %c0_i32_2 = arith.constant 0 : i32
    return %c0_i32, %c0_i32_0, %c0_i32_1 : i32, i32, i32
  }
  func.func @transform_6(%arg0: i32) -> (i32, i32, i32) {
    %c0_i32 = arith.constant 0 : i32
    %c0_i32_0 = arith.constant 0 : i32
    %c0_i32_1 = arith.constant 0 : i32
    %c0_i32_2 = arith.constant 0 : i32
    return %c0_i32, %c0_i32_0, %c0_i32_1 : i32, i32, i32
  }
  func.func @transform_7(%arg0: i32) -> (i32, i32, i32) {
    %c0_i32 = arith.constant 0 : i32
    %c0_i32_0 = arith.constant 0 : i32
    %c0_i32_1 = arith.constant 0 : i32
    %c0_i32_2 = arith.constant 0 : i32
    return %c0_i32, %c0_i32_0, %c0_i32_1 : i32, i32, i32
  }
  func.func @transform_8(%arg0: i32) -> (i32, i32, i32) {
    %c0_i32 = arith.constant 0 : i32
    %c0_i32_0 = arith.constant 0 : i32
    %c0_i32_1 = arith.constant 0 : i32
    %c0_i32_2 = arith.constant 0 : i32
    return %c0_i32, %c0_i32_0, %c0_i32_1 : i32, i32, i32
  }
  func.func @transform_9(%arg0: i32) -> (i32, i32, i32) {
    %c0_i32 = arith.constant 0 : i32
    %c0_i32_0 = arith.constant 0 : i32
    %c0_i32_1 = arith.constant 0 : i32
    %c0_i32_2 = arith.constant 0 : i32
    return %c0_i32, %c0_i32_0, %c0_i32_1 : i32, i32, i32
  }
  func.func @transform_10(%arg0: i32) -> (i32, i32, i32) {
    %c0_i32 = arith.constant 0 : i32
    %c0_i32_0 = arith.constant 0 : i32
    %c0_i32_1 = arith.constant 0 : i32
    return %arg0, %c0_i32, %c0_i32_0 : i32, i32, i32
  }
}

</mosaic_0001>

<llo_original>
// kernel: tpu_custom_call.1
$region0: #{tpu_custom_call.1}
  #allocation0 [shape = 'u32[]', space=smem, size = 0x4, offset = 0x4, fixed_abs, tag = 'smem constant byte address 0x4 - core index']
  #allocation1 [shape = 'u32[72,128]{1,0:T(1,128)}', space=vmem, size = 0x9000, scoped, tag = 'internal scratch']
  %s0 = inlined_call_operand.hbm [shape: f32[2,16,32], index: 0, kind: input, shape index: {}]
  %s1 = inlined_call_operand.hbm [shape: f32[2,32,512], index: 1, kind: input, shape index: {}]
  %s2 = inlined_call_operand.vmem [shape: f32[2,1,256], index: 2, kind: input, shape index: {}]
  %s3 = inlined_call_operand.hbm [shape: f32[2,1,256], index: 3, kind: input, shape index: {}]
  %s4 = inlined_call_operand.hbm [shape: f32[2,256,128], index: 4, kind: input, shape index: {}]
  %s5 = inlined_call_operand.hbm [shape: f32[2,1,128], index: 5, kind: input, shape index: {}]
  %s6 = inlined_call_operand.vmem [shape: f32[2,160,128], index: 6, kind: input, shape index: {}]
  %s7 = inlined_call_operand.hbm [shape: f32[2,1,128], index: 7, kind: input, shape index: {}]
  %s8 = inlined_call_operand.vmem [shape: f32[2,128,32], index: 8, kind: input, shape index: {}]
  %s9 = inlined_call_operand.vmem [shape: f32[2,1,32], index: 9, kind: input, shape index: {}]
  %s10 = inlined_call_operand.hbm [shape: f32[2,16,32], index: 10, kind: output, shape index: {}]
  %s11 = sld [smem:[#allocation0]]
  $region97: #{tpu_custom_call.1} parent=0
    _
  %s13 = ssub.s32 1, %s11
  %s14 = scalar_select 0, %s13, %s11
  $region1: #{tpu_custom_call.1} parent=0
    #allocation2 [shape = 'u8[16384]{0}', space=vmem, size = 0x4000, scoped, tag = 'input window, operand 0']
    #allocation3 [shape = 's32[2]{0}', space=sflag, size = 0x8, scoped, tag = 'scoped memory for tpu_custom_call.1']
    #allocation4 [shape = 's32[2]{0}', space=sflag, size = 0x8, scoped, tag = 'scoped memory for tpu_custom_call.1']
    #allocation5 [shape = 'u8[131072]{0}', space=vmem, size = 0x20000, scoped, tag = 'input window, operand 1, single buffered']
    #allocation6 [shape = 's32[1]{0}', space=sflag, size = 0x4, scoped, tag = 'scoped memory for tpu_custom_call.1']
    #allocation7 [shape = 'u8[2048]{0}', space=vmem, size = 0x800, scoped, tag = 'input window, operand 3, single buffered']
    #allocation8 [shape = 'u8[262144]{0}', space=vmem, size = 0x40000, scoped, tag = 'input window, operand 4, single buffered']
    #allocation9 [shape = 's32[1]{0}', space=sflag, size = 0x4, scoped, tag = 'scoped memory for tpu_custom_call.1']
    #allocation10 [shape = 'u8[1024]{0}', space=vmem, size = 0x400, scoped, tag = 'input window, operand 5, single buffered']
    #allocation11 [shape = 'u8[1024]{0}', space=vmem, size = 0x400, scoped, tag = 'input window, operand 7, single buffered']
    #allocation12 [shape = 's32[1]{0}', space=sflag, size = 0x4, scoped, tag = 'scoped memory for tpu_custom_call.1']
    #allocation13 [shape = 'u8[16384]{0}', space=vmem, size = 0x4000, scoped, tag = 'output window, operand 0']
    %15 = vsyncpa [#allocation3], 0
    %s16 = scalar_lea.sflag [#allocation3], 1
    %17 = vsyncpa %s16, 0
    %18 = vsyncpa [#allocation6], 0
    %19 = vsyncpa [#allocation9], 0
    %20 = vsyncpa [#allocation12], 0
    %21 = vsyncpa [#allocation4], 0
    %s22 = scalar_lea.sflag [#allocation4], 1
    %23 = vsyncpa %s22, 0
    loop: start=0, step=1, limit=4
    $region2: #{tpu_custom_call.1} parent=1 // loop_pre_header
      _
    $region3: #{tpu_custom_call.1} parent=1 // loop_header
      %s25 = sphi 0, %s29
      %p26 = scmp.ge.s32.totalorder %s25, 4
      %s35 = sphi 0, %s37
      %s38 = sphi 0, %s35
      %s39 = sphi 0, %s38
      %s55 = sphi 0, %s39
      %s59 = sphi 0, %s59
      %s61 = sphi 0, %s59
      %s62 = sphi 0, %s61
      %s76 = sphi 0, %s62
      %s80 = sphi 0, %s80
      %s82 = sphi 0, %s80
      %s83 = sphi 0, %s82
      %s97 = sphi 0, %s83
      %s101 = sphi 0, %s101
      %s103 = sphi 0, %s101
      %s104 = sphi 0, %s103
      %s118 = sphi 0, %s104
      %s122 = sphi 0, %s122
      %s124 = sphi 0, %s122
      %s125 = sphi 0, %s124
      %s139 = sphi 0, %s125
      %s143 = sphi 0, %s143
      %s145 = sphi 0, %s143
      %s146 = sphi 0, %s145
      %s160 = sphi 0, %s146
      %s164 = sphi 0, %s164
      %s166 = sphi 0, %s164
      %s167 = sphi 0, %s166
      %s181 = sphi 0, %s167
      %s185 = sphi 0, %s185
      %s187 = sphi 0, %s185
      %s188 = sphi 0, %s187
      %s202 = sphi 0, %s188
      %s206 = sphi 0, %s206
      %s208 = sphi 0, %s206
      %s209 = sphi 0, %s208
      %s223 = sphi 0, %s209
      %s227 = sphi 0, %s227
      %s229 = sphi 0, %s227
      %s230 = sphi 0, %s229
      %s244 = sphi 0, %s230
      %s250 = sphi 0, %s252
      %s253 = sphi 0, %s250
      %s254 = sphi 0, %s253
      %s270 = sphi 0, %s254
    $region4: #{tpu_custom_call.1} parent=1 // loop_header_branch
      %28 = sbr.rel (%p26) target = $region8
    $region5: #{tpu_custom_call.1} parent=1 // loop_body
      %s30 = ssub.s32 %s25, 1
      %s31 = ssub.s32 %s25, 2
      %s32 = sadd.s32 %s25, 1
      %s33 = ssub.s32 %s25, %s32
      %p34 = scmp.eq.s32.totalorder %s33, 0
      %s36 = sadd.s32 %s35, 1
      %s37 = scalar_select %p34, %s35, %s36
      %p40 = pneg %p34
      %p41 = scmp.eq.s32.totalorder %s25, 1
      %p42 = por %p40, %p41
      %p43 = scmp.ne.s32.totalorder %s35, %s38
      %p44 = scmp.eq.s32.totalorder %s25, 0
      %p45 = por %p43, %p44
      %p46 = scmp.ne.s32.totalorder %s35, %s38
      %p47 = scmp.eq.s32.totalorder %s30, 1
      %p48 = por %p46, %p47
      %p49 = scmp.ne.s32.totalorder %s38, %s39
      %p50 = scmp.eq.s32.totalorder %s30, 0
      %p51 = por %p49, %p50
      %p52 = scmp.ne.s32.totalorder %s38, %s39
      %p53 = scmp.eq.s32.totalorder %s31, 1
      %p54 = por %p52, %p53
      %p56 = scmp.ne.s32.totalorder %s39, %s55
      %p57 = scmp.eq.s32.totalorder %s31, 0
      %p58 = por %p56, %p57
      %s60 = sadd.s32 %s59, 1
      %p63 = scmp.eq.s32.totalorder %s25, 1
      %p64 = scmp.ne.s32.totalorder %s59, %s61
      %p65 = scmp.eq.s32.totalorder %s25, 0
      %p66 = por %p64, %p65
      %p67 = scmp.ne.s32.totalorder %s59, %s61
      %p68 = scmp.eq.s32.totalorder %s30, 1
      %p69 = por %p67, %p68
      %p70 = scmp.ne.s32.totalorder %s61, %s62
      %p71 = scmp.eq.s32.totalorder %s30, 0
      %p72 = por %p70, %p71
      %p73 = scmp.ne.s32.totalorder %s61, %s62
      %p74 = scmp.eq.s32.totalorder %s31, 1
      %p75 = por %p73, %p74
      %p77 = scmp.ne.s32.totalorder %s62, %s76
      %p78 = scmp.eq.s32.totalorder %s31, 0
      %p79 = por %p77, %p78
      %s81 = sadd.s32 %s80, 1
      %p84 = scmp.eq.s32.totalorder %s25, 1
      %p85 = scmp.ne.s32.totalorder %s80, %s82
      %p86 = scmp.eq.s32.totalorder %s25, 0
      %p87 = por %p85, %p86
      %p88 = scmp.ne.s32.totalorder %s80, %s82
      %p89 = scmp.eq.s32.totalorder %s30, 1
      %p90 = por %p88, %p89
      %p91 = scmp.ne.s32.totalorder %s82, %s83
      %p92 = scmp.eq.s32.totalorder %s30, 0
      %p93 = por %p91, %p92
      %p94 = scmp.ne.s32.totalorder %s82, %s83
      %p95 = scmp.eq.s32.totalorder %s31, 1
      %p96 = por %p94, %p95
      %p98 = scmp.ne.s32.totalorder %s83, %s97
      %p99 = scmp.eq.s32.totalorder %s31, 0
      %p100 = por %p98, %p99
      %s102 = sadd.s32 %s101, 1
      %p105 = scmp.eq.s32.totalorder %s25, 1
      %p106 = scmp.ne.s32.totalorder %s101, %s103
      %p107 = scmp.eq.s32.totalorder %s25, 0
      %p108 = por %p106, %p107
      %p109 = scmp.ne.s32.totalorder %s101, %s103
      %p110 = scmp.eq.s32.totalorder %s30, 1
      %p111 = por %p109, %p110
      %p112 = scmp.ne.s32.totalorder %s103, %s104
      %p113 = scmp.eq.s32.totalorder %s30, 0
      %p114 = por %p112, %p113
      %p115 = scmp.ne.s32.totalorder %s103, %s104
      %p116 = scmp.eq.s32.totalorder %s31, 1
      %p117 = por %p115, %p116
      %p119 = scmp.ne.s32.totalorder %s104, %s118
      %p120 = scmp.eq.s32.totalorder %s31, 0
      %p121 = por %p119, %p120
      %s123 = sadd.s32 %s122, 1
      %p126 = scmp.eq.s32.totalorder %s25, 1
      %p127 = scmp.ne.s32.totalorder %s122, %s124
      %p128 = scmp.eq.s32.totalorder %s25, 0
      %p129 = por %p127, %p128
      %p130 = scmp.ne.s32.totalorder %s122, %s124
      %p131 = scmp.eq.s32.totalorder %s30, 1
      %p132 = por %p130, %p131
      %p133 = scmp.ne.s32.totalorder %s124, %s125
      %p134 = scmp.eq.s32.totalorder %s30, 0
      %p135 = por %p133, %p134
      %p136 = scmp.ne.s32.totalorder %s124, %s125
      %p137 = scmp.eq.s32.totalorder %s31, 1
      %p138 = por %p136, %p137
      %p140 = scmp.ne.s32.totalorder %s125, %s139
      %p141 = scmp.eq.s32.totalorder %s31, 0
      %p142 = por %p140, %p141
      %s144 = sadd.s32 %s143, 1
      %p147 = scmp.eq.s32.totalorder %s25, 1
      %p148 = scmp.ne.s32.totalorder %s143, %s145
      %p149 = scmp.eq.s32.totalorder %s25, 0
      %p150 = por %p148, %p149
      %p151 = scmp.ne.s32.totalorder %s143, %s145
      %p152 = scmp.eq.s32.totalorder %s30, 1
      %p153 = por %p151, %p152
      %p154 = scmp.ne.s32.totalorder %s145, %s146
      %p155 = scmp.eq.s32.totalorder %s30, 0
      %p156 = por %p154, %p155
      %p157 = scmp.ne.s32.totalorder %s145, %s146
      %p158 = scmp.eq.s32.totalorder %s31, 1
      %p159 = por %p157, %p158
      %p161 = scmp.ne.s32.totalorder %s146, %s160
      %p162 = scmp.eq.s32.totalorder %s31, 0
      %p163 = por %p161, %p162
      %s165 = sadd.s32 %s164, 1
      %p168 = scmp.eq.s32.totalorder %s25, 1
      %p169 = scmp.ne.s32.totalorder %s164, %s166
      %p170 = scmp.eq.s32.totalorder %s25, 0
      %p171 = por %p169, %p170
      %p172 = scmp.ne.s32.totalorder %s164, %s166
      %p173 = scmp.eq.s32.totalorder %s30, 1
      %p174 = por %p172, %p173
      %p175 = scmp.ne.s32.totalorder %s166, %s167
      %p176 = scmp.eq.s32.totalorder %s30, 0
      %p177 = por %p175, %p176
      %p178 = scmp.ne.s32.totalorder %s166, %s167
      %p179 = scmp.eq.s32.totalorder %s31, 1
      %p180 = por %p178, %p179
      %p182 = scmp.ne.s32.totalorder %s167, %s181
      %p183 = scmp.eq.s32.totalorder %s31, 0
      %p184 = por %p182, %p183
      %s186 = sadd.s32 %s185, 1
      %p189 = scmp.eq.s32.totalorder %s25, 1
      %p190 = scmp.ne.s32.totalorder %s185, %s187
      %p191 = scmp.eq.s32.totalorder %s25, 0
      %p192 = por %p190, %p191
      %p193 = scmp.ne.s32.totalorder %s185, %s187
      %p194 = scmp.eq.s32.totalorder %s30, 1
      %p195 = por %p193, %p194
      %p196 = scmp.ne.s32.totalorder %s187, %s188
      %p197 = scmp.eq.s32.totalorder %s30, 0
      %p198 = por %p196, %p197
      %p199 = scmp.ne.s32.totalorder %s187, %s188
      %p200 = scmp.eq.s32.totalorder %s31, 1
      %p201 = por %p199, %p200
      %p203 = scmp.ne.s32.totalorder %s188, %s202
      %p204 = scmp.eq.s32.totalorder %s31, 0
      %p205 = por %p203, %p204
      %s207 = sadd.s32 %s206, 1
      %p210 = scmp.eq.s32.totalorder %s25, 1
      %p211 = scmp.ne.s32.totalorder %s206, %s208
      %p212 = scmp.eq.s32.totalorder %s25, 0
      %p213 = por %p211, %p212
      %p214 = scmp.ne.s32.totalorder %s206, %s208
      %p215 = scmp.eq.s32.totalorder %s30, 1
      %p216 = por %p214, %p215
      %p217 = scmp.ne.s32.totalorder %s208, %s209
      %p218 = scmp.eq.s32.totalorder %s30, 0
      %p219 = por %p217, %p218
      %p220 = scmp.ne.s32.totalorder %s208, %s209
      %p221 = scmp.eq.s32.totalorder %s31, 1
      %p222 = por %p220, %p221
      %p224 = scmp.ne.s32.totalorder %s209, %s223
      %p225 = scmp.eq.s32.totalorder %s31, 0
      %p226 = por %p224, %p225
      %s228 = sadd.s32 %s227, 1
      %p231 = scmp.eq.s32.totalorder %s25, 1
      %p232 = scmp.ne.s32.totalorder %s227, %s229
      %p233 = scmp.eq.s32.totalorder %s25, 0
      %p234 = por %p232, %p233
      %p235 = scmp.ne.s32.totalorder %s227, %s229
      %p236 = scmp.eq.s32.totalorder %s30, 1
      %p237 = por %p235, %p236
      %p238 = scmp.ne.s32.totalorder %s229, %s230
      %p239 = scmp.eq.s32.totalorder %s30, 0
      %p240 = por %p238, %p239
      %p241 = scmp.ne.s32.totalorder %s229, %s230
      %p242 = scmp.eq.s32.totalorder %s31, 1
      %p243 = por %p241, %p242
      %p245 = scmp.ne.s32.totalorder %s230, %s244
      %p246 = scmp.eq.s32.totalorder %s31, 0
      %p247 = por %p245, %p246
      %s248 = ssub.s32 %s25, %s32
      %p249 = scmp.eq.s32.totalorder %s248, 0
      %s251 = sadd.s32 %s250, 1
      %s252 = scalar_select %p249, %s250, %s251
      %p255 = pneg %p249
      %p256 = scmp.eq.s32.totalorder %s25, 1
      %p257 = por %p255, %p256
      %p258 = scmp.ne.s32.totalorder %s250, %s253
      %p259 = scmp.eq.s32.totalorder %s25, 0
      %p260 = por %p258, %p259
      %p261 = scmp.ne.s32.totalorder %s250, %s253
      %p262 = scmp.eq.s32.totalorder %s30, 1
      %p263 = por %p261, %p262
      %p264 = scmp.ne.s32.totalorder %s253, %s254
      %p265 = scmp.eq.s32.totalorder %s30, 0
      %p266 = por %p264, %p265
      %p267 = scmp.ne.s32.totalorder %s253, %s254
      %p268 = scmp.eq.s32.totalorder %s31, 1
      %p269 = por %p267, %p268
      %p271 = scmp.ne.s32.totalorder %s254, %s270
      %p272 = scmp.eq.s32.totalorder %s31, 0
      %p273 = por %p271, %p272
      %p274 = scmp.le.s32.totalorder 1, %s25
      %p275 = scmp.lt.s32.totalorder %s25, 3
      %p276 = pnand %p274, %p275
      %p277 = pneg %p276
      // Predicated region
      $region9: #{tpu_custom_call.1} parent=5 // pred_check
        _
      $region10: #{tpu_custom_call.1} parent=5 // pred_check_branch
        %279 = sbr.rel (%p276) target = $region12
      $region11: #{tpu_custom_call.1} parent=5 // pred_region
        %s280 = ssub.s32 %s25, 1
        // Predicated region
        $region13: #{tpu_custom_call.1} parent=11 // pred_check
          %p281 = pneg %p72
        $region14: #{tpu_custom_call.1} parent=11 // pred_check_branch
          %283 = sbr.rel (%p281) target = $region16
        $region15: #{tpu_custom_call.1} parent=11 // pred_region
          %285 = vsyncadd [#allocation6], 0
          %s286 = sshll.u32 %s1, 4
          %s287 = int_to_ptr.hbm [resolvable:$true] %s286
          %s288 = sshll.u32 [#allocation5], 4
          %s289 = int_to_ptr.vmem [resolvable:$true] %s288
          %294 = dma.hbm_to_vmem [thread:$0]  %s287, 4096, %s289, [#allocation6], 512, 512, 32
        $region16: #{tpu_custom_call.1} parent=11 // pred_fallthru
          _
        // Predicated region
        $region17: #{tpu_custom_call.1} parent=11 // pred_check
          %p295 = pneg %p93
        $region18: #{tpu_custom_call.1} parent=11 // pred_check_branch
          %297 = sbr.rel (%p295) target = $region20
        $region19: #{tpu_custom_call.1} parent=11 // pred_region
          _
        $region20: #{tpu_custom_call.1} parent=11 // pred_fallthru
          _
        // Predicated region
        $region21: #{tpu_custom_call.1} parent=11 // pred_check
          %p298 = pneg %p114
        $region22: #{tpu_custom_call.1} parent=11 // pred_check_branch
          %300 = sbr.rel (%p298) target = $region24
        $region23: #{tpu_custom_call.1} parent=11 // pred_region
          %302 = vsyncadd [#allocation6], 0
          %s303 = sshll.u32 %s3, 4
          %s304 = int_to_ptr.hbm [resolvable:$true] %s303
          %s305 = sshll.u32 [#allocation7], 4
          %s306 = int_to_ptr.vmem [resolvable:$true] %s305
          %311 = dma.hbm_to_vmem [thread:$0]  %s304, 64, %s306, [#allocation6], 32, 32, 2
        $region24: #{tpu_custom_call.1} parent=11 // pred_fallthru
          _
        // Predicated region
        $region25: #{tpu_custom_call.1} parent=11 // pred_check
          %p312 = pneg %p135
        $region26: #{tpu_custom_call.1} parent=11 // pred_check_branch
          %314 = sbr.rel (%p312) target = $region28
        $region27: #{tpu_custom_call.1} parent=11 // pred_region
          %316 = vsyncadd [#allocation9], 0
          %s317 = sshll.u32 %s4, 4
          %s318 = int_to_ptr.hbm [resolvable:$true] %s317
          %s319 = sshll.u32 [#allocation8], 4
          %s320 = int_to_ptr.vmem [resolvable:$true] %s319
          %325 = dma.hbm_to_vmem [thread:$0]  %s318, 8192, %s320, [#allocation9], 128, 128, 8
        $region28: #{tpu_custom_call.1} parent=11 // pred_fallthru
          _
        // Predicated region
        $region29: #{tpu_custom_call.1} parent=11 // pred_check
          %p326 = pneg %p156
        $region30: #{tpu_custom_call.1} parent=11 // pred_check_branch
          %328 = sbr.rel (%p326) target = $region32
        $region31: #{tpu_custom_call.1} parent=11 // pred_region
          %330 = vsyncadd [#allocation9], 0
          %s331 = sshll.u32 %s5, 4
          %s332 = int_to_ptr.hbm [resolvable:$true] %s331
          %s333 = sshll.u32 [#allocation10], 4
          %s334 = int_to_ptr.vmem [resolvable:$true] %s333
          %339 = dma.hbm_to_vmem [thread:$0]  %s332, 32, %s334, [#allocation9], 16, 16, 1
        $region32: #{tpu_custom_call.1} parent=11 // pred_fallthru
          _
        // Predicated region
        $region33: #{tpu_custom_call.1} parent=11 // pred_check
          %p340 = pneg %p177
        $region34: #{tpu_custom_call.1} parent=11 // pred_check_branch
          %342 = sbr.rel (%p340) target = $region36
        $region35: #{tpu_custom_call.1} parent=11 // pred_region
          _
        $region36: #{tpu_custom_call.1} parent=11 // pred_fallthru
          _
        // Predicated region
        $region37: #{tpu_custom_call.1} parent=11 // pred_check
          %p343 = pneg %p198
        $region38: #{tpu_custom_call.1} parent=11 // pred_check_branch
          %345 = sbr.rel (%p343) target = $region40
        $region39: #{tpu_custom_call.1} parent=11 // pred_region
          %347 = vsyncadd [#allocation12], 0
          %s348 = sshll.u32 %s7, 4
          %s349 = int_to_ptr.hbm [resolvable:$true] %s348
          %s350 = sshll.u32 [#allocation11], 4
          %s351 = int_to_ptr.vmem [resolvable:$true] %s350
          %356 = dma.hbm_to_vmem [thread:$0]  %s349, 32, %s351, [#allocation12], 16, 16, 1
        $region40: #{tpu_custom_call.1} parent=11 // pred_fallthru
          _
        // Predicated region
        $region41: #{tpu_custom_call.1} parent=11 // pred_check
          %p357 = pneg %p219
        $region42: #{tpu_custom_call.1} parent=11 // pred_check_branch
          %359 = sbr.rel (%p357) target = $region44
        $region43: #{tpu_custom_call.1} parent=11 // pred_region
          _
        $region44: #{tpu_custom_call.1} parent=11 // pred_fallthru
          _
        // Predicated region
        $region45: #{tpu_custom_call.1} parent=11 // pred_check
          %p360 = pneg %p240
        $region46: #{tpu_custom_call.1} parent=11 // pred_check_branch
          %362 = sbr.rel (%p360) target = $region48
        $region47: #{tpu_custom_call.1} parent=11 // pred_region
          _
        $region48: #{tpu_custom_call.1} parent=11 // pred_fallthru
          _
      $region12: #{tpu_custom_call.1} parent=5 // pred_fallthru
        _
      %p363 = scmp.lt.s32.totalorder %s25, 2
      // Predicated region
      $region49: #{tpu_custom_call.1} parent=5 // pred_check
        %p364 = pneg %p363
      $region50: #{tpu_custom_call.1} parent=5 // pred_check_branch
        %366 = sbr.rel (%p364) target = $region52
      $region51: #{tpu_custom_call.1} parent=5 // pred_region
        // Predicated region
        $region53: #{tpu_custom_call.1} parent=51 // pred_check
          %p367 = pneg %p45
        $region54: #{tpu_custom_call.1} parent=51 // pred_check_branch
          %369 = sbr.rel (%p367) target = $region56
        $region55: #{tpu_custom_call.1} parent=51 // pred_region
          %s370 = sand.u32 %s35, 1
          %s371 = scalar_lea.sflag [#allocation3], %s370
          %s372 = sand.u32 %s35, 1
          %s373 = smul.addr %s372, 16
          %s374 = scalar_lea.vmem [#allocation2], %s373
          %376 = vsyncadd %s371, 0
          %s377 = smul.addr %s25, 2
          %s378 = smul.addr %s377, 8
          %s379 = scalar_lea.hbm %s0, %s378
          %s380 = sshll.u32 %s379, 4
          %s381 = int_to_ptr.hbm [resolvable:$true] %s380
          %s382 = sshll.u32 %s374, 4
          %s383 = int_to_ptr.vmem [resolvable:$true] %s382
          %388 = dma.hbm_to_vmem [thread:$0]  %s381, 256, %s383, %s371, 128, 128, 8
        $region56: #{tpu_custom_call.1} parent=51 // pred_fallthru
          _
      $region52: #{tpu_custom_call.1} parent=5 // pred_fallthru
        _
      %p389 = scmp.le.s32.totalorder 1, %s25
      %p390 = scmp.lt.s32.totalorder %s25, 3
      %p391 = pnand %p389, %p390
      %p392 = pneg %p391
      // Predicated region
      $region57: #{tpu_custom_call.1} parent=5 // pred_check
        _
      $region58: #{tpu_custom_call.1} parent=5 // pred_check_branch
        %394 = sbr.rel (%p391) target = $region60
      $region59: #{tpu_custom_call.1} parent=5 // pred_region
        %s395 = ssub.s32 %s25, 1
        %s396 = sand.u32 %s38, 1
        %s397 = scalar_lea.sflag [#allocation3], %s396
        %s398 = sand.u32 %s38, 1
        %s399 = smul.addr %s398, 16
        %s400 = scalar_lea.vmem [#allocation2], %s399
        // Predicated region
        $region61: #{tpu_custom_call.1} parent=59 // pred_check
          %p401 = pneg %p51
        $region62: #{tpu_custom_call.1} parent=59 // pred_check_branch
          %403 = sbr.rel (%p401) target = $region64
        $region63: #{tpu_custom_call.1} parent=59 // pred_region
          %405 = dma.done %s397, 256
        $region64: #{tpu_custom_call.1} parent=59 // pred_fallthru
          _
        // Predicated region
        $region65: #{tpu_custom_call.1} parent=59 // pred_check
          %p406 = pneg %p72
        $region66: #{tpu_custom_call.1} parent=59 // pred_check_branch
          %408 = sbr.rel (%p406) target = $region68
        $region67: #{tpu_custom_call.1} parent=59 // pred_region
          %410 = dma.done [#allocation6], 4096
        $region68: #{tpu_custom_call.1} parent=59 // pred_fallthru
          _
        // Predicated region
        $region69: #{tpu_custom_call.1} parent=59 // pred_check
          %p411 = pneg %p114
        $region70: #{tpu_custom_call.1} parent=59 // pred_check_branch
          %413 = sbr.rel (%p411) target = $region72
        $region71: #{tpu_custom_call.1} parent=59 // pred_region
          %415 = dma.done [#allocation6], 64
        $region72: #{tpu_custom_call.1} parent=59 // pred_fallthru
          _
        // Predicated region
        $region73: #{tpu_custom_call.1} parent=59 // pred_check
          %p416 = pneg %p135
        $region74: #{tpu_custom_call.1} parent=59 // pred_check_branch
          %418 = sbr.rel (%p416) target = $region76
        $region75: #{tpu_custom_call.1} parent=59 // pred_region
          %420 = dma.done [#allocation9], 8192
        $region76: #{tpu_custom_call.1} parent=59 // pred_fallthru
          _
        // Predicated region
        $region77: #{tpu_custom_call.1} parent=59 // pred_check
          %p421 = pneg %p156
        $region78: #{tpu_custom_call.1} parent=59 // pred_check_branch
          %423 = sbr.rel (%p421) target = $region80
        $region79: #{tpu_custom_call.1} parent=59 // pred_region
          %425 = dma.done [#allocation9], 32
        $region80: #{tpu_custom_call.1} parent=59 // pred_fallthru
          _
        // Predicated region
        $region81: #{tpu_custom_call.1} parent=59 // pred_check
          %p426 = pneg %p198
        $region82: #{tpu_custom_call.1} parent=59 // pred_check_branch
          %428 = sbr.rel (%p426) target = $region84
        $region83: #{tpu_custom_call.1} parent=59 // pred_region
          %430 = dma.done [#allocation12], 32
        $region84: #{tpu_custom_call.1} parent=59 // pred_fallthru
          _
        %s431 = sand.u32 %s38, 1
        %s432 = scalar_lea.sflag [#allocation3], %s431
        %s433 = sand.u32 %s38, 1
        %s434 = smul.addr %s433, 16
        %s435 = scalar_lea.vmem [#allocation2], %s434
        %p436 = pneg %p51
        %p437 = pneg %p48
        %p438 = pneg %p72
        %p439 = pneg %p69
        %p440 = pneg %p93
        %p441 = pneg %p90
        %p442 = pneg %p114
        %p443 = pneg %p111
        %p444 = pneg %p135
        %p445 = pneg %p132
        %p446 = pneg %p156
        %p447 = pneg %p153
        %p448 = pneg %p177
        %p449 = pneg %p174
        %p450 = pneg %p198
        %p451 = pneg %p195
        %p452 = pneg %p219
        %p453 = pneg %p216
        %p454 = pneg %p240
        %p455 = pneg %p237
        %p456 = pneg %p266
        %p457 = pneg %p263
        %s458 = sand.u32 %s253, 1
        %s459 = scalar_lea.sflag [#allocation4], %s458
        %s460 = sand.u32 %s253, 1
        %s461 = smul.addr %s460, 16
        %s462 = scalar_lea.vmem [#allocation13], %s461
        %v463 = vld [vmem:[%s400] sm:$0xff]
        %v464 = vld [vmem:[%s400 + $0x8] sm:$0xff]
        %v465 = vld [vmem:[#allocation5] sm:$0xff]
        %v466 = vld [vmem:[#allocation5 + $0x8] sm:$0xff]
        %v467 = vld [vmem:[#allocation5 + $0x10] sm:$0xff]
        %v468 = vld [vmem:[#allocation5 + $0x18] sm:$0xff]
        %v469 = vld [vmem:[#allocation5 + $0x20] sm:$0xff]
        %v470 = vld [vmem:[#allocation5 + $0x28] sm:$0xff]
        %v471 = vld [vmem:[#allocation5 + $0x30] sm:$0xff]
        %v472 = vld [vmem:[#allocation5 + $0x38] sm:$0xff]
        %v473 = vld [vmem:[#allocation5 + $0x40] sm:$0xff]
        %v474 = vld [vmem:[#allocation5 + $0x48] sm:$0xff]
        %v475 = vld [vmem:[#allocation5 + $0x50] sm:$0xff]
        %v476 = vld [vmem:[#allocation5 + $0x58] sm:$0xff]
        %v477 = vld [vmem:[#allocation5 + $0x60] sm:$0xff]
        %v478 = vld [vmem:[#allocation5 + $0x68] sm:$0xff]
        %v479 = vld [vmem:[#allocation5 + $0x70] sm:$0xff]
        %v480 = vld [vmem:[#allocation5 + $0x78] sm:$0xff]
        %v481 = vld [vmem:[%s2] sm:$0x3]
        %v482 = vld [vmem:[#allocation7] sm:$0x3]
        %v483 = vld [vmem:[#allocation8] sm:$0xff]
        %v484 = vld [vmem:[#allocation8 + $0x8] sm:$0xff]
        %v485 = vld [vmem:[#allocation8 + $0x10] sm:$0xff]
        %v486 = vld [vmem:[#allocation8 + $0x18] sm:$0xff]
        %v487 = vld [vmem:[#allocation8 + $0x20] sm:$0xff]
        %v488 = vld [vmem:[#allocation8 + $0x28] sm:$0xff]
        %v489 = vld [vmem:[#allocation8 + $0x30] sm:$0xff]
        %v490 = vld [vmem:[#allocation8 + $0x38] sm:$0xff]
        %v491 = vld [vmem:[#allocation8 + $0x40] sm:$0xff]
        %v492 = vld [vmem:[#allocation8 + $0x48] sm:$0xff]
        %v493 = vld [vmem:[#allocation8 + $0x50] sm:$0xff]
        %v494 = vld [vmem:[#allocation8 + $0x58] sm:$0xff]
        %v495 = vld [vmem:[#allocation8 + $0x60] sm:$0xff]
        %v496 = vld [vmem:[#allocation8 + $0x68] sm:$0xff]
        %v497 = vld [vmem:[#allocation8 + $0x70] sm:$0xff]
        %v498 = vld [vmem:[#allocation8 + $0x78] sm:$0xff]
        %v499 = vld [vmem:[#allocation8 + $0x80] sm:$0xff]
        %v500 = vld [vmem:[#allocation8 + $0x88] sm:$0xff]
        %v501 = vld [vmem:[#allocation8 + $0x90] sm:$0xff]
        %v502 = vld [vmem:[#allocation8 + $0x98] sm:$0xff]
        %v503 = vld [vmem:[#allocation8 + $0xa0] sm:$0xff]
        %v504 = vld [vmem:[#allocation8 + $0xa8] sm:$0xff]
        %v505 = vld [vmem:[#allocation8 + $0xb0] sm:$0xff]
        %v506 = vld [vmem:[#allocation8 + $0xb8] sm:$0xff]
        %v507 = vld [vmem:[#allocation8 + $0xc0] sm:$0xff]
        %v508 = vld [vmem:[#allocation8 + $0xc8] sm:$0xff]
        %v509 = vld [vmem:[#allocation8 + $0xd0] sm:$0xff]
        %v510 = vld [vmem:[#allocation8 + $0xd8] sm:$0xff]
        %v511 = vld [vmem:[#allocation8 + $0xe0] sm:$0xff]
        %v512 = vld [vmem:[#allocation8 + $0xe8] sm:$0xff]
        %v513 = vld [vmem:[#allocation8 + $0xf0] sm:$0xff]
        %v514 = vld [vmem:[#allocation8 + $0xf8] sm:$0xff]
        %v515 = vld [vmem:[#allocation10] sm:$0x1]
        %v516 = vld [vmem:[%s6] sm:$0xff]
        %v517 = vld [vmem:[%s6 + $0x8] sm:$0xff]
        %v518 = vld [vmem:[%s6 + $0x10] sm:$0xff]
        %v519 = vld [vmem:[%s6 + $0x18] sm:$0xff]
        %v520 = vld [vmem:[%s6 + $0x20] sm:$0xff]
        %v521 = vld [vmem:[%s6 + $0x28] sm:$0xff]
        %v522 = vld [vmem:[%s6 + $0x30] sm:$0xff]
        %v523 = vld [vmem:[%s6 + $0x38] sm:$0xff]
        %v524 = vld [vmem:[%s6 + $0x40] sm:$0xff]
        %v525 = vld [vmem:[%s6 + $0x48] sm:$0xff]
        %v526 = vld [vmem:[%s6 + $0x50] sm:$0xff]
        %v527 = vld [vmem:[%s6 + $0x58] sm:$0xff]
        %v528 = vld [vmem:[%s6 + $0x60] sm:$0xff]
        %v529 = vld [vmem:[%s6 + $0x68] sm:$0xff]
        %v530 = vld [vmem:[%s6 + $0x70] sm:$0xff]
        %v531 = vld [vmem:[%s6 + $0x78] sm:$0xff]
        %v532 = vld [vmem:[%s6 + $0x80] sm:$0xff]
        %v533 = vld [vmem:[%s6 + $0x88] sm:$0xff]
        %v534 = vld [vmem:[%s6 + $0x90] sm:$0xff]
        %v535 = vld [vmem:[%s6 + $0x98] sm:$0xff]
        %v536 = vld [vmem:[#allocation11] sm:$0x1]
        %v537 = vld [vmem:[%s8] sm:$0xff]
        %v538 = vld [vmem:[%s8 + $0x8] sm:$0xff]
        %v539 = vld [vmem:[%s8 + $0x10] sm:$0xff]
        %v540 = vld [vmem:[%s8 + $0x18] sm:$0xff]
        %v541 = vld [vmem:[%s8 + $0x20] sm:$0xff]
        %v542 = vld [vmem:[%s8 + $0x28] sm:$0xff]
        %v543 = vld [vmem:[%s8 + $0x30] sm:$0xff]
        %v544 = vld [vmem:[%s8 + $0x38] sm:$0xff]
        %v545 = vld [vmem:[%s8 + $0x40] sm:$0xff]
        %v546 = vld [vmem:[%s8 + $0x48] sm:$0xff]
        %v547 = vld [vmem:[%s8 + $0x50] sm:$0xff]
        %v548 = vld [vmem:[%s8 + $0x58] sm:$0xff]
        %v549 = vld [vmem:[%s8 + $0x60] sm:$0xff]
        %v550 = vld [vmem:[%s8 + $0x68] sm:$0xff]
        %v551 = vld [vmem:[%s8 + $0x70] sm:$0xff]
        %v552 = vld [vmem:[%s8 + $0x78] sm:$0xff]
        %v553 = vld [vmem:[%s9] sm:$0x1]
        %v554 = vmul.f32 %v463, %v463
        %v555 = vmul.f32 %v464, %v464
        %vm556 = vcmask 261120
        %v557 = vsel %vm556, %v554, 0.0
        %558 = vadd.xlane.f32.xlu0 %v557
        %v559 = vpop.xlane.xlu0 %558
        %v560 = vsel %vm556, %v555, 0.0
        %561 = vadd.xlane.f32.xlu0 %v560
        %v562 = vpop.xlane.xlu0 %561
        %v564 = vsel %vm556, %v463, 0
        %v567 = vsel %vm556, %v464, 0
        %569 = vmatpush.xpose.msra.mxu0 0.0
        %570 = vmatpush.xpose.msra.mxu0 0.0
        %571 = vmatpush.xpose.msra.mxu0 0.0
        %572 = vmatpush.xpose.msra.mxu0 0.0
        %573 = vmatpush.xpose.msra.mxu0 0.0
        %574 = vmatpush.xpose.msra.mxu0 0.0
        %575 = vmatpush.xpose.msra.mxu0 0.0
        %576 = vmatpush.xpose.msra.mxu0 0.0
        %577 = vmatpush.xpose.msra.mxu0 0.0
        %578 = vmatpush.xpose.msra.mxu0 0.0
        %579 = vmatpush.xpose.msra.mxu0 0.0
        %580 = vmatpush.xpose.msra.mxu0 0.0
        %581 = vmatpush.xpose.msra.mxu0 0.0
        %582 = vmatpush.xpose.msra.mxu0 0.0
        %583 = vmatpush.xpose.msra.mxu0 %v567
        %584 = vmatpush.xpose.msra.mxu0 %v564
        %585 = vmatmul.f32.gmra.mxu0 %v564
        %v586 = vpop.f32.mrf.mxu0
        %v587 = vadd.f32 0.0, %v586
        %588 = vmatmul.f32.gmra.mxu0 %v567
        %v589 = vpop.f32.mrf.mxu0
        %v590 = vadd.f32 0.0, %v589
        %591 = vdwg.mxu0
        %592 = vxpose.xlu0.b32.start [1/16] %v559, 128
        %593 = vxpose.xlu0.b32.cont [2/16] %v562, 128
        %594 = vxpose.xlu0.b32.cont [3/16] 0.0, 128
        %595 = vxpose.xlu0.b32.cont [4/16] 0.0, 128
        %596 = vxpose.xlu0.b32.cont [5/16] 0.0, 128
        %597 = vxpose.xlu0.b32.cont [6/16] 0.0, 128
        %598 = vxpose.xlu0.b32.cont [7/16] 0.0, 128
        %599 = vxpose.xlu0.b32.cont [8/16] 0.0, 128
        %600 = vxpose.xlu0.b32.cont [9/16] 0.0, 128
        %601 = vxpose.xlu0.b32.cont [10/16] 0.0, 128
        %602 = vxpose.xlu0.b32.cont [11/16] 0.0, 128
        %603 = vxpose.xlu0.b32.cont [12/16] 0.0, 128
        %604 = vxpose.xlu0.b32.cont [13/16] 0.0, 128
        %605 = vxpose.xlu0.b32.cont [14/16] 0.0, 128
        %606 = vxpose.xlu0.b32.cont [15/16] 0.0, 128
        %607 = vxpose.xlu0.b32.end [16/16] 0.0, 128
        %v608 = vpop.trf.xlu0
        %v609 = vpop.trf.xlu0
        %v610 = vpop.trf.xlu0
        %v611 = vpop.trf.xlu0
        %v612 = vpop.trf.xlu0
        %v613 = vpop.trf.xlu0
        %v614 = vpop.trf.xlu0
        %v615 = vpop.trf.xlu0
        %v616 = vpop.trf.xlu0
        %v617 = vpop.trf.xlu0
        %v618 = vpop.trf.xlu0
        %v619 = vpop.trf.xlu0
        %v620 = vpop.trf.xlu0
        %v621 = vpop.trf.xlu0
        %v622 = vpop.trf.xlu0
        %v623 = vpop.trf.xlu0
        %v624 = vperm.slane %v608, 0
        %v625 = vadd.f32 %v559, %v624
        %v626 = vadd.f32 %v562, %v624
        %v627 = vmul.f32 %v587, 2.0
        %v628 = vmul.f32 %v590, 2.0
        %v629 = vsub.f32 %v625, %v627
        %v630 = vsub.f32 %v626, %v628
        %v631 = vmax.f32 %v629, 0.0
        %v632 = vmax.f32 %v630, 0.0
        %633 = vmatpush.msra.mxu0 0.0
        %634 = vmatpush.msra.mxu0 0.0
        %635 = vmatpush.msra.mxu0 0.0
        %636 = vmatpush.msra.mxu0 0.0
        %637 = vmatpush.msra.mxu0 0.0
        %638 = vmatpush.msra.mxu0 0.0
        %639 = vmatpush.msra.mxu0 0.0
        %640 = vmatpush.msra.mxu0 0.0
        %641 = vmatpush.msra.mxu0 0.0
        %642 = vmatpush.msra.mxu0 0.0
        %643 = vmatpush.msra.mxu0 0.0
        %644 = vmatpush.msra.mxu0 0.0
        %645 = vmatpush.msra.mxu0 %v477
        %646 = vmatpush.msra.mxu0 %v473
        %647 = vmatpush.msra.mxu0 %v469
        %648 = vmatpush.msra.mxu0 %v465
        %649 = vmatmul.f32.gmra.mxu0 %v564
        %v650 = vpop.f32.mrf.mxu0
        %v651 = vadd.f32 0.0, %v650
        %652 = vmatmul.f32.gmra.mxu0 %v567
        %v653 = vpop.f32.mrf.mxu0
        %v654 = vadd.f32 0.0, %v653
        %655 = vdwg.mxu0
        %656 = vmatpush.msra.mxu0 0.0
        %657 = vmatpush.msra.mxu0 0.0
        %658 = vmatpush.msra.mxu0 0.0
        %659 = vmatpush.msra.mxu0 0.0
        %660 = vmatpush.msra.mxu0 0.0
        %661 = vmatpush.msra.mxu0 0.0
        %662 = vmatpush.msra.mxu0 0.0
        %663 = vmatpush.msra.mxu0 0.0
        %664 = vmatpush.msra.mxu0 0.0
        %665 = vmatpush.msra.mxu0 0.0
        %666 = vmatpush.msra.mxu0 0.0
        %667 = vmatpush.msra.mxu0 0.0
        %668 = vmatpush.msra.mxu0 %v478
        %669 = vmatpush.msra.mxu0 %v474
        %670 = vmatpush.msra.mxu0 %v470
        %671 = vmatpush.msra.mxu0 %v466
        %672 = vmatmul.f32.gmra.mxu0 %v564
        %v673 = vpop.f32.mrf.mxu0
        %v674 = vadd.f32 0.0, %v673
        %675 = vmatmul.f32.gmra.mxu0 %v567
        %v676 = vpop.f32.mrf.mxu0
        %v677 = vadd.f32 0.0, %v676
        %678 = vdwg.mxu0
        %679 = vmatpush.msra.mxu0 0.0
        %680 = vmatpush.msra.mxu0 0.0
        %681 = vmatpush.msra.mxu0 0.0
        %682 = vmatpush.msra.mxu0 0.0
        %683 = vmatpush.msra.mxu0 0.0
        %684 = vmatpush.msra.mxu0 0.0
        %685 = vmatpush.msra.mxu0 0.0
        %686 = vmatpush.msra.mxu0 0.0
        %687 = vmatpush.msra.mxu0 0.0
        %688 = vmatpush.msra.mxu0 0.0
        %689 = vmatpush.msra.mxu0 0.0
        %690 = vmatpush.msra.mxu0 0.0
        %691 = vmatpush.msra.mxu0 %v479
        %692 = vmatpush.msra.mxu0 %v475
        %693 = vmatpush.msra.mxu0 %v471
        %694 = vmatpush.msra.mxu0 %v467
        %695 = vmatmul.f32.gmra.mxu0 %v564
        %v696 = vpop.f32.mrf.mxu0
        %v697 = vadd.f32 0.0, %v696
        %698 = vmatmul.f32.gmra.mxu0 %v567
        %v699 = vpop.f32.mrf.mxu0
        %v700 = vadd.f32 0.0, %v699
        %701 = vdwg.mxu0
        %702 = vmatpush.msra.mxu0 0.0
        %703 = vmatpush.msra.mxu0 0.0
        %704 = vmatpush.msra.mxu0 0.0
        %705 = vmatpush.msra.mxu0 0.0
        %706 = vmatpush.msra.mxu0 0.0
        %707 = vmatpush.msra.mxu0 0.0
        %708 = vmatpush.msra.mxu0 0.0
        %709 = vmatpush.msra.mxu0 0.0
        %710 = vmatpush.msra.mxu0 0.0
        %711 = vmatpush.msra.mxu0 0.0
        %712 = vmatpush.msra.mxu0 0.0
        %713 = vmatpush.msra.mxu0 0.0
        %714 = vmatpush.msra.mxu0 %v480
        %715 = vmatpush.msra.mxu0 %v476
        %716 = vmatpush.msra.mxu0 %v472
        %717 = vmatpush.msra.mxu0 %v468
        %718 = vmatmul.f32.gmra.mxu0 %v564
        %v719 = vpop.f32.mrf.mxu0
        %v720 = vadd.f32 0.0, %v719
        %721 = vmatmul.f32.gmra.mxu0 %v567
        %v722 = vpop.f32.mrf.mxu0
        %v723 = vadd.f32 0.0, %v722
        %724 = vdwg.mxu0
        %v729 = vrot.slane %v674, 7
        %v730 = vrot.slane %v677, 7
        %vm731 = vcmask 1040384
        %v732 = vsel %vm731, %v651, %v729
        %vm733 = vcmask 1041409
        %v734 = vsel %vm733, %v651, %v729
        %v735 = vrot.slane %v734, 1
        %vm736 = vcmask 1042434
        %v737 = vsel %vm736, %v651, %v729
        %v738 = vrot.slane %v737, 2
        %vm739 = vcmask 1043459
        %v740 = vsel %vm739, %v651, %v729
        %v741 = vrot.slane %v740, 3
        %vm742 = vcmask 1044484
        %v743 = vsel %vm742, %v651, %v729
        %v744 = vrot.slane %v743, 4
        %vm745 = vcmask 1045509
        %v746 = vsel %vm745, %v651, %v729
        %v747 = vrot.slane %v746, 5
        %vm748 = vcmask 1046534
        %v749 = vsel %vm748, %v651, %v729
        %v750 = vrot.slane %v749, 6
        %vm751 = vcmask 1046528
        %v752 = vsel %vm751, %v729, %v651
        %v753 = vrot.slane %v752, 7
        %v754 = vsel %vm731, %v654, %v730
        %v755 = vsel %vm733, %v654, %v730
        %v756 = vrot.slane %v755, 1
        %v757 = vsel %vm736, %v654, %v730
        %v758 = vrot.slane %v757, 2
        %v759 = vsel %vm739, %v654, %v730
        %v760 = vrot.slane %v759, 3
        %v761 = vsel %vm742, %v654, %v730
        %v762 = vrot.slane %v761, 4
        %v763 = vsel %vm745, %v654, %v730
        %v764 = vrot.slane %v763, 5
        %v765 = vsel %vm748, %v654, %v730
        %v766 = vrot.slane %v765, 6
        %v767 = vsel %vm751, %v730, %v654
        %v768 = vrot.slane %v767, 7
        %v769 = vperm.slane %v732, 0
        %v770 = vperm.slane %v732, 1
        %v771 = vperm.slane %v735, 0
        %v772 = vperm.slane %v735, 1
        %v773 = vperm.slane %v738, 0
        %v774 = vperm.slane %v738, 1
        %v775 = vperm.slane %v741, 0
        %v776 = vperm.slane %v741, 1
        %v777 = vperm.slane %v744, 0
        %v778 = vperm.slane %v744, 1
        %v779 = vperm.slane %v747, 0
        %v780 = vperm.slane %v747, 1
        %v781 = vperm.slane %v750, 0
        %v782 = vperm.slane %v750, 1
        %v783 = vperm.slane %v753, 0
        %v784 = vperm.slane %v753, 1
        %v785 = vperm.slane %v754, 0
        %v786 = vperm.slane %v754, 1
        %v787 = vperm.slane %v756, 0
        %v788 = vperm.slane %v756, 1
        %v789 = vperm.slane %v758, 0
        %v790 = vperm.slane %v758, 1
        %v791 = vperm.slane %v760, 0
        %v792 = vperm.slane %v760, 1
        %v793 = vperm.slane %v762, 0
        %v794 = vperm.slane %v762, 1
        %v795 = vperm.slane %v764, 0
        %v796 = vperm.slane %v764, 1
        %v797 = vperm.slane %v766, 0
        %v798 = vperm.slane %v766, 1
        %v799 = vperm.slane %v768, 0
        %v800 = vperm.slane %v768, 1
        %v833 = vadd.f32 %v769, %v697
        %v834 = vadd.f32 %v770, %v720
        %v835 = vadd.f32 %v769, %v700
        %v836 = vadd.f32 %v770, %v723
        %v837 = vadd.f32 %v771, %v697
        %v838 = vadd.f32 %v772, %v720
        %v839 = vadd.f32 %v771, %v700
        %v840 = vadd.f32 %v772, %v723
        %v841 = vadd.f32 %v773, %v697
        %v842 = vadd.f32 %v774, %v720
        %v843 = vadd.f32 %v773, %v700
        %v844 = vadd.f32 %v774, %v723
        %v845 = vadd.f32 %v775, %v697
        %v846 = vadd.f32 %v776, %v720
        %v847 = vadd.f32 %v775, %v700
        %v848 = vadd.f32 %v776, %v723
        %v849 = vadd.f32 %v777, %v697
        %v850 = vadd.f32 %v778, %v720
        %v851 = vadd.f32 %v777, %v700
        %v852 = vadd.f32 %v778, %v723
        %v853 = vadd.f32 %v779, %v697
        %v854 = vadd.f32 %v780, %v720
        %v855 = vadd.f32 %v779, %v700
        %v856 = vadd.f32 %v780, %v723
        %v857 = vadd.f32 %v781, %v697
        %v858 = vadd.f32 %v782, %v720
        %v859 = vadd.f32 %v781, %v700
        %v860 = vadd.f32 %v782, %v723
        %v861 = vadd.f32 %v783, %v697
        %v862 = vadd.f32 %v784, %v720
        %v863 = vadd.f32 %v783, %v700
        %v864 = vadd.f32 %v784, %v723
        %v865 = vadd.f32 %v785, %v697
        %v866 = vadd.f32 %v786, %v720
        %v867 = vadd.f32 %v785, %v700
        %v868 = vadd.f32 %v786, %v723
        %v869 = vadd.f32 %v787, %v697
        %v870 = vadd.f32 %v788, %v720
        %v871 = vadd.f32 %v787, %v700
        %v872 = vadd.f32 %v788, %v723
        %v873 = vadd.f32 %v789, %v697
        %v874 = vadd.f32 %v790, %v720
        %v875 = vadd.f32 %v789, %v700
        %v876 = vadd.f32 %v790, %v723
        %v877 = vadd.f32 %v791, %v697
        %v878 = vadd.f32 %v792, %v720
        %v879 = vadd.f32 %v791, %v700
        %v880 = vadd.f32 %v792, %v723
        %v881 = vadd.f32 %v793, %v697
        %v882 = vadd.f32 %v794, %v720
        %v883 = vadd.f32 %v793, %v700
        %v884 = vadd.f32 %v794, %v723
        %v885 = vadd.f32 %v795, %v697
        %v886 = vadd.f32 %v796, %v720
        %v887 = vadd.f32 %v795, %v700
        %v888 = vadd.f32 %v796, %v723
        %v889 = vadd.f32 %v797, %v697
        %v890 = vadd.f32 %v798, %v720
        %v891 = vadd.f32 %v797, %v700
        %v892 = vadd.f32 %v798, %v723
        %v893 = vadd.f32 %v799, %v697
        %v894 = vadd.f32 %v800, %v720
        %v895 = vadd.f32 %v799, %v700
        %v896 = vadd.f32 %v800, %v723
        %v897 = vperm.slane %v631, 0
        %v898 = vlaneseq
        %v899 = vshrl.u32 %v898, 7
        %901 = vset.pattern.permute.xlu0 %v899
        %902 = vperm.xlu0 %901, %v897
        %v903 = vpop.permute.xlu0 %902
        %v904 = vlaneseq
        %v905 = vshrl.u32 %v904, 7
        %v906 = vadd.s32 %v905, 8
        %907 = vset.pattern.permute.xlu0 %v906
        %908 = vperm.xlu0 %907, %v897
        %v909 = vpop.permute.xlu0 %908
        %v910 = vperm.slane %v631, 1
        %v911 = vlaneseq
        %v912 = vshrl.u32 %v911, 7
        %914 = vset.pattern.permute.xlu0 %v912
        %915 = vperm.xlu0 %914, %v910
        %v916 = vpop.permute.xlu0 %915
        %v917 = vlaneseq
        %v918 = vshrl.u32 %v917, 7
        %v919 = vadd.s32 %v918, 8
        %920 = vset.pattern.permute.xlu0 %v919
        %921 = vperm.xlu0 %920, %v910
        %v922 = vpop.permute.xlu0 %921
        %v923 = vperm.slane %v631, 2
        %v924 = vlaneseq
        %v925 = vshrl.u32 %v924, 7
        %927 = vset.pattern.permute.xlu0 %v925
        %928 = vperm.xlu0 %927, %v923
        %v929 = vpop.permute.xlu0 %928
        %v930 = vlaneseq
        %v931 = vshrl.u32 %v930, 7
        %v932 = vadd.s32 %v931, 8
        %933 = vset.pattern.permute.xlu0 %v932
        %934 = vperm.xlu0 %933, %v923
        %v935 = vpop.permute.xlu0 %934
        %v936 = vperm.slane %v631, 3
        %v937 = vlaneseq
        %v938 = vshrl.u32 %v937, 7
        %940 = vset.pattern.permute.xlu0 %v938
        %941 = vperm.xlu0 %940, %v936
        %v942 = vpop.permute.xlu0 %941
        %v943 = vlaneseq
        %v944 = vshrl.u32 %v943, 7
        %v945 = vadd.s32 %v944, 8
        %946 = vset.pattern.permute.xlu0 %v945
        %947 = vperm.xlu0 %946, %v936
        %v948 = vpop.permute.xlu0 %947
        %v949 = vperm.slane %v631, 4
        %v950 = vlaneseq
        %v951 = vshrl.u32 %v950, 7
        %953 = vset.pattern.permute.xlu0 %v951
        %954 = vperm.xlu0 %953, %v949
        %v955 = vpop.permute.xlu0 %954
        %v956 = vlaneseq
        %v957 = vshrl.u32 %v956, 7
        %v958 = vadd.s32 %v957, 8
        %959 = vset.pattern.permute.xlu0 %v958
        %960 = vperm.xlu0 %959, %v949
        %v961 = vpop.permute.xlu0 %960
        %v962 = vperm.slane %v631, 5
        %v963 = vlaneseq
        %v964 = vshrl.u32 %v963, 7
        %966 = vset.pattern.permute.xlu0 %v964
        %967 = vperm.xlu0 %966, %v962
        %v968 = vpop.permute.xlu0 %967
        %v969 = vlaneseq
        %v970 = vshrl.u32 %v969, 7
        %v971 = vadd.s32 %v970, 8
        %972 = vset.pattern.permute.xlu0 %v971
        %973 = vperm.xlu0 %972, %v962
        %v974 = vpop.permute.xlu0 %973
        %v975 = vperm.slane %v631, 6
        %v976 = vlaneseq
        %v977 = vshrl.u32 %v976, 7
        %979 = vset.pattern.permute.xlu0 %v977
        %980 = vperm.xlu0 %979, %v975
        %v981 = vpop.permute.xlu0 %980
        %v982 = vlaneseq
        %v983 = vshrl.u32 %v982, 7
        %v984 = vadd.s32 %v983, 8
        %985 = vset.pattern.permute.xlu0 %v984
        %986 = vperm.xlu0 %985, %v975
        %v987 = vpop.permute.xlu0 %986
        %v988 = vperm.slane %v631, 7
        %v989 = vlaneseq
        %v990 = vshrl.u32 %v989, 7
        %992 = vset.pattern.permute.xlu0 %v990
        %993 = vperm.xlu0 %992, %v988
        %v994 = vpop.permute.xlu0 %993
        %v995 = vlaneseq
        %v996 = vshrl.u32 %v995, 7
        %v997 = vadd.s32 %v996, 8
        %998 = vset.pattern.permute.xlu0 %v997
        %999 = vperm.xlu0 %998, %v988
        %v1000 = vpop.permute.xlu0 %999
        %v1001 = vperm.slane %v632, 0
        %v1002 = vlaneseq
        %v1003 = vshrl.u32 %v1002, 7
        %1005 = vset.pattern.permute.xlu0 %v1003
        %1006 = vperm.xlu0 %1005, %v1001
        %v1007 = vpop.permute.xlu0 %1006
        %v1008 = vlaneseq
        %v1009 = vshrl.u32 %v1008, 7
        %v1010 = vadd.s32 %v1009, 8
        %1011 = vset.pattern.permute.xlu0 %v1010
        %1012 = vperm.xlu0 %1011, %v1001
        %v1013 = vpop.permute.xlu0 %1012
        %v1014 = vperm.slane %v632, 1
        %v1015 = vlaneseq
        %v1016 = vshrl.u32 %v1015, 7
        %1018 = vset.pattern.permute.xlu0 %v1016
        %1019 = vperm.xlu0 %1018, %v1014
        %v1020 = vpop.permute.xlu0 %1019
        %v1021 = vlaneseq
        %v1022 = vshrl.u32 %v1021, 7
        %v1023 = vadd.s32 %v1022, 8
        %1024 = vset.pattern.permute.xlu0 %v1023
        %1025 = vperm.xlu0 %1024, %v1014
        %v1026 = vpop.permute.xlu0 %1025
        %v1027 = vperm.slane %v632, 2
        %v1028 = vlaneseq
        %v1029 = vshrl.u32 %v1028, 7
        %1031 = vset.pattern.permute.xlu0 %v1029
        %1032 = vperm.xlu0 %1031, %v1027
        %v1033 = vpop.permute.xlu0 %1032
        %v1034 = vlaneseq
        %v1035 = vshrl.u32 %v1034, 7
        %v1036 = vadd.s32 %v1035, 8
        %1037 = vset.pattern.permute.xlu0 %v1036
        %1038 = vperm.xlu0 %1037, %v1027
        %v1039 = vpop.permute.xlu0 %1038
        %v1040 = vperm.slane %v632, 3
        %v1041 = vlaneseq
        %v1042 = vshrl.u32 %v1041, 7
        %1044 = vset.pattern.permute.xlu0 %v1042
        %1045 = vperm.xlu0 %1044, %v1040
        %v1046 = vpop.permute.xlu0 %1045
        %v1047 = vlaneseq
        %v1048 = vshrl.u32 %v1047, 7
        %v1049 = vadd.s32 %v1048, 8
        %1050 = vset.pattern.permute.xlu0 %v1049
        %1051 = vperm.xlu0 %1050, %v1040
        %v1052 = vpop.permute.xlu0 %1051
        %v1053 = vperm.slane %v632, 4
        %v1054 = vlaneseq
        %v1055 = vshrl.u32 %v1054, 7
        %1057 = vset.pattern.permute.xlu0 %v1055
        %1058 = vperm.xlu0 %1057, %v1053
        %v1059 = vpop.permute.xlu0 %1058
        %v1060 = vlaneseq
        %v1061 = vshrl.u32 %v1060, 7
        %v1062 = vadd.s32 %v1061, 8
        %1063 = vset.pattern.permute.xlu0 %v1062
        %1064 = vperm.xlu0 %1063, %v1053
        %v1065 = vpop.permute.xlu0 %1064
        %v1066 = vperm.slane %v632, 5
        %v1067 = vlaneseq
        %v1068 = vshrl.u32 %v1067, 7
        %1070 = vset.pattern.permute.xlu0 %v1068
        %1071 = vperm.xlu0 %1070, %v1066
        %v1072 = vpop.permute.xlu0 %1071
        %v1073 = vlaneseq
        %v1074 = vshrl.u32 %v1073, 7
        %v1075 = vadd.s32 %v1074, 8
        %1076 = vset.pattern.permute.xlu0 %v1075
        %1077 = vperm.xlu0 %1076, %v1066
        %v1078 = vpop.permute.xlu0 %1077
        %v1079 = vperm.slane %v632, 6
        %v1080 = vlaneseq
        %v1081 = vshrl.u32 %v1080, 7
        %1083 = vset.pattern.permute.xlu0 %v1081
        %1084 = vperm.xlu0 %1083, %v1079
        %v1085 = vpop.permute.xlu0 %1084
        %v1086 = vlaneseq
        %v1087 = vshrl.u32 %v1086, 7
        %v1088 = vadd.s32 %v1087, 8
        %1089 = vset.pattern.permute.xlu0 %v1088
        %1090 = vperm.xlu0 %1089, %v1079
        %v1091 = vpop.permute.xlu0 %1090
        %v1092 = vperm.slane %v632, 7
        %v1093 = vlaneseq
        %v1094 = vshrl.u32 %v1093, 7
        %1096 = vset.pattern.permute.xlu0 %v1094
        %1097 = vperm.xlu0 %1096, %v1092
        %v1098 = vpop.permute.xlu0 %1097
        %v1099 = vlaneseq
        %v1100 = vshrl.u32 %v1099, 7
        %v1101 = vadd.s32 %v1100, 8
        %1102 = vset.pattern.permute.xlu0 %v1101
        %1103 = vperm.xlu0 %1102, %v1092
        %v1104 = vpop.permute.xlu0 %1103
        %v1106 = vperm.slane %v481, 0
        %v1107 = vperm.slane %v481, 1
        %v1110 = vmul.f32 %v903, %v1106
        %v1111 = vmul.f32 %v903, %v1107
        %v1112 = vmul.f32 %v909, %v1106
        %v1113 = vmul.f32 %v909, %v1107
        %v1114 = vmul.f32 %v916, %v1106
        %v1115 = vmul.f32 %v916, %v1107
        %v1116 = vmul.f32 %v922, %v1106
        %v1117 = vmul.f32 %v922, %v1107
        %v1118 = vmul.f32 %v929, %v1106
        %v1119 = vmul.f32 %v929, %v1107
        %v1120 = vmul.f32 %v935, %v1106
        %v1121 = vmul.f32 %v935, %v1107
        %v1122 = vmul.f32 %v942, %v1106
        %v1123 = vmul.f32 %v942, %v1107
        %v1124 = vmul.f32 %v948, %v1106
        %v1125 = vmul.f32 %v948, %v1107
        %v1126 = vmul.f32 %v955, %v1106
        %v1127 = vmul.f32 %v955, %v1107
        %v1128 = vmul.f32 %v961, %v1106
        %v1129 = vmul.f32 %v961, %v1107
        %v1130 = vmul.f32 %v968, %v1106
        %v1131 = vmul.f32 %v968, %v1107
        %v1132 = vmul.f32 %v974, %v1106
        %v1133 = vmul.f32 %v974, %v1107
        %v1134 = vmul.f32 %v981, %v1106
        %v1135 = vmul.f32 %v981, %v1107
        %v1136 = vmul.f32 %v987, %v1106
        %v1137 = vmul.f32 %v987, %v1107
        %v1138 = vmul.f32 %v994, %v1106
        %v1139 = vmul.f32 %v994, %v1107
        %v1140 = vmul.f32 %v1000, %v1106
        %v1141 = vmul.f32 %v1000, %v1107
        %v1142 = vmul.f32 %v1007, %v1106
        %v1143 = vmul.f32 %v1007, %v1107
        %v1144 = vmul.f32 %v1013, %v1106
        %v1145 = vmul.f32 %v1013, %v1107
        %v1146 = vmul.f32 %v1020, %v1106
        %v1147 = vmul.f32 %v1020, %v1107
        %v1148 = vmul.f32 %v1026, %v1106
        %v1149 = vmul.f32 %v1026, %v1107
        %v1150 = vmul.f32 %v1033, %v1106
        %v1151 = vmul.f32 %v1033, %v1107
        %v1152 = vmul.f32 %v1039, %v1106
        %v1153 = vmul.f32 %v1039, %v1107
        %v1154 = vmul.f32 %v1046, %v1106
        %v1155 = vmul.f32 %v1046, %v1107
        %v1156 = vmul.f32 %v1052, %v1106
        %v1157 = vmul.f32 %v1052, %v1107
        %v1158 = vmul.f32 %v1059, %v1106
        %v1159 = vmul.f32 %v1059, %v1107
        %v1160 = vmul.f32 %v1065, %v1106
        %v1161 = vmul.f32 %v1065, %v1107
        %v1162 = vmul.f32 %v1072, %v1106
        %v1163 = vmul.f32 %v1072, %v1107
        %v1164 = vmul.f32 %v1078, %v1106
        %v1165 = vmul.f32 %v1078, %v1107
        %v1166 = vmul.f32 %v1085, %v1106
        %v1167 = vmul.f32 %v1085, %v1107
        %v1168 = vmul.f32 %v1091, %v1106
        %v1169 = vmul.f32 %v1091, %v1107
        %v1170 = vmul.f32 %v1098, %v1106
        %v1171 = vmul.f32 %v1098, %v1107
        %v1172 = vmul.f32 %v1104, %v1106
        %v1173 = vmul.f32 %v1104, %v1107
        %v1174 = vadd.f32 %v833, %v1110
        %v1175 = vadd.f32 %v834, %v1111
        %v1176 = vadd.f32 %v835, %v1112
        %v1177 = vadd.f32 %v836, %v1113
        %v1178 = vadd.f32 %v837, %v1114
        %v1179 = vadd.f32 %v838, %v1115
        %v1180 = vadd.f32 %v839, %v1116
        %v1181 = vadd.f32 %v840, %v1117
        %v1182 = vadd.f32 %v841, %v1118
        %v1183 = vadd.f32 %v842, %v1119
        %v1184 = vadd.f32 %v843, %v1120
        %v1185 = vadd.f32 %v844, %v1121
        %v1186 = vadd.f32 %v845, %v1122
        %v1187 = vadd.f32 %v846, %v1123
        %v1188 = vadd.f32 %v847, %v1124
        %v1189 = vadd.f32 %v848, %v1125
        %v1190 = vadd.f32 %v849, %v1126
        %v1191 = vadd.f32 %v850, %v1127
        %v1192 = vadd.f32 %v851, %v1128
        %v1193 = vadd.f32 %v852, %v1129
        %v1194 = vadd.f32 %v853, %v1130
        %v1195 = vadd.f32 %v854, %v1131
        %v1196 = vadd.f32 %v855, %v1132
        %v1197 = vadd.f32 %v856, %v1133
        %v1198 = vadd.f32 %v857, %v1134
        %v1199 = vadd.f32 %v858, %v1135
        %v1200 = vadd.f32 %v859, %v1136
        %v1201 = vadd.f32 %v860, %v1137
        %v1202 = vadd.f32 %v861, %v1138
        %v1203 = vadd.f32 %v862, %v1139
        %v1204 = vadd.f32 %v863, %v1140
        %v1205 = vadd.f32 %v864, %v1141
        %v1206 = vadd.f32 %v865, %v1142
        %v1207 = vadd.f32 %v866, %v1143
        %v1208 = vadd.f32 %v867, %v1144
        %v1209 = vadd.f32 %v868, %v1145
        %v1210 = vadd.f32 %v869, %v1146
        %v1211 = vadd.f32 %v870, %v1147
        %v1212 = vadd.f32 %v871, %v1148
        %v1213 = vadd.f32 %v872, %v1149
        %v1214 = vadd.f32 %v873, %v1150
        %v1215 = vadd.f32 %v874, %v1151
        %v1216 = vadd.f32 %v875, %v1152
        %v1217 = vadd.f32 %v876, %v1153
        %v1218 = vadd.f32 %v877, %v1154
        %v1219 = vadd.f32 %v878, %v1155
        %v1220 = vadd.f32 %v879, %v1156
        %v1221 = vadd.f32 %v880, %v1157
        %v1222 = vadd.f32 %v881, %v1158
        %v1223 = vadd.f32 %v882, %v1159
        %v1224 = vadd.f32 %v883, %v1160
        %v1225 = vadd.f32 %v884, %v1161
        %v1226 = vadd.f32 %v885, %v1162
        %v1227 = vadd.f32 %v886, %v1163
        %v1228 = vadd.f32 %v887, %v1164
        %v1229 = vadd.f32 %v888, %v1165
        %v1230 = vadd.f32 %v889, %v1166
        %v1231 = vadd.f32 %v890, %v1167
        %v1232 = vadd.f32 %v891, %v1168
        %v1233 = vadd.f32 %v892, %v1169
        %v1234 = vadd.f32 %v893, %v1170
        %v1235 = vadd.f32 %v894, %v1171
        %v1236 = vadd.f32 %v895, %v1172
        %v1237 = vadd.f32 %v896, %v1173
        %v1239 = vperm.slane %v482, 0
        %v1240 = vperm.slane %v482, 1
        %v1243 = vadd.f32 %v1174, %v1239
        %v1244 = vadd.f32 %v1175, %v1240
        %v1245 = vadd.f32 %v1176, %v1239
        %v1246 = vadd.f32 %v1177, %v1240
        %v1247 = vadd.f32 %v1178, %v1239
        %v1248 = vadd.f32 %v1179, %v1240
        %v1249 = vadd.f32 %v1180, %v1239
        %v1250 = vadd.f32 %v1181, %v1240
        %v1251 = vadd.f32 %v1182, %v1239
        %v1252 = vadd.f32 %v1183, %v1240
        %v1253 = vadd.f32 %v1184, %v1239
        %v1254 = vadd.f32 %v1185, %v1240
        %v1255 = vadd.f32 %v1186, %v1239
        %v1256 = vadd.f32 %v1187, %v1240
        %v1257 = vadd.f32 %v1188, %v1239
        %v1258 = vadd.f32 %v1189, %v1240
        %v1259 = vadd.f32 %v1190, %v1239
        %v1260 = vadd.f32 %v1191, %v1240
        %v1261 = vadd.f32 %v1192, %v1239
        %v1262 = vadd.f32 %v1193, %v1240
        %v1263 = vadd.f32 %v1194, %v1239
        %v1264 = vadd.f32 %v1195, %v1240
        %v1265 = vadd.f32 %v1196, %v1239
        %v1266 = vadd.f32 %v1197, %v1240
        %v1267 = vadd.f32 %v1198, %v1239
        %v1268 = vadd.f32 %v1199, %v1240
        %v1269 = vadd.f32 %v1200, %v1239
        %v1270 = vadd.f32 %v1201, %v1240
        %v1271 = vadd.f32 %v1202, %v1239
        %v1272 = vadd.f32 %v1203, %v1240
        %v1273 = vadd.f32 %v1204, %v1239
        %v1274 = vadd.f32 %v1205, %v1240
        %v1275 = vadd.f32 %v1206, %v1239
        %v1276 = vadd.f32 %v1207, %v1240
        %v1277 = vadd.f32 %v1208, %v1239
        %v1278 = vadd.f32 %v1209, %v1240
        %v1279 = vadd.f32 %v1210, %v1239
        %v1280 = vadd.f32 %v1211, %v1240
        %v1281 = vadd.f32 %v1212, %v1239
        %v1282 = vadd.f32 %v1213, %v1240
        %v1283 = vadd.f32 %v1214, %v1239
        %v1284 = vadd.f32 %v1215, %v1240
        %v1285 = vadd.f32 %v1216, %v1239
        %v1286 = vadd.f32 %v1217, %v1240
        %v1287 = vadd.f32 %v1218, %v1239
        %v1288 = vadd.f32 %v1219, %v1240
        %v1289 = vadd.f32 %v1220, %v1239
        %v1290 = vadd.f32 %v1221, %v1240
        %v1291 = vadd.f32 %v1222, %v1239
        %v1292 = vadd.f32 %v1223, %v1240
        %v1293 = vadd.f32 %v1224, %v1239
        %v1294 = vadd.f32 %v1225, %v1240
        %v1295 = vadd.f32 %v1226, %v1239
        %v1296 = vadd.f32 %v1227, %v1240
        %v1297 = vadd.f32 %v1228, %v1239
        %v1298 = vadd.f32 %v1229, %v1240
        %v1299 = vadd.f32 %v1230, %v1239
        %v1300 = vadd.f32 %v1231, %v1240
        %v1301 = vadd.f32 %v1232, %v1239
        %v1302 = vadd.f32 %v1233, %v1240
        %v1303 = vadd.f32 %v1234, %v1239
        %v1304 = vadd.f32 %v1235, %v1240
        %v1305 = vadd.f32 %v1236, %v1239
        %v1306 = vadd.f32 %v1237, %v1240
        %v1307 = vxor.u32 %v1243, 2147483648
        %v1308 = vxor.u32 %v1244, 2147483648
        %v1309 = vxor.u32 %v1245, 2147483648
        %v1310 = vxor.u32 %v1246, 2147483648
        %v1311 = vxor.u32 %v1247, 2147483648
        %v1312 = vxor.u32 %v1248, 2147483648
        %v1313 = vxor.u32 %v1249, 2147483648
        %v1314 = vxor.u32 %v1250, 2147483648
        %v1315 = vxor.u32 %v1251, 2147483648
        %v1316 = vxor.u32 %v1252, 2147483648
        %v1317 = vxor.u32 %v1253, 2147483648
        %v1318 = vxor.u32 %v1254, 2147483648
        %v1319 = vxor.u32 %v1255, 2147483648
        %v1320 = vxor.u32 %v1256, 2147483648
        %v1321 = vxor.u32 %v1257, 2147483648
        %v1322 = vxor.u32 %v1258, 2147483648
        %v1323 = vxor.u32 %v1259, 2147483648
        %v1324 = vxor.u32 %v1260, 2147483648
        %v1325 = vxor.u32 %v1261, 2147483648
        %v1326 = vxor.u32 %v1262, 2147483648
        %v1327 = vxor.u32 %v1263, 2147483648
        %v1328 = vxor.u32 %v1264, 2147483648
        %v1329 = vxor.u32 %v1265, 2147483648
        %v1330 = vxor.u32 %v1266, 2147483648
        %v1331 = vxor.u32 %v1267, 2147483648
        %v1332 = vxor.u32 %v1268, 2147483648
        %v1333 = vxor.u32 %v1269, 2147483648
        %v1334 = vxor.u32 %v1270, 2147483648
        %v1335 = vxor.u32 %v1271, 2147483648
        %v1336 = vxor.u32 %v1272, 2147483648
        %v1337 = vxor.u32 %v1273, 2147483648
        %v1338 = vxor.u32 %v1274, 2147483648
        %v1339 = vxor.u32 %v1275, 2147483648
        %v1340 = vxor.u32 %v1276, 2147483648
        %v1341 = vxor.u32 %v1277, 2147483648
        %v1342 = vxor.u32 %v1278, 2147483648
        %v1343 = vxor.u32 %v1279, 2147483648
        %v1344 = vxor.u32 %v1280, 2147483648
        %v1345 = vxor.u32 %v1281, 2147483648
        %v1346 = vxor.u32 %v1282, 2147483648
        %v1347 = vxor.u32 %v1283, 2147483648
        %v1348 = vxor.u32 %v1284, 2147483648
        %v1349 = vxor.u32 %v1285, 2147483648
        %v1350 = vxor.u32 %v1286, 2147483648
        %v1351 = vxor.u32 %v1287, 2147483648
        %v1352 = vxor.u32 %v1288, 2147483648
        %v1353 = vxor.u32 %v1289, 2147483648
        %v1354 = vxor.u32 %v1290, 2147483648
        %v1355 = vxor.u32 %v1291, 2147483648
        %v1356 = vxor.u32 %v1292, 2147483648
        %v1357 = vxor.u32 %v1293, 2147483648
        %v1358 = vxor.u32 %v1294, 2147483648
        %v1359 = vxor.u32 %v1295, 2147483648
        %v1360 = vxor.u32 %v1296, 2147483648
        %v1361 = vxor.u32 %v1297, 2147483648
        %v1362 = vxor.u32 %v1298, 2147483648
        %v1363 = vxor.u32 %v1299, 2147483648
        %v1364 = vxor.u32 %v1300, 2147483648
        %v1365 = vxor.u32 %v1301, 2147483648
        %v1366 = vxor.u32 %v1302, 2147483648
        %v1367 = vxor.u32 %v1303, 2147483648
        %v1368 = vxor.u32 %v1304, 2147483648
        %v1369 = vxor.u32 %v1305, 2147483648
        %v1370 = vxor.u32 %v1306, 2147483648
        %v1371 = vmul.f32 %v1307, 1.442695
        %v1372 = vpow.pop %v1371
        %v1373 = vmul.f32 %v1308, 1.442695
        %v1374 = vpow.pop %v1373
        %v1375 = vmul.f32 %v1309, 1.442695
        %v1376 = vpow.pop %v1375
        %v1377 = vmul.f32 %v1310, 1.442695
        %v1378 = vpow.pop %v1377
        %v1379 = vmul.f32 %v1311, 1.442695
        %v1380 = vpow.pop %v1379
        %v1381 = vmul.f32 %v1312, 1.442695
        %v1382 = vpow.pop %v1381
        %v1383 = vmul.f32 %v1313, 1.442695
        %v1384 = vpow.pop %v1383
        %v1385 = vmul.f32 %v1314, 1.442695
        %v1386 = vpow.pop %v1385
        %v1387 = vmul.f32 %v1315, 1.442695
        %v1388 = vpow.pop %v1387
        %v1389 = vmul.f32 %v1316, 1.442695
        %v1390 = vpow.pop %v1389
        %v1391 = vmul.f32 %v1317, 1.442695
        %v1392 = vpow.pop %v1391
        %v1393 = vmul.f32 %v1318, 1.442695
        %v1394 = vpow.pop %v1393
        %v1395 = vmul.f32 %v1319, 1.442695
        %v1396 = vpow.pop %v1395
        %v1397 = vmul.f32 %v1320, 1.442695
        %v1398 = vpow.pop %v1397
        %v1399 = vmul.f32 %v1321, 1.442695
        %v1400 = vpow.pop %v1399
        %v1401 = vmul.f32 %v1322, 1.442695
        %v1402 = vpow.pop %v1401
        %v1403 = vmul.f32 %v1323, 1.442695
        %v1404 = vpow.pop %v1403
        %v1405 = vmul.f32 %v1324, 1.442695
        %v1406 = vpow.pop %v1405
        %v1407 = vmul.f32 %v1325, 1.442695
        %v1408 = vpow.pop %v1407
        %v1409 = vmul.f32 %v1326, 1.442695
        %v1410 = vpow.pop %v1409
        %v1411 = vmul.f32 %v1327, 1.442695
        %v1412 = vpow.pop %v1411
        %v1413 = vmul.f32 %v1328, 1.442695
        %v1414 = vpow.pop %v1413
        %v1415 = vmul.f32 %v1329, 1.442695
        %v1416 = vpow.pop %v1415
        %v1417 = vmul.f32 %v1330, 1.442695
        %v1418 = vpow.pop %v1417
        %v1419 = vmul.f32 %v1331, 1.442695
        %v1420 = vpow.pop %v1419
        %v1421 = vmul.f32 %v1332, 1.442695
        %v1422 = vpow.pop %v1421
        %v1423 = vmul.f32 %v1333, 1.442695
        %v1424 = vpow.pop %v1423
        %v1425 = vmul.f32 %v1334, 1.442695
        %v1426 = vpow.pop %v1425
        %v1427 = vmul.f32 %v1335, 1.442695
        %v1428 = vpow.pop %v1427
        %v1429 = vmul.f32 %v1336, 1.442695
        %v1430 = vpow.pop %v1429
        %v1431 = vmul.f32 %v1337, 1.442695
        %v1432 = vpow.pop %v1431
        %v1433 = vmul.f32 %v1338, 1.442695
        %v1434 = vpow.pop %v1433
        %v1435 = vmul.f32 %v1339, 1.442695
        %v1436 = vpow.pop %v1435
        %v1437 = vmul.f32 %v1340, 1.442695
        %v1438 = vpow.pop %v1437
        %v1439 = vmul.f32 %v1341, 1.442695
        %v1440 = vpow.pop %v1439
        %v1441 = vmul.f32 %v1342, 1.442695
        %v1442 = vpow.pop %v1441
        %v1443 = vmul.f32 %v1343, 1.442695
        %v1444 = vpow.pop %v1443
        %v1445 = vmul.f32 %v1344, 1.442695
        %v1446 = vpow.pop %v1445
        %v1447 = vmul.f32 %v1345, 1.442695
        %v1448 = vpow.pop %v1447
        %v1449 = vmul.f32 %v1346, 1.442695
        %v1450 = vpow.pop %v1449
        %v1451 = vmul.f32 %v1347, 1.442695
        %v1452 = vpow.pop %v1451
        %v1453 = vmul.f32 %v1348, 1.442695
        %v1454 = vpow.pop %v1453
        %v1455 = vmul.f32 %v1349, 1.442695
        %v1456 = vpow.pop %v1455
        %v1457 = vmul.f32 %v1350, 1.442695
        %v1458 = vpow.pop %v1457
        %v1459 = vmul.f32 %v1351, 1.442695
        %v1460 = vpow.pop %v1459
        %v1461 = vmul.f32 %v1352, 1.442695
        %v1462 = vpow.pop %v1461
        %v1463 = vmul.f32 %v1353, 1.442695
        %v1464 = vpow.pop %v1463
        %v1465 = vmul.f32 %v1354, 1.442695
        %v1466 = vpow.pop %v1465
        %v1467 = vmul.f32 %v1355, 1.442695
        %v1468 = vpow.pop %v1467
        %v1469 = vmul.f32 %v1356, 1.442695
        %v1470 = vpow.pop %v1469
        %v1471 = vmul.f32 %v1357, 1.442695
        %v1472 = vpow.pop %v1471
        %v1473 = vmul.f32 %v1358, 1.442695
        %v1474 = vpow.pop %v1473
        %v1475 = vmul.f32 %v1359, 1.442695
        %v1476 = vpow.pop %v1475
        %v1477 = vmul.f32 %v1360, 1.442695
        %v1478 = vpow.pop %v1477
        %v1479 = vmul.f32 %v1361, 1.442695
        %v1480 = vpow.pop %v1479
        %v1481 = vmul.f32 %v1362, 1.442695
        %v1482 = vpow.pop %v1481
        %v1483 = vmul.f32 %v1363, 1.442695
        %v1484 = vpow.pop %v1483
        %v1485 = vmul.f32 %v1364, 1.442695
        %v1486 = vpow.pop %v1485
        %v1487 = vmul.f32 %v1365, 1.442695
        %v1488 = vpow.pop %v1487
        %v1489 = vmul.f32 %v1366, 1.442695
        %v1490 = vpow.pop %v1489
        %v1491 = vmul.f32 %v1367, 1.442695
        %v1492 = vpow.pop %v1491
        %v1493 = vmul.f32 %v1368, 1.442695
        %v1494 = vpow.pop %v1493
        %v1495 = vmul.f32 %v1369, 1.442695
        %v1496 = vpow.pop %v1495
        %v1497 = vmul.f32 %v1370, 1.442695
        %v1498 = vpow.pop %v1497
        %v1499 = vadd.f32 %v1372, 1.0
        %v1500 = vadd.f32 %v1374, 1.0
        %v1501 = vadd.f32 %v1376, 1.0
        %v1502 = vadd.f32 %v1378, 1.0
        %v1503 = vadd.f32 %v1380, 1.0
        %v1504 = vadd.f32 %v1382, 1.0
        %v1505 = vadd.f32 %v1384, 1.0
        %v1506 = vadd.f32 %v1386, 1.0
        %v1507 = vadd.f32 %v1388, 1.0
        %v1508 = vadd.f32 %v1390, 1.0
        %v1509 = vadd.f32 %v1392, 1.0
        %v1510 = vadd.f32 %v1394, 1.0
        %v1511 = vadd.f32 %v1396, 1.0
        %v1512 = vadd.f32 %v1398, 1.0
        %v1513 = vadd.f32 %v1400, 1.0
        %v1514 = vadd.f32 %v1402, 1.0
        %v1515 = vadd.f32 %v1404, 1.0
        %v1516 = vadd.f32 %v1406, 1.0
        %v1517 = vadd.f32 %v1408, 1.0
        %v1518 = vadd.f32 %v1410, 1.0
        %v1519 = vadd.f32 %v1412, 1.0
        %v1520 = vadd.f32 %v1414, 1.0
        %v1521 = vadd.f32 %v1416, 1.0
        %v1522 = vadd.f32 %v1418, 1.0
        %v1523 = vadd.f32 %v1420, 1.0
        %v1524 = vadd.f32 %v1422, 1.0
        %v1525 = vadd.f32 %v1424, 1.0
        %v1526 = vadd.f32 %v1426, 1.0
        %v1527 = vadd.f32 %v1428, 1.0
        %v1528 = vadd.f32 %v1430, 1.0
        %v1529 = vadd.f32 %v1432, 1.0
        %v1530 = vadd.f32 %v1434, 1.0
        %v1531 = vadd.f32 %v1436, 1.0
        %v1532 = vadd.f32 %v1438, 1.0
        %v1533 = vadd.f32 %v1440, 1.0
        %v1534 = vadd.f32 %v1442, 1.0
        %v1535 = vadd.f32 %v1444, 1.0
        %v1536 = vadd.f32 %v1446, 1.0
        %v1537 = vadd.f32 %v1448, 1.0
        %v1538 = vadd.f32 %v1450, 1.0
        %v1539 = vadd.f32 %v1452, 1.0
        %v1540 = vadd.f32 %v1454, 1.0
        %v1541 = vadd.f32 %v1456, 1.0
        %v1542 = vadd.f32 %v1458, 1.0
        %v1543 = vadd.f32 %v1460, 1.0
        %v1544 = vadd.f32 %v1462, 1.0
        %v1545 = vadd.f32 %v1464, 1.0
        %v1546 = vadd.f32 %v1466, 1.0
        %v1547 = vadd.f32 %v1468, 1.0
        %v1548 = vadd.f32 %v1470, 1.0
        %v1549 = vadd.f32 %v1472, 1.0
        %v1550 = vadd.f32 %v1474, 1.0
        %v1551 = vadd.f32 %v1476, 1.0
        %v1552 = vadd.f32 %v1478, 1.0
        %v1553 = vadd.f32 %v1480, 1.0
        %v1554 = vadd.f32 %v1482, 1.0
        %v1555 = vadd.f32 %v1484, 1.0
        %v1556 = vadd.f32 %v1486, 1.0
        %v1557 = vadd.f32 %v1488, 1.0
        %v1558 = vadd.f32 %v1490, 1.0
        %v1559 = vadd.f32 %v1492, 1.0
        %v1560 = vadd.f32 %v1494, 1.0
        %v1561 = vadd.f32 %v1496, 1.0
        %v1562 = vadd.f32 %v1498, 1.0
        %v1563 = vrcp.pop %v1499
        %v1564 = vmul.f32 %v1499, %v1563
        %v1565 = vsub.f32 1.0, %v1564
        %v1566 = vmul.f32 %v1563, %v1565
        %v1567 = vadd.f32 %v1563, %v1566
        %vm1568 = vweird.f32 %v1499
        %vm1569 = vweird.f32 %v1563
        %vm1570 = vmor %vm1568, %vm1569
        %v1571 = vsel %vm1570, %v1563, %v1567
        %v1572 = vand.u32 2147483647, %v1499
        %vm1573 = vcmp.eq.f32.partialorder %v1572, 8.507059e+37
        %v1574 = vand.u32 %v1499, 2147483648
        %v1575 = vor.u32 1.1754944e-38, %v1574
        %v1576 = vsel %vm1573, %v1575, %v1571
        %v1577 = vmul.f32 1.0, %v1576
        %v1578 = vrcp.pop %v1500
        %v1579 = vmul.f32 %v1500, %v1578
        %v1580 = vsub.f32 1.0, %v1579
        %v1581 = vmul.f32 %v1578, %v1580
        %v1582 = vadd.f32 %v1578, %v1581
        %vm1583 = vweird.f32 %v1500
        %vm1584 = vweird.f32 %v1578
        %vm1585 = vmor %vm1583, %vm1584
        %v1586 = vsel %vm1585, %v1578, %v1582
        %v1587 = vand.u32 2147483647, %v1500
        %vm1588 = vcmp.eq.f32.partialorder %v1587, 8.507059e+37
        %v1589 = vand.u32 %v1500, 2147483648
        %v1590 = vor.u32 1.1754944e-38, %v1589
        %v1591 = vsel %vm1588, %v1590, %v1586
        %v1592 = vmul.f32 1.0, %v1591
        %v1593 = vrcp.pop %v1501
        %v1594 = vmul.f32 %v1501, %v1593
        %v1595 = vsub.f32 1.0, %v1594
        %v1596 = vmul.f32 %v1593, %v1595
        %v1597 = vadd.f32 %v1593, %v1596
        %vm1598 = vweird.f32 %v1501
        %vm1599 = vweird.f32 %v1593
        %vm1600 = vmor %vm1598, %vm1599
        %v1601 = vsel %vm1600, %v1593, %v1597
        %v1602 = vand.u32 2147483647, %v1501
        %vm1603 = vcmp.eq.f32.partialorder %v1602, 8.507059e+37
        %v1604 = vand.u32 %v1501, 2147483648
        %v1605 = vor.u32 1.1754944e-38, %v1604
        %v1606 = vsel %vm1603, %v1605, %v1601
        %v1607 = vmul.f32 1.0, %v1606
        %v1608 = vrcp.pop %v1502
        %v1609 = vmul.f32 %v1502, %v1608
        %v1610 = vsub.f32 1.0, %v1609
        %v1611 = vmul.f32 %v1608, %v1610
        %v1612 = vadd.f32 %v1608, %v1611
        %vm1613 = vweird.f32 %v1502
        %vm1614 = vweird.f32 %v1608
        %vm1615 = vmor %vm1613, %vm1614
        %v1616 = vsel %vm1615, %v1608, %v1612
        %v1617 = vand.u32 2147483647, %v1502
        %vm1618 = vcmp.eq.f32.partialorder %v1617, 8.507059e+37
        %v1619 = vand.u32 %v1502, 2147483648
        %v1620 = vor.u32 1.1754944e-38, %v1619
        %v1621 = vsel %vm1618, %v1620, %v1616
        %v1622 = vmul.f32 1.0, %v1621
        %v1623 = vrcp.pop %v1503
        %v1624 = vmul.f32 %v1503, %v1623
        %v1625 = vsub.f32 1.0, %v1624
        %v1626 = vmul.f32 %v1623, %v1625
        %v1627 = vadd.f32 %v1623, %v1626
        %vm1628 = vweird.f32 %v1503
        %vm1629 = vweird.f32 %v1623
        %vm1630 = vmor %vm1628, %vm1629
        %v1631 = vsel %vm1630, %v1623, %v1627
        %v1632 = vand.u32 2147483647, %v1503
        %vm1633 = vcmp.eq.f32.partialorder %v1632, 8.507059e+37
        %v1634 = vand.u32 %v1503, 2147483648
        %v1635 = vor.u32 1.1754944e-38, %v1634
        %v1636 = vsel %vm1633, %v1635, %v1631
        %v1637 = vmul.f32 1.0, %v1636
        %v1638 = vrcp.pop %v1504
        %v1639 = vmul.f32 %v1504, %v1638
        %v1640 = vsub.f32 1.0, %v1639
        %v1641 = vmul.f32 %v1638, %v1640
        %v1642 = vadd.f32 %v1638, %v1641
        %vm1643 = vweird.f32 %v1504
        %vm1644 = vweird.f32 %v1638
        %vm1645 = vmor %vm1643, %vm1644
        %v1646 = vsel %vm1645, %v1638, %v1642
        %v1647 = vand.u32 2147483647, %v1504
        %vm1648 = vcmp.eq.f32.partialorder %v1647, 8.507059e+37
        %v1649 = vand.u32 %v1504, 2147483648
        %v1650 = vor.u32 1.1754944e-38, %v1649
        %v1651 = vsel %vm1648, %v1650, %v1646
        %v1652 = vmul.f32 1.0, %v1651
        %v1653 = vrcp.pop %v1505
        %v1654 = vmul.f32 %v1505, %v1653
        %v1655 = vsub.f32 1.0, %v1654
        %v1656 = vmul.f32 %v1653, %v1655
        %v1657 = vadd.f32 %v1653, %v1656
        %vm1658 = vweird.f32 %v1505
        %vm1659 = vweird.f32 %v1653
        %vm1660 = vmor %vm1658, %vm1659
        %v1661 = vsel %vm1660, %v1653, %v1657
        %v1662 = vand.u32 2147483647, %v1505
        %vm1663 = vcmp.eq.f32.partialorder %v1662, 8.507059e+37
        %v1664 = vand.u32 %v1505, 2147483648
        %v1665 = vor.u32 1.1754944e-38, %v1664
        %v1666 = vsel %vm1663, %v1665, %v1661
        %v1667 = vmul.f32 1.0, %v1666
        %v1668 = vrcp.pop %v1506
        %v1669 = vmul.f32 %v1506, %v1668
        %v1670 = vsub.f32 1.0, %v1669
        %v1671 = vmul.f32 %v1668, %v1670
        %v1672 = vadd.f32 %v1668, %v1671
        %vm1673 = vweird.f32 %v1506
        %vm1674 = vweird.f32 %v1668
        %vm1675 = vmor %vm1673, %vm1674
        %v1676 = vsel %vm1675, %v1668, %v1672
        %v1677 = vand.u32 2147483647, %v1506
        %vm1678 = vcmp.eq.f32.partialorder %v1677, 8.507059e+37
        %v1679 = vand.u32 %v1506, 2147483648
        %v1680 = vor.u32 1.1754944e-38, %v1679
        %v1681 = vsel %vm1678, %v1680, %v1676
        %v1682 = vmul.f32 1.0, %v1681
        %v1683 = vrcp.pop %v1507
        %v1684 = vmul.f32 %v1507, %v1683
        %v1685 = vsub.f32 1.0, %v1684
        %v1686 = vmul.f32 %v1683, %v1685
        %v1687 = vadd.f32 %v1683, %v1686
        %vm1688 = vweird.f32 %v1507
        %vm1689 = vweird.f32 %v1683
        %vm1690 = vmor %vm1688, %vm1689
        %v1691 = vsel %vm1690, %v1683, %v1687
        %v1692 = vand.u32 2147483647, %v1507
        %vm1693 = vcmp.eq.f32.partialorder %v1692, 8.507059e+37
        %v1694 = vand.u32 %v1507, 2147483648
        %v1695 = vor.u32 1.1754944e-38, %v1694
        %v1696 = vsel %vm1693, %v1695, %v1691
        %v1697 = vmul.f32 1.0, %v1696
        %v1698 = vrcp.pop %v1508
        %v1699 = vmul.f32 %v1508, %v1698
        %v1700 = vsub.f32 1.0, %v1699
        %v1701 = vmul.f32 %v1698, %v1700
        %v1702 = vadd.f32 %v1698, %v1701
        %vm1703 = vweird.f32 %v1508
        %vm1704 = vweird.f32 %v1698
        %vm1705 = vmor %vm1703, %vm1704
        %v1706 = vsel %vm1705, %v1698, %v1702
        %v1707 = vand.u32 2147483647, %v1508
        %vm1708 = vcmp.eq.f32.partialorder %v1707, 8.507059e+37
        %v1709 = vand.u32 %v1508, 2147483648
        %v1710 = vor.u32 1.1754944e-38, %v1709
        %v1711 = vsel %vm1708, %v1710, %v1706
        %v1712 = vmul.f32 1.0, %v1711
        %v1713 = vrcp.pop %v1509
        %v1714 = vmul.f32 %v1509, %v1713
        %v1715 = vsub.f32 1.0, %v1714
        %v1716 = vmul.f32 %v1713, %v1715
        %v1717 = vadd.f32 %v1713, %v1716
        %vm1718 = vweird.f32 %v1509
        %vm1719 = vweird.f32 %v1713
        %vm1720 = vmor %vm1718, %vm1719
        %v1721 = vsel %vm1720, %v1713, %v1717
        %v1722 = vand.u32 2147483647, %v1509
        %vm1723 = vcmp.eq.f32.partialorder %v1722, 8.507059e+37
        %v1724 = vand.u32 %v1509, 2147483648
        %v1725 = vor.u32 1.1754944e-38, %v1724
        %v1726 = vsel %vm1723, %v1725, %v1721
        %v1727 = vmul.f32 1.0, %v1726
        %v1728 = vrcp.pop %v1510
        %v1729 = vmul.f32 %v1510, %v1728
        %v1730 = vsub.f32 1.0, %v1729
        %v1731 = vmul.f32 %v1728, %v1730
        %v1732 = vadd.f32 %v1728, %v1731
        %vm1733 = vweird.f32 %v1510
        %vm1734 = vweird.f32 %v1728
        %vm1735 = vmor %vm1733, %vm1734
        %v1736 = vsel %vm1735, %v1728, %v1732
        %v1737 = vand.u32 2147483647, %v1510
        %vm1738 = vcmp.eq.f32.partialorder %v1737, 8.507059e+37
        %v1739 = vand.u32 %v1510, 2147483648
        %v1740 = vor.u32 1.1754944e-38, %v1739
        %v1741 = vsel %vm1738, %v1740, %v1736
        %v1742 = vmul.f32 1.0, %v1741
        %v1743 = vrcp.pop %v1511
        %v1744 = vmul.f32 %v1511, %v1743
        %v1745 = vsub.f32 1.0, %v1744
        %v1746 = vmul.f32 %v1743, %v1745
        %v1747 = vadd.f32 %v1743, %v1746
        %vm1748 = vweird.f32 %v1511
        %vm1749 = vweird.f32 %v1743
        %vm1750 = vmor %vm1748, %vm1749
        %v1751 = vsel %vm1750, %v1743, %v1747
        %v1752 = vand.u32 2147483647, %v1511
        %vm1753 = vcmp.eq.f32.partialorder %v1752, 8.507059e+37
        %v1754 = vand.u32 %v1511, 2147483648
        %v1755 = vor.u32 1.1754944e-38, %v1754
        %v1756 = vsel %vm1753, %v1755, %v1751
        %v1757 = vmul.f32 1.0, %v1756
        %v1758 = vrcp.pop %v1512
        %v1759 = vmul.f32 %v1512, %v1758
        %v1760 = vsub.f32 1.0, %v1759
        %v1761 = vmul.f32 %v1758, %v1760
        %v1762 = vadd.f32 %v1758, %v1761
        %vm1763 = vweird.f32 %v1512
        %vm1764 = vweird.f32 %v1758
        %vm1765 = vmor %vm1763, %vm1764
        %v1766 = vsel %vm1765, %v1758, %v1762
        %v1767 = vand.u32 2147483647, %v1512
        %vm1768 = vcmp.eq.f32.partialorder %v1767, 8.507059e+37
        %v1769 = vand.u32 %v1512, 2147483648
        %v1770 = vor.u32 1.1754944e-38, %v1769
        %v1771 = vsel %vm1768, %v1770, %v1766
        %v1772 = vmul.f32 1.0, %v1771
        %v1773 = vrcp.pop %v1513
        %v1774 = vmul.f32 %v1513, %v1773
        %v1775 = vsub.f32 1.0, %v1774
        %v1776 = vmul.f32 %v1773, %v1775
        %v1777 = vadd.f32 %v1773, %v1776
        %vm1778 = vweird.f32 %v1513
        %vm1779 = vweird.f32 %v1773
        %vm1780 = vmor %vm1778, %vm1779
        %v1781 = vsel %vm1780, %v1773, %v1777
        %v1782 = vand.u32 2147483647, %v1513
        %vm1783 = vcmp.eq.f32.partialorder %v1782, 8.507059e+37
        %v1784 = vand.u32 %v1513, 2147483648
        %v1785 = vor.u32 1.1754944e-38, %v1784
        %v1786 = vsel %vm1783, %v1785, %v1781
        %v1787 = vmul.f32 1.0, %v1786
        %v1788 = vrcp.pop %v1514
        %v1789 = vmul.f32 %v1514, %v1788
        %v1790 = vsub.f32 1.0, %v1789
        %v1791 = vmul.f32 %v1788, %v1790
        %v1792 = vadd.f32 %v1788, %v1791
        %vm1793 = vweird.f32 %v1514
        %vm1794 = vweird.f32 %v1788
        %vm1795 = vmor %vm1793, %vm1794
        %v1796 = vsel %vm1795, %v1788, %v1792
        %v1797 = vand.u32 2147483647, %v1514
        %vm1798 = vcmp.eq.f32.partialorder %v1797, 8.507059e+37
        %v1799 = vand.u32 %v1514, 2147483648
        %v1800 = vor.u32 1.1754944e-38, %v1799
        %v1801 = vsel %vm1798, %v1800, %v1796
        %v1802 = vmul.f32 1.0, %v1801
        %v1803 = vrcp.pop %v1515
        %v1804 = vmul.f32 %v1515, %v1803
        %v1805 = vsub.f32 1.0, %v1804
        %v1806 = vmul.f32 %v1803, %v1805
        %v1807 = vadd.f32 %v1803, %v1806
        %vm1808 = vweird.f32 %v1515
        %vm1809 = vweird.f32 %v1803
        %vm1810 = vmor %vm1808, %vm1809
        %v1811 = vsel %vm1810, %v1803, %v1807
        %v1812 = vand.u32 2147483647, %v1515
        %vm1813 = vcmp.eq.f32.partialorder %v1812, 8.507059e+37
        %v1814 = vand.u32 %v1515, 2147483648
        %v1815 = vor.u32 1.1754944e-38, %v1814
        %v1816 = vsel %vm1813, %v1815, %v1811
        %v1817 = vmul.f32 1.0, %v1816
        %v1818 = vrcp.pop %v1516
        %v1819 = vmul.f32 %v1516, %v1818
        %v1820 = vsub.f32 1.0, %v1819
        %v1821 = vmul.f32 %v1818, %v1820
        %v1822 = vadd.f32 %v1818, %v1821
        %vm1823 = vweird.f32 %v1516
        %vm1824 = vweird.f32 %v1818
        %vm1825 = vmor %vm1823, %vm1824
        %v1826 = vsel %vm1825, %v1818, %v1822
        %v1827 = vand.u32 2147483647, %v1516
        %vm1828 = vcmp.eq.f32.partialorder %v1827, 8.507059e+37
        %v1829 = vand.u32 %v1516, 2147483648
        %v1830 = vor.u32 1.1754944e-38, %v1829
        %v1831 = vsel %vm1828, %v1830, %v1826
        %v1832 = vmul.f32 1.0, %v1831
        %v1833 = vrcp.pop %v1517
        %v1834 = vmul.f32 %v1517, %v1833
        %v1835 = vsub.f32 1.0, %v1834
        %v1836 = vmul.f32 %v1833, %v1835
        %v1837 = vadd.f32 %v1833, %v1836
        %vm1838 = vweird.f32 %v1517
        %vm1839 = vweird.f32 %v1833
        %vm1840 = vmor %vm1838, %vm1839
        %v1841 = vsel %vm1840, %v1833, %v1837
        %v1842 = vand.u32 2147483647, %v1517
        %vm1843 = vcmp.eq.f32.partialorder %v1842, 8.507059e+37
        %v1844 = vand.u32 %v1517, 2147483648
        %v1845 = vor.u32 1.1754944e-38, %v1844
        %v1846 = vsel %vm1843, %v1845, %v1841
        %v1847 = vmul.f32 1.0, %v1846
        %v1848 = vrcp.pop %v1518
        %v1849 = vmul.f32 %v1518, %v1848
        %v1850 = vsub.f32 1.0, %v1849
        %v1851 = vmul.f32 %v1848, %v1850
        %v1852 = vadd.f32 %v1848, %v1851
        %vm1853 = vweird.f32 %v1518
        %vm1854 = vweird.f32 %v1848
        %vm1855 = vmor %vm1853, %vm1854
        %v1856 = vsel %vm1855, %v1848, %v1852
        %v1857 = vand.u32 2147483647, %v1518
        %vm1858 = vcmp.eq.f32.partialorder %v1857, 8.507059e+37
        %v1859 = vand.u32 %v1518, 2147483648
        %v1860 = vor.u32 1.1754944e-38, %v1859
        %v1861 = vsel %vm1858, %v1860, %v1856
        %v1862 = vmul.f32 1.0, %v1861
        %v1863 = vrcp.pop %v1519
        %v1864 = vmul.f32 %v1519, %v1863
        %v1865 = vsub.f32 1.0, %v1864
        %v1866 = vmul.f32 %v1863, %v1865
        %v1867 = vadd.f32 %v1863, %v1866
        %vm1868 = vweird.f32 %v1519
        %vm1869 = vweird.f32 %v1863
        %vm1870 = vmor %vm1868, %vm1869
        %v1871 = vsel %vm1870, %v1863, %v1867
        %v1872 = vand.u32 2147483647, %v1519
        %vm1873 = vcmp.eq.f32.partialorder %v1872, 8.507059e+37
        %v1874 = vand.u32 %v1519, 2147483648
        %v1875 = vor.u32 1.1754944e-38, %v1874
        %v1876 = vsel %vm1873, %v1875, %v1871
        %v1877 = vmul.f32 1.0, %v1876
        %v1878 = vrcp.pop %v1520
        %v1879 = vmul.f32 %v1520, %v1878
        %v1880 = vsub.f32 1.0, %v1879
        %v1881 = vmul.f32 %v1878, %v1880
        %v1882 = vadd.f32 %v1878, %v1881
        %vm1883 = vweird.f32 %v1520
        %vm1884 = vweird.f32 %v1878
        %vm1885 = vmor %vm1883, %vm1884
        %v1886 = vsel %vm1885, %v1878, %v1882
        %v1887 = vand.u32 2147483647, %v1520
        %vm1888 = vcmp.eq.f32.partialorder %v1887, 8.507059e+37
        %v1889 = vand.u32 %v1520, 2147483648
        %v1890 = vor.u32 1.1754944e-38, %v1889
        %v1891 = vsel %vm1888, %v1890, %v1886
        %v1892 = vmul.f32 1.0, %v1891
        %v1893 = vrcp.pop %v1521
        %v1894 = vmul.f32 %v1521, %v1893
        %v1895 = vsub.f32 1.0, %v1894
        %v1896 = vmul.f32 %v1893, %v1895
        %v1897 = vadd.f32 %v1893, %v1896
        %vm1898 = vweird.f32 %v1521
        %vm1899 = vweird.f32 %v1893
        %vm1900 = vmor %vm1898, %vm1899
        %v1901 = vsel %vm1900, %v1893, %v1897
        %v1902 = vand.u32 2147483647, %v1521
        %vm1903 = vcmp.eq.f32.partialorder %v1902, 8.507059e+37
        %v1904 = vand.u32 %v1521, 2147483648
        %v1905 = vor.u32 1.1754944e-38, %v1904
        %v1906 = vsel %vm1903, %v1905, %v1901
        %v1907 = vmul.f32 1.0, %v1906
        %v1908 = vrcp.pop %v1522
        %v1909 = vmul.f32 %v1522, %v1908
        %v1910 = vsub.f32 1.0, %v1909
        %v1911 = vmul.f32 %v1908, %v1910
        %v1912 = vadd.f32 %v1908, %v1911
        %vm1913 = vweird.f32 %v1522
        %vm1914 = vweird.f32 %v1908
        %vm1915 = vmor %vm1913, %vm1914
        %v1916 = vsel %vm1915, %v1908, %v1912
        %v1917 = vand.u32 2147483647, %v1522
        %vm1918 = vcmp.eq.f32.partialorder %v1917, 8.507059e+37
        %v1919 = vand.u32 %v1522, 2147483648
        %v1920 = vor.u32 1.1754944e-38, %v1919
        %v1921 = vsel %vm1918, %v1920, %v1916
        %v1922 = vmul.f32 1.0, %v1921
        %v1923 = vrcp.pop %v1523
        %v1924 = vmul.f32 %v1523, %v1923
        %v1925 = vsub.f32 1.0, %v1924
        %v1926 = vmul.f32 %v1923, %v1925
        %v1927 = vadd.f32 %v1923, %v1926
        %vm1928 = vweird.f32 %v1523
        %vm1929 = vweird.f32 %v1923
        %vm1930 = vmor %vm1928, %vm1929
        %v1931 = vsel %vm1930, %v1923, %v1927
        %v1932 = vand.u32 2147483647, %v1523
        %vm1933 = vcmp.eq.f32.partialorder %v1932, 8.507059e+37
        %v1934 = vand.u32 %v1523, 2147483648
        %v1935 = vor.u32 1.1754944e-38, %v1934
        %v1936 = vsel %vm1933, %v1935, %v1931
        %v1937 = vmul.f32 1.0, %v1936
        %v1938 = vrcp.pop %v1524
        %v1939 = vmul.f32 %v1524, %v1938
        %v1940 = vsub.f32 1.0, %v1939
        %v1941 = vmul.f32 %v1938, %v1940
        %v1942 = vadd.f32 %v1938, %v1941
        %vm1943 = vweird.f32 %v1524
        %vm1944 = vweird.f32 %v1938
        %vm1945 = vmor %vm1943, %vm1944
        %v1946 = vsel %vm1945, %v1938, %v1942
        %v1947 = vand.u32 2147483647, %v1524
        %vm1948 = vcmp.eq.f32.partialorder %v1947, 8.507059e+37
        %v1949 = vand.u32 %v1524, 2147483648
        %v1950 = vor.u32 1.1754944e-38, %v1949
        %v1951 = vsel %vm1948, %v1950, %v1946
        %v1952 = vmul.f32 1.0, %v1951
        %v1953 = vrcp.pop %v1525
        %v1954 = vmul.f32 %v1525, %v1953
        %v1955 = vsub.f32 1.0, %v1954
        %v1956 = vmul.f32 %v1953, %v1955
        %v1957 = vadd.f32 %v1953, %v1956
        %vm1958 = vweird.f32 %v1525
        %vm1959 = vweird.f32 %v1953
        %vm1960 = vmor %vm1958, %vm1959
        %v1961 = vsel %vm1960, %v1953, %v1957
        %v1962 = vand.u32 2147483647, %v1525
        %vm1963 = vcmp.eq.f32.partialorder %v1962, 8.507059e+37
        %v1964 = vand.u32 %v1525, 2147483648
        %v1965 = vor.u32 1.1754944e-38, %v1964
        %v1966 = vsel %vm1963, %v1965, %v1961
        %v1967 = vmul.f32 1.0, %v1966
        %v1968 = vrcp.pop %v1526
        %v1969 = vmul.f32 %v1526, %v1968
        %v1970 = vsub.f32 1.0, %v1969
        %v1971 = vmul.f32 %v1968, %v1970
        %v1972 = vadd.f32 %v1968, %v1971
        %vm1973 = vweird.f32 %v1526
        %vm1974 = vweird.f32 %v1968
        %vm1975 = vmor %vm1973, %vm1974
        %v1976 = vsel %vm1975, %v1968, %v1972
        %v1977 = vand.u32 2147483647, %v1526
        %vm1978 = vcmp.eq.f32.partialorder %v1977, 8.507059e+37
        %v1979 = vand.u32 %v1526, 2147483648
        %v1980 = vor.u32 1.1754944e-38, %v1979
        %v1981 = vsel %vm1978, %v1980, %v1976
        %v1982 = vmul.f32 1.0, %v1981
        %v1983 = vrcp.pop %v1527
        %v1984 = vmul.f32 %v1527, %v1983
        %v1985 = vsub.f32 1.0, %v1984
        %v1986 = vmul.f32 %v1983, %v1985
        %v1987 = vadd.f32 %v1983, %v1986
        %vm1988 = vweird.f32 %v1527
        %vm1989 = vweird.f32 %v1983
        %vm1990 = vmor %vm1988, %vm1989
        %v1991 = vsel %vm1990, %v1983, %v1987
        %v1992 = vand.u32 2147483647, %v1527
        %vm1993 = vcmp.eq.f32.partialorder %v1992, 8.507059e+37
        %v1994 = vand.u32 %v1527, 2147483648
        %v1995 = vor.u32 1.1754944e-38, %v1994
        %v1996 = vsel %vm1993, %v1995, %v1991
        %v1997 = vmul.f32 1.0, %v1996
        %v1998 = vrcp.pop %v1528
        %v1999 = vmul.f32 %v1528, %v1998
        %v2000 = vsub.f32 1.0, %v1999
        %v2001 = vmul.f32 %v1998, %v2000
        %v2002 = vadd.f32 %v1998, %v2001
        %vm2003 = vweird.f32 %v1528
        %vm2004 = vweird.f32 %v1998
        %vm2005 = vmor %vm2003, %vm2004
        %v2006 = vsel %vm2005, %v1998, %v2002
        %v2007 = vand.u32 2147483647, %v1528
        %vm2008 = vcmp.eq.f32.partialorder %v2007, 8.507059e+37
        %v2009 = vand.u32 %v1528, 2147483648
        %v2010 = vor.u32 1.1754944e-38, %v2009
        %v2011 = vsel %vm2008, %v2010, %v2006
        %v2012 = vmul.f32 1.0, %v2011
        %v2013 = vrcp.pop %v1529
        %v2014 = vmul.f32 %v1529, %v2013
        %v2015 = vsub.f32 1.0, %v2014
        %v2016 = vmul.f32 %v2013, %v2015
        %v2017 = vadd.f32 %v2013, %v2016
        %vm2018 = vweird.f32 %v1529
        %vm2019 = vweird.f32 %v2013
        %vm2020 = vmor %vm2018, %vm2019
        %v2021 = vsel %vm2020, %v2013, %v2017
        %v2022 = vand.u32 2147483647, %v1529
        %vm2023 = vcmp.eq.f32.partialorder %v2022, 8.507059e+37
        %v2024 = vand.u32 %v1529, 2147483648
        %v2025 = vor.u32 1.1754944e-38, %v2024
        %v2026 = vsel %vm2023, %v2025, %v2021
        %v2027 = vmul.f32 1.0, %v2026
        %v2028 = vrcp.pop %v1530
        %v2029 = vmul.f32 %v1530, %v2028
        %v2030 = vsub.f32 1.0, %v2029
        %v2031 = vmul.f32 %v2028, %v2030
        %v2032 = vadd.f32 %v2028, %v2031
        %vm2033 = vweird.f32 %v1530
        %vm2034 = vweird.f32 %v2028
        %vm2035 = vmor %vm2033, %vm2034
        %v2036 = vsel %vm2035, %v2028, %v2032
        %v2037 = vand.u32 2147483647, %v1530
        %vm2038 = vcmp.eq.f32.partialorder %v2037, 8.507059e+37
        %v2039 = vand.u32 %v1530, 2147483648
        %v2040 = vor.u32 1.1754944e-38, %v2039
        %v2041 = vsel %vm2038, %v2040, %v2036
        %v2042 = vmul.f32 1.0, %v2041
        %v2043 = vrcp.pop %v1531
        %v2044 = vmul.f32 %v1531, %v2043
        %v2045 = vsub.f32 1.0, %v2044
        %v2046 = vmul.f32 %v2043, %v2045
        %v2047 = vadd.f32 %v2043, %v2046
        %vm2048 = vweird.f32 %v1531
        %vm2049 = vweird.f32 %v2043
        %vm2050 = vmor %vm2048, %vm2049
        %v2051 = vsel %vm2050, %v2043, %v2047
        %v2052 = vand.u32 2147483647, %v1531
        %vm2053 = vcmp.eq.f32.partialorder %v2052, 8.507059e+37
        %v2054 = vand.u32 %v1531, 2147483648
        %v2055 = vor.u32 1.1754944e-38, %v2054
        %v2056 = vsel %vm2053, %v2055, %v2051
        %v2057 = vmul.f32 1.0, %v2056
        %v2058 = vrcp.pop %v1532
        %v2059 = vmul.f32 %v1532, %v2058
        %v2060 = vsub.f32 1.0, %v2059
        %v2061 = vmul.f32 %v2058, %v2060
        %v2062 = vadd.f32 %v2058, %v2061
        %vm2063 = vweird.f32 %v1532
        %vm2064 = vweird.f32 %v2058
        %vm2065 = vmor %vm2063, %vm2064
        %v2066 = vsel %vm2065, %v2058, %v2062
        %v2067 = vand.u32 2147483647, %v1532
        %vm2068 = vcmp.eq.f32.partialorder %v2067, 8.507059e+37
        %v2069 = vand.u32 %v1532, 2147483648
        %v2070 = vor.u32 1.1754944e-38, %v2069
        %v2071 = vsel %vm2068, %v2070, %v2066
        %v2072 = vmul.f32 1.0, %v2071
        %v2073 = vrcp.pop %v1533
        %v2074 = vmul.f32 %v1533, %v2073
        %v2075 = vsub.f32 1.0, %v2074
        %v2076 = vmul.f32 %v2073, %v2075
        %v2077 = vadd.f32 %v2073, %v2076
        %vm2078 = vweird.f32 %v1533
        %vm2079 = vweird.f32 %v2073
        %vm2080 = vmor %vm2078, %vm2079
        %v2081 = vsel %vm2080, %v2073, %v2077
        %v2082 = vand.u32 2147483647, %v1533
        %vm2083 = vcmp.eq.f32.partialorder %v2082, 8.507059e+37
        %v2084 = vand.u32 %v1533, 2147483648
        %v2085 = vor.u32 1.1754944e-38, %v2084
        %v2086 = vsel %vm2083, %v2085, %v2081
        %v2087 = vmul.f32 1.0, %v2086
        %v2088 = vrcp.pop %v1534
        %v2089 = vmul.f32 %v1534, %v2088
        %v2090 = vsub.f32 1.0, %v2089
        %v2091 = vmul.f32 %v2088, %v2090
        %v2092 = vadd.f32 %v2088, %v2091
        %vm2093 = vweird.f32 %v1534
        %vm2094 = vweird.f32 %v2088
        %vm2095 = vmor %vm2093, %vm2094
        %v2096 = vsel %vm2095, %v2088, %v2092
        %v2097 = vand.u32 2147483647, %v1534
        %vm2098 = vcmp.eq.f32.partialorder %v2097, 8.507059e+37
        %v2099 = vand.u32 %v1534, 2147483648
        %v2100 = vor.u32 1.1754944e-38, %v2099
        %v2101 = vsel %vm2098, %v2100, %v2096
        %v2102 = vmul.f32 1.0, %v2101
        %v2103 = vrcp.pop %v1535
        %v2104 = vmul.f32 %v1535, %v2103
        %v2105 = vsub.f32 1.0, %v2104
        %v2106 = vmul.f32 %v2103, %v2105
        %v2107 = vadd.f32 %v2103, %v2106
        %vm2108 = vweird.f32 %v1535
        %vm2109 = vweird.f32 %v2103
        %vm2110 = vmor %vm2108, %vm2109
        %v2111 = vsel %vm2110, %v2103, %v2107
        %v2112 = vand.u32 2147483647, %v1535
        %vm2113 = vcmp.eq.f32.partialorder %v2112, 8.507059e+37
        %v2114 = vand.u32 %v1535, 2147483648
        %v2115 = vor.u32 1.1754944e-38, %v2114
        %v2116 = vsel %vm2113, %v2115, %v2111
        %v2117 = vmul.f32 1.0, %v2116
        %v2118 = vrcp.pop %v1536
        %v2119 = vmul.f32 %v1536, %v2118
        %v2120 = vsub.f32 1.0, %v2119
        %v2121 = vmul.f32 %v2118, %v2120
        %v2122 = vadd.f32 %v2118, %v2121
        %vm2123 = vweird.f32 %v1536
        %vm2124 = vweird.f32 %v2118
        %vm2125 = vmor %vm2123, %vm2124
        %v2126 = vsel %vm2125, %v2118, %v2122
        %v2127 = vand.u32 2147483647, %v1536
        %vm2128 = vcmp.eq.f32.partialorder %v2127, 8.507059e+37
        %v2129 = vand.u32 %v1536, 2147483648
        %v2130 = vor.u32 1.1754944e-38, %v2129
        %v2131 = vsel %vm2128, %v2130, %v2126
        %v2132 = vmul.f32 1.0, %v2131
        %v2133 = vrcp.pop %v1537
        %v2134 = vmul.f32 %v1537, %v2133
        %v2135 = vsub.f32 1.0, %v2134
        %v2136 = vmul.f32 %v2133, %v2135
        %v2137 = vadd.f32 %v2133, %v2136
        %vm2138 = vweird.f32 %v1537
        %vm2139 = vweird.f32 %v2133
        %vm2140 = vmor %vm2138, %vm2139
        %v2141 = vsel %vm2140, %v2133, %v2137
        %v2142 = vand.u32 2147483647, %v1537
        %vm2143 = vcmp.eq.f32.partialorder %v2142, 8.507059e+37
        %v2144 = vand.u32 %v1537, 2147483648
        %v2145 = vor.u32 1.1754944e-38, %v2144
        %v2146 = vsel %vm2143, %v2145, %v2141
        %v2147 = vmul.f32 1.0, %v2146
        %v2148 = vrcp.pop %v1538
        %v2149 = vmul.f32 %v1538, %v2148
        %v2150 = vsub.f32 1.0, %v2149
        %v2151 = vmul.f32 %v2148, %v2150
        %v2152 = vadd.f32 %v2148, %v2151
        %vm2153 = vweird.f32 %v1538
        %vm2154 = vweird.f32 %v2148
        %vm2155 = vmor %vm2153, %vm2154
        %v2156 = vsel %vm2155, %v2148, %v2152
        %v2157 = vand.u32 2147483647, %v1538
        %vm2158 = vcmp.eq.f32.partialorder %v2157, 8.507059e+37
        %v2159 = vand.u32 %v1538, 2147483648
        %v2160 = vor.u32 1.1754944e-38, %v2159
        %v2161 = vsel %vm2158, %v2160, %v2156
        %v2162 = vmul.f32 1.0, %v2161
        %v2163 = vrcp.pop %v1539
        %v2164 = vmul.f32 %v1539, %v2163
        %v2165 = vsub.f32 1.0, %v2164
        %v2166 = vmul.f32 %v2163, %v2165
        %v2167 = vadd.f32 %v2163, %v2166
        %vm2168 = vweird.f32 %v1539
        %vm2169 = vweird.f32 %v2163
        %vm2170 = vmor %vm2168, %vm2169
        %v2171 = vsel %vm2170, %v2163, %v2167
        %v2172 = vand.u32 2147483647, %v1539
        %vm2173 = vcmp.eq.f32.partialorder %v2172, 8.507059e+37
        %v2174 = vand.u32 %v1539, 2147483648
        %v2175 = vor.u32 1.1754944e-38, %v2174
        %v2176 = vsel %vm2173, %v2175, %v2171
        %v2177 = vmul.f32 1.0, %v2176
        %v2178 = vrcp.pop %v1540
        %v2179 = vmul.f32 %v1540, %v2178
        %v2180 = vsub.f32 1.0, %v2179
        %v2181 = vmul.f32 %v2178, %v2180
        %v2182 = vadd.f32 %v2178, %v2181
        %vm2183 = vweird.f32 %v1540
        %vm2184 = vweird.f32 %v2178
        %vm2185 = vmor %vm2183, %vm2184
        %v2186 = vsel %vm2185, %v2178, %v2182
        %v2187 = vand.u32 2147483647, %v1540
        %vm2188 = vcmp.eq.f32.partialorder %v2187, 8.507059e+37
        %v2189 = vand.u32 %v1540, 2147483648
        %v2190 = vor.u32 1.1754944e-38, %v2189
        %v2191 = vsel %vm2188, %v2190, %v2186
        %v2192 = vmul.f32 1.0, %v2191
        %v2193 = vrcp.pop %v1541
        %v2194 = vmul.f32 %v1541, %v2193
        %v2195 = vsub.f32 1.0, %v2194
        %v2196 = vmul.f32 %v2193, %v2195
        %v2197 = vadd.f32 %v2193, %v2196
        %vm2198 = vweird.f32 %v1541
        %vm2199 = vweird.f32 %v2193
        %vm2200 = vmor %vm2198, %vm2199
        %v2201 = vsel %vm2200, %v2193, %v2197
        %v2202 = vand.u32 2147483647, %v1541
        %vm2203 = vcmp.eq.f32.partialorder %v2202, 8.507059e+37
        %v2204 = vand.u32 %v1541, 2147483648
        %v2205 = vor.u32 1.1754944e-38, %v2204
        %v2206 = vsel %vm2203, %v2205, %v2201
        %v2207 = vmul.f32 1.0, %v2206
        %v2208 = vrcp.pop %v1542
        %v2209 = vmul.f32 %v1542, %v2208
        %v2210 = vsub.f32 1.0, %v2209
        %v2211 = vmul.f32 %v2208, %v2210
        %v2212 = vadd.f32 %v2208, %v2211
        %vm2213 = vweird.f32 %v1542
        %vm2214 = vweird.f32 %v2208
        %vm2215 = vmor %vm2213, %vm2214
        %v2216 = vsel %vm2215, %v2208, %v2212
        %v2217 = vand.u32 2147483647, %v1542
        %vm2218 = vcmp.eq.f32.partialorder %v2217, 8.507059e+37
        %v2219 = vand.u32 %v1542, 2147483648
        %v2220 = vor.u32 1.1754944e-38, %v2219
        %v2221 = vsel %vm2218, %v2220, %v2216
        %v2222 = vmul.f32 1.0, %v2221
        %v2223 = vrcp.pop %v1543
        %v2224 = vmul.f32 %v1543, %v2223
        %v2225 = vsub.f32 1.0, %v2224
        %v2226 = vmul.f32 %v2223, %v2225
        %v2227 = vadd.f32 %v2223, %v2226
        %vm2228 = vweird.f32 %v1543
        %vm2229 = vweird.f32 %v2223
        %vm2230 = vmor %vm2228, %vm2229
        %v2231 = vsel %vm2230, %v2223, %v2227
        %v2232 = vand.u32 2147483647, %v1543
        %vm2233 = vcmp.eq.f32.partialorder %v2232, 8.507059e+37
        %v2234 = vand.u32 %v1543, 2147483648
        %v2235 = vor.u32 1.1754944e-38, %v2234
        %v2236 = vsel %vm2233, %v2235, %v2231
        %v2237 = vmul.f32 1.0, %v2236
        %v2238 = vrcp.pop %v1544
        %v2239 = vmul.f32 %v1544, %v2238
        %v2240 = vsub.f32 1.0, %v2239
        %v2241 = vmul.f32 %v2238, %v2240
        %v2242 = vadd.f32 %v2238, %v2241
        %vm2243 = vweird.f32 %v1544
        %vm2244 = vweird.f32 %v2238
        %vm2245 = vmor %vm2243, %vm2244
        %v2246 = vsel %vm2245, %v2238, %v2242
        %v2247 = vand.u32 2147483647, %v1544
        %vm2248 = vcmp.eq.f32.partialorder %v2247, 8.507059e+37
        %v2249 = vand.u32 %v1544, 2147483648
        %v2250 = vor.u32 1.1754944e-38, %v2249
        %v2251 = vsel %vm2248, %v2250, %v2246
        %v2252 = vmul.f32 1.0, %v2251
        %v2253 = vrcp.pop %v1545
        %v2254 = vmul.f32 %v1545, %v2253
        %v2255 = vsub.f32 1.0, %v2254
        %v2256 = vmul.f32 %v2253, %v2255
        %v2257 = vadd.f32 %v2253, %v2256
        %vm2258 = vweird.f32 %v1545
        %vm2259 = vweird.f32 %v2253
        %vm2260 = vmor %vm2258, %vm2259
        %v2261 = vsel %vm2260, %v2253, %v2257
        %v2262 = vand.u32 2147483647, %v1545
        %vm2263 = vcmp.eq.f32.partialorder %v2262, 8.507059e+37
        %v2264 = vand.u32 %v1545, 2147483648
        %v2265 = vor.u32 1.1754944e-38, %v2264
        %v2266 = vsel %vm2263, %v2265, %v2261
        %v2267 = vmul.f32 1.0, %v2266
        %v2268 = vrcp.pop %v1546
        %v2269 = vmul.f32 %v1546, %v2268
        %v2270 = vsub.f32 1.0, %v2269
        %v2271 = vmul.f32 %v2268, %v2270
        %v2272 = vadd.f32 %v2268, %v2271
        %vm2273 = vweird.f32 %v1546
        %vm2274 = vweird.f32 %v2268
        %vm2275 = vmor %vm2273, %vm2274
        %v2276 = vsel %vm2275, %v2268, %v2272
        %v2277 = vand.u32 2147483647, %v1546
        %vm2278 = vcmp.eq.f32.partialorder %v2277, 8.507059e+37
        %v2279 = vand.u32 %v1546, 2147483648
        %v2280 = vor.u32 1.1754944e-38, %v2279
        %v2281 = vsel %vm2278, %v2280, %v2276
        %v2282 = vmul.f32 1.0, %v2281
        %v2283 = vrcp.pop %v1547
        %v2284 = vmul.f32 %v1547, %v2283
        %v2285 = vsub.f32 1.0, %v2284
        %v2286 = vmul.f32 %v2283, %v2285
        %v2287 = vadd.f32 %v2283, %v2286
        %vm2288 = vweird.f32 %v1547
        %vm2289 = vweird.f32 %v2283
        %vm2290 = vmor %vm2288, %vm2289
        %v2291 = vsel %vm2290, %v2283, %v2287
        %v2292 = vand.u32 2147483647, %v1547
        %vm2293 = vcmp.eq.f32.partialorder %v2292, 8.507059e+37
        %v2294 = vand.u32 %v1547, 2147483648
        %v2295 = vor.u32 1.1754944e-38, %v2294
        %v2296 = vsel %vm2293, %v2295, %v2291
        %v2297 = vmul.f32 1.0, %v2296
        %v2298 = vrcp.pop %v1548
        %v2299 = vmul.f32 %v1548, %v2298
        %v2300 = vsub.f32 1.0, %v2299
        %v2301 = vmul.f32 %v2298, %v2300
        %v2302 = vadd.f32 %v2298, %v2301
        %vm2303 = vweird.f32 %v1548
        %vm2304 = vweird.f32 %v2298
        %vm2305 = vmor %vm2303, %vm2304
        %v2306 = vsel %vm2305, %v2298, %v2302
        %v2307 = vand.u32 2147483647, %v1548
        %vm2308 = vcmp.eq.f32.partialorder %v2307, 8.507059e+37
        %v2309 = vand.u32 %v1548, 2147483648
        %v2310 = vor.u32 1.1754944e-38, %v2309
        %v2311 = vsel %vm2308, %v2310, %v2306
        %v2312 = vmul.f32 1.0, %v2311
        %v2313 = vrcp.pop %v1549
        %v2314 = vmul.f32 %v1549, %v2313
        %v2315 = vsub.f32 1.0, %v2314
        %v2316 = vmul.f32 %v2313, %v2315
        %v2317 = vadd.f32 %v2313, %v2316
        %vm2318 = vweird.f32 %v1549
        %vm2319 = vweird.f32 %v2313
        %vm2320 = vmor %vm2318, %vm2319
        %v2321 = vsel %vm2320, %v2313, %v2317
        %v2322 = vand.u32 2147483647, %v1549
        %vm2323 = vcmp.eq.f32.partialorder %v2322, 8.507059e+37
        %v2324 = vand.u32 %v1549, 2147483648
        %v2325 = vor.u32 1.1754944e-38, %v2324
        %v2326 = vsel %vm2323, %v2325, %v2321
        %v2327 = vmul.f32 1.0, %v2326
        %v2328 = vrcp.pop %v1550
        %v2329 = vmul.f32 %v1550, %v2328
        %v2330 = vsub.f32 1.0, %v2329
        %v2331 = vmul.f32 %v2328, %v2330
        %v2332 = vadd.f32 %v2328, %v2331
        %vm2333 = vweird.f32 %v1550
        %vm2334 = vweird.f32 %v2328
        %vm2335 = vmor %vm2333, %vm2334
        %v2336 = vsel %vm2335, %v2328, %v2332
        %v2337 = vand.u32 2147483647, %v1550
        %vm2338 = vcmp.eq.f32.partialorder %v2337, 8.507059e+37
        %v2339 = vand.u32 %v1550, 2147483648
        %v2340 = vor.u32 1.1754944e-38, %v2339
        %v2341 = vsel %vm2338, %v2340, %v2336
        %v2342 = vmul.f32 1.0, %v2341
        %v2343 = vrcp.pop %v1551
        %v2344 = vmul.f32 %v1551, %v2343
        %v2345 = vsub.f32 1.0, %v2344
        %v2346 = vmul.f32 %v2343, %v2345
        %v2347 = vadd.f32 %v2343, %v2346
        %vm2348 = vweird.f32 %v1551
        %vm2349 = vweird.f32 %v2343
        %vm2350 = vmor %vm2348, %vm2349
        %v2351 = vsel %vm2350, %v2343, %v2347
        %v2352 = vand.u32 2147483647, %v1551
        %vm2353 = vcmp.eq.f32.partialorder %v2352, 8.507059e+37
        %v2354 = vand.u32 %v1551, 2147483648
        %v2355 = vor.u32 1.1754944e-38, %v2354
        %v2356 = vsel %vm2353, %v2355, %v2351
        %v2357 = vmul.f32 1.0, %v2356
        %v2358 = vrcp.pop %v1552
        %v2359 = vmul.f32 %v1552, %v2358
        %v2360 = vsub.f32 1.0, %v2359
        %v2361 = vmul.f32 %v2358, %v2360
        %v2362 = vadd.f32 %v2358, %v2361
        %vm2363 = vweird.f32 %v1552
        %vm2364 = vweird.f32 %v2358
        %vm2365 = vmor %vm2363, %vm2364
        %v2366 = vsel %vm2365, %v2358, %v2362
        %v2367 = vand.u32 2147483647, %v1552
        %vm2368 = vcmp.eq.f32.partialorder %v2367, 8.507059e+37
        %v2369 = vand.u32 %v1552, 2147483648
        %v2370 = vor.u32 1.1754944e-38, %v2369
        %v2371 = vsel %vm2368, %v2370, %v2366
        %v2372 = vmul.f32 1.0, %v2371
        %v2373 = vrcp.pop %v1553
        %v2374 = vmul.f32 %v1553, %v2373
        %v2375 = vsub.f32 1.0, %v2374
        %v2376 = vmul.f32 %v2373, %v2375
        %v2377 = vadd.f32 %v2373, %v2376
        %vm2378 = vweird.f32 %v1553
        %vm2379 = vweird.f32 %v2373
        %vm2380 = vmor %vm2378, %vm2379
        %v2381 = vsel %vm2380, %v2373, %v2377
        %v2382 = vand.u32 2147483647, %v1553
        %vm2383 = vcmp.eq.f32.partialorder %v2382, 8.507059e+37
        %v2384 = vand.u32 %v1553, 2147483648
        %v2385 = vor.u32 1.1754944e-38, %v2384
        %v2386 = vsel %vm2383, %v2385, %v2381
        %v2387 = vmul.f32 1.0, %v2386
        %v2388 = vrcp.pop %v1554
        %v2389 = vmul.f32 %v1554, %v2388
        %v2390 = vsub.f32 1.0, %v2389
        %v2391 = vmul.f32 %v2388, %v2390
        %v2392 = vadd.f32 %v2388, %v2391
        %vm2393 = vweird.f32 %v1554
        %vm2394 = vweird.f32 %v2388
        %vm2395 = vmor %vm2393, %vm2394
        %v2396 = vsel %vm2395, %v2388, %v2392
        %v2397 = vand.u32 2147483647, %v1554
        %vm2398 = vcmp.eq.f32.partialorder %v2397, 8.507059e+37
        %v2399 = vand.u32 %v1554, 2147483648
        %v2400 = vor.u32 1.1754944e-38, %v2399
        %v2401 = vsel %vm2398, %v2400, %v2396
        %v2402 = vmul.f32 1.0, %v2401
        %v2403 = vrcp.pop %v1555
        %v2404 = vmul.f32 %v1555, %v2403
        %v2405 = vsub.f32 1.0, %v2404
        %v2406 = vmul.f32 %v2403, %v2405
        %v2407 = vadd.f32 %v2403, %v2406
        %vm2408 = vweird.f32 %v1555
        %vm2409 = vweird.f32 %v2403
        %vm2410 = vmor %vm2408, %vm2409
        %v2411 = vsel %vm2410, %v2403, %v2407
        %v2412 = vand.u32 2147483647, %v1555
        %vm2413 = vcmp.eq.f32.partialorder %v2412, 8.507059e+37
        %v2414 = vand.u32 %v1555, 2147483648
        %v2415 = vor.u32 1.1754944e-38, %v2414
        %v2416 = vsel %vm2413, %v2415, %v2411
        %v2417 = vmul.f32 1.0, %v2416
        %v2418 = vrcp.pop %v1556
        %v2419 = vmul.f32 %v1556, %v2418
        %v2420 = vsub.f32 1.0, %v2419
        %v2421 = vmul.f32 %v2418, %v2420
        %v2422 = vadd.f32 %v2418, %v2421
        %vm2423 = vweird.f32 %v1556
        %vm2424 = vweird.f32 %v2418
        %vm2425 = vmor %vm2423, %vm2424
        %v2426 = vsel %vm2425, %v2418, %v2422
        %v2427 = vand.u32 2147483647, %v1556
        %vm2428 = vcmp.eq.f32.partialorder %v2427, 8.507059e+37
        %v2429 = vand.u32 %v1556, 2147483648
        %v2430 = vor.u32 1.1754944e-38, %v2429
        %v2431 = vsel %vm2428, %v2430, %v2426
        %v2432 = vmul.f32 1.0, %v2431
        %v2433 = vrcp.pop %v1557
        %v2434 = vmul.f32 %v1557, %v2433
        %v2435 = vsub.f32 1.0, %v2434
        %v2436 = vmul.f32 %v2433, %v2435
        %v2437 = vadd.f32 %v2433, %v2436
        %vm2438 = vweird.f32 %v1557
        %vm2439 = vweird.f32 %v2433
        %vm2440 = vmor %vm2438, %vm2439
        %v2441 = vsel %vm2440, %v2433, %v2437
        %v2442 = vand.u32 2147483647, %v1557
        %vm2443 = vcmp.eq.f32.partialorder %v2442, 8.507059e+37
        %v2444 = vand.u32 %v1557, 2147483648
        %v2445 = vor.u32 1.1754944e-38, %v2444
        %v2446 = vsel %vm2443, %v2445, %v2441
        %v2447 = vmul.f32 1.0, %v2446
        %v2448 = vrcp.pop %v1558
        %v2449 = vmul.f32 %v1558, %v2448
        %v2450 = vsub.f32 1.0, %v2449
        %v2451 = vmul.f32 %v2448, %v2450
        %v2452 = vadd.f32 %v2448, %v2451
        %vm2453 = vweird.f32 %v1558
        %vm2454 = vweird.f32 %v2448
        %vm2455 = vmor %vm2453, %vm2454
        %v2456 = vsel %vm2455, %v2448, %v2452
        %v2457 = vand.u32 2147483647, %v1558
        %vm2458 = vcmp.eq.f32.partialorder %v2457, 8.507059e+37
        %v2459 = vand.u32 %v1558, 2147483648
        %v2460 = vor.u32 1.1754944e-38, %v2459
        %v2461 = vsel %vm2458, %v2460, %v2456
        %v2462 = vmul.f32 1.0, %v2461
        %v2463 = vrcp.pop %v1559
        %v2464 = vmul.f32 %v1559, %v2463
        %v2465 = vsub.f32 1.0, %v2464
        %v2466 = vmul.f32 %v2463, %v2465
        %v2467 = vadd.f32 %v2463, %v2466
        %vm2468 = vweird.f32 %v1559
        %vm2469 = vweird.f32 %v2463
        %vm2470 = vmor %vm2468, %vm2469
        %v2471 = vsel %vm2470, %v2463, %v2467
        %v2472 = vand.u32 2147483647, %v1559
        %vm2473 = vcmp.eq.f32.partialorder %v2472, 8.507059e+37
        %v2474 = vand.u32 %v1559, 2147483648
        %v2475 = vor.u32 1.1754944e-38, %v2474
        %v2476 = vsel %vm2473, %v2475, %v2471
        %v2477 = vmul.f32 1.0, %v2476
        %v2478 = vrcp.pop %v1560
        %v2479 = vmul.f32 %v1560, %v2478
        %v2480 = vsub.f32 1.0, %v2479
        %v2481 = vmul.f32 %v2478, %v2480
        %v2482 = vadd.f32 %v2478, %v2481
        %vm2483 = vweird.f32 %v1560
        %vm2484 = vweird.f32 %v2478
        %vm2485 = vmor %vm2483, %vm2484
        %v2486 = vsel %vm2485, %v2478, %v2482
        %v2487 = vand.u32 2147483647, %v1560
        %vm2488 = vcmp.eq.f32.partialorder %v2487, 8.507059e+37
        %v2489 = vand.u32 %v1560, 2147483648
        %v2490 = vor.u32 1.1754944e-38, %v2489
        %v2491 = vsel %vm2488, %v2490, %v2486
        %v2492 = vmul.f32 1.0, %v2491
        %v2493 = vrcp.pop %v1561
        %v2494 = vmul.f32 %v1561, %v2493
        %v2495 = vsub.f32 1.0, %v2494
        %v2496 = vmul.f32 %v2493, %v2495
        %v2497 = vadd.f32 %v2493, %v2496
        %vm2498 = vweird.f32 %v1561
        %vm2499 = vweird.f32 %v2493
        %vm2500 = vmor %vm2498, %vm2499
        %v2501 = vsel %vm2500, %v2493, %v2497
        %v2502 = vand.u32 2147483647, %v1561
        %vm2503 = vcmp.eq.f32.partialorder %v2502, 8.507059e+37
        %v2504 = vand.u32 %v1561, 2147483648
        %v2505 = vor.u32 1.1754944e-38, %v2504
        %v2506 = vsel %vm2503, %v2505, %v2501
        %v2507 = vmul.f32 1.0, %v2506
        %v2508 = vrcp.pop %v1562
        %v2509 = vmul.f32 %v1562, %v2508
        %v2510 = vsub.f32 1.0, %v2509
        %v2511 = vmul.f32 %v2508, %v2510
        %v2512 = vadd.f32 %v2508, %v2511
        %vm2513 = vweird.f32 %v1562
        %vm2514 = vweird.f32 %v2508
        %vm2515 = vmor %vm2513, %vm2514
        %v2516 = vsel %vm2515, %v2508, %v2512
        %v2517 = vand.u32 2147483647, %v1562
        %vm2518 = vcmp.eq.f32.partialorder %v2517, 8.507059e+37
        %v2519 = vand.u32 %v1562, 2147483648
        %v2520 = vor.u32 1.1754944e-38, %v2519
        %v2521 = vsel %vm2518, %v2520, %v2516
        %v2522 = vmul.f32 1.0, %v2521
        %v2523 = vmul.f32 %v1243, %v1577
        %v2524 = vmul.f32 %v1244, %v1592
        %v2525 = vmul.f32 %v1245, %v1607
        %v2526 = vmul.f32 %v1246, %v1622
        %v2527 = vmul.f32 %v1247, %v1637
        %v2528 = vmul.f32 %v1248, %v1652
        %v2529 = vmul.f32 %v1249, %v1667
        %v2530 = vmul.f32 %v1250, %v1682
        %v2531 = vmul.f32 %v1251, %v1697
        %v2532 = vmul.f32 %v1252, %v1712
        %v2533 = vmul.f32 %v1253, %v1727
        %v2534 = vmul.f32 %v1254, %v1742
        %v2535 = vmul.f32 %v1255, %v1757
        %v2536 = vmul.f32 %v1256, %v1772
        %v2537 = vmul.f32 %v1257, %v1787
        %v2538 = vmul.f32 %v1258, %v1802
        %v2539 = vmul.f32 %v1259, %v1817
        %v2540 = vmul.f32 %v1260, %v1832
        %v2541 = vmul.f32 %v1261, %v1847
        %v2542 = vmul.f32 %v1262, %v1862
        %v2543 = vmul.f32 %v1263, %v1877
        %v2544 = vmul.f32 %v1264, %v1892
        %v2545 = vmul.f32 %v1265, %v1907
        %v2546 = vmul.f32 %v1266, %v1922
        %v2547 = vmul.f32 %v1267, %v1937
        %v2548 = vmul.f32 %v1268, %v1952
        %v2549 = vmul.f32 %v1269, %v1967
        %v2550 = vmul.f32 %v1270, %v1982
        %v2551 = vmul.f32 %v1271, %v1997
        %v2552 = vmul.f32 %v1272, %v2012
        %v2553 = vmul.f32 %v1273, %v2027
        %v2554 = vmul.f32 %v1274, %v2042
        %v2555 = vmul.f32 %v1275, %v2057
        %v2556 = vmul.f32 %v1276, %v2072
        %v2557 = vmul.f32 %v1277, %v2087
        %v2558 = vmul.f32 %v1278, %v2102
        %v2559 = vmul.f32 %v1279, %v2117
        %v2560 = vmul.f32 %v1280, %v2132
        %v2561 = vmul.f32 %v1281, %v2147
        %v2562 = vmul.f32 %v1282, %v2162
        %v2563 = vmul.f32 %v1283, %v2177
        %v2564 = vmul.f32 %v1284, %v2192
        %v2565 = vmul.f32 %v1285, %v2207
        %v2566 = vmul.f32 %v1286, %v2222
        %v2567 = vmul.f32 %v1287, %v2237
        %v2568 = vmul.f32 %v1288, %v2252
        %v2569 = vmul.f32 %v1289, %v2267
        %v2570 = vmul.f32 %v1290, %v2282
        %v2571 = vmul.f32 %v1291, %v2297
        %v2572 = vmul.f32 %v1292, %v2312
        %v2573 = vmul.f32 %v1293, %v2327
        %v2574 = vmul.f32 %v1294, %v2342
        %v2575 = vmul.f32 %v1295, %v2357
        %v2576 = vmul.f32 %v1296, %v2372
        %v2577 = vmul.f32 %v1297, %v2387
        %v2578 = vmul.f32 %v1298, %v2402
        %v2579 = vmul.f32 %v1299, %v2417
        %v2580 = vmul.f32 %v1300, %v2432
        %v2581 = vmul.f32 %v1301, %v2447
        %v2582 = vmul.f32 %v1302, %v2462
        %v2583 = vmul.f32 %v1303, %v2477
        %v2584 = vmul.f32 %v1304, %v2492
        %v2585 = vmul.f32 %v1305, %v2507
        %v2586 = vmul.f32 %v1306, %v2522
        %v2588 = vperm.slane %v515, 0
        %2590 = vmatpush.msra.mxu0 %v498
        %2591 = vmatpush.msra.mxu0 %v497
        %2592 = vmatpush.msra.mxu0 %v496
        %2593 = vmatpush.msra.mxu0 %v495
        %2594 = vmatpush.msra.mxu0 %v494
        %2595 = vmatpush.msra.mxu0 %v493
        %2596 = vmatpush.msra.mxu0 %v492
        %2597 = vmatpush.msra.mxu0 %v491
        %2598 = vmatpush.msra.mxu0 %v490
        %2599 = vmatpush.msra.mxu0 %v489
        %2600 = vmatpush.msra.mxu0 %v488
        %2601 = vmatpush.msra.mxu0 %v487
        %2602 = vmatpush.msra.mxu0 %v486
        %2603 = vmatpush.msra.mxu0 %v485
        %2604 = vmatpush.msra.mxu0 %v484
        %2605 = vmatpush.msra.mxu0 %v483
        %2606 = vmatmul.f32.gmra.mxu0 %v2523
        %v2607 = vpop.f32.mrf.mxu0
        %v2608 = vadd.f32 %v2588, %v2607
        %2609 = vmatmul.f32.gmra.mxu0 %v2525
        %v2610 = vpop.f32.mrf.mxu0
        %v2611 = vadd.f32 %v2588, %v2610
        %2612 = vmatmul.f32.gmra.mxu0 %v2527
        %v2613 = vpop.f32.mrf.mxu0
        %v2614 = vadd.f32 %v2588, %v2613
        %2615 = vmatmul.f32.gmra.mxu0 %v2529
        %v2616 = vpop.f32.mrf.mxu0
        %v2617 = vadd.f32 %v2588, %v2616
        %2618 = vmatmul.f32.gmra.mxu0 %v2531
        %v2619 = vpop.f32.mrf.mxu0
        %v2620 = vadd.f32 %v2588, %v2619
        %2621 = vmatmul.f32.gmra.mxu0 %v2533
        %v2622 = vpop.f32.mrf.mxu0
        %v2623 = vadd.f32 %v2588, %v2622
        %2624 = vmatmul.f32.gmra.mxu0 %v2535
        %v2625 = vpop.f32.mrf.mxu0
        %v2626 = vadd.f32 %v2588, %v2625
        %2627 = vmatmul.f32.gmra.mxu0 %v2537
        %v2628 = vpop.f32.mrf.mxu0
        %v2629 = vadd.f32 %v2588, %v2628
        %2630 = vmatmul.f32.gmra.mxu0 %v2539
        %v2631 = vpop.f32.mrf.mxu0
        %v2632 = vadd.f32 %v2588, %v2631
        %2633 = vmatmul.f32.gmra.mxu0 %v2541
        %v2634 = vpop.f32.mrf.mxu0
        %v2635 = vadd.f32 %v2588, %v2634
        %2636 = vmatmul.f32.gmra.mxu0 %v2543
        %v2637 = vpop.f32.mrf.mxu0
        %v2638 = vadd.f32 %v2588, %v2637
        %2639 = vmatmul.f32.gmra.mxu0 %v2545
        %v2640 = vpop.f32.mrf.mxu0
        %v2641 = vadd.f32 %v2588, %v2640
        %2642 = vmatmul.f32.gmra.mxu0 %v2547
        %v2643 = vpop.f32.mrf.mxu0
        %v2644 = vadd.f32 %v2588, %v2643
        %2645 = vmatmul.f32.gmra.mxu0 %v2549
        %v2646 = vpop.f32.mrf.mxu0
        %v2647 = vadd.f32 %v2588, %v2646
        %2648 = vmatmul.f32.gmra.mxu0 %v2551
        %v2649 = vpop.f32.mrf.mxu0
        %v2650 = vadd.f32 %v2588, %v2649
        %2651 = vmatmul.f32.gmra.mxu0 %v2553
        %v2652 = vpop.f32.mrf.mxu0
        %v2653 = vadd.f32 %v2588, %v2652
        %2654 = vmatmul.f32.gmra.mxu0 %v2555
        %v2655 = vpop.f32.mrf.mxu0
        %v2656 = vadd.f32 %v2588, %v2655
        %2657 = vmatmul.f32.gmra.mxu0 %v2557
        %v2658 = vpop.f32.mrf.mxu0
        %v2659 = vadd.f32 %v2588, %v2658
        %2660 = vmatmul.f32.gmra.mxu0 %v2559
        %v2661 = vpop.f32.mrf.mxu0
        %v2662 = vadd.f32 %v2588, %v2661
        %2663 = vmatmul.f32.gmra.mxu0 %v2561
        %v2664 = vpop.f32.mrf.mxu0
        %v2665 = vadd.f32 %v2588, %v2664
        %2666 = vmatmul.f32.gmra.mxu0 %v2563
        %v2667 = vpop.f32.mrf.mxu0
        %v2668 = vadd.f32 %v2588, %v2667
        %2669 = vmatmul.f32.gmra.mxu0 %v2565
        %v2670 = vpop.f32.mrf.mxu0
        %v2671 = vadd.f32 %v2588, %v2670
        %2672 = vmatmul.f32.gmra.mxu0 %v2567
        %v2673 = vpop.f32.mrf.mxu0
        %v2674 = vadd.f32 %v2588, %v2673
        %2675 = vmatmul.f32.gmra.mxu0 %v2569
        %v2676 = vpop.f32.mrf.mxu0
        %v2677 = vadd.f32 %v2588, %v2676
        %2678 = vmatmul.f32.gmra.mxu0 %v2571
        %v2679 = vpop.f32.mrf.mxu0
        %v2680 = vadd.f32 %v2588, %v2679
        %2681 = vmatmul.f32.gmra.mxu0 %v2573
        %v2682 = vpop.f32.mrf.mxu0
        %v2683 = vadd.f32 %v2588, %v2682
        %2684 = vmatmul.f32.gmra.mxu0 %v2575
        %v2685 = vpop.f32.mrf.mxu0
        %v2686 = vadd.f32 %v2588, %v2685
        %2687 = vmatmul.f32.gmra.mxu0 %v2577
        %v2688 = vpop.f32.mrf.mxu0
        %v2689 = vadd.f32 %v2588, %v2688
        %2690 = vmatmul.f32.gmra.mxu0 %v2579
        %v2691 = vpop.f32.mrf.mxu0
        %v2692 = vadd.f32 %v2588, %v2691
        %2693 = vmatmul.f32.gmra.mxu0 %v2581
        %v2694 = vpop.f32.mrf.mxu0
        %v2695 = vadd.f32 %v2588, %v2694
        %2696 = vmatmul.f32.gmra.mxu0 %v2583
        %v2697 = vpop.f32.mrf.mxu0
        %v2698 = vadd.f32 %v2588, %v2697
        %2699 = vmatmul.f32.gmra.mxu0 %v2585
        %v2700 = vpop.f32.mrf.mxu0
        %v2701 = vadd.f32 %v2588, %v2700
        %2702 = vdwg.mxu0
        %2703 = vmatpush.msra.mxu0 %v514
        %2704 = vmatpush.msra.mxu0 %v513
        %2705 = vmatpush.msra.mxu0 %v512
        %2706 = vmatpush.msra.mxu0 %v511
        %2707 = vmatpush.msra.mxu0 %v510
        %2708 = vmatpush.msra.mxu0 %v509
        %2709 = vmatpush.msra.mxu0 %v508
        %2710 = vmatpush.msra.mxu0 %v507
        %2711 = vmatpush.msra.mxu0 %v506
        %2712 = vmatpush.msra.mxu0 %v505
        %2713 = vmatpush.msra.mxu0 %v504
        %2714 = vmatpush.msra.mxu0 %v503
        %2715 = vmatpush.msra.mxu0 %v502
        %2716 = vmatpush.msra.mxu0 %v501
        %2717 = vmatpush.msra.mxu0 %v500
        %2718 = vmatpush.msra.mxu0 %v499
        %2719 = vmatmul.f32.gmra.mxu0 %v2524
        %v2720 = vpop.f32.mrf.mxu0
        %v2721 = vadd.f32 %v2608, %v2720
        %2722 = vmatmul.f32.gmra.mxu0 %v2526
        %v2723 = vpop.f32.mrf.mxu0
        %v2724 = vadd.f32 %v2611, %v2723
        %2725 = vmatmul.f32.gmra.mxu0 %v2528
        %v2726 = vpop.f32.mrf.mxu0
        %v2727 = vadd.f32 %v2614, %v2726
        %2728 = vmatmul.f32.gmra.mxu0 %v2530
        %v2729 = vpop.f32.mrf.mxu0
        %v2730 = vadd.f32 %v2617, %v2729
        %2731 = vmatmul.f32.gmra.mxu0 %v2532
        %v2732 = vpop.f32.mrf.mxu0
        %v2733 = vadd.f32 %v2620, %v2732
        %2734 = vmatmul.f32.gmra.mxu0 %v2534
        %v2735 = vpop.f32.mrf.mxu0
        %v2736 = vadd.f32 %v2623, %v2735
        %2737 = vmatmul.f32.gmra.mxu0 %v2536
        %v2738 = vpop.f32.mrf.mxu0
        %v2739 = vadd.f32 %v2626, %v2738
        %2740 = vmatmul.f32.gmra.mxu0 %v2538
        %v2741 = vpop.f32.mrf.mxu0
        %v2742 = vadd.f32 %v2629, %v2741
        %2743 = vmatmul.f32.gmra.mxu0 %v2540
        %v2744 = vpop.f32.mrf.mxu0
        %v2745 = vadd.f32 %v2632, %v2744
        %2746 = vmatmul.f32.gmra.mxu0 %v2542
        %v2747 = vpop.f32.mrf.mxu0
        %v2748 = vadd.f32 %v2635, %v2747
        %2749 = vmatmul.f32.gmra.mxu0 %v2544
        %v2750 = vpop.f32.mrf.mxu0
        %v2751 = vadd.f32 %v2638, %v2750
        %2752 = vmatmul.f32.gmra.mxu0 %v2546
        %v2753 = vpop.f32.mrf.mxu0
        %v2754 = vadd.f32 %v2641, %v2753
        %2755 = vmatmul.f32.gmra.mxu0 %v2548
        %v2756 = vpop.f32.mrf.mxu0
        %v2757 = vadd.f32 %v2644, %v2756
        %2758 = vmatmul.f32.gmra.mxu0 %v2550
        %v2759 = vpop.f32.mrf.mxu0
        %v2760 = vadd.f32 %v2647, %v2759
        %2761 = vmatmul.f32.gmra.mxu0 %v2552
        %v2762 = vpop.f32.mrf.mxu0
        %v2763 = vadd.f32 %v2650, %v2762
        %2764 = vmatmul.f32.gmra.mxu0 %v2554
        %v2765 = vpop.f32.mrf.mxu0
        %v2766 = vadd.f32 %v2653, %v2765
        %2767 = vmatmul.f32.gmra.mxu0 %v2556
        %v2768 = vpop.f32.mrf.mxu0
        %v2769 = vadd.f32 %v2656, %v2768
        %2770 = vmatmul.f32.gmra.mxu0 %v2558
        %v2771 = vpop.f32.mrf.mxu0
        %v2772 = vadd.f32 %v2659, %v2771
        %2773 = vmatmul.f32.gmra.mxu0 %v2560
        %v2774 = vpop.f32.mrf.mxu0
        %v2775 = vadd.f32 %v2662, %v2774
        %2776 = vmatmul.f32.gmra.mxu0 %v2562
        %v2777 = vpop.f32.mrf.mxu0
        %v2778 = vadd.f32 %v2665, %v2777
        %2779 = vmatmul.f32.gmra.mxu0 %v2564
        %v2780 = vpop.f32.mrf.mxu0
        %v2781 = vadd.f32 %v2668, %v2780
        %2782 = vmatmul.f32.gmra.mxu0 %v2566
        %v2783 = vpop.f32.mrf.mxu0
        %v2784 = vadd.f32 %v2671, %v2783
        %2785 = vmatmul.f32.gmra.mxu0 %v2568
        %v2786 = vpop.f32.mrf.mxu0
        %v2787 = vadd.f32 %v2674, %v2786
        %2788 = vmatmul.f32.gmra.mxu0 %v2570
        %v2789 = vpop.f32.mrf.mxu0
        %v2790 = vadd.f32 %v2677, %v2789
        %2791 = vmatmul.f32.gmra.mxu0 %v2572
        %v2792 = vpop.f32.mrf.mxu0
        %v2793 = vadd.f32 %v2680, %v2792
        %2794 = vmatmul.f32.gmra.mxu0 %v2574
        %v2795 = vpop.f32.mrf.mxu0
        %v2796 = vadd.f32 %v2683, %v2795
        %2797 = vmatmul.f32.gmra.mxu0 %v2576
        %v2798 = vpop.f32.mrf.mxu0
        %v2799 = vadd.f32 %v2686, %v2798
        %2800 = vmatmul.f32.gmra.mxu0 %v2578
        %v2801 = vpop.f32.mrf.mxu0
        %v2802 = vadd.f32 %v2689, %v2801
        %2803 = vmatmul.f32.gmra.mxu0 %v2580
        %v2804 = vpop.f32.mrf.mxu0
        %v2805 = vadd.f32 %v2692, %v2804
        %2806 = vmatmul.f32.gmra.mxu0 %v2582
        %v2807 = vpop.f32.mrf.mxu0
        %v2808 = vadd.f32 %v2695, %v2807
        %2809 = vmatmul.f32.gmra.mxu0 %v2584
        %v2810 = vpop.f32.mrf.mxu0
        %v2811 = vadd.f32 %v2698, %v2810
        %2812 = vmatmul.f32.gmra.mxu0 %v2586
        %v2813 = vpop.f32.mrf.mxu0
        %v2814 = vadd.f32 %v2701, %v2813
        %2815 = vdwg.mxu0
        %v2816 = vxor.u32 %v2721, 2147483648
        %v2817 = vxor.u32 %v2724, 2147483648
        %v2818 = vxor.u32 %v2727, 2147483648
        %v2819 = vxor.u32 %v2730, 2147483648
        %v2820 = vxor.u32 %v2733, 2147483648
        %v2821 = vxor.u32 %v2736, 2147483648
        %v2822 = vxor.u32 %v2739, 2147483648
        %v2823 = vxor.u32 %v2742, 2147483648
        %v2824 = vxor.u32 %v2745, 2147483648
        %v2825 = vxor.u32 %v2748, 2147483648
        %v2826 = vxor.u32 %v2751, 2147483648
        %v2827 = vxor.u32 %v2754, 2147483648
        %v2828 = vxor.u32 %v2757, 2147483648
        %v2829 = vxor.u32 %v2760, 2147483648
        %v2830 = vxor.u32 %v2763, 2147483648
        %v2831 = vxor.u32 %v2766, 2147483648
        %v2832 = vxor.u32 %v2769, 2147483648
        %v2833 = vxor.u32 %v2772, 2147483648
        %v2834 = vxor.u32 %v2775, 2147483648
        %v2835 = vxor.u32 %v2778, 2147483648
        %v2836 = vxor.u32 %v2781, 2147483648
        %v2837 = vxor.u32 %v2784, 2147483648
        %v2838 = vxor.u32 %v2787, 2147483648
        %v2839 = vxor.u32 %v2790, 2147483648
        %v2840 = vxor.u32 %v2793, 2147483648
        %v2841 = vxor.u32 %v2796, 2147483648
        %v2842 = vxor.u32 %v2799, 2147483648
        %v2843 = vxor.u32 %v2802, 2147483648
        %v2844 = vxor.u32 %v2805, 2147483648
        %v2845 = vxor.u32 %v2808, 2147483648
        %v2846 = vxor.u32 %v2811, 2147483648
        %v2847 = vxor.u32 %v2814, 2147483648
        %v2848 = vmul.f32 %v2816, 1.442695
        %v2849 = vpow.pop %v2848
        %v2850 = vmul.f32 %v2817, 1.442695
        %v2851 = vpow.pop %v2850
        %v2852 = vmul.f32 %v2818, 1.442695
        %v2853 = vpow.pop %v2852
        %v2854 = vmul.f32 %v2819, 1.442695
        %v2855 = vpow.pop %v2854
        %v2856 = vmul.f32 %v2820, 1.442695
        %v2857 = vpow.pop %v2856
        %v2858 = vmul.f32 %v2821, 1.442695
        %v2859 = vpow.pop %v2858
        %v2860 = vmul.f32 %v2822, 1.442695
        %v2861 = vpow.pop %v2860
        %v2862 = vmul.f32 %v2823, 1.442695
        %v2863 = vpow.pop %v2862
        %v2864 = vmul.f32 %v2824, 1.442695
        %v2865 = vpow.pop %v2864
        %v2866 = vmul.f32 %v2825, 1.442695
        %v2867 = vpow.pop %v2866
        %v2868 = vmul.f32 %v2826, 1.442695
        %v2869 = vpow.pop %v2868
        %v2870 = vmul.f32 %v2827, 1.442695
        %v2871 = vpow.pop %v2870
        %v2872 = vmul.f32 %v2828, 1.442695
        %v2873 = vpow.pop %v2872
        %v2874 = vmul.f32 %v2829, 1.442695
        %v2875 = vpow.pop %v2874
        %v2876 = vmul.f32 %v2830, 1.442695
        %v2877 = vpow.pop %v2876
        %v2878 = vmul.f32 %v2831, 1.442695
        %v2879 = vpow.pop %v2878
        %v2880 = vmul.f32 %v2832, 1.442695
        %v2881 = vpow.pop %v2880
        %v2882 = vmul.f32 %v2833, 1.442695
        %v2883 = vpow.pop %v2882
        %v2884 = vmul.f32 %v2834, 1.442695
        %v2885 = vpow.pop %v2884
        %v2886 = vmul.f32 %v2835, 1.442695
        %v2887 = vpow.pop %v2886
        %v2888 = vmul.f32 %v2836, 1.442695
        %v2889 = vpow.pop %v2888
        %v2890 = vmul.f32 %v2837, 1.442695
        %v2891 = vpow.pop %v2890
        %v2892 = vmul.f32 %v2838, 1.442695
        %v2893 = vpow.pop %v2892
        %v2894 = vmul.f32 %v2839, 1.442695
        %v2895 = vpow.pop %v2894
        %v2896 = vmul.f32 %v2840, 1.442695
        %v2897 = vpow.pop %v2896
        %v2898 = vmul.f32 %v2841, 1.442695
        %v2899 = vpow.pop %v2898
        %v2900 = vmul.f32 %v2842, 1.442695
        %v2901 = vpow.pop %v2900
        %v2902 = vmul.f32 %v2843, 1.442695
        %v2903 = vpow.pop %v2902
        %v2904 = vmul.f32 %v2844, 1.442695
        %v2905 = vpow.pop %v2904
        %v2906 = vmul.f32 %v2845, 1.442695
        %v2907 = vpow.pop %v2906
        %v2908 = vmul.f32 %v2846, 1.442695
        %v2909 = vpow.pop %v2908
        %v2910 = vmul.f32 %v2847, 1.442695
        %v2911 = vpow.pop %v2910
        %v2912 = vadd.f32 %v2849, 1.0
        %v2913 = vadd.f32 %v2851, 1.0
        %v2914 = vadd.f32 %v2853, 1.0
        %v2915 = vadd.f32 %v2855, 1.0
        %v2916 = vadd.f32 %v2857, 1.0
        %v2917 = vadd.f32 %v2859, 1.0
        %v2918 = vadd.f32 %v2861, 1.0
        %v2919 = vadd.f32 %v2863, 1.0
        %v2920 = vadd.f32 %v2865, 1.0
        %v2921 = vadd.f32 %v2867, 1.0
        %v2922 = vadd.f32 %v2869, 1.0
        %v2923 = vadd.f32 %v2871, 1.0
        %v2924 = vadd.f32 %v2873, 1.0
        %v2925 = vadd.f32 %v2875, 1.0
        %v2926 = vadd.f32 %v2877, 1.0
        %v2927 = vadd.f32 %v2879, 1.0
        %v2928 = vadd.f32 %v2881, 1.0
        %v2929 = vadd.f32 %v2883, 1.0
        %v2930 = vadd.f32 %v2885, 1.0
        %v2931 = vadd.f32 %v2887, 1.0
        %v2932 = vadd.f32 %v2889, 1.0
        %v2933 = vadd.f32 %v2891, 1.0
        %v2934 = vadd.f32 %v2893, 1.0
        %v2935 = vadd.f32 %v2895, 1.0
        %v2936 = vadd.f32 %v2897, 1.0
        %v2937 = vadd.f32 %v2899, 1.0
        %v2938 = vadd.f32 %v2901, 1.0
        %v2939 = vadd.f32 %v2903, 1.0
        %v2940 = vadd.f32 %v2905, 1.0
        %v2941 = vadd.f32 %v2907, 1.0
        %v2942 = vadd.f32 %v2909, 1.0
        %v2943 = vadd.f32 %v2911, 1.0
        %v2944 = vrcp.pop %v2912
        %v2945 = vmul.f32 %v2912, %v2944
        %v2946 = vsub.f32 1.0, %v2945
        %v2947 = vmul.f32 %v2944, %v2946
        %v2948 = vadd.f32 %v2944, %v2947
        %vm2949 = vweird.f32 %v2912
        %vm2950 = vweird.f32 %v2944
        %vm2951 = vmor %vm2949, %vm2950
        %v2952 = vsel %vm2951, %v2944, %v2948
        %v2953 = vand.u32 2147483647, %v2912
        %vm2954 = vcmp.eq.f32.partialorder %v2953, 8.507059e+37
        %v2955 = vand.u32 %v2912, 2147483648
        %v2956 = vor.u32 1.1754944e-38, %v2955
        %v2957 = vsel %vm2954, %v2956, %v2952
        %v2958 = vmul.f32 1.0, %v2957
        %v2959 = vrcp.pop %v2913
        %v2960 = vmul.f32 %v2913, %v2959
        %v2961 = vsub.f32 1.0, %v2960
        %v2962 = vmul.f32 %v2959, %v2961
        %v2963 = vadd.f32 %v2959, %v2962
        %vm2964 = vweird.f32 %v2913
        %vm2965 = vweird.f32 %v2959
        %vm2966 = vmor %vm2964, %vm2965
        %v2967 = vsel %vm2966, %v2959, %v2963
        %v2968 = vand.u32 2147483647, %v2913
        %vm2969 = vcmp.eq.f32.partialorder %v2968, 8.507059e+37
        %v2970 = vand.u32 %v2913, 2147483648
        %v2971 = vor.u32 1.1754944e-38, %v2970
        %v2972 = vsel %vm2969, %v2971, %v2967
        %v2973 = vmul.f32 1.0, %v2972
        %v2974 = vrcp.pop %v2914
        %v2975 = vmul.f32 %v2914, %v2974
        %v2976 = vsub.f32 1.0, %v2975
        %v2977 = vmul.f32 %v2974, %v2976
        %v2978 = vadd.f32 %v2974, %v2977
        %vm2979 = vweird.f32 %v2914
        %vm2980 = vweird.f32 %v2974
        %vm2981 = vmor %vm2979, %vm2980
        %v2982 = vsel %vm2981, %v2974, %v2978
        %v2983 = vand.u32 2147483647, %v2914
        %vm2984 = vcmp.eq.f32.partialorder %v2983, 8.507059e+37
        %v2985 = vand.u32 %v2914, 2147483648
        %v2986 = vor.u32 1.1754944e-38, %v2985
        %v2987 = vsel %vm2984, %v2986, %v2982
        %v2988 = vmul.f32 1.0, %v2987
        %v2989 = vrcp.pop %v2915
        %v2990 = vmul.f32 %v2915, %v2989
        %v2991 = vsub.f32 1.0, %v2990
        %v2992 = vmul.f32 %v2989, %v2991
        %v2993 = vadd.f32 %v2989, %v2992
        %vm2994 = vweird.f32 %v2915
        %vm2995 = vweird.f32 %v2989
        %vm2996 = vmor %vm2994, %vm2995
        %v2997 = vsel %vm2996, %v2989, %v2993
        %v2998 = vand.u32 2147483647, %v2915
        %vm2999 = vcmp.eq.f32.partialorder %v2998, 8.507059e+37
        %v3000 = vand.u32 %v2915, 2147483648
        %v3001 = vor.u32 1.1754944e-38, %v3000
        %v3002 = vsel %vm2999, %v3001, %v2997
        %v3003 = vmul.f32 1.0, %v3002
        %v3004 = vrcp.pop %v2916
        %v3005 = vmul.f32 %v2916, %v3004
        %v3006 = vsub.f32 1.0, %v3005
        %v3007 = vmul.f32 %v3004, %v3006
        %v3008 = vadd.f32 %v3004, %v3007
        %vm3009 = vweird.f32 %v2916
        %vm3010 = vweird.f32 %v3004
        %vm3011 = vmor %vm3009, %vm3010
        %v3012 = vsel %vm3011, %v3004, %v3008
        %v3013 = vand.u32 2147483647, %v2916
        %vm3014 = vcmp.eq.f32.partialorder %v3013, 8.507059e+37
        %v3015 = vand.u32 %v2916, 2147483648
        %v3016 = vor.u32 1.1754944e-38, %v3015
        %v3017 = vsel %vm3014, %v3016, %v3012
        %v3018 = vmul.f32 1.0, %v3017
        %v3019 = vrcp.pop %v2917
        %v3020 = vmul.f32 %v2917, %v3019
        %v3021 = vsub.f32 1.0, %v3020
        %v3022 = vmul.f32 %v3019, %v3021
        %v3023 = vadd.f32 %v3019, %v3022
        %vm3024 = vweird.f32 %v2917
        %vm3025 = vweird.f32 %v3019
        %vm3026 = vmor %vm3024, %vm3025
        %v3027 = vsel %vm3026, %v3019, %v3023
        %v3028 = vand.u32 2147483647, %v2917
        %vm3029 = vcmp.eq.f32.partialorder %v3028, 8.507059e+37
        %v3030 = vand.u32 %v2917, 2147483648
        %v3031 = vor.u32 1.1754944e-38, %v3030
        %v3032 = vsel %vm3029, %v3031, %v3027
        %v3033 = vmul.f32 1.0, %v3032
        %v3034 = vrcp.pop %v2918
        %v3035 = vmul.f32 %v2918, %v3034
        %v3036 = vsub.f32 1.0, %v3035
        %v3037 = vmul.f32 %v3034, %v3036
        %v3038 = vadd.f32 %v3034, %v3037
        %vm3039 = vweird.f32 %v2918
        %vm3040 = vweird.f32 %v3034
        %vm3041 = vmor %vm3039, %vm3040
        %v3042 = vsel %vm3041, %v3034, %v3038
        %v3043 = vand.u32 2147483647, %v2918
        %vm3044 = vcmp.eq.f32.partialorder %v3043, 8.507059e+37
        %v3045 = vand.u32 %v2918, 2147483648
        %v3046 = vor.u32 1.1754944e-38, %v3045
        %v3047 = vsel %vm3044, %v3046, %v3042
        %v3048 = vmul.f32 1.0, %v3047
        %v3049 = vrcp.pop %v2919
        %v3050 = vmul.f32 %v2919, %v3049
        %v3051 = vsub.f32 1.0, %v3050
        %v3052 = vmul.f32 %v3049, %v3051
        %v3053 = vadd.f32 %v3049, %v3052
        %vm3054 = vweird.f32 %v2919
        %vm3055 = vweird.f32 %v3049
        %vm3056 = vmor %vm3054, %vm3055
        %v3057 = vsel %vm3056, %v3049, %v3053
        %v3058 = vand.u32 2147483647, %v2919
        %vm3059 = vcmp.eq.f32.partialorder %v3058, 8.507059e+37
        %v3060 = vand.u32 %v2919, 2147483648
        %v3061 = vor.u32 1.1754944e-38, %v3060
        %v3062 = vsel %vm3059, %v3061, %v3057
        %v3063 = vmul.f32 1.0, %v3062
        %v3064 = vrcp.pop %v2920
        %v3065 = vmul.f32 %v2920, %v3064
        %v3066 = vsub.f32 1.0, %v3065
        %v3067 = vmul.f32 %v3064, %v3066
        %v3068 = vadd.f32 %v3064, %v3067
        %vm3069 = vweird.f32 %v2920
        %vm3070 = vweird.f32 %v3064
        %vm3071 = vmor %vm3069, %vm3070
        %v3072 = vsel %vm3071, %v3064, %v3068
        %v3073 = vand.u32 2147483647, %v2920
        %vm3074 = vcmp.eq.f32.partialorder %v3073, 8.507059e+37
        %v3075 = vand.u32 %v2920, 2147483648
        %v3076 = vor.u32 1.1754944e-38, %v3075
        %v3077 = vsel %vm3074, %v3076, %v3072
        %v3078 = vmul.f32 1.0, %v3077
        %v3079 = vrcp.pop %v2921
        %v3080 = vmul.f32 %v2921, %v3079
        %v3081 = vsub.f32 1.0, %v3080
        %v3082 = vmul.f32 %v3079, %v3081
        %v3083 = vadd.f32 %v3079, %v3082
        %vm3084 = vweird.f32 %v2921
        %vm3085 = vweird.f32 %v3079
        %vm3086 = vmor %vm3084, %vm3085
        %v3087 = vsel %vm3086, %v3079, %v3083
        %v3088 = vand.u32 2147483647, %v2921
        %vm3089 = vcmp.eq.f32.partialorder %v3088, 8.507059e+37
        %v3090 = vand.u32 %v2921, 2147483648
        %v3091 = vor.u32 1.1754944e-38, %v3090
        %v3092 = vsel %vm3089, %v3091, %v3087
        %v3093 = vmul.f32 1.0, %v3092
        %v3094 = vrcp.pop %v2922
        %v3095 = vmul.f32 %v2922, %v3094
        %v3096 = vsub.f32 1.0, %v3095
        %v3097 = vmul.f32 %v3094, %v3096
        %v3098 = vadd.f32 %v3094, %v3097
        %vm3099 = vweird.f32 %v2922
        %vm3100 = vweird.f32 %v3094
        %vm3101 = vmor %vm3099, %vm3100
        %v3102 = vsel %vm3101, %v3094, %v3098
        %v3103 = vand.u32 2147483647, %v2922
        %vm3104 = vcmp.eq.f32.partialorder %v3103, 8.507059e+37
        %v3105 = vand.u32 %v2922, 2147483648
        %v3106 = vor.u32 1.1754944e-38, %v3105
        %v3107 = vsel %vm3104, %v3106, %v3102
        %v3108 = vmul.f32 1.0, %v3107
        %v3109 = vrcp.pop %v2923
        %v3110 = vmul.f32 %v2923, %v3109
        %v3111 = vsub.f32 1.0, %v3110
        %v3112 = vmul.f32 %v3109, %v3111
        %v3113 = vadd.f32 %v3109, %v3112
        %vm3114 = vweird.f32 %v2923
        %vm3115 = vweird.f32 %v3109
        %vm3116 = vmor %vm3114, %vm3115
        %v3117 = vsel %vm3116, %v3109, %v3113
        %v3118 = vand.u32 2147483647, %v2923
        %vm3119 = vcmp.eq.f32.partialorder %v3118, 8.507059e+37
        %v3120 = vand.u32 %v2923, 2147483648
        %v3121 = vor.u32 1.1754944e-38, %v3120
        %v3122 = vsel %vm3119, %v3121, %v3117
        %v3123 = vmul.f32 1.0, %v3122
        %v3124 = vrcp.pop %v2924
        %v3125 = vmul.f32 %v2924, %v3124
        %v3126 = vsub.f32 1.0, %v3125
        %v3127 = vmul.f32 %v3124, %v3126
        %v3128 = vadd.f32 %v3124, %v3127
        %vm3129 = vweird.f32 %v2924
        %vm3130 = vweird.f32 %v3124
        %vm3131 = vmor %vm3129, %vm3130
        %v3132 = vsel %vm3131, %v3124, %v3128
        %v3133 = vand.u32 2147483647, %v2924
        %vm3134 = vcmp.eq.f32.partialorder %v3133, 8.507059e+37
        %v3135 = vand.u32 %v2924, 2147483648
        %v3136 = vor.u32 1.1754944e-38, %v3135
        %v3137 = vsel %vm3134, %v3136, %v3132
        %v3138 = vmul.f32 1.0, %v3137
        %v3139 = vrcp.pop %v2925
        %v3140 = vmul.f32 %v2925, %v3139
        %v3141 = vsub.f32 1.0, %v3140
        %v3142 = vmul.f32 %v3139, %v3141
        %v3143 = vadd.f32 %v3139, %v3142
        %vm3144 = vweird.f32 %v2925
        %vm3145 = vweird.f32 %v3139
        %vm3146 = vmor %vm3144, %vm3145
        %v3147 = vsel %vm3146, %v3139, %v3143
        %v3148 = vand.u32 2147483647, %v2925
        %vm3149 = vcmp.eq.f32.partialorder %v3148, 8.507059e+37
        %v3150 = vand.u32 %v2925, 2147483648
        %v3151 = vor.u32 1.1754944e-38, %v3150
        %v3152 = vsel %vm3149, %v3151, %v3147
        %v3153 = vmul.f32 1.0, %v3152
        %v3154 = vrcp.pop %v2926
        %v3155 = vmul.f32 %v2926, %v3154
        %v3156 = vsub.f32 1.0, %v3155
        %v3157 = vmul.f32 %v3154, %v3156
        %v3158 = vadd.f32 %v3154, %v3157
        %vm3159 = vweird.f32 %v2926
        %vm3160 = vweird.f32 %v3154
        %vm3161 = vmor %vm3159, %vm3160
        %v3162 = vsel %vm3161, %v3154, %v3158
        %v3163 = vand.u32 2147483647, %v2926
        %vm3164 = vcmp.eq.f32.partialorder %v3163, 8.507059e+37
        %v3165 = vand.u32 %v2926, 2147483648
        %v3166 = vor.u32 1.1754944e-38, %v3165
        %v3167 = vsel %vm3164, %v3166, %v3162
        %v3168 = vmul.f32 1.0, %v3167
        %v3169 = vrcp.pop %v2927
        %v3170 = vmul.f32 %v2927, %v3169
        %v3171 = vsub.f32 1.0, %v3170
        %v3172 = vmul.f32 %v3169, %v3171
        %v3173 = vadd.f32 %v3169, %v3172
        %vm3174 = vweird.f32 %v2927
        %vm3175 = vweird.f32 %v3169
        %vm3176 = vmor %vm3174, %vm3175
        %v3177 = vsel %vm3176, %v3169, %v3173
        %v3178 = vand.u32 2147483647, %v2927
        %vm3179 = vcmp.eq.f32.partialorder %v3178, 8.507059e+37
        %v3180 = vand.u32 %v2927, 2147483648
        %v3181 = vor.u32 1.1754944e-38, %v3180
        %v3182 = vsel %vm3179, %v3181, %v3177
        %v3183 = vmul.f32 1.0, %v3182
        %v3184 = vrcp.pop %v2928
        %v3185 = vmul.f32 %v2928, %v3184
        %v3186 = vsub.f32 1.0, %v3185
        %v3187 = vmul.f32 %v3184, %v3186
        %v3188 = vadd.f32 %v3184, %v3187
        %vm3189 = vweird.f32 %v2928
        %vm3190 = vweird.f32 %v3184
        %vm3191 = vmor %vm3189, %vm3190
        %v3192 = vsel %vm3191, %v3184, %v3188
        %v3193 = vand.u32 2147483647, %v2928
        %vm3194 = vcmp.eq.f32.partialorder %v3193, 8.507059e+37
        %v3195 = vand.u32 %v2928, 2147483648
        %v3196 = vor.u32 1.1754944e-38, %v3195
        %v3197 = vsel %vm3194, %v3196, %v3192
        %v3198 = vmul.f32 1.0, %v3197
        %v3199 = vrcp.pop %v2929
        %v3200 = vmul.f32 %v2929, %v3199
        %v3201 = vsub.f32 1.0, %v3200
        %v3202 = vmul.f32 %v3199, %v3201
        %v3203 = vadd.f32 %v3199, %v3202
        %vm3204 = vweird.f32 %v2929
        %vm3205 = vweird.f32 %v3199
        %vm3206 = vmor %vm3204, %vm3205
        %v3207 = vsel %vm3206, %v3199, %v3203
        %v3208 = vand.u32 2147483647, %v2929
        %vm3209 = vcmp.eq.f32.partialorder %v3208, 8.507059e+37
        %v3210 = vand.u32 %v2929, 2147483648
        %v3211 = vor.u32 1.1754944e-38, %v3210
        %v3212 = vsel %vm3209, %v3211, %v3207
        %v3213 = vmul.f32 1.0, %v3212
        %v3214 = vrcp.pop %v2930
        %v3215 = vmul.f32 %v2930, %v3214
        %v3216 = vsub.f32 1.0, %v3215
        %v3217 = vmul.f32 %v3214, %v3216
        %v3218 = vadd.f32 %v3214, %v3217
        %vm3219 = vweird.f32 %v2930
        %vm3220 = vweird.f32 %v3214
        %vm3221 = vmor %vm3219, %vm3220
        %v3222 = vsel %vm3221, %v3214, %v3218
        %v3223 = vand.u32 2147483647, %v2930
        %vm3224 = vcmp.eq.f32.partialorder %v3223, 8.507059e+37
        %v3225 = vand.u32 %v2930, 2147483648
        %v3226 = vor.u32 1.1754944e-38, %v3225
        %v3227 = vsel %vm3224, %v3226, %v3222
        %v3228 = vmul.f32 1.0, %v3227
        %v3229 = vrcp.pop %v2931
        %v3230 = vmul.f32 %v2931, %v3229
        %v3231 = vsub.f32 1.0, %v3230
        %v3232 = vmul.f32 %v3229, %v3231
        %v3233 = vadd.f32 %v3229, %v3232
        %vm3234 = vweird.f32 %v2931
        %vm3235 = vweird.f32 %v3229
        %vm3236 = vmor %vm3234, %vm3235
        %v3237 = vsel %vm3236, %v3229, %v3233
        %v3238 = vand.u32 2147483647, %v2931
        %vm3239 = vcmp.eq.f32.partialorder %v3238, 8.507059e+37
        %v3240 = vand.u32 %v2931, 2147483648
        %v3241 = vor.u32 1.1754944e-38, %v3240
        %v3242 = vsel %vm3239, %v3241, %v3237
        %v3243 = vmul.f32 1.0, %v3242
        %v3244 = vrcp.pop %v2932
        %v3245 = vmul.f32 %v2932, %v3244
        %v3246 = vsub.f32 1.0, %v3245
        %v3247 = vmul.f32 %v3244, %v3246
        %v3248 = vadd.f32 %v3244, %v3247
        %vm3249 = vweird.f32 %v2932
        %vm3250 = vweird.f32 %v3244
        %vm3251 = vmor %vm3249, %vm3250
        %v3252 = vsel %vm3251, %v3244, %v3248
        %v3253 = vand.u32 2147483647, %v2932
        %vm3254 = vcmp.eq.f32.partialorder %v3253, 8.507059e+37
        %v3255 = vand.u32 %v2932, 2147483648
        %v3256 = vor.u32 1.1754944e-38, %v3255
        %v3257 = vsel %vm3254, %v3256, %v3252
        %v3258 = vmul.f32 1.0, %v3257
        %v3259 = vrcp.pop %v2933
        %v3260 = vmul.f32 %v2933, %v3259
        %v3261 = vsub.f32 1.0, %v3260
        %v3262 = vmul.f32 %v3259, %v3261
        %v3263 = vadd.f32 %v3259, %v3262
        %vm3264 = vweird.f32 %v2933
        %vm3265 = vweird.f32 %v3259
        %vm3266 = vmor %vm3264, %vm3265
        %v3267 = vsel %vm3266, %v3259, %v3263
        %v3268 = vand.u32 2147483647, %v2933
        %vm3269 = vcmp.eq.f32.partialorder %v3268, 8.507059e+37
        %v3270 = vand.u32 %v2933, 2147483648
        %v3271 = vor.u32 1.1754944e-38, %v3270
        %v3272 = vsel %vm3269, %v3271, %v3267
        %v3273 = vmul.f32 1.0, %v3272
        %v3274 = vrcp.pop %v2934
        %v3275 = vmul.f32 %v2934, %v3274
        %v3276 = vsub.f32 1.0, %v3275
        %v3277 = vmul.f32 %v3274, %v3276
        %v3278 = vadd.f32 %v3274, %v3277
        %vm3279 = vweird.f32 %v2934
        %vm3280 = vweird.f32 %v3274
        %vm3281 = vmor %vm3279, %vm3280
        %v3282 = vsel %vm3281, %v3274, %v3278
        %v3283 = vand.u32 2147483647, %v2934
        %vm3284 = vcmp.eq.f32.partialorder %v3283, 8.507059e+37
        %v3285 = vand.u32 %v2934, 2147483648
        %v3286 = vor.u32 1.1754944e-38, %v3285
        %v3287 = vsel %vm3284, %v3286, %v3282
        %v3288 = vmul.f32 1.0, %v3287
        %v3289 = vrcp.pop %v2935
        %v3290 = vmul.f32 %v2935, %v3289
        %v3291 = vsub.f32 1.0, %v3290
        %v3292 = vmul.f32 %v3289, %v3291
        %v3293 = vadd.f32 %v3289, %v3292
        %vm3294 = vweird.f32 %v2935
        %vm3295 = vweird.f32 %v3289
        %vm3296 = vmor %vm3294, %vm3295
        %v3297 = vsel %vm3296, %v3289, %v3293
        %v3298 = vand.u32 2147483647, %v2935
        %vm3299 = vcmp.eq.f32.partialorder %v3298, 8.507059e+37
        %v3300 = vand.u32 %v2935, 2147483648
        %v3301 = vor.u32 1.1754944e-38, %v3300
        %v3302 = vsel %vm3299, %v3301, %v3297
        %v3303 = vmul.f32 1.0, %v3302
        %v3304 = vrcp.pop %v2936
        %v3305 = vmul.f32 %v2936, %v3304
        %v3306 = vsub.f32 1.0, %v3305
        %v3307 = vmul.f32 %v3304, %v3306
        %v3308 = vadd.f32 %v3304, %v3307
        %vm3309 = vweird.f32 %v2936
        %vm3310 = vweird.f32 %v3304
        %vm3311 = vmor %vm3309, %vm3310
        %v3312 = vsel %vm3311, %v3304, %v3308
        %v3313 = vand.u32 2147483647, %v2936
        %vm3314 = vcmp.eq.f32.partialorder %v3313, 8.507059e+37
        %v3315 = vand.u32 %v2936, 2147483648
        %v3316 = vor.u32 1.1754944e-38, %v3315
        %v3317 = vsel %vm3314, %v3316, %v3312
        %v3318 = vmul.f32 1.0, %v3317
        %v3319 = vrcp.pop %v2937
        %v3320 = vmul.f32 %v2937, %v3319
        %v3321 = vsub.f32 1.0, %v3320
        %v3322 = vmul.f32 %v3319, %v3321
        %v3323 = vadd.f32 %v3319, %v3322
        %vm3324 = vweird.f32 %v2937
        %vm3325 = vweird.f32 %v3319
        %vm3326 = vmor %vm3324, %vm3325
        %v3327 = vsel %vm3326, %v3319, %v3323
        %v3328 = vand.u32 2147483647, %v2937
        %vm3329 = vcmp.eq.f32.partialorder %v3328, 8.507059e+37
        %v3330 = vand.u32 %v2937, 2147483648
        %v3331 = vor.u32 1.1754944e-38, %v3330
        %v3332 = vsel %vm3329, %v3331, %v3327
        %v3333 = vmul.f32 1.0, %v3332
        %v3334 = vrcp.pop %v2938
        %v3335 = vmul.f32 %v2938, %v3334
        %v3336 = vsub.f32 1.0, %v3335
        %v3337 = vmul.f32 %v3334, %v3336
        %v3338 = vadd.f32 %v3334, %v3337
        %vm3339 = vweird.f32 %v2938
        %vm3340 = vweird.f32 %v3334
        %vm3341 = vmor %vm3339, %vm3340
        %v3342 = vsel %vm3341, %v3334, %v3338
        %v3343 = vand.u32 2147483647, %v2938
        %vm3344 = vcmp.eq.f32.partialorder %v3343, 8.507059e+37
        %v3345 = vand.u32 %v2938, 2147483648
        %v3346 = vor.u32 1.1754944e-38, %v3345
        %v3347 = vsel %vm3344, %v3346, %v3342
        %v3348 = vmul.f32 1.0, %v3347
        %v3349 = vrcp.pop %v2939
        %v3350 = vmul.f32 %v2939, %v3349
        %v3351 = vsub.f32 1.0, %v3350
        %v3352 = vmul.f32 %v3349, %v3351
        %v3353 = vadd.f32 %v3349, %v3352
        %vm3354 = vweird.f32 %v2939
        %vm3355 = vweird.f32 %v3349
        %vm3356 = vmor %vm3354, %vm3355
        %v3357 = vsel %vm3356, %v3349, %v3353
        %v3358 = vand.u32 2147483647, %v2939
        %vm3359 = vcmp.eq.f32.partialorder %v3358, 8.507059e+37
        %v3360 = vand.u32 %v2939, 2147483648
        %v3361 = vor.u32 1.1754944e-38, %v3360
        %v3362 = vsel %vm3359, %v3361, %v3357
        %v3363 = vmul.f32 1.0, %v3362
        %v3364 = vrcp.pop %v2940
        %v3365 = vmul.f32 %v2940, %v3364
        %v3366 = vsub.f32 1.0, %v3365
        %v3367 = vmul.f32 %v3364, %v3366
        %v3368 = vadd.f32 %v3364, %v3367
        %vm3369 = vweird.f32 %v2940
        %vm3370 = vweird.f32 %v3364
        %vm3371 = vmor %vm3369, %vm3370
        %v3372 = vsel %vm3371, %v3364, %v3368
        %v3373 = vand.u32 2147483647, %v2940
        %vm3374 = vcmp.eq.f32.partialorder %v3373, 8.507059e+37
        %v3375 = vand.u32 %v2940, 2147483648
        %v3376 = vor.u32 1.1754944e-38, %v3375
        %v3377 = vsel %vm3374, %v3376, %v3372
        %v3378 = vmul.f32 1.0, %v3377
        %v3379 = vrcp.pop %v2941
        %v3380 = vmul.f32 %v2941, %v3379
        %v3381 = vsub.f32 1.0, %v3380
        %v3382 = vmul.f32 %v3379, %v3381
        %v3383 = vadd.f32 %v3379, %v3382
        %vm3384 = vweird.f32 %v2941
        %vm3385 = vweird.f32 %v3379
        %vm3386 = vmor %vm3384, %vm3385
        %v3387 = vsel %vm3386, %v3379, %v3383
        %v3388 = vand.u32 2147483647, %v2941
        %vm3389 = vcmp.eq.f32.partialorder %v3388, 8.507059e+37
        %v3390 = vand.u32 %v2941, 2147483648
        %v3391 = vor.u32 1.1754944e-38, %v3390
        %v3392 = vsel %vm3389, %v3391, %v3387
        %v3393 = vmul.f32 1.0, %v3392
        %v3394 = vrcp.pop %v2942
        %v3395 = vmul.f32 %v2942, %v3394
        %v3396 = vsub.f32 1.0, %v3395
        %v3397 = vmul.f32 %v3394, %v3396
        %v3398 = vadd.f32 %v3394, %v3397
        %vm3399 = vweird.f32 %v2942
        %vm3400 = vweird.f32 %v3394
        %vm3401 = vmor %vm3399, %vm3400
        %v3402 = vsel %vm3401, %v3394, %v3398
        %v3403 = vand.u32 2147483647, %v2942
        %vm3404 = vcmp.eq.f32.partialorder %v3403, 8.507059e+37
        %v3405 = vand.u32 %v2942, 2147483648
        %v3406 = vor.u32 1.1754944e-38, %v3405
        %v3407 = vsel %vm3404, %v3406, %v3402
        %v3408 = vmul.f32 1.0, %v3407
        %v3409 = vrcp.pop %v2943
        %v3410 = vmul.f32 %v2943, %v3409
        %v3411 = vsub.f32 1.0, %v3410
        %v3412 = vmul.f32 %v3409, %v3411
        %v3413 = vadd.f32 %v3409, %v3412
        %vm3414 = vweird.f32 %v2943
        %vm3415 = vweird.f32 %v3409
        %vm3416 = vmor %vm3414, %vm3415
        %v3417 = vsel %vm3416, %v3409, %v3413
        %v3418 = vand.u32 2147483647, %v2943
        %vm3419 = vcmp.eq.f32.partialorder %v3418, 8.507059e+37
        %v3420 = vand.u32 %v2943, 2147483648
        %v3421 = vor.u32 1.1754944e-38, %v3420
        %v3422 = vsel %vm3419, %v3421, %v3417
        %v3423 = vmul.f32 1.0, %v3422
        %v3424 = vmul.f32 %v2721, %v2958
        %v3425 = vmul.f32 %v2724, %v2973
        %v3426 = vmul.f32 %v2727, %v2988
        %v3427 = vmul.f32 %v2730, %v3003
        %v3428 = vmul.f32 %v2733, %v3018
        %v3429 = vmul.f32 %v2736, %v3033
        %v3430 = vmul.f32 %v2739, %v3048
        %v3431 = vmul.f32 %v2742, %v3063
        %v3432 = vmul.f32 %v2745, %v3078
        %v3433 = vmul.f32 %v2748, %v3093
        %v3434 = vmul.f32 %v2751, %v3108
        %v3435 = vmul.f32 %v2754, %v3123
        %v3436 = vmul.f32 %v2757, %v3138
        %v3437 = vmul.f32 %v2760, %v3153
        %v3438 = vmul.f32 %v2763, %v3168
        %v3439 = vmul.f32 %v2766, %v3183
        %v3440 = vmul.f32 %v2769, %v3198
        %v3441 = vmul.f32 %v2772, %v3213
        %v3442 = vmul.f32 %v2775, %v3228
        %v3443 = vmul.f32 %v2778, %v3243
        %v3444 = vmul.f32 %v2781, %v3258
        %v3445 = vmul.f32 %v2784, %v3273
        %v3446 = vmul.f32 %v2787, %v3288
        %v3447 = vmul.f32 %v2790, %v3303
        %v3448 = vmul.f32 %v2793, %v3318
        %v3449 = vmul.f32 %v2796, %v3333
        %v3450 = vmul.f32 %v2799, %v3348
        %v3451 = vmul.f32 %v2802, %v3363
        %v3452 = vmul.f32 %v2805, %v3378
        %v3453 = vmul.f32 %v2808, %v3393
        %v3454 = vmul.f32 %v2811, %v3408
        %v3455 = vmul.f32 %v2814, %v3423
        %v3456 = vadd.f32 %v3424, %v3425
        %v3457 = vrot.slane %v3456, 4
        %v3458 = vadd.f32 %v3456, %v3457
        %v3459 = vrot.slane %v3458, 2
        %v3460 = vadd.f32 %v3458, %v3459
        %v3461 = vrot.slane %v3460, 1
        %v3462 = vadd.f32 %v3460, %v3461
        %v3463 = vadd.f32 %v3426, %v3427
        %v3464 = vrot.slane %v3463, 4
        %v3465 = vadd.f32 %v3463, %v3464
        %v3466 = vrot.slane %v3465, 2
        %v3467 = vadd.f32 %v3465, %v3466
        %v3468 = vrot.slane %v3467, 1
        %v3469 = vadd.f32 %v3467, %v3468
        %v3470 = vadd.f32 %v3428, %v3429
        %v3471 = vrot.slane %v3470, 4
        %v3472 = vadd.f32 %v3470, %v3471
        %v3473 = vrot.slane %v3472, 2
        %v3474 = vadd.f32 %v3472, %v3473
        %v3475 = vrot.slane %v3474, 1
        %v3476 = vadd.f32 %v3474, %v3475
        %v3477 = vadd.f32 %v3430, %v3431
        %v3478 = vrot.slane %v3477, 4
        %v3479 = vadd.f32 %v3477, %v3478
        %v3480 = vrot.slane %v3479, 2
        %v3481 = vadd.f32 %v3479, %v3480
        %v3482 = vrot.slane %v3481, 1
        %v3483 = vadd.f32 %v3481, %v3482
        %v3484 = vadd.f32 %v3432, %v3433
        %v3485 = vrot.slane %v3484, 4
        %v3486 = vadd.f32 %v3484, %v3485
        %v3487 = vrot.slane %v3486, 2
        %v3488 = vadd.f32 %v3486, %v3487
        %v3489 = vrot.slane %v3488, 1
        %v3490 = vadd.f32 %v3488, %v3489
        %v3491 = vadd.f32 %v3434, %v3435
        %v3492 = vrot.slane %v3491, 4
        %v3493 = vadd.f32 %v3491, %v3492
        %v3494 = vrot.slane %v3493, 2
        %v3495 = vadd.f32 %v3493, %v3494
        %v3496 = vrot.slane %v3495, 1
        %v3497 = vadd.f32 %v3495, %v3496
        %v3498 = vadd.f32 %v3436, %v3437
        %v3499 = vrot.slane %v3498, 4
        %v3500 = vadd.f32 %v3498, %v3499
        %v3501 = vrot.slane %v3500, 2
        %v3502 = vadd.f32 %v3500, %v3501
        %v3503 = vrot.slane %v3502, 1
        %v3504 = vadd.f32 %v3502, %v3503
        %v3505 = vadd.f32 %v3438, %v3439
        %v3506 = vrot.slane %v3505, 4
        %v3507 = vadd.f32 %v3505, %v3506
        %v3508 = vrot.slane %v3507, 2
        %v3509 = vadd.f32 %v3507, %v3508
        %v3510 = vrot.slane %v3509, 1
        %v3511 = vadd.f32 %v3509, %v3510
        %v3512 = vadd.f32 %v3440, %v3441
        %v3513 = vrot.slane %v3512, 4
        %v3514 = vadd.f32 %v3512, %v3513
        %v3515 = vrot.slane %v3514, 2
        %v3516 = vadd.f32 %v3514, %v3515
        %v3517 = vrot.slane %v3516, 1
        %v3518 = vadd.f32 %v3516, %v3517
        %v3519 = vadd.f32 %v3442, %v3443
        %v3520 = vrot.slane %v3519, 4
        %v3521 = vadd.f32 %v3519, %v3520
        %v3522 = vrot.slane %v3521, 2
        %v3523 = vadd.f32 %v3521, %v3522
        %v3524 = vrot.slane %v3523, 1
        %v3525 = vadd.f32 %v3523, %v3524
        %v3526 = vadd.f32 %v3444, %v3445
        %v3527 = vrot.slane %v3526, 4
        %v3528 = vadd.f32 %v3526, %v3527
        %v3529 = vrot.slane %v3528, 2
        %v3530 = vadd.f32 %v3528, %v3529
        %v3531 = vrot.slane %v3530, 1
        %v3532 = vadd.f32 %v3530, %v3531
        %v3533 = vadd.f32 %v3446, %v3447
        %v3534 = vrot.slane %v3533, 4
        %v3535 = vadd.f32 %v3533, %v3534
        %v3536 = vrot.slane %v3535, 2
        %v3537 = vadd.f32 %v3535, %v3536
        %v3538 = vrot.slane %v3537, 1
        %v3539 = vadd.f32 %v3537, %v3538
        %v3540 = vadd.f32 %v3448, %v3449
        %v3541 = vrot.slane %v3540, 4
        %v3542 = vadd.f32 %v3540, %v3541
        %v3543 = vrot.slane %v3542, 2
        %v3544 = vadd.f32 %v3542, %v3543
        %v3545 = vrot.slane %v3544, 1
        %v3546 = vadd.f32 %v3544, %v3545
        %v3547 = vadd.f32 %v3450, %v3451
        %v3548 = vrot.slane %v3547, 4
        %v3549 = vadd.f32 %v3547, %v3548
        %v3550 = vrot.slane %v3549, 2
        %v3551 = vadd.f32 %v3549, %v3550
        %v3552 = vrot.slane %v3551, 1
        %v3553 = vadd.f32 %v3551, %v3552
        %v3554 = vadd.f32 %v3452, %v3453
        %v3555 = vrot.slane %v3554, 4
        %v3556 = vadd.f32 %v3554, %v3555
        %v3557 = vrot.slane %v3556, 2
        %v3558 = vadd.f32 %v3556, %v3557
        %v3559 = vrot.slane %v3558, 1
        %v3560 = vadd.f32 %v3558, %v3559
        %v3561 = vadd.f32 %v3454, %v3455
        %v3562 = vrot.slane %v3561, 4
        %v3563 = vadd.f32 %v3561, %v3562
        %v3564 = vrot.slane %v3563, 2
        %v3565 = vadd.f32 %v3563, %v3564
        %v3566 = vrot.slane %v3565, 1
        %v3567 = vadd.f32 %v3565, %v3566
        %v3584 = vsel %vm733, %v3469, %v3462
        %v3585 = vsel %vm736, %v3476, %v3584
        %v3586 = vsel %vm739, %v3483, %v3585
        %v3587 = vsel %vm742, %v3490, %v3586
        %v3588 = vsel %vm745, %v3497, %v3587
        %v3589 = vsel %vm748, %v3504, %v3588
        %vm3590 = vcmask 1047559
        %v3591 = vsel %vm3590, %v3511, %v3589
        %v3592 = vsel %vm733, %v3525, %v3518
        %v3593 = vsel %vm736, %v3532, %v3592
        %v3594 = vsel %vm739, %v3539, %v3593
        %v3595 = vsel %vm742, %v3546, %v3594
        %v3596 = vsel %vm745, %v3553, %v3595
        %v3597 = vsel %vm748, %v3560, %v3596
        %v3598 = vsel %vm3590, %v3567, %v3597
        %v3602 = vperm.slane %v536, 0
        %3604 = vmatpush.msra.mxu0 %v531
        %3605 = vmatpush.msra.mxu0 %v530
        %3606 = vmatpush.msra.mxu0 %v529
        %3607 = vmatpush.msra.mxu0 %v528
        %3608 = vmatpush.msra.mxu0 %v527
        %3609 = vmatpush.msra.mxu0 %v526
        %3610 = vmatpush.msra.mxu0 %v525
        %3611 = vmatpush.msra.mxu0 %v524
        %3612 = vmatpush.msra.mxu0 %v523
        %3613 = vmatpush.msra.mxu0 %v522
        %3614 = vmatpush.msra.mxu0 %v521
        %3615 = vmatpush.msra.mxu0 %v520
        %3616 = vmatpush.msra.mxu0 %v519
        %3617 = vmatpush.msra.mxu0 %v518
        %3618 = vmatpush.msra.mxu0 %v517
        %3619 = vmatpush.msra.mxu0 %v516
        %3620 = vmatmul.f32.gmra.mxu0 %v3591
        %v3621 = vpop.f32.mrf.mxu0
        %v3622 = vadd.f32 %v3602, %v3621
        %3623 = vmatmul.f32.gmra.mxu0 %v3598
        %v3624 = vpop.f32.mrf.mxu0
        %v3625 = vadd.f32 %v3602, %v3624
        %3626 = vdwg.mxu0
        %3627 = vmatpush.msra.mxu0 0.0
        %3628 = vmatpush.msra.mxu0 0.0
        %3629 = vmatpush.msra.mxu0 0.0
        %3630 = vmatpush.msra.mxu0 0.0
        %3631 = vmatpush.msra.mxu0 0.0
        %3632 = vmatpush.msra.mxu0 0.0
        %3633 = vmatpush.msra.mxu0 0.0
        %3634 = vmatpush.msra.mxu0 0.0
        %3635 = vmatpush.msra.mxu0 0.0
        %3636 = vmatpush.msra.mxu0 0.0
        %3637 = vmatpush.msra.mxu0 0.0
        %3638 = vmatpush.msra.mxu0 0.0
        %3639 = vmatpush.msra.mxu0 %v535
        %3640 = vmatpush.msra.mxu0 %v534
        %3641 = vmatpush.msra.mxu0 %v533
        %3642 = vmatpush.msra.mxu0 %v532
        %3643 = vmatmul.f32.gmra.mxu0 %v564
        %v3644 = vpop.f32.mrf.mxu0
        %v3645 = vadd.f32 %v3622, %v3644
        %3646 = vmatmul.f32.gmra.mxu0 %v567
        %v3647 = vpop.f32.mrf.mxu0
        %v3648 = vadd.f32 %v3625, %v3647
        %3649 = vdwg.mxu0
        %v3650 = vxor.u32 %v3645, 2147483648
        %v3651 = vxor.u32 %v3648, 2147483648
        %v3652 = vmul.f32 %v3650, 1.442695
        %v3653 = vpow.pop %v3652
        %v3654 = vmul.f32 %v3651, 1.442695
        %v3655 = vpow.pop %v3654
        %v3656 = vadd.f32 %v3653, 1.0
        %v3657 = vadd.f32 %v3655, 1.0
        %v3658 = vrcp.pop %v3656
        %v3659 = vmul.f32 %v3656, %v3658
        %v3660 = vsub.f32 1.0, %v3659
        %v3661 = vmul.f32 %v3658, %v3660
        %v3662 = vadd.f32 %v3658, %v3661
        %vm3663 = vweird.f32 %v3656
        %vm3664 = vweird.f32 %v3658
        %vm3665 = vmor %vm3663, %vm3664
        %v3666 = vsel %vm3665, %v3658, %v3662
        %v3667 = vand.u32 2147483647, %v3656
        %vm3668 = vcmp.eq.f32.partialorder %v3667, 8.507059e+37
        %v3669 = vand.u32 %v3656, 2147483648
        %v3670 = vor.u32 1.1754944e-38, %v3669
        %v3671 = vsel %vm3668, %v3670, %v3666
        %v3672 = vmul.f32 1.0, %v3671
        %v3673 = vrcp.pop %v3657
        %v3674 = vmul.f32 %v3657, %v3673
        %v3675 = vsub.f32 1.0, %v3674
        %v3676 = vmul.f32 %v3673, %v3675
        %v3677 = vadd.f32 %v3673, %v3676
        %vm3678 = vweird.f32 %v3657
        %vm3679 = vweird.f32 %v3673
        %vm3680 = vmor %vm3678, %vm3679
        %v3681 = vsel %vm3680, %v3673, %v3677
        %v3682 = vand.u32 2147483647, %v3657
        %vm3683 = vcmp.eq.f32.partialorder %v3682, 8.507059e+37
        %v3684 = vand.u32 %v3657, 2147483648
        %v3685 = vor.u32 1.1754944e-38, %v3684
        %v3686 = vsel %vm3683, %v3685, %v3681
        %v3687 = vmul.f32 1.0, %v3686
        %v3688 = vmul.f32 %v3645, %v3672
        %v3689 = vmul.f32 %v3648, %v3687
        %v3691 = vperm.slane %v553, 0
        %3693 = vmatpush.msra.mxu0 %v552
        %3694 = vmatpush.msra.mxu0 %v551
        %3695 = vmatpush.msra.mxu0 %v550
        %3696 = vmatpush.msra.mxu0 %v549
        %3697 = vmatpush.msra.mxu0 %v548
        %3698 = vmatpush.msra.mxu0 %v547
        %3699 = vmatpush.msra.mxu0 %v546
        %3700 = vmatpush.msra.mxu0 %v545
        %3701 = vmatpush.msra.mxu0 %v544
        %3702 = vmatpush.msra.mxu0 %v543
        %3703 = vmatpush.msra.mxu0 %v542
        %3704 = vmatpush.msra.mxu0 %v541
        %3705 = vmatpush.msra.mxu0 %v540
        %3706 = vmatpush.msra.mxu0 %v539
        %3707 = vmatpush.msra.mxu0 %v538
        %3708 = vmatpush.msra.mxu0 %v537
        %3709 = vmatmul.f32.gmra.mxu0 %v3688
        %v3710 = vpop.f32.mrf.mxu0
        %v3711 = vadd.f32 %v3691, %v3710
        %3712 = vmatmul.f32.gmra.mxu0 %v3689
        %v3713 = vpop.f32.mrf.mxu0
        %v3714 = vadd.f32 %v3691, %v3713
        %3715 = vdwg.mxu0
        %v3716 = vadd.f32 %v3711, %v463
        %v3717 = vadd.f32 %v3714, %v464
        %s3718 = scalar_lea.vmem [#allocation5], 128
        %v3719 = vld [vmem:[%s3718] sm:$0xff]
        %v3720 = vld [vmem:[%s3718 + $0x8] sm:$0xff]
        %v3721 = vld [vmem:[%s3718 + $0x10] sm:$0xff]
        %v3722 = vld [vmem:[%s3718 + $0x18] sm:$0xff]
        %v3723 = vld [vmem:[%s3718 + $0x20] sm:$0xff]
        %v3724 = vld [vmem:[%s3718 + $0x28] sm:$0xff]
        %v3725 = vld [vmem:[%s3718 + $0x30] sm:$0xff]
        %v3726 = vld [vmem:[%s3718 + $0x38] sm:$0xff]
        %v3727 = vld [vmem:[%s3718 + $0x40] sm:$0xff]
        %v3728 = vld [vmem:[%s3718 + $0x48] sm:$0xff]
        %v3729 = vld [vmem:[%s3718 + $0x50] sm:$0xff]
        %v3730 = vld [vmem:[%s3718 + $0x58] sm:$0xff]
        %v3731 = vld [vmem:[%s3718 + $0x60] sm:$0xff]
        %v3732 = vld [vmem:[%s3718 + $0x68] sm:$0xff]
        %v3733 = vld [vmem:[%s3718 + $0x70] sm:$0xff]
        %v3734 = vld [vmem:[%s3718 + $0x78] sm:$0xff]
        %s3735 = scalar_lea.vmem %s2, 2
        %v3736 = vld [vmem:[%s3735] sm:$0x3]
        %s3737 = scalar_lea.vmem [#allocation7], 2
        %v3738 = vld [vmem:[%s3737] sm:$0x3]
        %s3739 = scalar_lea.vmem [#allocation8], 256
        %v3740 = vld [vmem:[%s3739] sm:$0xff]
        %v3741 = vld [vmem:[%s3739 + $0x8] sm:$0xff]
        %v3742 = vld [vmem:[%s3739 + $0x10] sm:$0xff]
        %v3743 = vld [vmem:[%s3739 + $0x18] sm:$0xff]
        %v3744 = vld [vmem:[%s3739 + $0x20] sm:$0xff]
        %v3745 = vld [vmem:[%s3739 + $0x28] sm:$0xff]
        %v3746 = vld [vmem:[%s3739 + $0x30] sm:$0xff]
        %v3747 = vld [vmem:[%s3739 + $0x38] sm:$0xff]
        %v3748 = vld [vmem:[%s3739 + $0x40] sm:$0xff]
        %v3749 = vld [vmem:[%s3739 + $0x48] sm:$0xff]
        %v3750 = vld [vmem:[%s3739 + $0x50] sm:$0xff]
        %v3751 = vld [vmem:[%s3739 + $0x58] sm:$0xff]
        %v3752 = vld [vmem:[%s3739 + $0x60] sm:$0xff]
        %v3753 = vld [vmem:[%s3739 + $0x68] sm:$0xff]
        %v3754 = vld [vmem:[%s3739 + $0x70] sm:$0xff]
        %v3755 = vld [vmem:[%s3739 + $0x78] sm:$0xff]
        %v3756 = vld [vmem:[%s3739 + $0x80] sm:$0xff]
        %v3757 = vld [vmem:[%s3739 + $0x88] sm:$0xff]
        %v3758 = vld [vmem:[%s3739 + $0x90] sm:$0xff]
        %v3759 = vld [vmem:[%s3739 + $0x98] sm:$0xff]
        %v3760 = vld [vmem:[%s3739 + $0xa0] sm:$0xff]
        %v3761 = vld [vmem:[%s3739 + $0xa8] sm:$0xff]
        %v3762 = vld [vmem:[%s3739 + $0xb0] sm:$0xff]
        %v3763 = vld [vmem:[%s3739 + $0xb8] sm:$0xff]
        %v3764 = vld [vmem:[%s3739 + $0xc0] sm:$0xff]
        %v3765 = vld [vmem:[%s3739 + $0xc8] sm:$0xff]
        %v3766 = vld [vmem:[%s3739 + $0xd0] sm:$0xff]
        %v3767 = vld [vmem:[%s3739 + $0xd8] sm:$0xff]
        %v3768 = vld [vmem:[%s3739 + $0xe0] sm:$0xff]
        %v3769 = vld [vmem:[%s3739 + $0xe8] sm:$0xff]
        %v3770 = vld [vmem:[%s3739 + $0xf0] sm:$0xff]
        %v3771 = vld [vmem:[%s3739 + $0xf8] sm:$0xff]
        %s3772 = scalar_lea.vmem [#allocation10], 1
        %v3773 = vld [vmem:[%s3772] sm:$0x1]
        %s3774 = scalar_lea.vmem %s6, 160
        %v3775 = vld [vmem:[%s3774] sm:$0xff]
        %v3776 = vld [vmem:[%s3774 + $0x8] sm:$0xff]
        %v3777 = vld [vmem:[%s3774 + $0x10] sm:$0xff]
        %v3778 = vld [vmem:[%s3774 + $0x18] sm:$0xff]
        %v3779 = vld [vmem:[%s3774 + $0x20] sm:$0xff]
        %v3780 = vld [vmem:[%s3774 + $0x28] sm:$0xff]
        %v3781 = vld [vmem:[%s3774 + $0x30] sm:$0xff]
        %v3782 = vld [vmem:[%s3774 + $0x38] sm:$0xff]
        %v3783 = vld [vmem:[%s3774 + $0x40] sm:$0xff]
        %v3784 = vld [vmem:[%s3774 + $0x48] sm:$0xff]
        %v3785 = vld [vmem:[%s3774 + $0x50] sm:$0xff]
        %v3786 = vld [vmem:[%s3774 + $0x58] sm:$0xff]
        %v3787 = vld [vmem:[%s3774 + $0x60] sm:$0xff]
        %v3788 = vld [vmem:[%s3774 + $0x68] sm:$0xff]
        %v3789 = vld [vmem:[%s3774 + $0x70] sm:$0xff]
        %v3790 = vld [vmem:[%s3774 + $0x78] sm:$0xff]
        %v3791 = vld [vmem:[%s3774 + $0x80] sm:$0xff]
        %v3792 = vld [vmem:[%s3774 + $0x88] sm:$0xff]
        %v3793 = vld [vmem:[%s3774 + $0x90] sm:$0xff]
        %v3794 = vld [vmem:[%s3774 + $0x98] sm:$0xff]
        %s3795 = scalar_lea.vmem [#allocation11], 1
        %v3796 = vld [vmem:[%s3795] sm:$0x1]
        %s3797 = scalar_lea.vmem %s8, 128
        %v3798 = vld [vmem:[%s3797] sm:$0xff]
        %v3799 = vld [vmem:[%s3797 + $0x8] sm:$0xff]
        %v3800 = vld [vmem:[%s3797 + $0x10] sm:$0xff]
        %v3801 = vld [vmem:[%s3797 + $0x18] sm:$0xff]
        %v3802 = vld [vmem:[%s3797 + $0x20] sm:$0xff]
        %v3803 = vld [vmem:[%s3797 + $0x28] sm:$0xff]
        %v3804 = vld [vmem:[%s3797 + $0x30] sm:$0xff]
        %v3805 = vld [vmem:[%s3797 + $0x38] sm:$0xff]
        %v3806 = vld [vmem:[%s3797 + $0x40] sm:$0xff]
        %v3807 = vld [vmem:[%s3797 + $0x48] sm:$0xff]
        %v3808 = vld [vmem:[%s3797 + $0x50] sm:$0xff]
        %v3809 = vld [vmem:[%s3797 + $0x58] sm:$0xff]
        %v3810 = vld [vmem:[%s3797 + $0x60] sm:$0xff]
        %v3811 = vld [vmem:[%s3797 + $0x68] sm:$0xff]
        %v3812 = vld [vmem:[%s3797 + $0x70] sm:$0xff]
        %v3813 = vld [vmem:[%s3797 + $0x78] sm:$0xff]
        %s3814 = scalar_lea.vmem %s9, 1
        %v3815 = vld [vmem:[%s3814] sm:$0x1]
        %v3816 = vmul.f32 %v3716, %v3716
        %v3817 = vmul.f32 %v3717, %v3717
        %v3818 = vsel %vm556, %v3816, 0.0
        %3819 = vadd.xlane.f32.xlu0 %v3818
        %v3820 = vpop.xlane.xlu0 %3819
        %v3821 = vsel %vm556, %v3817, 0.0
        %3822 = vadd.xlane.f32.xlu0 %v3821
        %v3823 = vpop.xlane.xlu0 %3822
        %v3825 = vsel %vm556, %v3716, 0
        %v3828 = vsel %vm556, %v3717, 0
        %3830 = vmatpush.xpose.msra.mxu0 0.0
        %3831 = vmatpush.xpose.msra.mxu0 0.0
        %3832 = vmatpush.xpose.msra.mxu0 0.0
        %3833 = vmatpush.xpose.msra.mxu0 0.0
        %3834 = vmatpush.xpose.msra.mxu0 0.0
        %3835 = vmatpush.xpose.msra.mxu0 0.0
        %3836 = vmatpush.xpose.msra.mxu0 0.0
        %3837 = vmatpush.xpose.msra.mxu0 0.0
        %3838 = vmatpush.xpose.msra.mxu0 0.0
        %3839 = vmatpush.xpose.msra.mxu0 0.0
        %3840 = vmatpush.xpose.msra.mxu0 0.0
        %3841 = vmatpush.xpose.msra.mxu0 0.0
        %3842 = vmatpush.xpose.msra.mxu0 0.0
        %3843 = vmatpush.xpose.msra.mxu0 0.0
        %3844 = vmatpush.xpose.msra.mxu0 %v3828
        %3845 = vmatpush.xpose.msra.mxu0 %v3825
        %3846 = vmatmul.f32.gmra.mxu0 %v3825
        %v3847 = vpop.f32.mrf.mxu0
        %v3848 = vadd.f32 0.0, %v3847
        %3849 = vmatmul.f32.gmra.mxu0 %v3828
        %v3850 = vpop.f32.mrf.mxu0
        %v3851 = vadd.f32 0.0, %v3850
        %3852 = vdwg.mxu0
        %3853 = vxpose.xlu0.b32.start [1/16] %v3820, 128
        %3854 = vxpose.xlu0.b32.cont [2/16] %v3823, 128
        %3855 = vxpose.xlu0.b32.cont [3/16] 0.0, 128
        %3856 = vxpose.xlu0.b32.cont [4/16] 0.0, 128
        %3857 = vxpose.xlu0.b32.cont [5/16] 0.0, 128
        %3858 = vxpose.xlu0.b32.cont [6/16] 0.0, 128
        %3859 = vxpose.xlu0.b32.cont [7/16] 0.0, 128
        %3860 = vxpose.xlu0.b32.cont [8/16] 0.0, 128
        %3861 = vxpose.xlu0.b32.cont [9/16] 0.0, 128
        %3862 = vxpose.xlu0.b32.cont [10/16] 0.0, 128
        %3863 = vxpose.xlu0.b32.cont [11/16] 0.0, 128
        %3864 = vxpose.xlu0.b32.cont [12/16] 0.0, 128
        %3865 = vxpose.xlu0.b32.cont [13/16] 0.0, 128
        %3866 = vxpose.xlu0.b32.cont [14/16] 0.0, 128
        %3867 = vxpose.xlu0.b32.cont [15/16] 0.0, 128
        %3868 = vxpose.xlu0.b32.end [16/16] 0.0, 128
        %v3869 = vpop.trf.xlu0
        %v3870 = vpop.trf.xlu0
        %v3871 = vpop.trf.xlu0
        %v3872 = vpop.trf.xlu0
        %v3873 = vpop.trf.xlu0
        %v3874 = vpop.trf.xlu0
        %v3875 = vpop.trf.xlu0
        %v3876 = vpop.trf.xlu0
        %v3877 = vpop.trf.xlu0
        %v3878 = vpop.trf.xlu0
        %v3879 = vpop.trf.xlu0
        %v3880 = vpop.trf.xlu0
        %v3881 = vpop.trf.xlu0
        %v3882 = vpop.trf.xlu0
        %v3883 = vpop.trf.xlu0
        %v3884 = vpop.trf.xlu0
        %v3885 = vperm.slane %v3869, 0
        %v3886 = vadd.f32 %v3820, %v3885
        %v3887 = vadd.f32 %v3823, %v3885
        %v3888 = vmul.f32 %v3848, 2.0
        %v3889 = vmul.f32 %v3851, 2.0
        %v3890 = vsub.f32 %v3886, %v3888
        %v3891 = vsub.f32 %v3887, %v3889
        %v3892 = vmax.f32 %v3890, 0.0
        %v3893 = vmax.f32 %v3891, 0.0
        %3894 = vmatpush.msra.mxu0 0.0
        %3895 = vmatpush.msra.mxu0 0.0
        %3896 = vmatpush.msra.mxu0 0.0
        %3897 = vmatpush.msra.mxu0 0.0
        %3898 = vmatpush.msra.mxu0 0.0
        %3899 = vmatpush.msra.mxu0 0.0
        %3900 = vmatpush.msra.mxu0 0.0
        %3901 = vmatpush.msra.mxu0 0.0
        %3902 = vmatpush.msra.mxu0 0.0
        %3903 = vmatpush.msra.mxu0 0.0
        %3904 = vmatpush.msra.mxu0 0.0
        %3905 = vmatpush.msra.mxu0 0.0
        %3906 = vmatpush.msra.mxu0 %v3731
        %3907 = vmatpush.msra.mxu0 %v3727
        %3908 = vmatpush.msra.mxu0 %v3723
        %3909 = vmatpush.msra.mxu0 %v3719
        %3910 = vmatmul.f32.gmra.mxu0 %v3825
        %v3911 = vpop.f32.mrf.mxu0
        %v3912 = vadd.f32 0.0, %v3911
        %3913 = vmatmul.f32.gmra.mxu0 %v3828
        %v3914 = vpop.f32.mrf.mxu0
        %v3915 = vadd.f32 0.0, %v3914
        %3916 = vdwg.mxu0
        %3917 = vmatpush.msra.mxu0 0.0
        %3918 = vmatpush.msra.mxu0 0.0
        %3919 = vmatpush.msra.mxu0 0.0
        %3920 = vmatpush.msra.mxu0 0.0
        %3921 = vmatpush.msra.mxu0 0.0
        %3922 = vmatpush.msra.mxu0 0.0
        %3923 = vmatpush.msra.mxu0 0.0
        %3924 = vmatpush.msra.mxu0 0.0
        %3925 = vmatpush.msra.mxu0 0.0
        %3926 = vmatpush.msra.mxu0 0.0
        %3927 = vmatpush.msra.mxu0 0.0
        %3928 = vmatpush.msra.mxu0 0.0
        %3929 = vmatpush.msra.mxu0 %v3732
        %3930 = vmatpush.msra.mxu0 %v3728
        %3931 = vmatpush.msra.mxu0 %v3724
        %3932 = vmatpush.msra.mxu0 %v3720
        %3933 = vmatmul.f32.gmra.mxu0 %v3825
        %v3934 = vpop.f32.mrf.mxu0
        %v3935 = vadd.f32 0.0, %v3934
        %3936 = vmatmul.f32.gmra.mxu0 %v3828
        %v3937 = vpop.f32.mrf.mxu0
        %v3938 = vadd.f32 0.0, %v3937
        %3939 = vdwg.mxu0
        %3940 = vmatpush.msra.mxu0 0.0
        %3941 = vmatpush.msra.mxu0 0.0
        %3942 = vmatpush.msra.mxu0 0.0
        %3943 = vmatpush.msra.mxu0 0.0
        %3944 = vmatpush.msra.mxu0 0.0
        %3945 = vmatpush.msra.mxu0 0.0
        %3946 = vmatpush.msra.mxu0 0.0
        %3947 = vmatpush.msra.mxu0 0.0
        %3948 = vmatpush.msra.mxu0 0.0
        %3949 = vmatpush.msra.mxu0 0.0
        %3950 = vmatpush.msra.mxu0 0.0
        %3951 = vmatpush.msra.mxu0 0.0
        %3952 = vmatpush.msra.mxu0 %v3733
        %3953 = vmatpush.msra.mxu0 %v3729
        %3954 = vmatpush.msra.mxu0 %v3725
        %3955 = vmatpush.msra.mxu0 %v3721
        %3956 = vmatmul.f32.gmra.mxu0 %v3825
        %v3957 = vpop.f32.mrf.mxu0
        %v3958 = vadd.f32 0.0, %v3957
        %3959 = vmatmul.f32.gmra.mxu0 %v3828
        %v3960 = vpop.f32.mrf.mxu0
        %v3961 = vadd.f32 0.0, %v3960
        %3962 = vdwg.mxu0
        %3963 = vmatpush.msra.mxu0 0.0
        %3964 = vmatpush.msra.mxu0 0.0
        %3965 = vmatpush.msra.mxu0 0.0
        %3966 = vmatpush.msra.mxu0 0.0
        %3967 = vmatpush.msra.mxu0 0.0
        %3968 = vmatpush.msra.mxu0 0.0
        %3969 = vmatpush.msra.mxu0 0.0
        %3970 = vmatpush.msra.mxu0 0.0
        %3971 = vmatpush.msra.mxu0 0.0
        %3972 = vmatpush.msra.mxu0 0.0
        %3973 = vmatpush.msra.mxu0 0.0
        %3974 = vmatpush.msra.mxu0 0.0
        %3975 = vmatpush.msra.mxu0 %v3734
        %3976 = vmatpush.msra.mxu0 %v3730
        %3977 = vmatpush.msra.mxu0 %v3726
        %3978 = vmatpush.msra.mxu0 %v3722
        %3979 = vmatmul.f32.gmra.mxu0 %v3825
        %v3980 = vpop.f32.mrf.mxu0
        %v3981 = vadd.f32 0.0, %v3980
        %3982 = vmatmul.f32.gmra.mxu0 %v3828
        %v3983 = vpop.f32.mrf.mxu0
        %v3984 = vadd.f32 0.0, %v3983
        %3985 = vdwg.mxu0
        %v3990 = vrot.slane %v3935, 7
        %v3991 = vrot.slane %v3938, 7
        %v3992 = vsel %vm731, %v3912, %v3990
        %v3993 = vsel %vm733, %v3912, %v3990
        %v3994 = vrot.slane %v3993, 1
        %v3995 = vsel %vm736, %v3912, %v3990
        %v3996 = vrot.slane %v3995, 2
        %v3997 = vsel %vm739, %v3912, %v3990
        %v3998 = vrot.slane %v3997, 3
        %v3999 = vsel %vm742, %v3912, %v3990
        %v4000 = vrot.slane %v3999, 4
        %v4001 = vsel %vm745, %v3912, %v3990
        %v4002 = vrot.slane %v4001, 5
        %v4003 = vsel %vm748, %v3912, %v3990
        %v4004 = vrot.slane %v4003, 6
        %v4005 = vsel %vm751, %v3990, %v3912
        %v4006 = vrot.slane %v4005, 7
        %v4007 = vsel %vm731, %v3915, %v3991
        %v4008 = vsel %vm733, %v3915, %v3991
        %v4009 = vrot.slane %v4008, 1
        %v4010 = vsel %vm736, %v3915, %v3991
        %v4011 = vrot.slane %v4010, 2
        %v4012 = vsel %vm739, %v3915, %v3991
        %v4013 = vrot.slane %v4012, 3
        %v4014 = vsel %vm742, %v3915, %v3991
        %v4015 = vrot.slane %v4014, 4
        %v4016 = vsel %vm745, %v3915, %v3991
        %v4017 = vrot.slane %v4016, 5
        %v4018 = vsel %vm748, %v3915, %v3991
        %v4019 = vrot.slane %v4018, 6
        %v4020 = vsel %vm751, %v3991, %v3915
        %v4021 = vrot.slane %v4020, 7
        %v4022 = vperm.slane %v3992, 0
        %v4023 = vperm.slane %v3992, 1
        %v4024 = vperm.slane %v3994, 0
        %v4025 = vperm.slane %v3994, 1
        %v4026 = vperm.slane %v3996, 0
        %v4027 = vperm.slane %v3996, 1
        %v4028 = vperm.slane %v3998, 0
        %v4029 = vperm.slane %v3998, 1
        %v4030 = vperm.slane %v4000, 0
        %v4031 = vperm.slane %v4000, 1
        %v4032 = vperm.slane %v4002, 0
        %v4033 = vperm.slane %v4002, 1
        %v4034 = vperm.slane %v4004, 0
        %v4035 = vperm.slane %v4004, 1
        %v4036 = vperm.slane %v4006, 0
        %v4037 = vperm.slane %v4006, 1
        %v4038 = vperm.slane %v4007, 0
        %v4039 = vperm.slane %v4007, 1
        %v4040 = vperm.slane %v4009, 0
        %v4041 = vperm.slane %v4009, 1
        %v4042 = vperm.slane %v4011, 0
        %v4043 = vperm.slane %v4011, 1
        %v4044 = vperm.slane %v4013, 0
        %v4045 = vperm.slane %v4013, 1
        %v4046 = vperm.slane %v4015, 0
        %v4047 = vperm.slane %v4015, 1
        %v4048 = vperm.slane %v4017, 0
        %v4049 = vperm.slane %v4017, 1
        %v4050 = vperm.slane %v4019, 0
        %v4051 = vperm.slane %v4019, 1
        %v4052 = vperm.slane %v4021, 0
        %v4053 = vperm.slane %v4021, 1
        %v4086 = vadd.f32 %v4022, %v3958
        %v4087 = vadd.f32 %v4023, %v3981
        %v4088 = vadd.f32 %v4022, %v3961
        %v4089 = vadd.f32 %v4023, %v3984
        %v4090 = vadd.f32 %v4024, %v3958
        %v4091 = vadd.f32 %v4025, %v3981
        %v4092 = vadd.f32 %v4024, %v3961
        %v4093 = vadd.f32 %v4025, %v3984
        %v4094 = vadd.f32 %v4026, %v3958
        %v4095 = vadd.f32 %v4027, %v3981
        %v4096 = vadd.f32 %v4026, %v3961
        %v4097 = vadd.f32 %v4027, %v3984
        %v4098 = vadd.f32 %v4028, %v3958
        %v4099 = vadd.f32 %v4029, %v3981
        %v4100 = vadd.f32 %v4028, %v3961
        %v4101 = vadd.f32 %v4029, %v3984
        %v4102 = vadd.f32 %v4030, %v3958
        %v4103 = vadd.f32 %v4031, %v3981
        %v4104 = vadd.f32 %v4030, %v3961
        %v4105 = vadd.f32 %v4031, %v3984
        %v4106 = vadd.f32 %v4032, %v3958
        %v4107 = vadd.f32 %v4033, %v3981
        %v4108 = vadd.f32 %v4032, %v3961
        %v4109 = vadd.f32 %v4033, %v3984
        %v4110 = vadd.f32 %v4034, %v3958
        %v4111 = vadd.f32 %v4035, %v3981
        %v4112 = vadd.f32 %v4034, %v3961
        %v4113 = vadd.f32 %v4035, %v3984
        %v4114 = vadd.f32 %v4036, %v3958
        %v4115 = vadd.f32 %v4037, %v3981
        %v4116 = vadd.f32 %v4036, %v3961
        %v4117 = vadd.f32 %v4037, %v3984
        %v4118 = vadd.f32 %v4038, %v3958
        %v4119 = vadd.f32 %v4039, %v3981
        %v4120 = vadd.f32 %v4038, %v3961
        %v4121 = vadd.f32 %v4039, %v3984
        %v4122 = vadd.f32 %v4040, %v3958
        %v4123 = vadd.f32 %v4041, %v3981
        %v4124 = vadd.f32 %v4040, %v3961
        %v4125 = vadd.f32 %v4041, %v3984
        %v4126 = vadd.f32 %v4042, %v3958
        %v4127 = vadd.f32 %v4043, %v3981
        %v4128 = vadd.f32 %v4042, %v3961
        %v4129 = vadd.f32 %v4043, %v3984
        %v4130 = vadd.f32 %v4044, %v3958
        %v4131 = vadd.f32 %v4045, %v3981
        %v4132 = vadd.f32 %v4044, %v3961
        %v4133 = vadd.f32 %v4045, %v3984
        %v4134 = vadd.f32 %v4046, %v3958
        %v4135 = vadd.f32 %v4047, %v3981
        %v4136 = vadd.f32 %v4046, %v3961
        %v4137 = vadd.f32 %v4047, %v3984
        %v4138 = vadd.f32 %v4048, %v3958
        %v4139 = vadd.f32 %v4049, %v3981
        %v4140 = vadd.f32 %v4048, %v3961
        %v4141 = vadd.f32 %v4049, %v3984
        %v4142 = vadd.f32 %v4050, %v3958
        %v4143 = vadd.f32 %v4051, %v3981
        %v4144 = vadd.f32 %v4050, %v3961
        %v4145 = vadd.f32 %v4051, %v3984
        %v4146 = vadd.f32 %v4052, %v3958
        %v4147 = vadd.f32 %v4053, %v3981
        %v4148 = vadd.f32 %v4052, %v3961
        %v4149 = vadd.f32 %v4053, %v3984
        %v4150 = vperm.slane %v3892, 0
        %v4151 = vlaneseq
        %v4152 = vshrl.u32 %v4151, 7
        %4154 = vset.pattern.permute.xlu0 %v4152
        %4155 = vperm.xlu0 %4154, %v4150
        %v4156 = vpop.permute.xlu0 %4155
        %v4157 = vlaneseq
        %v4158 = vshrl.u32 %v4157, 7
        %v4159 = vadd.s32 %v4158, 8
        %4160 = vset.pattern.permute.xlu0 %v4159
        %4161 = vperm.xlu0 %4160, %v4150
        %v4162 = vpop.permute.xlu0 %4161
        %v4163 = vperm.slane %v3892, 1
        %v4164 = vlaneseq
        %v4165 = vshrl.u32 %v4164, 7
        %4167 = vset.pattern.permute.xlu0 %v4165
        %4168 = vperm.xlu0 %4167, %v4163
        %v4169 = vpop.permute.xlu0 %4168
        %v4170 = vlaneseq
        %v4171 = vshrl.u32 %v4170, 7
        %v4172 = vadd.s32 %v4171, 8
        %4173 = vset.pattern.permute.xlu0 %v4172
        %4174 = vperm.xlu0 %4173, %v4163
        %v4175 = vpop.permute.xlu0 %4174
        %v4176 = vperm.slane %v3892, 2
        %v4177 = vlaneseq
        %v4178 = vshrl.u32 %v4177, 7
        %4180 = vset.pattern.permute.xlu0 %v4178
        %4181 = vperm.xlu0 %4180, %v4176
        %v4182 = vpop.permute.xlu0 %4181
        %v4183 = vlaneseq
        %v4184 = vshrl.u32 %v4183, 7
        %v4185 = vadd.s32 %v4184, 8
        %4186 = vset.pattern.permute.xlu0 %v4185
        %4187 = vperm.xlu0 %4186, %v4176
        %v4188 = vpop.permute.xlu0 %4187
        %v4189 = vperm.slane %v3892, 3
        %v4190 = vlaneseq
        %v4191 = vshrl.u32 %v4190, 7
        %4193 = vset.pattern.permute.xlu0 %v4191
        %4194 = vperm.xlu0 %4193, %v4189
        %v4195 = vpop.permute.xlu0 %4194
        %v4196 = vlaneseq
        %v4197 = vshrl.u32 %v4196, 7
        %v4198 = vadd.s32 %v4197, 8
        %4199 = vset.pattern.permute.xlu0 %v4198
        %4200 = vperm.xlu0 %4199, %v4189
        %v4201 = vpop.permute.xlu0 %4200
        %v4202 = vperm.slane %v3892, 4
        %v4203 = vlaneseq
        %v4204 = vshrl.u32 %v4203, 7
        %4206 = vset.pattern.permute.xlu0 %v4204
        %4207 = vperm.xlu0 %4206, %v4202
        %v4208 = vpop.permute.xlu0 %4207
        %v4209 = vlaneseq
        %v4210 = vshrl.u32 %v4209, 7
        %v4211 = vadd.s32 %v4210, 8
        %4212 = vset.pattern.permute.xlu0 %v4211
        %4213 = vperm.xlu0 %4212, %v4202
        %v4214 = vpop.permute.xlu0 %4213
        %v4215 = vperm.slane %v3892, 5
        %v4216 = vlaneseq
        %v4217 = vshrl.u32 %v4216, 7
        %4219 = vset.pattern.permute.xlu0 %v4217
        %4220 = vperm.xlu0 %4219, %v4215
        %v4221 = vpop.permute.xlu0 %4220
        %v4222 = vlaneseq
        %v4223 = vshrl.u32 %v4222, 7
        %v4224 = vadd.s32 %v4223, 8
        %4225 = vset.pattern.permute.xlu0 %v4224
        %4226 = vperm.xlu0 %4225, %v4215
        %v4227 = vpop.permute.xlu0 %4226
        %v4228 = vperm.slane %v3892, 6
        %v4229 = vlaneseq
        %v4230 = vshrl.u32 %v4229, 7
        %4232 = vset.pattern.permute.xlu0 %v4230
        %4233 = vperm.xlu0 %4232, %v4228
        %v4234 = vpop.permute.xlu0 %4233
        %v4235 = vlaneseq
        %v4236 = vshrl.u32 %v4235, 7
        %v4237 = vadd.s32 %v4236, 8
        %4238 = vset.pattern.permute.xlu0 %v4237
        %4239 = vperm.xlu0 %4238, %v4228
        %v4240 = vpop.permute.xlu0 %4239
        %v4241 = vperm.slane %v3892, 7
        %v4242 = vlaneseq
        %v4243 = vshrl.u32 %v4242, 7
        %4245 = vset.pattern.permute.xlu0 %v4243
        %4246 = vperm.xlu0 %4245, %v4241
        %v4247 = vpop.permute.xlu0 %4246
        %v4248 = vlaneseq
        %v4249 = vshrl.u32 %v4248, 7
        %v4250 = vadd.s32 %v4249, 8
        %4251 = vset.pattern.permute.xlu0 %v4250
        %4252 = vperm.xlu0 %4251, %v4241
        %v4253 = vpop.permute.xlu0 %4252
        %v4254 = vperm.slane %v3893, 0
        %v4255 = vlaneseq
        %v4256 = vshrl.u32 %v4255, 7
        %4258 = vset.pattern.permute.xlu0 %v4256
        %4259 = vperm.xlu0 %4258, %v4254
        %v4260 = vpop.permute.xlu0 %4259
        %v4261 = vlaneseq
        %v4262 = vshrl.u32 %v4261, 7
        %v4263 = vadd.s32 %v4262, 8
        %4264 = vset.pattern.permute.xlu0 %v4263
        %4265 = vperm.xlu0 %4264, %v4254
        %v4266 = vpop.permute.xlu0 %4265
        %v4267 = vperm.slane %v3893, 1
        %v4268 = vlaneseq
        %v4269 = vshrl.u32 %v4268, 7
        %4271 = vset.pattern.permute.xlu0 %v4269
        %4272 = vperm.xlu0 %4271, %v4267
        %v4273 = vpop.permute.xlu0 %4272
        %v4274 = vlaneseq
        %v4275 = vshrl.u32 %v4274, 7
        %v4276 = vadd.s32 %v4275, 8
        %4277 = vset.pattern.permute.xlu0 %v4276
        %4278 = vperm.xlu0 %4277, %v4267
        %v4279 = vpop.permute.xlu0 %4278
        %v4280 = vperm.slane %v3893, 2
        %v4281 = vlaneseq
        %v4282 = vshrl.u32 %v4281, 7
        %4284 = vset.pattern.permute.xlu0 %v4282
        %4285 = vperm.xlu0 %4284, %v4280
        %v4286 = vpop.permute.xlu0 %4285
        %v4287 = vlaneseq
        %v4288 = vshrl.u32 %v4287, 7
        %v4289 = vadd.s32 %v4288, 8
        %4290 = vset.pattern.permute.xlu0 %v4289
        %4291 = vperm.xlu0 %4290, %v4280
        %v4292 = vpop.permute.xlu0 %4291
        %v4293 = vperm.slane %v3893, 3
        %v4294 = vlaneseq
        %v4295 = vshrl.u32 %v4294, 7
        %4297 = vset.pattern.permute.xlu0 %v4295
        %4298 = vperm.xlu0 %4297, %v4293
        %v4299 = vpop.permute.xlu0 %4298
        %v4300 = vlaneseq
        %v4301 = vshrl.u32 %v4300, 7
        %v4302 = vadd.s32 %v4301, 8
        %4303 = vset.pattern.permute.xlu0 %v4302
        %4304 = vperm.xlu0 %4303, %v4293
        %v4305 = vpop.permute.xlu0 %4304
        %v4306 = vperm.slane %v3893, 4
        %v4307 = vlaneseq
        %v4308 = vshrl.u32 %v4307, 7
        %4310 = vset.pattern.permute.xlu0 %v4308
        %4311 = vperm.xlu0 %4310, %v4306
        %v4312 = vpop.permute.xlu0 %4311
        %v4313 = vlaneseq
        %v4314 = vshrl.u32 %v4313, 7
        %v4315 = vadd.s32 %v4314, 8
        %4316 = vset.pattern.permute.xlu0 %v4315
        %4317 = vperm.xlu0 %4316, %v4306
        %v4318 = vpop.permute.xlu0 %4317
        %v4319 = vperm.slane %v3893, 5
        %v4320 = vlaneseq
        %v4321 = vshrl.u32 %v4320, 7
        %4323 = vset.pattern.permute.xlu0 %v4321
        %4324 = vperm.xlu0 %4323, %v4319
        %v4325 = vpop.permute.xlu0 %4324
        %v4326 = vlaneseq
        %v4327 = vshrl.u32 %v4326, 7
        %v4328 = vadd.s32 %v4327, 8
        %4329 = vset.pattern.permute.xlu0 %v4328
        %4330 = vperm.xlu0 %4329, %v4319
        %v4331 = vpop.permute.xlu0 %4330
        %v4332 = vperm.slane %v3893, 6
        %v4333 = vlaneseq
        %v4334 = vshrl.u32 %v4333, 7
        %4336 = vset.pattern.permute.xlu0 %v4334
        %4337 = vperm.xlu0 %4336, %v4332
        %v4338 = vpop.permute.xlu0 %4337
        %v4339 = vlaneseq
        %v4340 = vshrl.u32 %v4339, 7
        %v4341 = vadd.s32 %v4340, 8
        %4342 = vset.pattern.permute.xlu0 %v4341
        %4343 = vperm.xlu0 %4342, %v4332
        %v4344 = vpop.permute.xlu0 %4343
        %v4345 = vperm.slane %v3893, 7
        %v4346 = vlaneseq
        %v4347 = vshrl.u32 %v4346, 7
        %4349 = vset.pattern.permute.xlu0 %v4347
        %4350 = vperm.xlu0 %4349, %v4345
        %v4351 = vpop.permute.xlu0 %4350
        %v4352 = vlaneseq
        %v4353 = vshrl.u32 %v4352, 7
        %v4354 = vadd.s32 %v4353, 8
        %4355 = vset.pattern.permute.xlu0 %v4354
        %4356 = vperm.xlu0 %4355, %v4345
        %v4357 = vpop.permute.xlu0 %4356
        %v4359 = vperm.slane %v3736, 0
        %v4360 = vperm.slane %v3736, 1
        %v4363 = vmul.f32 %v4156, %v4359
        %v4364 = vmul.f32 %v4156, %v4360
        %v4365 = vmul.f32 %v4162, %v4359
        %v4366 = vmul.f32 %v4162, %v4360
        %v4367 = vmul.f32 %v4169, %v4359
        %v4368 = vmul.f32 %v4169, %v4360
        %v4369 = vmul.f32 %v4175, %v4359
        %v4370 = vmul.f32 %v4175, %v4360
        %v4371 = vmul.f32 %v4182, %v4359
        %v4372 = vmul.f32 %v4182, %v4360
        %v4373 = vmul.f32 %v4188, %v4359
        %v4374 = vmul.f32 %v4188, %v4360
        %v4375 = vmul.f32 %v4195, %v4359
        %v4376 = vmul.f32 %v4195, %v4360
        %v4377 = vmul.f32 %v4201, %v4359
        %v4378 = vmul.f32 %v4201, %v4360
        %v4379 = vmul.f32 %v4208, %v4359
        %v4380 = vmul.f32 %v4208, %v4360
        %v4381 = vmul.f32 %v4214, %v4359
        %v4382 = vmul.f32 %v4214, %v4360
        %v4383 = vmul.f32 %v4221, %v4359
        %v4384 = vmul.f32 %v4221, %v4360
        %v4385 = vmul.f32 %v4227, %v4359
        %v4386 = vmul.f32 %v4227, %v4360
        %v4387 = vmul.f32 %v4234, %v4359
        %v4388 = vmul.f32 %v4234, %v4360
        %v4389 = vmul.f32 %v4240, %v4359
        %v4390 = vmul.f32 %v4240, %v4360
        %v4391 = vmul.f32 %v4247, %v4359
        %v4392 = vmul.f32 %v4247, %v4360
        %v4393 = vmul.f32 %v4253, %v4359
        %v4394 = vmul.f32 %v4253, %v4360
        %v4395 = vmul.f32 %v4260, %v4359
        %v4396 = vmul.f32 %v4260, %v4360
        %v4397 = vmul.f32 %v4266, %v4359
        %v4398 = vmul.f32 %v4266, %v4360
        %v4399 = vmul.f32 %v4273, %v4359
        %v4400 = vmul.f32 %v4273, %v4360
        %v4401 = vmul.f32 %v4279, %v4359
        %v4402 = vmul.f32 %v4279, %v4360
        %v4403 = vmul.f32 %v4286, %v4359
        %v4404 = vmul.f32 %v4286, %v4360
        %v4405 = vmul.f32 %v4292, %v4359
        %v4406 = vmul.f32 %v4292, %v4360
        %v4407 = vmul.f32 %v4299, %v4359
        %v4408 = vmul.f32 %v4299, %v4360
        %v4409 = vmul.f32 %v4305, %v4359
        %v4410 = vmul.f32 %v4305, %v4360
        %v4411 = vmul.f32 %v4312, %v4359
        %v4412 = vmul.f32 %v4312, %v4360
        %v4413 = vmul.f32 %v4318, %v4359
        %v4414 = vmul.f32 %v4318, %v4360
        %v4415 = vmul.f32 %v4325, %v4359
        %v4416 = vmul.f32 %v4325, %v4360
        %v4417 = vmul.f32 %v4331, %v4359
        %v4418 = vmul.f32 %v4331, %v4360
        %v4419 = vmul.f32 %v4338, %v4359
        %v4420 = vmul.f32 %v4338, %v4360
        %v4421 = vmul.f32 %v4344, %v4359
        %v4422 = vmul.f32 %v4344, %v4360
        %v4423 = vmul.f32 %v4351, %v4359
        %v4424 = vmul.f32 %v4351, %v4360
        %v4425 = vmul.f32 %v4357, %v4359
        %v4426 = vmul.f32 %v4357, %v4360
        %v4427 = vadd.f32 %v4086, %v4363
        %v4428 = vadd.f32 %v4087, %v4364
        %v4429 = vadd.f32 %v4088, %v4365
        %v4430 = vadd.f32 %v4089, %v4366
        %v4431 = vadd.f32 %v4090, %v4367
        %v4432 = vadd.f32 %v4091, %v4368
        %v4433 = vadd.f32 %v4092, %v4369
        %v4434 = vadd.f32 %v4093, %v4370
        %v4435 = vadd.f32 %v4094, %v4371
        %v4436 = vadd.f32 %v4095, %v4372
        %v4437 = vadd.f32 %v4096, %v4373
        %v4438 = vadd.f32 %v4097, %v4374
        %v4439 = vadd.f32 %v4098, %v4375
        %v4440 = vadd.f32 %v4099, %v4376
        %v4441 = vadd.f32 %v4100, %v4377
        %v4442 = vadd.f32 %v4101, %v4378
        %v4443 = vadd.f32 %v4102, %v4379
        %v4444 = vadd.f32 %v4103, %v4380
        %v4445 = vadd.f32 %v4104, %v4381
        %v4446 = vadd.f32 %v4105, %v4382
        %v4447 = vadd.f32 %v4106, %v4383
        %v4448 = vadd.f32 %v4107, %v4384
        %v4449 = vadd.f32 %v4108, %v4385
        %v4450 = vadd.f32 %v4109, %v4386
        %v4451 = vadd.f32 %v4110, %v4387
        %v4452 = vadd.f32 %v4111, %v4388
        %v4453 = vadd.f32 %v4112, %v4389
        %v4454 = vadd.f32 %v4113, %v4390
        %v4455 = vadd.f32 %v4114, %v4391
        %v4456 = vadd.f32 %v4115, %v4392
        %v4457 = vadd.f32 %v4116, %v4393
        %v4458 = vadd.f32 %v4117, %v4394
        %v4459 = vadd.f32 %v4118, %v4395
        %v4460 = vadd.f32 %v4119, %v4396
        %v4461 = vadd.f32 %v4120, %v4397
        %v4462 = vadd.f32 %v4121, %v4398
        %v4463 = vadd.f32 %v4122, %v4399
        %v4464 = vadd.f32 %v4123, %v4400
        %v4465 = vadd.f32 %v4124, %v4401
        %v4466 = vadd.f32 %v4125, %v4402
        %v4467 = vadd.f32 %v4126, %v4403
        %v4468 = vadd.f32 %v4127, %v4404
        %v4469 = vadd.f32 %v4128, %v4405
        %v4470 = vadd.f32 %v4129, %v4406
        %v4471 = vadd.f32 %v4130, %v4407
        %v4472 = vadd.f32 %v4131, %v4408
        %v4473 = vadd.f32 %v4132, %v4409
        %v4474 = vadd.f32 %v4133, %v4410
        %v4475 = vadd.f32 %v4134, %v4411
        %v4476 = vadd.f32 %v4135, %v4412
        %v4477 = vadd.f32 %v4136, %v4413
        %v4478 = vadd.f32 %v4137, %v4414
        %v4479 = vadd.f32 %v4138, %v4415
        %v4480 = vadd.f32 %v4139, %v4416
        %v4481 = vadd.f32 %v4140, %v4417
        %v4482 = vadd.f32 %v4141, %v4418
        %v4483 = vadd.f32 %v4142, %v4419
        %v4484 = vadd.f32 %v4143, %v4420
        %v4485 = vadd.f32 %v4144, %v4421
        %v4486 = vadd.f32 %v4145, %v4422
        %v4487 = vadd.f32 %v4146, %v4423
        %v4488 = vadd.f32 %v4147, %v4424
        %v4489 = vadd.f32 %v4148, %v4425
        %v4490 = vadd.f32 %v4149, %v4426
        %v4492 = vperm.slane %v3738, 0
        %v4493 = vperm.slane %v3738, 1
        %v4496 = vadd.f32 %v4427, %v4492
        %v4497 = vadd.f32 %v4428, %v4493
        %v4498 = vadd.f32 %v4429, %v4492
        %v4499 = vadd.f32 %v4430, %v4493
        %v4500 = vadd.f32 %v4431, %v4492
        %v4501 = vadd.f32 %v4432, %v4493
        %v4502 = vadd.f32 %v4433, %v4492
        %v4503 = vadd.f32 %v4434, %v4493
        %v4504 = vadd.f32 %v4435, %v4492
        %v4505 = vadd.f32 %v4436, %v4493
        %v4506 = vadd.f32 %v4437, %v4492
        %v4507 = vadd.f32 %v4438, %v4493
        %v4508 = vadd.f32 %v4439, %v4492
        %v4509 = vadd.f32 %v4440, %v4493
        %v4510 = vadd.f32 %v4441, %v4492
        %v4511 = vadd.f32 %v4442, %v4493
        %v4512 = vadd.f32 %v4443, %v4492
        %v4513 = vadd.f32 %v4444, %v4493
        %v4514 = vadd.f32 %v4445, %v4492
        %v4515 = vadd.f32 %v4446, %v4493
        %v4516 = vadd.f32 %v4447, %v4492
        %v4517 = vadd.f32 %v4448, %v4493
        %v4518 = vadd.f32 %v4449, %v4492
        %v4519 = vadd.f32 %v4450, %v4493
        %v4520 = vadd.f32 %v4451, %v4492
        %v4521 = vadd.f32 %v4452, %v4493
        %v4522 = vadd.f32 %v4453, %v4492
        %v4523 = vadd.f32 %v4454, %v4493
        %v4524 = vadd.f32 %v4455, %v4492
        %v4525 = vadd.f32 %v4456, %v4493
        %v4526 = vadd.f32 %v4457, %v4492
        %v4527 = vadd.f32 %v4458, %v4493
        %v4528 = vadd.f32 %v4459, %v4492
        %v4529 = vadd.f32 %v4460, %v4493
        %v4530 = vadd.f32 %v4461, %v4492
        %v4531 = vadd.f32 %v4462, %v4493
        %v4532 = vadd.f32 %v4463, %v4492
        %v4533 = vadd.f32 %v4464, %v4493
        %v4534 = vadd.f32 %v4465, %v4492
        %v4535 = vadd.f32 %v4466, %v4493
        %v4536 = vadd.f32 %v4467, %v4492
        %v4537 = vadd.f32 %v4468, %v4493
        %v4538 = vadd.f32 %v4469, %v4492
        %v4539 = vadd.f32 %v4470, %v4493
        %v4540 = vadd.f32 %v4471, %v4492
        %v4541 = vadd.f32 %v4472, %v4493
        %v4542 = vadd.f32 %v4473, %v4492
        %v4543 = vadd.f32 %v4474, %v4493
        %v4544 = vadd.f32 %v4475, %v4492
        %v4545 = vadd.f32 %v4476, %v4493
        %v4546 = vadd.f32 %v4477, %v4492
        %v4547 = vadd.f32 %v4478, %v4493
        %v4548 = vadd.f32 %v4479, %v4492
        %v4549 = vadd.f32 %v4480, %v4493
        %v4550 = vadd.f32 %v4481, %v4492
        %v4551 = vadd.f32 %v4482, %v4493
        %v4552 = vadd.f32 %v4483, %v4492
        %v4553 = vadd.f32 %v4484, %v4493
        %v4554 = vadd.f32 %v4485, %v4492
        %v4555 = vadd.f32 %v4486, %v4493
        %v4556 = vadd.f32 %v4487, %v4492
        %v4557 = vadd.f32 %v4488, %v4493
        %v4558 = vadd.f32 %v4489, %v4492
        %v4559 = vadd.f32 %v4490, %v4493
        %v4560 = vxor.u32 %v4496, 2147483648
        %v4561 = vxor.u32 %v4497, 2147483648
        %v4562 = vxor.u32 %v4498, 2147483648
        %v4563 = vxor.u32 %v4499, 2147483648
        %v4564 = vxor.u32 %v4500, 2147483648
        %v4565 = vxor.u32 %v4501, 2147483648
        %v4566 = vxor.u32 %v4502, 2147483648
        %v4567 = vxor.u32 %v4503, 2147483648
        %v4568 = vxor.u32 %v4504, 2147483648
        %v4569 = vxor.u32 %v4505, 2147483648
        %v4570 = vxor.u32 %v4506, 2147483648
        %v4571 = vxor.u32 %v4507, 2147483648
        %v4572 = vxor.u32 %v4508, 2147483648
        %v4573 = vxor.u32 %v4509, 2147483648
        %v4574 = vxor.u32 %v4510, 2147483648
        %v4575 = vxor.u32 %v4511, 2147483648
        %v4576 = vxor.u32 %v4512, 2147483648
        %v4577 = vxor.u32 %v4513, 2147483648
        %v4578 = vxor.u32 %v4514, 2147483648
        %v4579 = vxor.u32 %v4515, 2147483648
        %v4580 = vxor.u32 %v4516, 2147483648
        %v4581 = vxor.u32 %v4517, 2147483648
        %v4582 = vxor.u32 %v4518, 2147483648
        %v4583 = vxor.u32 %v4519, 2147483648
        %v4584 = vxor.u32 %v4520, 2147483648
        %v4585 = vxor.u32 %v4521, 2147483648
        %v4586 = vxor.u32 %v4522, 2147483648
        %v4587 = vxor.u32 %v4523, 2147483648
        %v4588 = vxor.u32 %v4524, 2147483648
        %v4589 = vxor.u32 %v4525, 2147483648
        %v4590 = vxor.u32 %v4526, 2147483648
        %v4591 = vxor.u32 %v4527, 2147483648
        %v4592 = vxor.u32 %v4528, 2147483648
        %v4593 = vxor.u32 %v4529, 2147483648
        %v4594 = vxor.u32 %v4530, 2147483648
        %v4595 = vxor.u32 %v4531, 2147483648
        %v4596 = vxor.u32 %v4532, 2147483648
        %v4597 = vxor.u32 %v4533, 2147483648
        %v4598 = vxor.u32 %v4534, 2147483648
        %v4599 = vxor.u32 %v4535, 2147483648
        %v4600 = vxor.u32 %v4536, 2147483648
        %v4601 = vxor.u32 %v4537, 2147483648
        %v4602 = vxor.u32 %v4538, 2147483648
        %v4603 = vxor.u32 %v4539, 2147483648
        %v4604 = vxor.u32 %v4540, 2147483648
        %v4605 = vxor.u32 %v4541, 2147483648
        %v4606 = vxor.u32 %v4542, 2147483648
        %v4607 = vxor.u32 %v4543, 2147483648
        %v4608 = vxor.u32 %v4544, 2147483648
        %v4609 = vxor.u32 %v4545, 2147483648
        %v4610 = vxor.u32 %v4546, 2147483648
        %v4611 = vxor.u32 %v4547, 2147483648
        %v4612 = vxor.u32 %v4548, 2147483648
        %v4613 = vxor.u32 %v4549, 2147483648
        %v4614 = vxor.u32 %v4550, 2147483648
        %v4615 = vxor.u32 %v4551, 2147483648
        %v4616 = vxor.u32 %v4552, 2147483648
        %v4617 = vxor.u32 %v4553, 2147483648
        %v4618 = vxor.u32 %v4554, 2147483648
        %v4619 = vxor.u32 %v4555, 2147483648
        %v4620 = vxor.u32 %v4556, 2147483648
        %v4621 = vxor.u32 %v4557, 2147483648
        %v4622 = vxor.u32 %v4558, 2147483648
        %v4623 = vxor.u32 %v4559, 2147483648
        %v4624 = vmul.f32 %v4560, 1.442695
        %v4625 = vpow.pop %v4624
        %v4626 = vmul.f32 %v4561, 1.442695
        %v4627 = vpow.pop %v4626
        %v4628 = vmul.f32 %v4562, 1.442695
        %v4629 = vpow.pop %v4628
        %v4630 = vmul.f32 %v4563, 1.442695
        %v4631 = vpow.pop %v4630
        %v4632 = vmul.f32 %v4564, 1.442695
        %v4633 = vpow.pop %v4632
        %v4634 = vmul.f32 %v4565, 1.442695
        %v4635 = vpow.pop %v4634
        %v4636 = vmul.f32 %v4566, 1.442695
        %v4637 = vpow.pop %v4636
        %v4638 = vmul.f32 %v4567, 1.442695
        %v4639 = vpow.pop %v4638
        %v4640 = vmul.f32 %v4568, 1.442695
        %v4641 = vpow.pop %v4640
        %v4642 = vmul.f32 %v4569, 1.442695
        %v4643 = vpow.pop %v4642
        %v4644 = vmul.f32 %v4570, 1.442695
        %v4645 = vpow.pop %v4644
        %v4646 = vmul.f32 %v4571, 1.442695
        %v4647 = vpow.pop %v4646
        %v4648 = vmul.f32 %v4572, 1.442695
        %v4649 = vpow.pop %v4648
        %v4650 = vmul.f32 %v4573, 1.442695
        %v4651 = vpow.pop %v4650
        %v4652 = vmul.f32 %v4574, 1.442695
        %v4653 = vpow.pop %v4652
        %v4654 = vmul.f32 %v4575, 1.442695
        %v4655 = vpow.pop %v4654
        %v4656 = vmul.f32 %v4576, 1.442695
        %v4657 = vpow.pop %v4656
        %v4658 = vmul.f32 %v4577, 1.442695
        %v4659 = vpow.pop %v4658
        %v4660 = vmul.f32 %v4578, 1.442695
        %v4661 = vpow.pop %v4660
        %v4662 = vmul.f32 %v4579, 1.442695
        %v4663 = vpow.pop %v4662
        %v4664 = vmul.f32 %v4580, 1.442695
        %v4665 = vpow.pop %v4664
        %v4666 = vmul.f32 %v4581, 1.442695
        %v4667 = vpow.pop %v4666
        %v4668 = vmul.f32 %v4582, 1.442695
        %v4669 = vpow.pop %v4668
        %v4670 = vmul.f32 %v4583, 1.442695
        %v4671 = vpow.pop %v4670
        %v4672 = vmul.f32 %v4584, 1.442695
        %v4673 = vpow.pop %v4672
        %v4674 = vmul.f32 %v4585, 1.442695
        %v4675 = vpow.pop %v4674
        %v4676 = vmul.f32 %v4586, 1.442695
        %v4677 = vpow.pop %v4676
        %v4678 = vmul.f32 %v4587, 1.442695
        %v4679 = vpow.pop %v4678
        %v4680 = vmul.f32 %v4588, 1.442695
        %v4681 = vpow.pop %v4680
        %v4682 = vmul.f32 %v4589, 1.442695
        %v4683 = vpow.pop %v4682
        %v4684 = vmul.f32 %v4590, 1.442695
        %v4685 = vpow.pop %v4684
        %v4686 = vmul.f32 %v4591, 1.442695
        %v4687 = vpow.pop %v4686
        %v4688 = vmul.f32 %v4592, 1.442695
        %v4689 = vpow.pop %v4688
        %v4690 = vmul.f32 %v4593, 1.442695
        %v4691 = vpow.pop %v4690
        %v4692 = vmul.f32 %v4594, 1.442695
        %v4693 = vpow.pop %v4692
        %v4694 = vmul.f32 %v4595, 1.442695
        %v4695 = vpow.pop %v4694
        %v4696 = vmul.f32 %v4596, 1.442695
        %v4697 = vpow.pop %v4696
        %v4698 = vmul.f32 %v4597, 1.442695
        %v4699 = vpow.pop %v4698
        %v4700 = vmul.f32 %v4598, 1.442695
        %v4701 = vpow.pop %v4700
        %v4702 = vmul.f32 %v4599, 1.442695
        %v4703 = vpow.pop %v4702
        %v4704 = vmul.f32 %v4600, 1.442695
        %v4705 = vpow.pop %v4704
        %v4706 = vmul.f32 %v4601, 1.442695
        %v4707 = vpow.pop %v4706
        %v4708 = vmul.f32 %v4602, 1.442695
        %v4709 = vpow.pop %v4708
        %v4710 = vmul.f32 %v4603, 1.442695
        %v4711 = vpow.pop %v4710
        %v4712 = vmul.f32 %v4604, 1.442695
        %v4713 = vpow.pop %v4712
        %v4714 = vmul.f32 %v4605, 1.442695
        %v4715 = vpow.pop %v4714
        %v4716 = vmul.f32 %v4606, 1.442695
        %v4717 = vpow.pop %v4716
        %v4718 = vmul.f32 %v4607, 1.442695
        %v4719 = vpow.pop %v4718
        %v4720 = vmul.f32 %v4608, 1.442695
        %v4721 = vpow.pop %v4720
        %v4722 = vmul.f32 %v4609, 1.442695
        %v4723 = vpow.pop %v4722
        %v4724 = vmul.f32 %v4610, 1.442695
        %v4725 = vpow.pop %v4724
        %v4726 = vmul.f32 %v4611, 1.442695
        %v4727 = vpow.pop %v4726
        %v4728 = vmul.f32 %v4612, 1.442695
        %v4729 = vpow.pop %v4728
        %v4730 = vmul.f32 %v4613, 1.442695
        %v4731 = vpow.pop %v4730
        %v4732 = vmul.f32 %v4614, 1.442695
        %v4733 = vpow.pop %v4732
        %v4734 = vmul.f32 %v4615, 1.442695
        %v4735 = vpow.pop %v4734
        %v4736 = vmul.f32 %v4616, 1.442695
        %v4737 = vpow.pop %v4736
        %v4738 = vmul.f32 %v4617, 1.442695
        %v4739 = vpow.pop %v4738
        %v4740 = vmul.f32 %v4618, 1.442695
        %v4741 = vpow.pop %v4740
        %v4742 = vmul.f32 %v4619, 1.442695
        %v4743 = vpow.pop %v4742
        %v4744 = vmul.f32 %v4620, 1.442695
        %v4745 = vpow.pop %v4744
        %v4746 = vmul.f32 %v4621, 1.442695
        %v4747 = vpow.pop %v4746
        %v4748 = vmul.f32 %v4622, 1.442695
        %v4749 = vpow.pop %v4748
        %v4750 = vmul.f32 %v4623, 1.442695
        %v4751 = vpow.pop %v4750
        %v4752 = vadd.f32 %v4625, 1.0
        %v4753 = vadd.f32 %v4627, 1.0
        %v4754 = vadd.f32 %v4629, 1.0
        %v4755 = vadd.f32 %v4631, 1.0
        %v4756 = vadd.f32 %v4633, 1.0
        %v4757 = vadd.f32 %v4635, 1.0
        %v4758 = vadd.f32 %v4637, 1.0
        %v4759 = vadd.f32 %v4639, 1.0
        %v4760 = vadd.f32 %v4641, 1.0
        %v4761 = vadd.f32 %v4643, 1.0
        %v4762 = vadd.f32 %v4645, 1.0
        %v4763 = vadd.f32 %v4647, 1.0
        %v4764 = vadd.f32 %v4649, 1.0
        %v4765 = vadd.f32 %v4651, 1.0
        %v4766 = vadd.f32 %v4653, 1.0
        %v4767 = vadd.f32 %v4655, 1.0
        %v4768 = vadd.f32 %v4657, 1.0
        %v4769 = vadd.f32 %v4659, 1.0
        %v4770 = vadd.f32 %v4661, 1.0
        %v4771 = vadd.f32 %v4663, 1.0
        %v4772 = vadd.f32 %v4665, 1.0
        %v4773 = vadd.f32 %v4667, 1.0
        %v4774 = vadd.f32 %v4669, 1.0
        %v4775 = vadd.f32 %v4671, 1.0
        %v4776 = vadd.f32 %v4673, 1.0
        %v4777 = vadd.f32 %v4675, 1.0
        %v4778 = vadd.f32 %v4677, 1.0
        %v4779 = vadd.f32 %v4679, 1.0
        %v4780 = vadd.f32 %v4681, 1.0
        %v4781 = vadd.f32 %v4683, 1.0
        %v4782 = vadd.f32 %v4685, 1.0
        %v4783 = vadd.f32 %v4687, 1.0
        %v4784 = vadd.f32 %v4689, 1.0
        %v4785 = vadd.f32 %v4691, 1.0
        %v4786 = vadd.f32 %v4693, 1.0
        %v4787 = vadd.f32 %v4695, 1.0
        %v4788 = vadd.f32 %v4697, 1.0
        %v4789 = vadd.f32 %v4699, 1.0
        %v4790 = vadd.f32 %v4701, 1.0
        %v4791 = vadd.f32 %v4703, 1.0
        %v4792 = vadd.f32 %v4705, 1.0
        %v4793 = vadd.f32 %v4707, 1.0
        %v4794 = vadd.f32 %v4709, 1.0
        %v4795 = vadd.f32 %v4711, 1.0
        %v4796 = vadd.f32 %v4713, 1.0
        %v4797 = vadd.f32 %v4715, 1.0
        %v4798 = vadd.f32 %v4717, 1.0
        %v4799 = vadd.f32 %v4719, 1.0
        %v4800 = vadd.f32 %v4721, 1.0
        %v4801 = vadd.f32 %v4723, 1.0
        %v4802 = vadd.f32 %v4725, 1.0
        %v4803 = vadd.f32 %v4727, 1.0
        %v4804 = vadd.f32 %v4729, 1.0
        %v4805 = vadd.f32 %v4731, 1.0
        %v4806 = vadd.f32 %v4733, 1.0
        %v4807 = vadd.f32 %v4735, 1.0
        %v4808 = vadd.f32 %v4737, 1.0
        %v4809 = vadd.f32 %v4739, 1.0
        %v4810 = vadd.f32 %v4741, 1.0
        %v4811 = vadd.f32 %v4743, 1.0
        %v4812 = vadd.f32 %v4745, 1.0
        %v4813 = vadd.f32 %v4747, 1.0
        %v4814 = vadd.f32 %v4749, 1.0
        %v4815 = vadd.f32 %v4751, 1.0
        %v4816 = vrcp.pop %v4752
        %v4817 = vmul.f32 %v4752, %v4816
        %v4818 = vsub.f32 1.0, %v4817
        %v4819 = vmul.f32 %v4816, %v4818
        %v4820 = vadd.f32 %v4816, %v4819
        %vm4821 = vweird.f32 %v4752
        %vm4822 = vweird.f32 %v4816
        %vm4823 = vmor %vm4821, %vm4822
        %v4824 = vsel %vm4823, %v4816, %v4820
        %v4825 = vand.u32 2147483647, %v4752
        %vm4826 = vcmp.eq.f32.partialorder %v4825, 8.507059e+37
        %v4827 = vand.u32 %v4752, 2147483648
        %v4828 = vor.u32 1.1754944e-38, %v4827
        %v4829 = vsel %vm4826, %v4828, %v4824
        %v4830 = vmul.f32 1.0, %v4829
        %v4831 = vrcp.pop %v4753
        %v4832 = vmul.f32 %v4753, %v4831
        %v4833 = vsub.f32 1.0, %v4832
        %v4834 = vmul.f32 %v4831, %v4833
        %v4835 = vadd.f32 %v4831, %v4834
        %vm4836 = vweird.f32 %v4753
        %vm4837 = vweird.f32 %v4831
        %vm4838 = vmor %vm4836, %vm4837
        %v4839 = vsel %vm4838, %v4831, %v4835
        %v4840 = vand.u32 2147483647, %v4753
        %vm4841 = vcmp.eq.f32.partialorder %v4840, 8.507059e+37
        %v4842 = vand.u32 %v4753, 2147483648
        %v4843 = vor.u32 1.1754944e-38, %v4842
        %v4844 = vsel %vm4841, %v4843, %v4839
        %v4845 = vmul.f32 1.0, %v4844
        %v4846 = vrcp.pop %v4754
        %v4847 = vmul.f32 %v4754, %v4846
        %v4848 = vsub.f32 1.0, %v4847
        %v4849 = vmul.f32 %v4846, %v4848
        %v4850 = vadd.f32 %v4846, %v4849
        %vm4851 = vweird.f32 %v4754
        %vm4852 = vweird.f32 %v4846
        %vm4853 = vmor %vm4851, %vm4852
        %v4854 = vsel %vm4853, %v4846, %v4850
        %v4855 = vand.u32 2147483647, %v4754
        %vm4856 = vcmp.eq.f32.partialorder %v4855, 8.507059e+37
        %v4857 = vand.u32 %v4754, 2147483648
        %v4858 = vor.u32 1.1754944e-38, %v4857
        %v4859 = vsel %vm4856, %v4858, %v4854
        %v4860 = vmul.f32 1.0, %v4859
        %v4861 = vrcp.pop %v4755
        %v4862 = vmul.f32 %v4755, %v4861
        %v4863 = vsub.f32 1.0, %v4862
        %v4864 = vmul.f32 %v4861, %v4863
        %v4865 = vadd.f32 %v4861, %v4864
        %vm4866 = vweird.f32 %v4755
        %vm4867 = vweird.f32 %v4861
        %vm4868 = vmor %vm4866, %vm4867
        %v4869 = vsel %vm4868, %v4861, %v4865
        %v4870 = vand.u32 2147483647, %v4755
        %vm4871 = vcmp.eq.f32.partialorder %v4870, 8.507059e+37
        %v4872 = vand.u32 %v4755, 2147483648
        %v4873 = vor.u32 1.1754944e-38, %v4872
        %v4874 = vsel %vm4871, %v4873, %v4869
        %v4875 = vmul.f32 1.0, %v4874
        %v4876 = vrcp.pop %v4756
        %v4877 = vmul.f32 %v4756, %v4876
        %v4878 = vsub.f32 1.0, %v4877
        %v4879 = vmul.f32 %v4876, %v4878
        %v4880 = vadd.f32 %v4876, %v4879
        %vm4881 = vweird.f32 %v4756
        %vm4882 = vweird.f32 %v4876
        %vm4883 = vmor %vm4881, %vm4882
        %v4884 = vsel %vm4883, %v4876, %v4880
        %v4885 = vand.u32 2147483647, %v4756
        %vm4886 = vcmp.eq.f32.partialorder %v4885, 8.507059e+37
        %v4887 = vand.u32 %v4756, 2147483648
        %v4888 = vor.u32 1.1754944e-38, %v4887
        %v4889 = vsel %vm4886, %v4888, %v4884
        %v4890 = vmul.f32 1.0, %v4889
        %v4891 = vrcp.pop %v4757
        %v4892 = vmul.f32 %v4757, %v4891
        %v4893 = vsub.f32 1.0, %v4892
        %v4894 = vmul.f32 %v4891, %v4893
        %v4895 = vadd.f32 %v4891, %v4894
        %vm4896 = vweird.f32 %v4757
        %vm4897 = vweird.f32 %v4891
        %vm4898 = vmor %vm4896, %vm4897
        %v4899 = vsel %vm4898, %v4891, %v4895
        %v4900 = vand.u32 2147483647, %v4757
        %vm4901 = vcmp.eq.f32.partialorder %v4900, 8.507059e+37
        %v4902 = vand.u32 %v4757, 2147483648
        %v4903 = vor.u32 1.1754944e-38, %v4902
        %v4904 = vsel %vm4901, %v4903, %v4899
        %v4905 = vmul.f32 1.0, %v4904
        %v4906 = vrcp.pop %v4758
        %v4907 = vmul.f32 %v4758, %v4906
        %v4908 = vsub.f32 1.0, %v4907
        %v4909 = vmul.f32 %v4906, %v4908
        %v4910 = vadd.f32 %v4906, %v4909
        %vm4911 = vweird.f32 %v4758
        %vm4912 = vweird.f32 %v4906
        %vm4913 = vmor %vm4911, %vm4912
        %v4914 = vsel %vm4913, %v4906, %v4910
        %v4915 = vand.u32 2147483647, %v4758
        %vm4916 = vcmp.eq.f32.partialorder %v4915, 8.507059e+37
        %v4917 = vand.u32 %v4758, 2147483648
        %v4918 = vor.u32 1.1754944e-38, %v4917
        %v4919 = vsel %vm4916, %v4918, %v4914
        %v4920 = vmul.f32 1.0, %v4919
        %v4921 = vrcp.pop %v4759
        %v4922 = vmul.f32 %v4759, %v4921
        %v4923 = vsub.f32 1.0, %v4922
        %v4924 = vmul.f32 %v4921, %v4923
        %v4925 = vadd.f32 %v4921, %v4924
        %vm4926 = vweird.f32 %v4759
        %vm4927 = vweird.f32 %v4921
        %vm4928 = vmor %vm4926, %vm4927
        %v4929 = vsel %vm4928, %v4921, %v4925
        %v4930 = vand.u32 2147483647, %v4759
        %vm4931 = vcmp.eq.f32.partialorder %v4930, 8.507059e+37
        %v4932 = vand.u32 %v4759, 2147483648
        %v4933 = vor.u32 1.1754944e-38, %v4932
        %v4934 = vsel %vm4931, %v4933, %v4929
        %v4935 = vmul.f32 1.0, %v4934
        %v4936 = vrcp.pop %v4760
        %v4937 = vmul.f32 %v4760, %v4936
        %v4938 = vsub.f32 1.0, %v4937
        %v4939 = vmul.f32 %v4936, %v4938
        %v4940 = vadd.f32 %v4936, %v4939
        %vm4941 = vweird.f32 %v4760
        %vm4942 = vweird.f32 %v4936
        %vm4943 = vmor %vm4941, %vm4942
        %v4944 = vsel %vm4943, %v4936, %v4940
        %v4945 = vand.u32 2147483647, %v4760
        %vm4946 = vcmp.eq.f32.partialorder %v4945, 8.507059e+37
        %v4947 = vand.u32 %v4760, 2147483648
        %v4948 = vor.u32 1.1754944e-38, %v4947
        %v4949 = vsel %vm4946, %v4948, %v4944
        %v4950 = vmul.f32 1.0, %v4949
        %v4951 = vrcp.pop %v4761
        %v4952 = vmul.f32 %v4761, %v4951
        %v4953 = vsub.f32 1.0, %v4952
        %v4954 = vmul.f32 %v4951, %v4953
        %v4955 = vadd.f32 %v4951, %v4954
        %vm4956 = vweird.f32 %v4761
        %vm4957 = vweird.f32 %v4951
        %vm4958 = vmor %vm4956, %vm4957
        %v4959 = vsel %vm4958, %v4951, %v4955
        %v4960 = vand.u32 2147483647, %v4761
        %vm4961 = vcmp.eq.f32.partialorder %v4960, 8.507059e+37
        %v4962 = vand.u32 %v4761, 2147483648
        %v4963 = vor.u32 1.1754944e-38, %v4962
        %v4964 = vsel %vm4961, %v4963, %v4959
        %v4965 = vmul.f32 1.0, %v4964
        %v4966 = vrcp.pop %v4762
        %v4967 = vmul.f32 %v4762, %v4966
        %v4968 = vsub.f32 1.0, %v4967
        %v4969 = vmul.f32 %v4966, %v4968
        %v4970 = vadd.f32 %v4966, %v4969
        %vm4971 = vweird.f32 %v4762
        %vm4972 = vweird.f32 %v4966
        %vm4973 = vmor %vm4971, %vm4972
        %v4974 = vsel %vm4973, %v4966, %v4970
        %v4975 = vand.u32 2147483647, %v4762
        %vm4976 = vcmp.eq.f32.partialorder %v4975, 8.507059e+37
        %v4977 = vand.u32 %v4762, 2147483648
        %v4978 = vor.u32 1.1754944e-38, %v4977
        %v4979 = vsel %vm4976, %v4978, %v4974
        %v4980 = vmul.f32 1.0, %v4979
        %v4981 = vrcp.pop %v4763
        %v4982 = vmul.f32 %v4763, %v4981
        %v4983 = vsub.f32 1.0, %v4982
        %v4984 = vmul.f32 %v4981, %v4983
        %v4985 = vadd.f32 %v4981, %v4984
        %vm4986 = vweird.f32 %v4763
        %vm4987 = vweird.f32 %v4981
        %vm4988 = vmor %vm4986, %vm4987
        %v4989 = vsel %vm4988, %v4981, %v4985
        %v4990 = vand.u32 2147483647, %v4763
        %vm4991 = vcmp.eq.f32.partialorder %v4990, 8.507059e+37
        %v4992 = vand.u32 %v4763, 2147483648
        %v4993 = vor.u32 1.1754944e-38, %v4992
        %v4994 = vsel %vm4991, %v4993, %v4989
        %v4995 = vmul.f32 1.0, %v4994
        %v4996 = vrcp.pop %v4764
        %v4997 = vmul.f32 %v4764, %v4996
        %v4998 = vsub.f32 1.0, %v4997
        %v4999 = vmul.f32 %v4996, %v4998
        %v5000 = vadd.f32 %v4996, %v4999
        %vm5001 = vweird.f32 %v4764
        %vm5002 = vweird.f32 %v4996
        %vm5003 = vmor %vm5001, %vm5002
        %v5004 = vsel %vm5003, %v4996, %v5000
        %v5005 = vand.u32 2147483647, %v4764
        %vm5006 = vcmp.eq.f32.partialorder %v5005, 8.507059e+37
        %v5007 = vand.u32 %v4764, 2147483648
        %v5008 = vor.u32 1.1754944e-38, %v5007
        %v5009 = vsel %vm5006, %v5008, %v5004
        %v5010 = vmul.f32 1.0, %v5009
        %v5011 = vrcp.pop %v4765
        %v5012 = vmul.f32 %v4765, %v5011
        %v5013 = vsub.f32 1.0, %v5012
        %v5014 = vmul.f32 %v5011, %v5013
        %v5015 = vadd.f32 %v5011, %v5014
        %vm5016 = vweird.f32 %v4765
        %vm5017 = vweird.f32 %v5011
        %vm5018 = vmor %vm5016, %vm5017
        %v5019 = vsel %vm5018, %v5011, %v5015
        %v5020 = vand.u32 2147483647, %v4765
        %vm5021 = vcmp.eq.f32.partialorder %v5020, 8.507059e+37
        %v5022 = vand.u32 %v4765, 2147483648
        %v5023 = vor.u32 1.1754944e-38, %v5022
        %v5024 = vsel %vm5021, %v5023, %v5019
        %v5025 = vmul.f32 1.0, %v5024
        %v5026 = vrcp.pop %v4766
        %v5027 = vmul.f32 %v4766, %v5026
        %v5028 = vsub.f32 1.0, %v5027
        %v5029 = vmul.f32 %v5026, %v5028
        %v5030 = vadd.f32 %v5026, %v5029
        %vm5031 = vweird.f32 %v4766
        %vm5032 = vweird.f32 %v5026
        %vm5033 = vmor %vm5031, %vm5032
        %v5034 = vsel %vm5033, %v5026, %v5030
        %v5035 = vand.u32 2147483647, %v4766
        %vm5036 = vcmp.eq.f32.partialorder %v5035, 8.507059e+37
        %v5037 = vand.u32 %v4766, 2147483648
        %v5038 = vor.u32 1.1754944e-38, %v5037
        %v5039 = vsel %vm5036, %v5038, %v5034
        %v5040 = vmul.f32 1.0, %v5039
        %v5041 = vrcp.pop %v4767
        %v5042 = vmul.f32 %v4767, %v5041
        %v5043 = vsub.f32 1.0, %v5042
        %v5044 = vmul.f32 %v5041, %v5043
        %v5045 = vadd.f32 %v5041, %v5044
        %vm5046 = vweird.f32 %v4767
        %vm5047 = vweird.f32 %v5041
        %vm5048 = vmor %vm5046, %vm5047
        %v5049 = vsel %vm5048, %v5041, %v5045
        %v5050 = vand.u32 2147483647, %v4767
        %vm5051 = vcmp.eq.f32.partialorder %v5050, 8.507059e+37
        %v5052 = vand.u32 %v4767, 2147483648
        %v5053 = vor.u32 1.1754944e-38, %v5052
        %v5054 = vsel %vm5051, %v5053, %v5049
        %v5055 = vmul.f32 1.0, %v5054
        %v5056 = vrcp.pop %v4768
        %v5057 = vmul.f32 %v4768, %v5056
        %v5058 = vsub.f32 1.0, %v5057
        %v5059 = vmul.f32 %v5056, %v5058
        %v5060 = vadd.f32 %v5056, %v5059
        %vm5061 = vweird.f32 %v4768
        %vm5062 = vweird.f32 %v5056
        %vm5063 = vmor %vm5061, %vm5062
        %v5064 = vsel %vm5063, %v5056, %v5060
        %v5065 = vand.u32 2147483647, %v4768
        %vm5066 = vcmp.eq.f32.partialorder %v5065, 8.507059e+37
        %v5067 = vand.u32 %v4768, 2147483648
        %v5068 = vor.u32 1.1754944e-38, %v5067
        %v5069 = vsel %vm5066, %v5068, %v5064
        %v5070 = vmul.f32 1.0, %v5069
        %v5071 = vrcp.pop %v4769
        %v5072 = vmul.f32 %v4769, %v5071
        %v5073 = vsub.f32 1.0, %v5072
        %v5074 = vmul.f32 %v5071, %v5073
        %v5075 = vadd.f32 %v5071, %v5074
        %vm5076 = vweird.f32 %v4769
        %vm5077 = vweird.f32 %v5071
        %vm5078 = vmor %vm5076, %vm5077
        %v5079 = vsel %vm5078, %v5071, %v5075
        %v5080 = vand.u32 2147483647, %v4769
        %vm5081 = vcmp.eq.f32.partialorder %v5080, 8.507059e+37
        %v5082 = vand.u32 %v4769, 2147483648
        %v5083 = vor.u32 1.1754944e-38, %v5082
        %v5084 = vsel %vm5081, %v5083, %v5079
        %v5085 = vmul.f32 1.0, %v5084
        %v5086 = vrcp.pop %v4770
        %v5087 = vmul.f32 %v4770, %v5086
        %v5088 = vsub.f32 1.0, %v5087
        %v5089 = vmul.f32 %v5086, %v5088
        %v5090 = vadd.f32 %v5086, %v5089
        %vm5091 = vweird.f32 %v4770
        %vm5092 = vweird.f32 %v5086
        %vm5093 = vmor %vm5091, %vm5092
        %v5094 = vsel %vm5093, %v5086, %v5090
        %v5095 = vand.u32 2147483647, %v4770
        %vm5096 = vcmp.eq.f32.partialorder %v5095, 8.507059e+37
        %v5097 = vand.u32 %v4770, 2147483648
        %v5098 = vor.u32 1.1754944e-38, %v5097
        %v5099 = vsel %vm5096, %v5098, %v5094
        %v5100 = vmul.f32 1.0, %v5099
        %v5101 = vrcp.pop %v4771
        %v5102 = vmul.f32 %v4771, %v5101
        %v5103 = vsub.f32 1.0, %v5102
        %v5104 = vmul.f32 %v5101, %v5103
        %v5105 = vadd.f32 %v5101, %v5104
        %vm5106 = vweird.f32 %v4771
        %vm5107 = vweird.f32 %v5101
        %vm5108 = vmor %vm5106, %vm5107
        %v5109 = vsel %vm5108, %v5101, %v5105
        %v5110 = vand.u32 2147483647, %v4771
        %vm5111 = vcmp.eq.f32.partialorder %v5110, 8.507059e+37
        %v5112 = vand.u32 %v4771, 2147483648
        %v5113 = vor.u32 1.1754944e-38, %v5112
        %v5114 = vsel %vm5111, %v5113, %v5109
        %v5115 = vmul.f32 1.0, %v5114
        %v5116 = vrcp.pop %v4772
        %v5117 = vmul.f32 %v4772, %v5116
        %v5118 = vsub.f32 1.0, %v5117
        %v5119 = vmul.f32 %v5116, %v5118
        %v5120 = vadd.f32 %v5116, %v5119
        %vm5121 = vweird.f32 %v4772
        %vm5122 = vweird.f32 %v5116
        %vm5123 = vmor %vm5121, %vm5122
        %v5124 = vsel %vm5123, %v5116, %v5120
        %v5125 = vand.u32 2147483647, %v4772
        %vm5126 = vcmp.eq.f32.partialorder %v5125, 8.507059e+37
        %v5127 = vand.u32 %v4772, 2147483648
        %v5128 = vor.u32 1.1754944e-38, %v5127
        %v5129 = vsel %vm5126, %v5128, %v5124
        %v5130 = vmul.f32 1.0, %v5129
        %v5131 = vrcp.pop %v4773
        %v5132 = vmul.f32 %v4773, %v5131
        %v5133 = vsub.f32 1.0, %v5132
        %v5134 = vmul.f32 %v5131, %v5133
        %v5135 = vadd.f32 %v5131, %v5134
        %vm5136 = vweird.f32 %v4773
        %vm5137 = vweird.f32 %v5131
        %vm5138 = vmor %vm5136, %vm5137
        %v5139 = vsel %vm5138, %v5131, %v5135
        %v5140 = vand.u32 2147483647, %v4773
        %vm5141 = vcmp.eq.f32.partialorder %v5140, 8.507059e+37
        %v5142 = vand.u32 %v4773, 2147483648
        %v5143 = vor.u32 1.1754944e-38, %v5142
        %v5144 = vsel %vm5141, %v5143, %v5139
        %v5145 = vmul.f32 1.0, %v5144
        %v5146 = vrcp.pop %v4774
        %v5147 = vmul.f32 %v4774, %v5146
        %v5148 = vsub.f32 1.0, %v5147
        %v5149 = vmul.f32 %v5146, %v5148
        %v5150 = vadd.f32 %v5146, %v5149
        %vm5151 = vweird.f32 %v4774
        %vm5152 = vweird.f32 %v5146
        %vm5153 = vmor %vm5151, %vm5152
        %v5154 = vsel %vm5153, %v5146, %v5150
        %v5155 = vand.u32 2147483647, %v4774
        %vm5156 = vcmp.eq.f32.partialorder %v5155, 8.507059e+37
        %v5157 = vand.u32 %v4774, 2147483648
        %v5158 = vor.u32 1.1754944e-38, %v5157
        %v5159 = vsel %vm5156, %v5158, %v5154
        %v5160 = vmul.f32 1.0, %v5159
        %v5161 = vrcp.pop %v4775
        %v5162 = vmul.f32 %v4775, %v5161
        %v5163 = vsub.f32 1.0, %v5162
        %v5164 = vmul.f32 %v5161, %v5163
        %v5165 = vadd.f32 %v5161, %v5164
        %vm5166 = vweird.f32 %v4775
        %vm5167 = vweird.f32 %v5161
        %vm5168 = vmor %vm5166, %vm5167
        %v5169 = vsel %vm5168, %v5161, %v5165
        %v5170 = vand.u32 2147483647, %v4775
        %vm5171 = vcmp.eq.f32.partialorder %v5170, 8.507059e+37
        %v5172 = vand.u32 %v4775, 2147483648
        %v5173 = vor.u32 1.1754944e-38, %v5172
        %v5174 = vsel %vm5171, %v5173, %v5169
        %v5175 = vmul.f32 1.0, %v5174
        %v5176 = vrcp.pop %v4776
        %v5177 = vmul.f32 %v4776, %v5176
        %v5178 = vsub.f32 1.0, %v5177
        %v5179 = vmul.f32 %v5176, %v5178
        %v5180 = vadd.f32 %v5176, %v5179
        %vm5181 = vweird.f32 %v4776
        %vm5182 = vweird.f32 %v5176
        %vm5183 = vmor %vm5181, %vm5182
        %v5184 = vsel %vm5183, %v5176, %v5180
        %v5185 = vand.u32 2147483647, %v4776
        %vm5186 = vcmp.eq.f32.partialorder %v5185, 8.507059e+37
        %v5187 = vand.u32 %v4776, 2147483648
        %v5188 = vor.u32 1.1754944e-38, %v5187
        %v5189 = vsel %vm5186, %v5188, %v5184
        %v5190 = vmul.f32 1.0, %v5189
        %v5191 = vrcp.pop %v4777
        %v5192 = vmul.f32 %v4777, %v5191
        %v5193 = vsub.f32 1.0, %v5192
        %v5194 = vmul.f32 %v5191, %v5193
        %v5195 = vadd.f32 %v5191, %v5194
        %vm5196 = vweird.f32 %v4777
        %vm5197 = vweird.f32 %v5191
        %vm5198 = vmor %vm5196, %vm5197
        %v5199 = vsel %vm5198, %v5191, %v5195
        %v5200 = vand.u32 2147483647, %v4777
        %vm5201 = vcmp.eq.f32.partialorder %v5200, 8.507059e+37
        %v5202 = vand.u32 %v4777, 2147483648
        %v5203 = vor.u32 1.1754944e-38, %v5202
        %v5204 = vsel %vm5201, %v5203, %v5199
        %v5205 = vmul.f32 1.0, %v5204
        %v5206 = vrcp.pop %v4778
        %v5207 = vmul.f32 %v4778, %v5206
        %v5208 = vsub.f32 1.0, %v5207
        %v5209 = vmul.f32 %v5206, %v5208
        %v5210 = vadd.f32 %v5206, %v5209
        %vm5211 = vweird.f32 %v4778
        %vm5212 = vweird.f32 %v5206
        %vm5213 = vmor %vm5211, %vm5212
        %v5214 = vsel %vm5213, %v5206, %v5210
        %v5215 = vand.u32 2147483647, %v4778
        %vm5216 = vcmp.eq.f32.partialorder %v5215, 8.507059e+37
        %v5217 = vand.u32 %v4778, 2147483648
        %v5218 = vor.u32 1.1754944e-38, %v5217
        %v5219 = vsel %vm5216, %v5218, %v5214
        %v5220 = vmul.f32 1.0, %v5219
        %v5221 = vrcp.pop %v4779
        %v5222 = vmul.f32 %v4779, %v5221
        %v5223 = vsub.f32 1.0, %v5222
        %v5224 = vmul.f32 %v5221, %v5223
        %v5225 = vadd.f32 %v5221, %v5224
        %vm5226 = vweird.f32 %v4779
        %vm5227 = vweird.f32 %v5221
        %vm5228 = vmor %vm5226, %vm5227
        %v5229 = vsel %vm5228, %v5221, %v5225
        %v5230 = vand.u32 2147483647, %v4779
        %vm5231 = vcmp.eq.f32.partialorder %v5230, 8.507059e+37
        %v5232 = vand.u32 %v4779, 2147483648
        %v5233 = vor.u32 1.1754944e-38, %v5232
        %v5234 = vsel %vm5231, %v5233, %v5229
        %v5235 = vmul.f32 1.0, %v5234
        %v5236 = vrcp.pop %v4780
        %v5237 = vmul.f32 %v4780, %v5236
        %v5238 = vsub.f32 1.0, %v5237
        %v5239 = vmul.f32 %v5236, %v5238
        %v5240 = vadd.f32 %v5236, %v5239
        %vm5241 = vweird.f32 %v4780
        %vm5242 = vweird.f32 %v5236
        %vm5243 = vmor %vm5241, %vm5242
        %v5244 = vsel %vm5243, %v5236, %v5240
        %v5245 = vand.u32 2147483647, %v4780
        %vm5246 = vcmp.eq.f32.partialorder %v5245, 8.507059e+37
        %v5247 = vand.u32 %v4780, 2147483648
        %v5248 = vor.u32 1.1754944e-38, %v5247
        %v5249 = vsel %vm5246, %v5248, %v5244
        %v5250 = vmul.f32 1.0, %v5249
        %v5251 = vrcp.pop %v4781
        %v5252 = vmul.f32 %v4781, %v5251
        %v5253 = vsub.f32 1.0, %v5252
        %v5254 = vmul.f32 %v5251, %v5253
        %v5255 = vadd.f32 %v5251, %v5254
        %vm5256 = vweird.f32 %v4781
        %vm5257 = vweird.f32 %v5251
        %vm5258 = vmor %vm5256, %vm5257
        %v5259 = vsel %vm5258, %v5251, %v5255
        %v5260 = vand.u32 2147483647, %v4781
        %vm5261 = vcmp.eq.f32.partialorder %v5260, 8.507059e+37
        %v5262 = vand.u32 %v4781, 2147483648
        %v5263 = vor.u32 1.1754944e-38, %v5262
        %v5264 = vsel %vm5261, %v5263, %v5259
        %v5265 = vmul.f32 1.0, %v5264
        %v5266 = vrcp.pop %v4782
        %v5267 = vmul.f32 %v4782, %v5266
        %v5268 = vsub.f32 1.0, %v5267
        %v5269 = vmul.f32 %v5266, %v5268
        %v5270 = vadd.f32 %v5266, %v5269
        %vm5271 = vweird.f32 %v4782
        %vm5272 = vweird.f32 %v5266
        %vm5273 = vmor %vm5271, %vm5272
        %v5274 = vsel %vm5273, %v5266, %v5270
        %v5275 = vand.u32 2147483647, %v4782
        %vm5276 = vcmp.eq.f32.partialorder %v5275, 8.507059e+37
        %v5277 = vand.u32 %v4782, 2147483648
        %v5278 = vor.u32 1.1754944e-38, %v5277
        %v5279 = vsel %vm5276, %v5278, %v5274
        %v5280 = vmul.f32 1.0, %v5279
        %v5281 = vrcp.pop %v4783
        %v5282 = vmul.f32 %v4783, %v5281
        %v5283 = vsub.f32 1.0, %v5282
        %v5284 = vmul.f32 %v5281, %v5283
        %v5285 = vadd.f32 %v5281, %v5284
        %vm5286 = vweird.f32 %v4783
        %vm5287 = vweird.f32 %v5281
        %vm5288 = vmor %vm5286, %vm5287
        %v5289 = vsel %vm5288, %v5281, %v5285
        %v5290 = vand.u32 2147483647, %v4783
        %vm5291 = vcmp.eq.f32.partialorder %v5290, 8.507059e+37
        %v5292 = vand.u32 %v4783, 2147483648
        %v5293 = vor.u32 1.1754944e-38, %v5292
        %v5294 = vsel %vm5291, %v5293, %v5289
        %v5295 = vmul.f32 1.0, %v5294
        %v5296 = vrcp.pop %v4784
        %v5297 = vmul.f32 %v4784, %v5296
        %v5298 = vsub.f32 1.0, %v5297
        %v5299 = vmul.f32 %v5296, %v5298
        %v5300 = vadd.f32 %v5296, %v5299
        %vm5301 = vweird.f32 %v4784
        %vm5302 = vweird.f32 %v5296
        %vm5303 = vmor %vm5301, %vm5302
        %v5304 = vsel %vm5303, %v5296, %v5300
        %v5305 = vand.u32 2147483647, %v4784
        %vm5306 = vcmp.eq.f32.partialorder %v5305, 8.507059e+37
        %v5307 = vand.u32 %v4784, 2147483648
        %v5308 = vor.u32 1.1754944e-38, %v5307
        %v5309 = vsel %vm5306, %v5308, %v5304
        %v5310 = vmul.f32 1.0, %v5309
        %v5311 = vrcp.pop %v4785
        %v5312 = vmul.f32 %v4785, %v5311
        %v5313 = vsub.f32 1.0, %v5312
        %v5314 = vmul.f32 %v5311, %v5313
        %v5315 = vadd.f32 %v5311, %v5314
        %vm5316 = vweird.f32 %v4785
        %vm5317 = vweird.f32 %v5311
        %vm5318 = vmor %vm5316, %vm5317
        %v5319 = vsel %vm5318, %v5311, %v5315
        %v5320 = vand.u32 2147483647, %v4785
        %vm5321 = vcmp.eq.f32.partialorder %v5320, 8.507059e+37
        %v5322 = vand.u32 %v4785, 2147483648
        %v5323 = vor.u32 1.1754944e-38, %v5322
        %v5324 = vsel %vm5321, %v5323, %v5319
        %v5325 = vmul.f32 1.0, %v5324
        %v5326 = vrcp.pop %v4786
        %v5327 = vmul.f32 %v4786, %v5326
        %v5328 = vsub.f32 1.0, %v5327
        %v5329 = vmul.f32 %v5326, %v5328
        %v5330 = vadd.f32 %v5326, %v5329
        %vm5331 = vweird.f32 %v4786
        %vm5332 = vweird.f32 %v5326
        %vm5333 = vmor %vm5331, %vm5332
        %v5334 = vsel %vm5333, %v5326, %v5330
        %v5335 = vand.u32 2147483647, %v4786
        %vm5336 = vcmp.eq.f32.partialorder %v5335, 8.507059e+37
        %v5337 = vand.u32 %v4786, 2147483648
        %v5338 = vor.u32 1.1754944e-38, %v5337
        %v5339 = vsel %vm5336, %v5338, %v5334
        %v5340 = vmul.f32 1.0, %v5339
        %v5341 = vrcp.pop %v4787
        %v5342 = vmul.f32 %v4787, %v5341
        %v5343 = vsub.f32 1.0, %v5342
        %v5344 = vmul.f32 %v5341, %v5343
        %v5345 = vadd.f32 %v5341, %v5344
        %vm5346 = vweird.f32 %v4787
        %vm5347 = vweird.f32 %v5341
        %vm5348 = vmor %vm5346, %vm5347
        %v5349 = vsel %vm5348, %v5341, %v5345
        %v5350 = vand.u32 2147483647, %v4787
        %vm5351 = vcmp.eq.f32.partialorder %v5350, 8.507059e+37
        %v5352 = vand.u32 %v4787, 2147483648
        %v5353 = vor.u32 1.1754944e-38, %v5352
        %v5354 = vsel %vm5351, %v5353, %v5349
        %v5355 = vmul.f32 1.0, %v5354
        %v5356 = vrcp.pop %v4788
        %v5357 = vmul.f32 %v4788, %v5356
        %v5358 = vsub.f32 1.0, %v5357
        %v5359 = vmul.f32 %v5356, %v5358
        %v5360 = vadd.f32 %v5356, %v5359
        %vm5361 = vweird.f32 %v4788
        %vm5362 = vweird.f32 %v5356
        %vm5363 = vmor %vm5361, %vm5362
        %v5364 = vsel %vm5363, %v5356, %v5360
        %v5365 = vand.u32 2147483647, %v4788
        %vm5366 = vcmp.eq.f32.partialorder %v5365, 8.507059e+37
        %v5367 = vand.u32 %v4788, 2147483648
        %v5368 = vor.u32 1.1754944e-38, %v5367
        %v5369 = vsel %vm5366, %v5368, %v5364
        %v5370 = vmul.f32 1.0, %v5369
        %v5371 = vrcp.pop %v4789
        %v5372 = vmul.f32 %v4789, %v5371
        %v5373 = vsub.f32 1.0, %v5372
        %v5374 = vmul.f32 %v5371, %v5373
        %v5375 = vadd.f32 %v5371, %v5374
        %vm5376 = vweird.f32 %v4789
        %vm5377 = vweird.f32 %v5371
        %vm5378 = vmor %vm5376, %vm5377
        %v5379 = vsel %vm5378, %v5371, %v5375
        %v5380 = vand.u32 2147483647, %v4789
        %vm5381 = vcmp.eq.f32.partialorder %v5380, 8.507059e+37
        %v5382 = vand.u32 %v4789, 2147483648
        %v5383 = vor.u32 1.1754944e-38, %v5382
        %v5384 = vsel %vm5381, %v5383, %v5379
        %v5385 = vmul.f32 1.0, %v5384
        %v5386 = vrcp.pop %v4790
        %v5387 = vmul.f32 %v4790, %v5386
        %v5388 = vsub.f32 1.0, %v5387
        %v5389 = vmul.f32 %v5386, %v5388
        %v5390 = vadd.f32 %v5386, %v5389
        %vm5391 = vweird.f32 %v4790
        %vm5392 = vweird.f32 %v5386
        %vm5393 = vmor %vm5391, %vm5392
        %v5394 = vsel %vm5393, %v5386, %v5390
        %v5395 = vand.u32 2147483647, %v4790
        %vm5396 = vcmp.eq.f32.partialorder %v5395, 8.507059e+37
        %v5397 = vand.u32 %v4790, 2147483648
        %v5398 = vor.u32 1.1754944e-38, %v5397
        %v5399 = vsel %vm5396, %v5398, %v5394
        %v5400 = vmul.f32 1.0, %v5399
        %v5401 = vrcp.pop %v4791
        %v5402 = vmul.f32 %v4791, %v5401
        %v5403 = vsub.f32 1.0, %v5402
        %v5404 = vmul.f32 %v5401, %v5403
        %v5405 = vadd.f32 %v5401, %v5404
        %vm5406 = vweird.f32 %v4791
        %vm5407 = vweird.f32 %v5401
        %vm5408 = vmor %vm5406, %vm5407
        %v5409 = vsel %vm5408, %v5401, %v5405
        %v5410 = vand.u32 2147483647, %v4791
        %vm5411 = vcmp.eq.f32.partialorder %v5410, 8.507059e+37
        %v5412 = vand.u32 %v4791, 2147483648
        %v5413 = vor.u32 1.1754944e-38, %v5412
        %v5414 = vsel %vm5411, %v5413, %v5409
        %v5415 = vmul.f32 1.0, %v5414
        %v5416 = vrcp.pop %v4792
        %v5417 = vmul.f32 %v4792, %v5416
        %v5418 = vsub.f32 1.0, %v5417
        %v5419 = vmul.f32 %v5416, %v5418
        %v5420 = vadd.f32 %v5416, %v5419
        %vm5421 = vweird.f32 %v4792
        %vm5422 = vweird.f32 %v5416
        %vm5423 = vmor %vm5421, %vm5422
        %v5424 = vsel %vm5423, %v5416, %v5420
        %v5425 = vand.u32 2147483647, %v4792
        %vm5426 = vcmp.eq.f32.partialorder %v5425, 8.507059e+37
        %v5427 = vand.u32 %v4792, 2147483648
        %v5428 = vor.u32 1.1754944e-38, %v5427
        %v5429 = vsel %vm5426, %v5428, %v5424
        %v5430 = vmul.f32 1.0, %v5429
        %v5431 = vrcp.pop %v4793
        %v5432 = vmul.f32 %v4793, %v5431
        %v5433 = vsub.f32 1.0, %v5432
        %v5434 = vmul.f32 %v5431, %v5433
        %v5435 = vadd.f32 %v5431, %v5434
        %vm5436 = vweird.f32 %v4793
        %vm5437 = vweird.f32 %v5431
        %vm5438 = vmor %vm5436, %vm5437
        %v5439 = vsel %vm5438, %v5431, %v5435
        %v5440 = vand.u32 2147483647, %v4793
        %vm5441 = vcmp.eq.f32.partialorder %v5440, 8.507059e+37
        %v5442 = vand.u32 %v4793, 2147483648
        %v5443 = vor.u32 1.1754944e-38, %v5442
        %v5444 = vsel %vm5441, %v5443, %v5439
        %v5445 = vmul.f32 1.0, %v5444
        %v5446 = vrcp.pop %v4794
        %v5447 = vmul.f32 %v4794, %v5446
        %v5448 = vsub.f32 1.0, %v5447
        %v5449 = vmul.f32 %v5446, %v5448
        %v5450 = vadd.f32 %v5446, %v5449
        %vm5451 = vweird.f32 %v4794
        %vm5452 = vweird.f32 %v5446
        %vm5453 = vmor %vm5451, %vm5452
        %v5454 = vsel %vm5453, %v5446, %v5450
        %v5455 = vand.u32 2147483647, %v4794
        %vm5456 = vcmp.eq.f32.partialorder %v5455, 8.507059e+37
        %v5457 = vand.u32 %v4794, 2147483648
        %v5458 = vor.u32 1.1754944e-38, %v5457
        %v5459 = vsel %vm5456, %v5458, %v5454
        %v5460 = vmul.f32 1.0, %v5459
        %v5461 = vrcp.pop %v4795
        %v5462 = vmul.f32 %v4795, %v5461
        %v5463 = vsub.f32 1.0, %v5462
        %v5464 = vmul.f32 %v5461, %v5463
        %v5465 = vadd.f32 %v5461, %v5464
        %vm5466 = vweird.f32 %v4795
        %vm5467 = vweird.f32 %v5461
        %vm5468 = vmor %vm5466, %vm5467
        %v5469 = vsel %vm5468, %v5461, %v5465
        %v5470 = vand.u32 2147483647, %v4795
        %vm5471 = vcmp.eq.f32.partialorder %v5470, 8.507059e+37
        %v5472 = vand.u32 %v4795, 2147483648
        %v5473 = vor.u32 1.1754944e-38, %v5472
        %v5474 = vsel %vm5471, %v5473, %v5469
        %v5475 = vmul.f32 1.0, %v5474
        %v5476 = vrcp.pop %v4796
        %v5477 = vmul.f32 %v4796, %v5476
        %v5478 = vsub.f32 1.0, %v5477
        %v5479 = vmul.f32 %v5476, %v5478
        %v5480 = vadd.f32 %v5476, %v5479
        %vm5481 = vweird.f32 %v4796
        %vm5482 = vweird.f32 %v5476
        %vm5483 = vmor %vm5481, %vm5482
        %v5484 = vsel %vm5483, %v5476, %v5480
        %v5485 = vand.u32 2147483647, %v4796
        %vm5486 = vcmp.eq.f32.partialorder %v5485, 8.507059e+37
        %v5487 = vand.u32 %v4796, 2147483648
        %v5488 = vor.u32 1.1754944e-38, %v5487
        %v5489 = vsel %vm5486, %v5488, %v5484
        %v5490 = vmul.f32 1.0, %v5489
        %v5491 = vrcp.pop %v4797
        %v5492 = vmul.f32 %v4797, %v5491
        %v5493 = vsub.f32 1.0, %v5492
        %v5494 = vmul.f32 %v5491, %v5493
        %v5495 = vadd.f32 %v5491, %v5494
        %vm5496 = vweird.f32 %v4797
        %vm5497 = vweird.f32 %v5491
        %vm5498 = vmor %vm5496, %vm5497
        %v5499 = vsel %vm5498, %v5491, %v5495
        %v5500 = vand.u32 2147483647, %v4797
        %vm5501 = vcmp.eq.f32.partialorder %v5500, 8.507059e+37
        %v5502 = vand.u32 %v4797, 2147483648
        %v5503 = vor.u32 1.1754944e-38, %v5502
        %v5504 = vsel %vm5501, %v5503, %v5499
        %v5505 = vmul.f32 1.0, %v5504
        %v5506 = vrcp.pop %v4798
        %v5507 = vmul.f32 %v4798, %v5506
        %v5508 = vsub.f32 1.0, %v5507
        %v5509 = vmul.f32 %v5506, %v5508
        %v5510 = vadd.f32 %v5506, %v5509
        %vm5511 = vweird.f32 %v4798
        %vm5512 = vweird.f32 %v5506
        %vm5513 = vmor %vm5511, %vm5512
        %v5514 = vsel %vm5513, %v5506, %v5510
        %v5515 = vand.u32 2147483647, %v4798
        %vm5516 = vcmp.eq.f32.partialorder %v5515, 8.507059e+37
        %v5517 = vand.u32 %v4798, 2147483648
        %v5518 = vor.u32 1.1754944e-38, %v5517
        %v5519 = vsel %vm5516, %v5518, %v5514
        %v5520 = vmul.f32 1.0, %v5519
        %v5521 = vrcp.pop %v4799
        %v5522 = vmul.f32 %v4799, %v5521
        %v5523 = vsub.f32 1.0, %v5522
        %v5524 = vmul.f32 %v5521, %v5523
        %v5525 = vadd.f32 %v5521, %v5524
        %vm5526 = vweird.f32 %v4799
        %vm5527 = vweird.f32 %v5521
        %vm5528 = vmor %vm5526, %vm5527
        %v5529 = vsel %vm5528, %v5521, %v5525
        %v5530 = vand.u32 2147483647, %v4799
        %vm5531 = vcmp.eq.f32.partialorder %v5530, 8.507059e+37
        %v5532 = vand.u32 %v4799, 2147483648
        %v5533 = vor.u32 1.1754944e-38, %v5532
        %v5534 = vsel %vm5531, %v5533, %v5529
        %v5535 = vmul.f32 1.0, %v5534
        %v5536 = vrcp.pop %v4800
        %v5537 = vmul.f32 %v4800, %v5536
        %v5538 = vsub.f32 1.0, %v5537
        %v5539 = vmul.f32 %v5536, %v5538
        %v5540 = vadd.f32 %v5536, %v5539
        %vm5541 = vweird.f32 %v4800
        %vm5542 = vweird.f32 %v5536
        %vm5543 = vmor %vm5541, %vm5542
        %v5544 = vsel %vm5543, %v5536, %v5540
        %v5545 = vand.u32 2147483647, %v4800
        %vm5546 = vcmp.eq.f32.partialorder %v5545, 8.507059e+37
        %v5547 = vand.u32 %v4800, 2147483648
        %v5548 = vor.u32 1.1754944e-38, %v5547
        %v5549 = vsel %vm5546, %v5548, %v5544
        %v5550 = vmul.f32 1.0, %v5549
        %v5551 = vrcp.pop %v4801
        %v5552 = vmul.f32 %v4801, %v5551
        %v5553 = vsub.f32 1.0, %v5552
        %v5554 = vmul.f32 %v5551, %v5553
        %v5555 = vadd.f32 %v5551, %v5554
        %vm5556 = vweird.f32 %v4801
        %vm5557 = vweird.f32 %v5551
        %vm5558 = vmor %vm5556, %vm5557
        %v5559 = vsel %vm5558, %v5551, %v5555
        %v5560 = vand.u32 2147483647, %v4801
        %vm5561 = vcmp.eq.f32.partialorder %v5560, 8.507059e+37
        %v5562 = vand.u32 %v4801, 2147483648
        %v5563 = vor.u32 1.1754944e-38, %v5562
        %v5564 = vsel %vm5561, %v5563, %v5559
        %v5565 = vmul.f32 1.0, %v5564
        %v5566 = vrcp.pop %v4802
        %v5567 = vmul.f32 %v4802, %v5566
        %v5568 = vsub.f32 1.0, %v5567
        %v5569 = vmul.f32 %v5566, %v5568
        %v5570 = vadd.f32 %v5566, %v5569
        %vm5571 = vweird.f32 %v4802
        %vm5572 = vweird.f32 %v5566
        %vm5573 = vmor %vm5571, %vm5572
        %v5574 = vsel %vm5573, %v5566, %v5570
        %v5575 = vand.u32 2147483647, %v4802
        %vm5576 = vcmp.eq.f32.partialorder %v5575, 8.507059e+37
        %v5577 = vand.u32 %v4802, 2147483648
        %v5578 = vor.u32 1.1754944e-38, %v5577
        %v5579 = vsel %vm5576, %v5578, %v5574
        %v5580 = vmul.f32 1.0, %v5579
        %v5581 = vrcp.pop %v4803
        %v5582 = vmul.f32 %v4803, %v5581
        %v5583 = vsub.f32 1.0, %v5582
        %v5584 = vmul.f32 %v5581, %v5583
        %v5585 = vadd.f32 %v5581, %v5584
        %vm5586 = vweird.f32 %v4803
        %vm5587 = vweird.f32 %v5581
        %vm5588 = vmor %vm5586, %vm5587
        %v5589 = vsel %vm5588, %v5581, %v5585
        %v5590 = vand.u32 2147483647, %v4803
        %vm5591 = vcmp.eq.f32.partialorder %v5590, 8.507059e+37
        %v5592 = vand.u32 %v4803, 2147483648
        %v5593 = vor.u32 1.1754944e-38, %v5592
        %v5594 = vsel %vm5591, %v5593, %v5589
        %v5595 = vmul.f32 1.0, %v5594
        %v5596 = vrcp.pop %v4804
        %v5597 = vmul.f32 %v4804, %v5596
        %v5598 = vsub.f32 1.0, %v5597
        %v5599 = vmul.f32 %v5596, %v5598
        %v5600 = vadd.f32 %v5596, %v5599
        %vm5601 = vweird.f32 %v4804
        %vm5602 = vweird.f32 %v5596
        %vm5603 = vmor %vm5601, %vm5602
        %v5604 = vsel %vm5603, %v5596, %v5600
        %v5605 = vand.u32 2147483647, %v4804
        %vm5606 = vcmp.eq.f32.partialorder %v5605, 8.507059e+37
        %v5607 = vand.u32 %v4804, 2147483648
        %v5608 = vor.u32 1.1754944e-38, %v5607
        %v5609 = vsel %vm5606, %v5608, %v5604
        %v5610 = vmul.f32 1.0, %v5609
        %v5611 = vrcp.pop %v4805
        %v5612 = vmul.f32 %v4805, %v5611
        %v5613 = vsub.f32 1.0, %v5612
        %v5614 = vmul.f32 %v5611, %v5613
        %v5615 = vadd.f32 %v5611, %v5614
        %vm5616 = vweird.f32 %v4805
        %vm5617 = vweird.f32 %v5611
        %vm5618 = vmor %vm5616, %vm5617
        %v5619 = vsel %vm5618, %v5611, %v5615
        %v5620 = vand.u32 2147483647, %v4805
        %vm5621 = vcmp.eq.f32.partialorder %v5620, 8.507059e+37
        %v5622 = vand.u32 %v4805, 2147483648
        %v5623 = vor.u32 1.1754944e-38, %v5622
        %v5624 = vsel %vm5621, %v5623, %v5619
        %v5625 = vmul.f32 1.0, %v5624
        %v5626 = vrcp.pop %v4806
        %v5627 = vmul.f32 %v4806, %v5626
        %v5628 = vsub.f32 1.0, %v5627
        %v5629 = vmul.f32 %v5626, %v5628
        %v5630 = vadd.f32 %v5626, %v5629
        %vm5631 = vweird.f32 %v4806
        %vm5632 = vweird.f32 %v5626
        %vm5633 = vmor %vm5631, %vm5632
        %v5634 = vsel %vm5633, %v5626, %v5630
        %v5635 = vand.u32 2147483647, %v4806
        %vm5636 = vcmp.eq.f32.partialorder %v5635, 8.507059e+37
        %v5637 = vand.u32 %v4806, 2147483648
        %v5638 = vor.u32 1.1754944e-38, %v5637
        %v5639 = vsel %vm5636, %v5638, %v5634
        %v5640 = vmul.f32 1.0, %v5639
        %v5641 = vrcp.pop %v4807
        %v5642 = vmul.f32 %v4807, %v5641
        %v5643 = vsub.f32 1.0, %v5642
        %v5644 = vmul.f32 %v5641, %v5643
        %v5645 = vadd.f32 %v5641, %v5644
        %vm5646 = vweird.f32 %v4807
        %vm5647 = vweird.f32 %v5641
        %vm5648 = vmor %vm5646, %vm5647
        %v5649 = vsel %vm5648, %v5641, %v5645
        %v5650 = vand.u32 2147483647, %v4807
        %vm5651 = vcmp.eq.f32.partialorder %v5650, 8.507059e+37
        %v5652 = vand.u32 %v4807, 2147483648
        %v5653 = vor.u32 1.1754944e-38, %v5652
        %v5654 = vsel %vm5651, %v5653, %v5649
        %v5655 = vmul.f32 1.0, %v5654
        %v5656 = vrcp.pop %v4808
        %v5657 = vmul.f32 %v4808, %v5656
        %v5658 = vsub.f32 1.0, %v5657
        %v5659 = vmul.f32 %v5656, %v5658
        %v5660 = vadd.f32 %v5656, %v5659
        %vm5661 = vweird.f32 %v4808
        %vm5662 = vweird.f32 %v5656
        %vm5663 = vmor %vm5661, %vm5662
        %v5664 = vsel %vm5663, %v5656, %v5660
        %v5665 = vand.u32 2147483647, %v4808
        %vm5666 = vcmp.eq.f32.partialorder %v5665, 8.507059e+37
        %v5667 = vand.u32 %v4808, 2147483648
        %v5668 = vor.u32 1.1754944e-38, %v5667
        %v5669 = vsel %vm5666, %v5668, %v5664
        %v5670 = vmul.f32 1.0, %v5669
        %v5671 = vrcp.pop %v4809
        %v5672 = vmul.f32 %v4809, %v5671
        %v5673 = vsub.f32 1.0, %v5672
        %v5674 = vmul.f32 %v5671, %v5673
        %v5675 = vadd.f32 %v5671, %v5674
        %vm5676 = vweird.f32 %v4809
        %vm5677 = vweird.f32 %v5671
        %vm5678 = vmor %vm5676, %vm5677
        %v5679 = vsel %vm5678, %v5671, %v5675
        %v5680 = vand.u32 2147483647, %v4809
        %vm5681 = vcmp.eq.f32.partialorder %v5680, 8.507059e+37
        %v5682 = vand.u32 %v4809, 2147483648
        %v5683 = vor.u32 1.1754944e-38, %v5682
        %v5684 = vsel %vm5681, %v5683, %v5679
        %v5685 = vmul.f32 1.0, %v5684
        %v5686 = vrcp.pop %v4810
        %v5687 = vmul.f32 %v4810, %v5686
        %v5688 = vsub.f32 1.0, %v5687
        %v5689 = vmul.f32 %v5686, %v5688
        %v5690 = vadd.f32 %v5686, %v5689
        %vm5691 = vweird.f32 %v4810
        %vm5692 = vweird.f32 %v5686
        %vm5693 = vmor %vm5691, %vm5692
        %v5694 = vsel %vm5693, %v5686, %v5690
        %v5695 = vand.u32 2147483647, %v4810
        %vm5696 = vcmp.eq.f32.partialorder %v5695, 8.507059e+37
        %v5697 = vand.u32 %v4810, 2147483648
        %v5698 = vor.u32 1.1754944e-38, %v5697
        %v5699 = vsel %vm5696, %v5698, %v5694
        %v5700 = vmul.f32 1.0, %v5699
        %v5701 = vrcp.pop %v4811
        %v5702 = vmul.f32 %v4811, %v5701
        %v5703 = vsub.f32 1.0, %v5702
        %v5704 = vmul.f32 %v5701, %v5703
        %v5705 = vadd.f32 %v5701, %v5704
        %vm5706 = vweird.f32 %v4811
        %vm5707 = vweird.f32 %v5701
        %vm5708 = vmor %vm5706, %vm5707
        %v5709 = vsel %vm5708, %v5701, %v5705
        %v5710 = vand.u32 2147483647, %v4811
        %vm5711 = vcmp.eq.f32.partialorder %v5710, 8.507059e+37
        %v5712 = vand.u32 %v4811, 2147483648
        %v5713 = vor.u32 1.1754944e-38, %v5712
        %v5714 = vsel %vm5711, %v5713, %v5709
        %v5715 = vmul.f32 1.0, %v5714
        %v5716 = vrcp.pop %v4812
        %v5717 = vmul.f32 %v4812, %v5716
        %v5718 = vsub.f32 1.0, %v5717
        %v5719 = vmul.f32 %v5716, %v5718
        %v5720 = vadd.f32 %v5716, %v5719
        %vm5721 = vweird.f32 %v4812
        %vm5722 = vweird.f32 %v5716
        %vm5723 = vmor %vm5721, %vm5722
        %v5724 = vsel %vm5723, %v5716, %v5720
        %v5725 = vand.u32 2147483647, %v4812
        %vm5726 = vcmp.eq.f32.partialorder %v5725, 8.507059e+37
        %v5727 = vand.u32 %v4812, 2147483648
        %v5728 = vor.u32 1.1754944e-38, %v5727
        %v5729 = vsel %vm5726, %v5728, %v5724
        %v5730 = vmul.f32 1.0, %v5729
        %v5731 = vrcp.pop %v4813
        %v5732 = vmul.f32 %v4813, %v5731
        %v5733 = vsub.f32 1.0, %v5732
        %v5734 = vmul.f32 %v5731, %v5733
        %v5735 = vadd.f32 %v5731, %v5734
        %vm5736 = vweird.f32 %v4813
        %vm5737 = vweird.f32 %v5731
        %vm5738 = vmor %vm5736, %vm5737
        %v5739 = vsel %vm5738, %v5731, %v5735
        %v5740 = vand.u32 2147483647, %v4813
        %vm5741 = vcmp.eq.f32.partialorder %v5740, 8.507059e+37
        %v5742 = vand.u32 %v4813, 2147483648
        %v5743 = vor.u32 1.1754944e-38, %v5742
        %v5744 = vsel %vm5741, %v5743, %v5739
        %v5745 = vmul.f32 1.0, %v5744
        %v5746 = vrcp.pop %v4814
        %v5747 = vmul.f32 %v4814, %v5746
        %v5748 = vsub.f32 1.0, %v5747
        %v5749 = vmul.f32 %v5746, %v5748
        %v5750 = vadd.f32 %v5746, %v5749
        %vm5751 = vweird.f32 %v4814
        %vm5752 = vweird.f32 %v5746
        %vm5753 = vmor %vm5751, %vm5752
        %v5754 = vsel %vm5753, %v5746, %v5750
        %v5755 = vand.u32 2147483647, %v4814
        %vm5756 = vcmp.eq.f32.partialorder %v5755, 8.507059e+37
        %v5757 = vand.u32 %v4814, 2147483648
        %v5758 = vor.u32 1.1754944e-38, %v5757
        %v5759 = vsel %vm5756, %v5758, %v5754
        %v5760 = vmul.f32 1.0, %v5759
        %v5761 = vrcp.pop %v4815
        %v5762 = vmul.f32 %v4815, %v5761
        %v5763 = vsub.f32 1.0, %v5762
        %v5764 = vmul.f32 %v5761, %v5763
        %v5765 = vadd.f32 %v5761, %v5764
        %vm5766 = vweird.f32 %v4815
        %vm5767 = vweird.f32 %v5761
        %vm5768 = vmor %vm5766, %vm5767
        %v5769 = vsel %vm5768, %v5761, %v5765
        %v5770 = vand.u32 2147483647, %v4815
        %vm5771 = vcmp.eq.f32.partialorder %v5770, 8.507059e+37
        %v5772 = vand.u32 %v4815, 2147483648
        %v5773 = vor.u32 1.1754944e-38, %v5772
        %v5774 = vsel %vm5771, %v5773, %v5769
        %v5775 = vmul.f32 1.0, %v5774
        %v5776 = vmul.f32 %v4496, %v4830
        %v5777 = vmul.f32 %v4497, %v4845
        %v5778 = vmul.f32 %v4498, %v4860
        %v5779 = vmul.f32 %v4499, %v4875
        %v5780 = vmul.f32 %v4500, %v4890
        %v5781 = vmul.f32 %v4501, %v4905
        %v5782 = vmul.f32 %v4502, %v4920
        %v5783 = vmul.f32 %v4503, %v4935
        %v5784 = vmul.f32 %v4504, %v4950
        %v5785 = vmul.f32 %v4505, %v4965
        %v5786 = vmul.f32 %v4506, %v4980
        %v5787 = vmul.f32 %v4507, %v4995
        %v5788 = vmul.f32 %v4508, %v5010
        %v5789 = vmul.f32 %v4509, %v5025
        %v5790 = vmul.f32 %v4510, %v5040
        %v5791 = vmul.f32 %v4511, %v5055
        %v5792 = vmul.f32 %v4512, %v5070
        %v5793 = vmul.f32 %v4513, %v5085
        %v5794 = vmul.f32 %v4514, %v5100
        %v5795 = vmul.f32 %v4515, %v5115
        %v5796 = vmul.f32 %v4516, %v5130
        %v5797 = vmul.f32 %v4517, %v5145
        %v5798 = vmul.f32 %v4518, %v5160
        %v5799 = vmul.f32 %v4519, %v5175
        %v5800 = vmul.f32 %v4520, %v5190
        %v5801 = vmul.f32 %v4521, %v5205
        %v5802 = vmul.f32 %v4522, %v5220
        %v5803 = vmul.f32 %v4523, %v5235
        %v5804 = vmul.f32 %v4524, %v5250
        %v5805 = vmul.f32 %v4525, %v5265
        %v5806 = vmul.f32 %v4526, %v5280
        %v5807 = vmul.f32 %v4527, %v5295
        %v5808 = vmul.f32 %v4528, %v5310
        %v5809 = vmul.f32 %v4529, %v5325
        %v5810 = vmul.f32 %v4530, %v5340
        %v5811 = vmul.f32 %v4531, %v5355
        %v5812 = vmul.f32 %v4532, %v5370
        %v5813 = vmul.f32 %v4533, %v5385
        %v5814 = vmul.f32 %v4534, %v5400
        %v5815 = vmul.f32 %v4535, %v5415
        %v5816 = vmul.f32 %v4536, %v5430
        %v5817 = vmul.f32 %v4537, %v5445
        %v5818 = vmul.f32 %v4538, %v5460
        %v5819 = vmul.f32 %v4539, %v5475
        %v5820 = vmul.f32 %v4540, %v5490
        %v5821 = vmul.f32 %v4541, %v5505
        %v5822 = vmul.f32 %v4542, %v5520
        %v5823 = vmul.f32 %v4543, %v5535
        %v5824 = vmul.f32 %v4544, %v5550
        %v5825 = vmul.f32 %v4545, %v5565
        %v5826 = vmul.f32 %v4546, %v5580
        %v5827 = vmul.f32 %v4547, %v5595
        %v5828 = vmul.f32 %v4548, %v5610
        %v5829 = vmul.f32 %v4549, %v5625
        %v5830 = vmul.f32 %v4550, %v5640
        %v5831 = vmul.f32 %v4551, %v5655
        %v5832 = vmul.f32 %v4552, %v5670
        %v5833 = vmul.f32 %v4553, %v5685
        %v5834 = vmul.f32 %v4554, %v5700
        %v5835 = vmul.f32 %v4555, %v5715
        %v5836 = vmul.f32 %v4556, %v5730
        %v5837 = vmul.f32 %v4557, %v5745
        %v5838 = vmul.f32 %v4558, %v5760
        %v5839 = vmul.f32 %v4559, %v5775
        %v5841 = vperm.slane %v3773, 0
        %5843 = vmatpush.msra.mxu0 %v3755
        %5844 = vmatpush.msra.mxu0 %v3754
        %5845 = vmatpush.msra.mxu0 %v3753
        %5846 = vmatpush.msra.mxu0 %v3752
        %5847 = vmatpush.msra.mxu0 %v3751
        %5848 = vmatpush.msra.mxu0 %v3750
        %5849 = vmatpush.msra.mxu0 %v3749
        %5850 = vmatpush.msra.mxu0 %v3748
        %5851 = vmatpush.msra.mxu0 %v3747
        %5852 = vmatpush.msra.mxu0 %v3746
        %5853 = vmatpush.msra.mxu0 %v3745
        %5854 = vmatpush.msra.mxu0 %v3744
        %5855 = vmatpush.msra.mxu0 %v3743
        %5856 = vmatpush.msra.mxu0 %v3742
        %5857 = vmatpush.msra.mxu0 %v3741
        %5858 = vmatpush.msra.mxu0 %v3740
        %5859 = vmatmul.f32.gmra.mxu0 %v5776
        %v5860 = vpop.f32.mrf.mxu0
        %v5861 = vadd.f32 %v5841, %v5860
        %5862 = vmatmul.f32.gmra.mxu0 %v5778
        %v5863 = vpop.f32.mrf.mxu0
        %v5864 = vadd.f32 %v5841, %v5863
        %5865 = vmatmul.f32.gmra.mxu0 %v5780
        %v5866 = vpop.f32.mrf.mxu0
        %v5867 = vadd.f32 %v5841, %v5866
        %5868 = vmatmul.f32.gmra.mxu0 %v5782
        %v5869 = vpop.f32.mrf.mxu0
        %v5870 = vadd.f32 %v5841, %v5869
        %5871 = vmatmul.f32.gmra.mxu0 %v5784
        %v5872 = vpop.f32.mrf.mxu0
        %v5873 = vadd.f32 %v5841, %v5872
        %5874 = vmatmul.f32.gmra.mxu0 %v5786
        %v5875 = vpop.f32.mrf.mxu0
        %v5876 = vadd.f32 %v5841, %v5875
        %5877 = vmatmul.f32.gmra.mxu0 %v5788
        %v5878 = vpop.f32.mrf.mxu0
        %v5879 = vadd.f32 %v5841, %v5878
        %5880 = vmatmul.f32.gmra.mxu0 %v5790
        %v5881 = vpop.f32.mrf.mxu0
        %v5882 = vadd.f32 %v5841, %v5881
        %5883 = vmatmul.f32.gmra.mxu0 %v5792
        %v5884 = vpop.f32.mrf.mxu0
        %v5885 = vadd.f32 %v5841, %v5884
        %5886 = vmatmul.f32.gmra.mxu0 %v5794
        %v5887 = vpop.f32.mrf.mxu0
        %v5888 = vadd.f32 %v5841, %v5887
        %5889 = vmatmul.f32.gmra.mxu0 %v5796
        %v5890 = vpop.f32.mrf.mxu0
        %v5891 = vadd.f32 %v5841, %v5890
        %5892 = vmatmul.f32.gmra.mxu0 %v5798
        %v5893 = vpop.f32.mrf.mxu0
        %v5894 = vadd.f32 %v5841, %v5893
        %5895 = vmatmul.f32.gmra.mxu0 %v5800
        %v5896 = vpop.f32.mrf.mxu0
        %v5897 = vadd.f32 %v5841, %v5896
        %5898 = vmatmul.f32.gmra.mxu0 %v5802
        %v5899 = vpop.f32.mrf.mxu0
        %v5900 = vadd.f32 %v5841, %v5899
        %5901 = vmatmul.f32.gmra.mxu0 %v5804
        %v5902 = vpop.f32.mrf.mxu0
        %v5903 = vadd.f32 %v5841, %v5902
        %5904 = vmatmul.f32.gmra.mxu0 %v5806
        %v5905 = vpop.f32.mrf.mxu0
        %v5906 = vadd.f32 %v5841, %v5905
        %5907 = vmatmul.f32.gmra.mxu0 %v5808
        %v5908 = vpop.f32.mrf.mxu0
        %v5909 = vadd.f32 %v5841, %v5908
        %5910 = vmatmul.f32.gmra.mxu0 %v5810
        %v5911 = vpop.f32.mrf.mxu0
        %v5912 = vadd.f32 %v5841, %v5911
        %5913 = vmatmul.f32.gmra.mxu0 %v5812
        %v5914 = vpop.f32.mrf.mxu0
        %v5915 = vadd.f32 %v5841, %v5914
        %5916 = vmatmul.f32.gmra.mxu0 %v5814
        %v5917 = vpop.f32.mrf.mxu0
        %v5918 = vadd.f32 %v5841, %v5917
        %5919 = vmatmul.f32.gmra.mxu0 %v5816
        %v5920 = vpop.f32.mrf.mxu0
        %v5921 = vadd.f32 %v5841, %v5920
        %5922 = vmatmul.f32.gmra.mxu0 %v5818
        %v5923 = vpop.f32.mrf.mxu0
        %v5924 = vadd.f32 %v5841, %v5923
        %5925 = vmatmul.f32.gmra.mxu0 %v5820
        %v5926 = vpop.f32.mrf.mxu0
        %v5927 = vadd.f32 %v5841, %v5926
        %5928 = vmatmul.f32.gmra.mxu0 %v5822
        %v5929 = vpop.f32.mrf.mxu0
        %v5930 = vadd.f32 %v5841, %v5929
        %5931 = vmatmul.f32.gmra.mxu0 %v5824
        %v5932 = vpop.f32.mrf.mxu0
        %v5933 = vadd.f32 %v5841, %v5932
        %5934 = vmatmul.f32.gmra.mxu0 %v5826
        %v5935 = vpop.f32.mrf.mxu0
        %v5936 = vadd.f32 %v5841, %v5935
        %5937 = vmatmul.f32.gmra.mxu0 %v5828
        %v5938 = vpop.f32.mrf.mxu0
        %v5939 = vadd.f32 %v5841, %v5938
        %5940 = vmatmul.f32.gmra.mxu0 %v5830
        %v5941 = vpop.f32.mrf.mxu0
        %v5942 = vadd.f32 %v5841, %v5941
        %5943 = vmatmul.f32.gmra.mxu0 %v5832
        %v5944 = vpop.f32.mrf.mxu0
        %v5945 = vadd.f32 %v5841, %v5944
        %5946 = vmatmul.f32.gmra.mxu0 %v5834
        %v5947 = vpop.f32.mrf.mxu0
        %v5948 = vadd.f32 %v5841, %v5947
        %5949 = vmatmul.f32.gmra.mxu0 %v5836
        %v5950 = vpop.f32.mrf.mxu0
        %v5951 = vadd.f32 %v5841, %v5950
        %5952 = vmatmul.f32.gmra.mxu0 %v5838
        %v5953 = vpop.f32.mrf.mxu0
        %v5954 = vadd.f32 %v5841, %v5953
        %5955 = vdwg.mxu0
        %5956 = vmatpush.msra.mxu0 %v3771
        %5957 = vmatpush.msra.mxu0 %v3770
        %5958 = vmatpush.msra.mxu0 %v3769
        %5959 = vmatpush.msra.mxu0 %v3768
        %5960 = vmatpush.msra.mxu0 %v3767
        %5961 = vmatpush.msra.mxu0 %v3766
        %5962 = vmatpush.msra.mxu0 %v3765
        %5963 = vmatpush.msra.mxu0 %v3764
        %5964 = vmatpush.msra.mxu0 %v3763
        %5965 = vmatpush.msra.mxu0 %v3762
        %5966 = vmatpush.msra.mxu0 %v3761
        %5967 = vmatpush.msra.mxu0 %v3760
        %5968 = vmatpush.msra.mxu0 %v3759
        %5969 = vmatpush.msra.mxu0 %v3758
        %5970 = vmatpush.msra.mxu0 %v3757
        %5971 = vmatpush.msra.mxu0 %v3756
        %5972 = vmatmul.f32.gmra.mxu0 %v5777
        %v5973 = vpop.f32.mrf.mxu0
        %v5974 = vadd.f32 %v5861, %v5973
        %5975 = vmatmul.f32.gmra.mxu0 %v5779
        %v5976 = vpop.f32.mrf.mxu0
        %v5977 = vadd.f32 %v5864, %v5976
        %5978 = vmatmul.f32.gmra.mxu0 %v5781
        %v5979 = vpop.f32.mrf.mxu0
        %v5980 = vadd.f32 %v5867, %v5979
        %5981 = vmatmul.f32.gmra.mxu0 %v5783
        %v5982 = vpop.f32.mrf.mxu0
        %v5983 = vadd.f32 %v5870, %v5982
        %5984 = vmatmul.f32.gmra.mxu0 %v5785
        %v5985 = vpop.f32.mrf.mxu0
        %v5986 = vadd.f32 %v5873, %v5985
        %5987 = vmatmul.f32.gmra.mxu0 %v5787
        %v5988 = vpop.f32.mrf.mxu0
        %v5989 = vadd.f32 %v5876, %v5988
        %5990 = vmatmul.f32.gmra.mxu0 %v5789
        %v5991 = vpop.f32.mrf.mxu0
        %v5992 = vadd.f32 %v5879, %v5991
        %5993 = vmatmul.f32.gmra.mxu0 %v5791
        %v5994 = vpop.f32.mrf.mxu0
        %v5995 = vadd.f32 %v5882, %v5994
        %5996 = vmatmul.f32.gmra.mxu0 %v5793
        %v5997 = vpop.f32.mrf.mxu0
        %v5998 = vadd.f32 %v5885, %v5997
        %5999 = vmatmul.f32.gmra.mxu0 %v5795
        %v6000 = vpop.f32.mrf.mxu0
        %v6001 = vadd.f32 %v5888, %v6000
        %6002 = vmatmul.f32.gmra.mxu0 %v5797
        %v6003 = vpop.f32.mrf.mxu0
        %v6004 = vadd.f32 %v5891, %v6003
        %6005 = vmatmul.f32.gmra.mxu0 %v5799
        %v6006 = vpop.f32.mrf.mxu0
        %v6007 = vadd.f32 %v5894, %v6006
        %6008 = vmatmul.f32.gmra.mxu0 %v5801
        %v6009 = vpop.f32.mrf.mxu0
        %v6010 = vadd.f32 %v5897, %v6009
        %6011 = vmatmul.f32.gmra.mxu0 %v5803
        %v6012 = vpop.f32.mrf.mxu0
        %v6013 = vadd.f32 %v5900, %v6012
        %6014 = vmatmul.f32.gmra.mxu0 %v5805
        %v6015 = vpop.f32.mrf.mxu0
        %v6016 = vadd.f32 %v5903, %v6015
        %6017 = vmatmul.f32.gmra.mxu0 %v5807
        %v6018 = vpop.f32.mrf.mxu0
        %v6019 = vadd.f32 %v5906, %v6018
        %6020 = vmatmul.f32.gmra.mxu0 %v5809
        %v6021 = vpop.f32.mrf.mxu0
        %v6022 = vadd.f32 %v5909, %v6021
        %6023 = vmatmul.f32.gmra.mxu0 %v5811
        %v6024 = vpop.f32.mrf.mxu0
        %v6025 = vadd.f32 %v5912, %v6024
        %6026 = vmatmul.f32.gmra.mxu0 %v5813
        %v6027 = vpop.f32.mrf.mxu0
        %v6028 = vadd.f32 %v5915, %v6027
        %6029 = vmatmul.f32.gmra.mxu0 %v5815
        %v6030 = vpop.f32.mrf.mxu0
        %v6031 = vadd.f32 %v5918, %v6030
        %6032 = vmatmul.f32.gmra.mxu0 %v5817
        %v6033 = vpop.f32.mrf.mxu0
        %v6034 = vadd.f32 %v5921, %v6033
        %6035 = vmatmul.f32.gmra.mxu0 %v5819
        %v6036 = vpop.f32.mrf.mxu0
        %v6037 = vadd.f32 %v5924, %v6036
        %6038 = vmatmul.f32.gmra.mxu0 %v5821
        %v6039 = vpop.f32.mrf.mxu0
        %v6040 = vadd.f32 %v5927, %v6039
        %6041 = vmatmul.f32.gmra.mxu0 %v5823
        %v6042 = vpop.f32.mrf.mxu0
        %v6043 = vadd.f32 %v5930, %v6042
        %6044 = vmatmul.f32.gmra.mxu0 %v5825
        %v6045 = vpop.f32.mrf.mxu0
        %v6046 = vadd.f32 %v5933, %v6045
        %6047 = vmatmul.f32.gmra.mxu0 %v5827
        %v6048 = vpop.f32.mrf.mxu0
        %v6049 = vadd.f32 %v5936, %v6048
        %6050 = vmatmul.f32.gmra.mxu0 %v5829
        %v6051 = vpop.f32.mrf.mxu0
        %v6052 = vadd.f32 %v5939, %v6051
        %6053 = vmatmul.f32.gmra.mxu0 %v5831
        %v6054 = vpop.f32.mrf.mxu0
        %v6055 = vadd.f32 %v5942, %v6054
        %6056 = vmatmul.f32.gmra.mxu0 %v5833
        %v6057 = vpop.f32.mrf.mxu0
        %v6058 = vadd.f32 %v5945, %v6057
        %6059 = vmatmul.f32.gmra.mxu0 %v5835
        %v6060 = vpop.f32.mrf.mxu0
        %v6061 = vadd.f32 %v5948, %v6060
        %6062 = vmatmul.f32.gmra.mxu0 %v5837
        %v6063 = vpop.f32.mrf.mxu0
        %v6064 = vadd.f32 %v5951, %v6063
        %6065 = vmatmul.f32.gmra.mxu0 %v5839
        %v6066 = vpop.f32.mrf.mxu0
        %v6067 = vadd.f32 %v5954, %v6066
        %6068 = vdwg.mxu0
        %v6069 = vxor.u32 %v5974, 2147483648
        %v6070 = vxor.u32 %v5977, 2147483648
        %v6071 = vxor.u32 %v5980, 2147483648
        %v6072 = vxor.u32 %v5983, 2147483648
        %v6073 = vxor.u32 %v5986, 2147483648
        %v6074 = vxor.u32 %v5989, 2147483648
        %v6075 = vxor.u32 %v5992, 2147483648
        %v6076 = vxor.u32 %v5995, 2147483648
        %v6077 = vxor.u32 %v5998, 2147483648
        %v6078 = vxor.u32 %v6001, 2147483648
        %v6079 = vxor.u32 %v6004, 2147483648
        %v6080 = vxor.u32 %v6007, 2147483648
        %v6081 = vxor.u32 %v6010, 2147483648
        %v6082 = vxor.u32 %v6013, 2147483648
        %v6083 = vxor.u32 %v6016, 2147483648
        %v6084 = vxor.u32 %v6019, 2147483648
        %v6085 = vxor.u32 %v6022, 2147483648
        %v6086 = vxor.u32 %v6025, 2147483648
        %v6087 = vxor.u32 %v6028, 2147483648
        %v6088 = vxor.u32 %v6031, 2147483648
        %v6089 = vxor.u32 %v6034, 2147483648
        %v6090 = vxor.u32 %v6037, 2147483648
        %v6091 = vxor.u32 %v6040, 2147483648
        %v6092 = vxor.u32 %v6043, 2147483648
        %v6093 = vxor.u32 %v6046, 2147483648
        %v6094 = vxor.u32 %v6049, 2147483648
        %v6095 = vxor.u32 %v6052, 2147483648
        %v6096 = vxor.u32 %v6055, 2147483648
        %v6097 = vxor.u32 %v6058, 2147483648
        %v6098 = vxor.u32 %v6061, 2147483648
        %v6099 = vxor.u32 %v6064, 2147483648
        %v6100 = vxor.u32 %v6067, 2147483648
        %v6101 = vmul.f32 %v6069, 1.442695
        %v6102 = vpow.pop %v6101
        %v6103 = vmul.f32 %v6070, 1.442695
        %v6104 = vpow.pop %v6103
        %v6105 = vmul.f32 %v6071, 1.442695
        %v6106 = vpow.pop %v6105
        %v6107 = vmul.f32 %v6072, 1.442695
        %v6108 = vpow.pop %v6107
        %v6109 = vmul.f32 %v6073, 1.442695
        %v6110 = vpow.pop %v6109
        %v6111 = vmul.f32 %v6074, 1.442695
        %v6112 = vpow.pop %v6111
        %v6113 = vmul.f32 %v6075, 1.442695
        %v6114 = vpow.pop %v6113
        %v6115 = vmul.f32 %v6076, 1.442695
        %v6116 = vpow.pop %v6115
        %v6117 = vmul.f32 %v6077, 1.442695
        %v6118 = vpow.pop %v6117
        %v6119 = vmul.f32 %v6078, 1.442695
        %v6120 = vpow.pop %v6119
        %v6121 = vmul.f32 %v6079, 1.442695
        %v6122 = vpow.pop %v6121
        %v6123 = vmul.f32 %v6080, 1.442695
        %v6124 = vpow.pop %v6123
        %v6125 = vmul.f32 %v6081, 1.442695
        %v6126 = vpow.pop %v6125
        %v6127 = vmul.f32 %v6082, 1.442695
        %v6128 = vpow.pop %v6127
        %v6129 = vmul.f32 %v6083, 1.442695
        %v6130 = vpow.pop %v6129
        %v6131 = vmul.f32 %v6084, 1.442695
        %v6132 = vpow.pop %v6131
        %v6133 = vmul.f32 %v6085, 1.442695
        %v6134 = vpow.pop %v6133
        %v6135 = vmul.f32 %v6086, 1.442695
        %v6136 = vpow.pop %v6135
        %v6137 = vmul.f32 %v6087, 1.442695
        %v6138 = vpow.pop %v6137
        %v6139 = vmul.f32 %v6088, 1.442695
        %v6140 = vpow.pop %v6139
        %v6141 = vmul.f32 %v6089, 1.442695
        %v6142 = vpow.pop %v6141
        %v6143 = vmul.f32 %v6090, 1.442695
        %v6144 = vpow.pop %v6143
        %v6145 = vmul.f32 %v6091, 1.442695
        %v6146 = vpow.pop %v6145
        %v6147 = vmul.f32 %v6092, 1.442695
        %v6148 = vpow.pop %v6147
        %v6149 = vmul.f32 %v6093, 1.442695
        %v6150 = vpow.pop %v6149
        %v6151 = vmul.f32 %v6094, 1.442695
        %v6152 = vpow.pop %v6151
        %v6153 = vmul.f32 %v6095, 1.442695
        %v6154 = vpow.pop %v6153
        %v6155 = vmul.f32 %v6096, 1.442695
        %v6156 = vpow.pop %v6155
        %v6157 = vmul.f32 %v6097, 1.442695
        %v6158 = vpow.pop %v6157
        %v6159 = vmul.f32 %v6098, 1.442695
        %v6160 = vpow.pop %v6159
        %v6161 = vmul.f32 %v6099, 1.442695
        %v6162 = vpow.pop %v6161
        %v6163 = vmul.f32 %v6100, 1.442695
        %v6164 = vpow.pop %v6163
        %v6165 = vadd.f32 %v6102, 1.0
        %v6166 = vadd.f32 %v6104, 1.0
        %v6167 = vadd.f32 %v6106, 1.0
        %v6168 = vadd.f32 %v6108, 1.0
        %v6169 = vadd.f32 %v6110, 1.0
        %v6170 = vadd.f32 %v6112, 1.0
        %v6171 = vadd.f32 %v6114, 1.0
        %v6172 = vadd.f32 %v6116, 1.0
        %v6173 = vadd.f32 %v6118, 1.0
        %v6174 = vadd.f32 %v6120, 1.0
        %v6175 = vadd.f32 %v6122, 1.0
        %v6176 = vadd.f32 %v6124, 1.0
        %v6177 = vadd.f32 %v6126, 1.0
        %v6178 = vadd.f32 %v6128, 1.0
        %v6179 = vadd.f32 %v6130, 1.0
        %v6180 = vadd.f32 %v6132, 1.0
        %v6181 = vadd.f32 %v6134, 1.0
        %v6182 = vadd.f32 %v6136, 1.0
        %v6183 = vadd.f32 %v6138, 1.0
        %v6184 = vadd.f32 %v6140, 1.0
        %v6185 = vadd.f32 %v6142, 1.0
        %v6186 = vadd.f32 %v6144, 1.0
        %v6187 = vadd.f32 %v6146, 1.0
        %v6188 = vadd.f32 %v6148, 1.0
        %v6189 = vadd.f32 %v6150, 1.0
        %v6190 = vadd.f32 %v6152, 1.0
        %v6191 = vadd.f32 %v6154, 1.0
        %v6192 = vadd.f32 %v6156, 1.0
        %v6193 = vadd.f32 %v6158, 1.0
        %v6194 = vadd.f32 %v6160, 1.0
        %v6195 = vadd.f32 %v6162, 1.0
        %v6196 = vadd.f32 %v6164, 1.0
        %v6197 = vrcp.pop %v6165
        %v6198 = vmul.f32 %v6165, %v6197
        %v6199 = vsub.f32 1.0, %v6198
        %v6200 = vmul.f32 %v6197, %v6199
        %v6201 = vadd.f32 %v6197, %v6200
        %vm6202 = vweird.f32 %v6165
        %vm6203 = vweird.f32 %v6197
        %vm6204 = vmor %vm6202, %vm6203
        %v6205 = vsel %vm6204, %v6197, %v6201
        %v6206 = vand.u32 2147483647, %v6165
        %vm6207 = vcmp.eq.f32.partialorder %v6206, 8.507059e+37
        %v6208 = vand.u32 %v6165, 2147483648
        %v6209 = vor.u32 1.1754944e-38, %v6208
        %v6210 = vsel %vm6207, %v6209, %v6205
        %v6211 = vmul.f32 1.0, %v6210
        %v6212 = vrcp.pop %v6166
        %v6213 = vmul.f32 %v6166, %v6212
        %v6214 = vsub.f32 1.0, %v6213
        %v6215 = vmul.f32 %v6212, %v6214
        %v6216 = vadd.f32 %v6212, %v6215
        %vm6217 = vweird.f32 %v6166
        %vm6218 = vweird.f32 %v6212
        %vm6219 = vmor %vm6217, %vm6218
        %v6220 = vsel %vm6219, %v6212, %v6216
        %v6221 = vand.u32 2147483647, %v6166
        %vm6222 = vcmp.eq.f32.partialorder %v6221, 8.507059e+37
        %v6223 = vand.u32 %v6166, 2147483648
        %v6224 = vor.u32 1.1754944e-38, %v6223
        %v6225 = vsel %vm6222, %v6224, %v6220
        %v6226 = vmul.f32 1.0, %v6225
        %v6227 = vrcp.pop %v6167
        %v6228 = vmul.f32 %v6167, %v6227
        %v6229 = vsub.f32 1.0, %v6228
        %v6230 = vmul.f32 %v6227, %v6229
        %v6231 = vadd.f32 %v6227, %v6230
        %vm6232 = vweird.f32 %v6167
        %vm6233 = vweird.f32 %v6227
        %vm6234 = vmor %vm6232, %vm6233
        %v6235 = vsel %vm6234, %v6227, %v6231
        %v6236 = vand.u32 2147483647, %v6167
        %vm6237 = vcmp.eq.f32.partialorder %v6236, 8.507059e+37
        %v6238 = vand.u32 %v6167, 2147483648
        %v6239 = vor.u32 1.1754944e-38, %v6238
        %v6240 = vsel %vm6237, %v6239, %v6235
        %v6241 = vmul.f32 1.0, %v6240
        %v6242 = vrcp.pop %v6168
        %v6243 = vmul.f32 %v6168, %v6242
        %v6244 = vsub.f32 1.0, %v6243
        %v6245 = vmul.f32 %v6242, %v6244
        %v6246 = vadd.f32 %v6242, %v6245
        %vm6247 = vweird.f32 %v6168
        %vm6248 = vweird.f32 %v6242
        %vm6249 = vmor %vm6247, %vm6248
        %v6250 = vsel %vm6249, %v6242, %v6246
        %v6251 = vand.u32 2147483647, %v6168
        %vm6252 = vcmp.eq.f32.partialorder %v6251, 8.507059e+37
        %v6253 = vand.u32 %v6168, 2147483648
        %v6254 = vor.u32 1.1754944e-38, %v6253
        %v6255 = vsel %vm6252, %v6254, %v6250
        %v6256 = vmul.f32 1.0, %v6255
        %v6257 = vrcp.pop %v6169
        %v6258 = vmul.f32 %v6169, %v6257
        %v6259 = vsub.f32 1.0, %v6258
        %v6260 = vmul.f32 %v6257, %v6259
        %v6261 = vadd.f32 %v6257, %v6260
        %vm6262 = vweird.f32 %v6169
        %vm6263 = vweird.f32 %v6257
        %vm6264 = vmor %vm6262, %vm6263
        %v6265 = vsel %vm6264, %v6257, %v6261
        %v6266 = vand.u32 2147483647, %v6169
        %vm6267 = vcmp.eq.f32.partialorder %v6266, 8.507059e+37
        %v6268 = vand.u32 %v6169, 2147483648
        %v6269 = vor.u32 1.1754944e-38, %v6268
        %v6270 = vsel %vm6267, %v6269, %v6265
        %v6271 = vmul.f32 1.0, %v6270
        %v6272 = vrcp.pop %v6170
        %v6273 = vmul.f32 %v6170, %v6272
        %v6274 = vsub.f32 1.0, %v6273
        %v6275 = vmul.f32 %v6272, %v6274
        %v6276 = vadd.f32 %v6272, %v6275
        %vm6277 = vweird.f32 %v6170
        %vm6278 = vweird.f32 %v6272
        %vm6279 = vmor %vm6277, %vm6278
        %v6280 = vsel %vm6279, %v6272, %v6276
        %v6281 = vand.u32 2147483647, %v6170
        %vm6282 = vcmp.eq.f32.partialorder %v6281, 8.507059e+37
        %v6283 = vand.u32 %v6170, 2147483648
        %v6284 = vor.u32 1.1754944e-38, %v6283
        %v6285 = vsel %vm6282, %v6284, %v6280
        %v6286 = vmul.f32 1.0, %v6285
        %v6287 = vrcp.pop %v6171
        %v6288 = vmul.f32 %v6171, %v6287
        %v6289 = vsub.f32 1.0, %v6288
        %v6290 = vmul.f32 %v6287, %v6289
        %v6291 = vadd.f32 %v6287, %v6290
        %vm6292 = vweird.f32 %v6171
        %vm6293 = vweird.f32 %v6287
        %vm6294 = vmor %vm6292, %vm6293
        %v6295 = vsel %vm6294, %v6287, %v6291
        %v6296 = vand.u32 2147483647, %v6171
        %vm6297 = vcmp.eq.f32.partialorder %v6296, 8.507059e+37
        %v6298 = vand.u32 %v6171, 2147483648
        %v6299 = vor.u32 1.1754944e-38, %v6298
        %v6300 = vsel %vm6297, %v6299, %v6295
        %v6301 = vmul.f32 1.0, %v6300
        %v6302 = vrcp.pop %v6172
        %v6303 = vmul.f32 %v6172, %v6302
        %v6304 = vsub.f32 1.0, %v6303
        %v6305 = vmul.f32 %v6302, %v6304
        %v6306 = vadd.f32 %v6302, %v6305
        %vm6307 = vweird.f32 %v6172
        %vm6308 = vweird.f32 %v6302
        %vm6309 = vmor %vm6307, %vm6308
        %v6310 = vsel %vm6309, %v6302, %v6306
        %v6311 = vand.u32 2147483647, %v6172
        %vm6312 = vcmp.eq.f32.partialorder %v6311, 8.507059e+37
        %v6313 = vand.u32 %v6172, 2147483648
        %v6314 = vor.u32 1.1754944e-38, %v6313
        %v6315 = vsel %vm6312, %v6314, %v6310
        %v6316 = vmul.f32 1.0, %v6315
        %v6317 = vrcp.pop %v6173
        %v6318 = vmul.f32 %v6173, %v6317
        %v6319 = vsub.f32 1.0, %v6318
        %v6320 = vmul.f32 %v6317, %v6319
        %v6321 = vadd.f32 %v6317, %v6320
        %vm6322 = vweird.f32 %v6173
        %vm6323 = vweird.f32 %v6317
        %vm6324 = vmor %vm6322, %vm6323
        %v6325 = vsel %vm6324, %v6317, %v6321
        %v6326 = vand.u32 2147483647, %v6173
        %vm6327 = vcmp.eq.f32.partialorder %v6326, 8.507059e+37
        %v6328 = vand.u32 %v6173, 2147483648
        %v6329 = vor.u32 1.1754944e-38, %v6328
        %v6330 = vsel %vm6327, %v6329, %v6325
        %v6331 = vmul.f32 1.0, %v6330
        %v6332 = vrcp.pop %v6174
        %v6333 = vmul.f32 %v6174, %v6332
        %v6334 = vsub.f32 1.0, %v6333
        %v6335 = vmul.f32 %v6332, %v6334
        %v6336 = vadd.f32 %v6332, %v6335
        %vm6337 = vweird.f32 %v6174
        %vm6338 = vweird.f32 %v6332
        %vm6339 = vmor %vm6337, %vm6338
        %v6340 = vsel %vm6339, %v6332, %v6336
        %v6341 = vand.u32 2147483647, %v6174
        %vm6342 = vcmp.eq.f32.partialorder %v6341, 8.507059e+37
        %v6343 = vand.u32 %v6174, 2147483648
        %v6344 = vor.u32 1.1754944e-38, %v6343
        %v6345 = vsel %vm6342, %v6344, %v6340
        %v6346 = vmul.f32 1.0, %v6345
        %v6347 = vrcp.pop %v6175
        %v6348 = vmul.f32 %v6175, %v6347
        %v6349 = vsub.f32 1.0, %v6348
        %v6350 = vmul.f32 %v6347, %v6349
        %v6351 = vadd.f32 %v6347, %v6350
        %vm6352 = vweird.f32 %v6175
        %vm6353 = vweird.f32 %v6347
        %vm6354 = vmor %vm6352, %vm6353
        %v6355 = vsel %vm6354, %v6347, %v6351
        %v6356 = vand.u32 2147483647, %v6175
        %vm6357 = vcmp.eq.f32.partialorder %v6356, 8.507059e+37
        %v6358 = vand.u32 %v6175, 2147483648
        %v6359 = vor.u32 1.1754944e-38, %v6358
        %v6360 = vsel %vm6357, %v6359, %v6355
        %v6361 = vmul.f32 1.0, %v6360
        %v6362 = vrcp.pop %v6176
        %v6363 = vmul.f32 %v6176, %v6362
        %v6364 = vsub.f32 1.0, %v6363
        %v6365 = vmul.f32 %v6362, %v6364
        %v6366 = vadd.f32 %v6362, %v6365
        %vm6367 = vweird.f32 %v6176
        %vm6368 = vweird.f32 %v6362
        %vm6369 = vmor %vm6367, %vm6368
        %v6370 = vsel %vm6369, %v6362, %v6366
        %v6371 = vand.u32 2147483647, %v6176
        %vm6372 = vcmp.eq.f32.partialorder %v6371, 8.507059e+37
        %v6373 = vand.u32 %v6176, 2147483648
        %v6374 = vor.u32 1.1754944e-38, %v6373
        %v6375 = vsel %vm6372, %v6374, %v6370
        %v6376 = vmul.f32 1.0, %v6375
        %v6377 = vrcp.pop %v6177
        %v6378 = vmul.f32 %v6177, %v6377
        %v6379 = vsub.f32 1.0, %v6378
        %v6380 = vmul.f32 %v6377, %v6379
        %v6381 = vadd.f32 %v6377, %v6380
        %vm6382 = vweird.f32 %v6177
        %vm6383 = vweird.f32 %v6377
        %vm6384 = vmor %vm6382, %vm6383
        %v6385 = vsel %vm6384, %v6377, %v6381
        %v6386 = vand.u32 2147483647, %v6177
        %vm6387 = vcmp.eq.f32.partialorder %v6386, 8.507059e+37
        %v6388 = vand.u32 %v6177, 2147483648
        %v6389 = vor.u32 1.1754944e-38, %v6388
        %v6390 = vsel %vm6387, %v6389, %v6385
        %v6391 = vmul.f32 1.0, %v6390
        %v6392 = vrcp.pop %v6178
        %v6393 = vmul.f32 %v6178, %v6392
        %v6394 = vsub.f32 1.0, %v6393
        %v6395 = vmul.f32 %v6392, %v6394
        %v6396 = vadd.f32 %v6392, %v6395
        %vm6397 = vweird.f32 %v6178
        %vm6398 = vweird.f32 %v6392
        %vm6399 = vmor %vm6397, %vm6398
        %v6400 = vsel %vm6399, %v6392, %v6396
        %v6401 = vand.u32 2147483647, %v6178
        %vm6402 = vcmp.eq.f32.partialorder %v6401, 8.507059e+37
        %v6403 = vand.u32 %v6178, 2147483648
        %v6404 = vor.u32 1.1754944e-38, %v6403
        %v6405 = vsel %vm6402, %v6404, %v6400
        %v6406 = vmul.f32 1.0, %v6405
        %v6407 = vrcp.pop %v6179
        %v6408 = vmul.f32 %v6179, %v6407
        %v6409 = vsub.f32 1.0, %v6408
        %v6410 = vmul.f32 %v6407, %v6409
        %v6411 = vadd.f32 %v6407, %v6410
        %vm6412 = vweird.f32 %v6179
        %vm6413 = vweird.f32 %v6407
        %vm6414 = vmor %vm6412, %vm6413
        %v6415 = vsel %vm6414, %v6407, %v6411
        %v6416 = vand.u32 2147483647, %v6179
        %vm6417 = vcmp.eq.f32.partialorder %v6416, 8.507059e+37
        %v6418 = vand.u32 %v6179, 2147483648
        %v6419 = vor.u32 1.1754944e-38, %v6418
        %v6420 = vsel %vm6417, %v6419, %v6415
        %v6421 = vmul.f32 1.0, %v6420
        %v6422 = vrcp.pop %v6180
        %v6423 = vmul.f32 %v6180, %v6422
        %v6424 = vsub.f32 1.0, %v6423
        %v6425 = vmul.f32 %v6422, %v6424
        %v6426 = vadd.f32 %v6422, %v6425
        %vm6427 = vweird.f32 %v6180
        %vm6428 = vweird.f32 %v6422
        %vm6429 = vmor %vm6427, %vm6428
        %v6430 = vsel %vm6429, %v6422, %v6426
        %v6431 = vand.u32 2147483647, %v6180
        %vm6432 = vcmp.eq.f32.partialorder %v6431, 8.507059e+37
        %v6433 = vand.u32 %v6180, 2147483648
        %v6434 = vor.u32 1.1754944e-38, %v6433
        %v6435 = vsel %vm6432, %v6434, %v6430
        %v6436 = vmul.f32 1.0, %v6435
        %v6437 = vrcp.pop %v6181
        %v6438 = vmul.f32 %v6181, %v6437
        %v6439 = vsub.f32 1.0, %v6438
        %v6440 = vmul.f32 %v6437, %v6439
        %v6441 = vadd.f32 %v6437, %v6440
        %vm6442 = vweird.f32 %v6181
        %vm6443 = vweird.f32 %v6437
        %vm6444 = vmor %vm6442, %vm6443
        %v6445 = vsel %vm6444, %v6437, %v6441
        %v6446 = vand.u32 2147483647, %v6181
        %vm6447 = vcmp.eq.f32.partialorder %v6446, 8.507059e+37
        %v6448 = vand.u32 %v6181, 2147483648
        %v6449 = vor.u32 1.1754944e-38, %v6448
        %v6450 = vsel %vm6447, %v6449, %v6445
        %v6451 = vmul.f32 1.0, %v6450
        %v6452 = vrcp.pop %v6182
        %v6453 = vmul.f32 %v6182, %v6452
        %v6454 = vsub.f32 1.0, %v6453
        %v6455 = vmul.f32 %v6452, %v6454
        %v6456 = vadd.f32 %v6452, %v6455
        %vm6457 = vweird.f32 %v6182
        %vm6458 = vweird.f32 %v6452
        %vm6459 = vmor %vm6457, %vm6458
        %v6460 = vsel %vm6459, %v6452, %v6456
        %v6461 = vand.u32 2147483647, %v6182
        %vm6462 = vcmp.eq.f32.partialorder %v6461, 8.507059e+37
        %v6463 = vand.u32 %v6182, 2147483648
        %v6464 = vor.u32 1.1754944e-38, %v6463
        %v6465 = vsel %vm6462, %v6464, %v6460
        %v6466 = vmul.f32 1.0, %v6465
        %v6467 = vrcp.pop %v6183
        %v6468 = vmul.f32 %v6183, %v6467
        %v6469 = vsub.f32 1.0, %v6468
        %v6470 = vmul.f32 %v6467, %v6469
        %v6471 = vadd.f32 %v6467, %v6470
        %vm6472 = vweird.f32 %v6183
        %vm6473 = vweird.f32 %v6467
        %vm6474 = vmor %vm6472, %vm6473
        %v6475 = vsel %vm6474, %v6467, %v6471
        %v6476 = vand.u32 2147483647, %v6183
        %vm6477 = vcmp.eq.f32.partialorder %v6476, 8.507059e+37
        %v6478 = vand.u32 %v6183, 2147483648
        %v6479 = vor.u32 1.1754944e-38, %v6478
        %v6480 = vsel %vm6477, %v6479, %v6475
        %v6481 = vmul.f32 1.0, %v6480
        %v6482 = vrcp.pop %v6184
        %v6483 = vmul.f32 %v6184, %v6482
        %v6484 = vsub.f32 1.0, %v6483
        %v6485 = vmul.f32 %v6482, %v6484
        %v6486 = vadd.f32 %v6482, %v6485
        %vm6487 = vweird.f32 %v6184
        %vm6488 = vweird.f32 %v6482
        %vm6489 = vmor %vm6487, %vm6488
        %v6490 = vsel %vm6489, %v6482, %v6486
        %v6491 = vand.u32 2147483647, %v6184
        %vm6492 = vcmp.eq.f32.partialorder %v6491, 8.507059e+37
        %v6493 = vand.u32 %v6184, 2147483648
        %v6494 = vor.u32 1.1754944e-38, %v6493
        %v6495 = vsel %vm6492, %v6494, %v6490
        %v6496 = vmul.f32 1.0, %v6495
        %v6497 = vrcp.pop %v6185
        %v6498 = vmul.f32 %v6185, %v6497
        %v6499 = vsub.f32 1.0, %v6498
        %v6500 = vmul.f32 %v6497, %v6499
        %v6501 = vadd.f32 %v6497, %v6500
        %vm6502 = vweird.f32 %v6185
        %vm6503 = vweird.f32 %v6497
        %vm6504 = vmor %vm6502, %vm6503
        %v6505 = vsel %vm6504, %v6497, %v6501
        %v6506 = vand.u32 2147483647, %v6185
        %vm6507 = vcmp.eq.f32.partialorder %v6506, 8.507059e+37
        %v6508 = vand.u32 %v6185, 2147483648
        %v6509 = vor.u32 1.1754944e-38, %v6508
        %v6510 = vsel %vm6507, %v6509, %v6505
        %v6511 = vmul.f32 1.0, %v6510
        %v6512 = vrcp.pop %v6186
        %v6513 = vmul.f32 %v6186, %v6512
        %v6514 = vsub.f32 1.0, %v6513
        %v6515 = vmul.f32 %v6512, %v6514
        %v6516 = vadd.f32 %v6512, %v6515
        %vm6517 = vweird.f32 %v6186
        %vm6518 = vweird.f32 %v6512
        %vm6519 = vmor %vm6517, %vm6518
        %v6520 = vsel %vm6519, %v6512, %v6516
        %v6521 = vand.u32 2147483647, %v6186
        %vm6522 = vcmp.eq.f32.partialorder %v6521, 8.507059e+37
        %v6523 = vand.u32 %v6186, 2147483648
        %v6524 = vor.u32 1.1754944e-38, %v6523
        %v6525 = vsel %vm6522, %v6524, %v6520
        %v6526 = vmul.f32 1.0, %v6525
        %v6527 = vrcp.pop %v6187
        %v6528 = vmul.f32 %v6187, %v6527
        %v6529 = vsub.f32 1.0, %v6528
        %v6530 = vmul.f32 %v6527, %v6529
        %v6531 = vadd.f32 %v6527, %v6530
        %vm6532 = vweird.f32 %v6187
        %vm6533 = vweird.f32 %v6527
        %vm6534 = vmor %vm6532, %vm6533
        %v6535 = vsel %vm6534, %v6527, %v6531
        %v6536 = vand.u32 2147483647, %v6187
        %vm6537 = vcmp.eq.f32.partialorder %v6536, 8.507059e+37
        %v6538 = vand.u32 %v6187, 2147483648
        %v6539 = vor.u32 1.1754944e-38, %v6538
        %v6540 = vsel %vm6537, %v6539, %v6535
        %v6541 = vmul.f32 1.0, %v6540
        %v6542 = vrcp.pop %v6188
        %v6543 = vmul.f32 %v6188, %v6542
        %v6544 = vsub.f32 1.0, %v6543
        %v6545 = vmul.f32 %v6542, %v6544
        %v6546 = vadd.f32 %v6542, %v6545
        %vm6547 = vweird.f32 %v6188
        %vm6548 = vweird.f32 %v6542
        %vm6549 = vmor %vm6547, %vm6548
        %v6550 = vsel %vm6549, %v6542, %v6546
        %v6551 = vand.u32 2147483647, %v6188
        %vm6552 = vcmp.eq.f32.partialorder %v6551, 8.507059e+37
        %v6553 = vand.u32 %v6188, 2147483648
        %v6554 = vor.u32 1.1754944e-38, %v6553
        %v6555 = vsel %vm6552, %v6554, %v6550
        %v6556 = vmul.f32 1.0, %v6555
        %v6557 = vrcp.pop %v6189
        %v6558 = vmul.f32 %v6189, %v6557
        %v6559 = vsub.f32 1.0, %v6558
        %v6560 = vmul.f32 %v6557, %v6559
        %v6561 = vadd.f32 %v6557, %v6560
        %vm6562 = vweird.f32 %v6189
        %vm6563 = vweird.f32 %v6557
        %vm6564 = vmor %vm6562, %vm6563
        %v6565 = vsel %vm6564, %v6557, %v6561
        %v6566 = vand.u32 2147483647, %v6189
        %vm6567 = vcmp.eq.f32.partialorder %v6566, 8.507059e+37
        %v6568 = vand.u32 %v6189, 2147483648
        %v6569 = vor.u32 1.1754944e-38, %v6568
        %v6570 = vsel %vm6567, %v6569, %v6565
        %v6571 = vmul.f32 1.0, %v6570
        %v6572 = vrcp.pop %v6190
        %v6573 = vmul.f32 %v6190, %v6572
        %v6574 = vsub.f32 1.0, %v6573
        %v6575 = vmul.f32 %v6572, %v6574
        %v6576 = vadd.f32 %v6572, %v6575
        %vm6577 = vweird.f32 %v6190
        %vm6578 = vweird.f32 %v6572
        %vm6579 = vmor %vm6577, %vm6578
        %v6580 = vsel %vm6579, %v6572, %v6576
        %v6581 = vand.u32 2147483647, %v6190
        %vm6582 = vcmp.eq.f32.partialorder %v6581, 8.507059e+37
        %v6583 = vand.u32 %v6190, 2147483648
        %v6584 = vor.u32 1.1754944e-38, %v6583
        %v6585 = vsel %vm6582, %v6584, %v6580
        %v6586 = vmul.f32 1.0, %v6585
        %v6587 = vrcp.pop %v6191
        %v6588 = vmul.f32 %v6191, %v6587
        %v6589 = vsub.f32 1.0, %v6588
        %v6590 = vmul.f32 %v6587, %v6589
        %v6591 = vadd.f32 %v6587, %v6590
        %vm6592 = vweird.f32 %v6191
        %vm6593 = vweird.f32 %v6587
        %vm6594 = vmor %vm6592, %vm6593
        %v6595 = vsel %vm6594, %v6587, %v6591
        %v6596 = vand.u32 2147483647, %v6191
        %vm6597 = vcmp.eq.f32.partialorder %v6596, 8.507059e+37
        %v6598 = vand.u32 %v6191, 2147483648
        %v6599 = vor.u32 1.1754944e-38, %v6598
        %v6600 = vsel %vm6597, %v6599, %v6595
        %v6601 = vmul.f32 1.0, %v6600
        %v6602 = vrcp.pop %v6192
        %v6603 = vmul.f32 %v6192, %v6602
        %v6604 = vsub.f32 1.0, %v6603
        %v6605 = vmul.f32 %v6602, %v6604
        %v6606 = vadd.f32 %v6602, %v6605
        %vm6607 = vweird.f32 %v6192
        %vm6608 = vweird.f32 %v6602
        %vm6609 = vmor %vm6607, %vm6608
        %v6610 = vsel %vm6609, %v6602, %v6606
        %v6611 = vand.u32 2147483647, %v6192
        %vm6612 = vcmp.eq.f32.partialorder %v6611, 8.507059e+37
        %v6613 = vand.u32 %v6192, 2147483648
        %v6614 = vor.u32 1.1754944e-38, %v6613
        %v6615 = vsel %vm6612, %v6614, %v6610
        %v6616 = vmul.f32 1.0, %v6615
        %v6617 = vrcp.pop %v6193
        %v6618 = vmul.f32 %v6193, %v6617
        %v6619 = vsub.f32 1.0, %v6618
        %v6620 = vmul.f32 %v6617, %v6619
        %v6621 = vadd.f32 %v6617, %v6620
        %vm6622 = vweird.f32 %v6193
        %vm6623 = vweird.f32 %v6617
        %vm6624 = vmor %vm6622, %vm6623
        %v6625 = vsel %vm6624, %v6617, %v6621
        %v6626 = vand.u32 2147483647, %v6193
        %vm6627 = vcmp.eq.f32.partialorder %v6626, 8.507059e+37
        %v6628 = vand.u32 %v6193, 2147483648
        %v6629 = vor.u32 1.1754944e-38, %v6628
        %v6630 = vsel %vm6627, %v6629, %v6625
        %v6631 = vmul.f32 1.0, %v6630
        %v6632 = vrcp.pop %v6194
        %v6633 = vmul.f32 %v6194, %v6632
        %v6634 = vsub.f32 1.0, %v6633
        %v6635 = vmul.f32 %v6632, %v6634
        %v6636 = vadd.f32 %v6632, %v6635
        %vm6637 = vweird.f32 %v6194
        %vm6638 = vweird.f32 %v6632
        %vm6639 = vmor %vm6637, %vm6638
        %v6640 = vsel %vm6639, %v6632, %v6636
        %v6641 = vand.u32 2147483647, %v6194
        %vm6642 = vcmp.eq.f32.partialorder %v6641, 8.507059e+37
        %v6643 = vand.u32 %v6194, 2147483648
        %v6644 = vor.u32 1.1754944e-38, %v6643
        %v6645 = vsel %vm6642, %v6644, %v6640
        %v6646 = vmul.f32 1.0, %v6645
        %v6647 = vrcp.pop %v6195
        %v6648 = vmul.f32 %v6195, %v6647
        %v6649 = vsub.f32 1.0, %v6648
        %v6650 = vmul.f32 %v6647, %v6649
        %v6651 = vadd.f32 %v6647, %v6650
        %vm6652 = vweird.f32 %v6195
        %vm6653 = vweird.f32 %v6647
        %vm6654 = vmor %vm6652, %vm6653
        %v6655 = vsel %vm6654, %v6647, %v6651
        %v6656 = vand.u32 2147483647, %v6195
        %vm6657 = vcmp.eq.f32.partialorder %v6656, 8.507059e+37
        %v6658 = vand.u32 %v6195, 2147483648
        %v6659 = vor.u32 1.1754944e-38, %v6658
        %v6660 = vsel %vm6657, %v6659, %v6655
        %v6661 = vmul.f32 1.0, %v6660
        %v6662 = vrcp.pop %v6196
        %v6663 = vmul.f32 %v6196, %v6662
        %v6664 = vsub.f32 1.0, %v6663
        %v6665 = vmul.f32 %v6662, %v6664
        %v6666 = vadd.f32 %v6662, %v6665
        %vm6667 = vweird.f32 %v6196
        %vm6668 = vweird.f32 %v6662
        %vm6669 = vmor %vm6667, %vm6668
        %v6670 = vsel %vm6669, %v6662, %v6666
        %v6671 = vand.u32 2147483647, %v6196
        %vm6672 = vcmp.eq.f32.partialorder %v6671, 8.507059e+37
        %v6673 = vand.u32 %v6196, 2147483648
        %v6674 = vor.u32 1.1754944e-38, %v6673
        %v6675 = vsel %vm6672, %v6674, %v6670
        %v6676 = vmul.f32 1.0, %v6675
        %v6677 = vmul.f32 %v5974, %v6211
        %v6678 = vmul.f32 %v5977, %v6226
        %v6679 = vmul.f32 %v5980, %v6241
        %v6680 = vmul.f32 %v5983, %v6256
        %v6681 = vmul.f32 %v5986, %v6271
        %v6682 = vmul.f32 %v5989, %v6286
        %v6683 = vmul.f32 %v5992, %v6301
        %v6684 = vmul.f32 %v5995, %v6316
        %v6685 = vmul.f32 %v5998, %v6331
        %v6686 = vmul.f32 %v6001, %v6346
        %v6687 = vmul.f32 %v6004, %v6361
        %v6688 = vmul.f32 %v6007, %v6376
        %v6689 = vmul.f32 %v6010, %v6391
        %v6690 = vmul.f32 %v6013, %v6406
        %v6691 = vmul.f32 %v6016, %v6421
        %v6692 = vmul.f32 %v6019, %v6436
        %v6693 = vmul.f32 %v6022, %v6451
        %v6694 = vmul.f32 %v6025, %v6466
        %v6695 = vmul.f32 %v6028, %v6481
        %v6696 = vmul.f32 %v6031, %v6496
        %v6697 = vmul.f32 %v6034, %v6511
        %v6698 = vmul.f32 %v6037, %v6526
        %v6699 = vmul.f32 %v6040, %v6541
        %v6700 = vmul.f32 %v6043, %v6556
        %v6701 = vmul.f32 %v6046, %v6571
        %v6702 = vmul.f32 %v6049, %v6586
        %v6703 = vmul.f32 %v6052, %v6601
        %v6704 = vmul.f32 %v6055, %v6616
        %v6705 = vmul.f32 %v6058, %v6631
        %v6706 = vmul.f32 %v6061, %v6646
        %v6707 = vmul.f32 %v6064, %v6661
        %v6708 = vmul.f32 %v6067, %v6676
        %v6709 = vadd.f32 %v6677, %v6678
        %v6710 = vrot.slane %v6709, 4
        %v6711 = vadd.f32 %v6709, %v6710
        %v6712 = vrot.slane %v6711, 2
        %v6713 = vadd.f32 %v6711, %v6712
        %v6714 = vrot.slane %v6713, 1
        %v6715 = vadd.f32 %v6713, %v6714
        %v6716 = vadd.f32 %v6679, %v6680
        %v6717 = vrot.slane %v6716, 4
        %v6718 = vadd.f32 %v6716, %v6717
        %v6719 = vrot.slane %v6718, 2
        %v6720 = vadd.f32 %v6718, %v6719
        %v6721 = vrot.slane %v6720, 1
        %v6722 = vadd.f32 %v6720, %v6721
        %v6723 = vadd.f32 %v6681, %v6682
        %v6724 = vrot.slane %v6723, 4
        %v6725 = vadd.f32 %v6723, %v6724
        %v6726 = vrot.slane %v6725, 2
        %v6727 = vadd.f32 %v6725, %v6726
        %v6728 = vrot.slane %v6727, 1
        %v6729 = vadd.f32 %v6727, %v6728
        %v6730 = vadd.f32 %v6683, %v6684
        %v6731 = vrot.slane %v6730, 4
        %v6732 = vadd.f32 %v6730, %v6731
        %v6733 = vrot.slane %v6732, 2
        %v6734 = vadd.f32 %v6732, %v6733
        %v6735 = vrot.slane %v6734, 1
        %v6736 = vadd.f32 %v6734, %v6735
        %v6737 = vadd.f32 %v6685, %v6686
        %v6738 = vrot.slane %v6737, 4
        %v6739 = vadd.f32 %v6737, %v6738
        %v6740 = vrot.slane %v6739, 2
        %v6741 = vadd.f32 %v6739, %v6740
        %v6742 = vrot.slane %v6741, 1
        %v6743 = vadd.f32 %v6741, %v6742
        %v6744 = vadd.f32 %v6687, %v6688
        %v6745 = vrot.slane %v6744, 4
        %v6746 = vadd.f32 %v6744, %v6745
        %v6747 = vrot.slane %v6746, 2
        %v6748 = vadd.f32 %v6746, %v6747
        %v6749 = vrot.slane %v6748, 1
        %v6750 = vadd.f32 %v6748, %v6749
        %v6751 = vadd.f32 %v6689, %v6690
        %v6752 = vrot.slane %v6751, 4
        %v6753 = vadd.f32 %v6751, %v6752
        %v6754 = vrot.slane %v6753, 2
        %v6755 = vadd.f32 %v6753, %v6754
        %v6756 = vrot.slane %v6755, 1
        %v6757 = vadd.f32 %v6755, %v6756
        %v6758 = vadd.f32 %v6691, %v6692
        %v6759 = vrot.slane %v6758, 4
        %v6760 = vadd.f32 %v6758, %v6759
        %v6761 = vrot.slane %v6760, 2
        %v6762 = vadd.f32 %v6760, %v6761
        %v6763 = vrot.slane %v6762, 1
        %v6764 = vadd.f32 %v6762, %v6763
        %v6765 = vadd.f32 %v6693, %v6694
        %v6766 = vrot.slane %v6765, 4
        %v6767 = vadd.f32 %v6765, %v6766
        %v6768 = vrot.slane %v6767, 2
        %v6769 = vadd.f32 %v6767, %v6768
        %v6770 = vrot.slane %v6769, 1
        %v6771 = vadd.f32 %v6769, %v6770
        %v6772 = vadd.f32 %v6695, %v6696
        %v6773 = vrot.slane %v6772, 4
        %v6774 = vadd.f32 %v6772, %v6773
        %v6775 = vrot.slane %v6774, 2
        %v6776 = vadd.f32 %v6774, %v6775
        %v6777 = vrot.slane %v6776, 1
        %v6778 = vadd.f32 %v6776, %v6777
        %v6779 = vadd.f32 %v6697, %v6698
        %v6780 = vrot.slane %v6779, 4
        %v6781 = vadd.f32 %v6779, %v6780
        %v6782 = vrot.slane %v6781, 2
        %v6783 = vadd.f32 %v6781, %v6782
        %v6784 = vrot.slane %v6783, 1
        %v6785 = vadd.f32 %v6783, %v6784
        %v6786 = vadd.f32 %v6699, %v6700
        %v6787 = vrot.slane %v6786, 4
        %v6788 = vadd.f32 %v6786, %v6787
        %v6789 = vrot.slane %v6788, 2
        %v6790 = vadd.f32 %v6788, %v6789
        %v6791 = vrot.slane %v6790, 1
        %v6792 = vadd.f32 %v6790, %v6791
        %v6793 = vadd.f32 %v6701, %v6702
        %v6794 = vrot.slane %v6793, 4
        %v6795 = vadd.f32 %v6793, %v6794
        %v6796 = vrot.slane %v6795, 2
        %v6797 = vadd.f32 %v6795, %v6796
        %v6798 = vrot.slane %v6797, 1
        %v6799 = vadd.f32 %v6797, %v6798
        %v6800 = vadd.f32 %v6703, %v6704
        %v6801 = vrot.slane %v6800, 4
        %v6802 = vadd.f32 %v6800, %v6801
        %v6803 = vrot.slane %v6802, 2
        %v6804 = vadd.f32 %v6802, %v6803
        %v6805 = vrot.slane %v6804, 1
        %v6806 = vadd.f32 %v6804, %v6805
        %v6807 = vadd.f32 %v6705, %v6706
        %v6808 = vrot.slane %v6807, 4
        %v6809 = vadd.f32 %v6807, %v6808
        %v6810 = vrot.slane %v6809, 2
        %v6811 = vadd.f32 %v6809, %v6810
        %v6812 = vrot.slane %v6811, 1
        %v6813 = vadd.f32 %v6811, %v6812
        %v6814 = vadd.f32 %v6707, %v6708
        %v6815 = vrot.slane %v6814, 4
        %v6816 = vadd.f32 %v6814, %v6815
        %v6817 = vrot.slane %v6816, 2
        %v6818 = vadd.f32 %v6816, %v6817
        %v6819 = vrot.slane %v6818, 1
        %v6820 = vadd.f32 %v6818, %v6819
        %v6837 = vsel %vm733, %v6722, %v6715
        %v6838 = vsel %vm736, %v6729, %v6837
        %v6839 = vsel %vm739, %v6736, %v6838
        %v6840 = vsel %vm742, %v6743, %v6839
        %v6841 = vsel %vm745, %v6750, %v6840
        %v6842 = vsel %vm748, %v6757, %v6841
        %v6843 = vsel %vm3590, %v6764, %v6842
        %v6844 = vsel %vm733, %v6778, %v6771
        %v6845 = vsel %vm736, %v6785, %v6844
        %v6846 = vsel %vm739, %v6792, %v6845
        %v6847 = vsel %vm742, %v6799, %v6846
        %v6848 = vsel %vm745, %v6806, %v6847
        %v6849 = vsel %vm748, %v6813, %v6848
        %v6850 = vsel %vm3590, %v6820, %v6849
        %v6854 = vperm.slane %v3796, 0
        %6856 = vmatpush.msra.mxu0 %v3790
        %6857 = vmatpush.msra.mxu0 %v3789
        %6858 = vmatpush.msra.mxu0 %v3788
        %6859 = vmatpush.msra.mxu0 %v3787
        %6860 = vmatpush.msra.mxu0 %v3786
        %6861 = vmatpush.msra.mxu0 %v3785
        %6862 = vmatpush.msra.mxu0 %v3784
        %6863 = vmatpush.msra.mxu0 %v3783
        %6864 = vmatpush.msra.mxu0 %v3782
        %6865 = vmatpush.msra.mxu0 %v3781
        %6866 = vmatpush.msra.mxu0 %v3780
        %6867 = vmatpush.msra.mxu0 %v3779
        %6868 = vmatpush.msra.mxu0 %v3778
        %6869 = vmatpush.msra.mxu0 %v3777
        %6870 = vmatpush.msra.mxu0 %v3776
        %6871 = vmatpush.msra.mxu0 %v3775
        %6872 = vmatmul.f32.gmra.mxu0 %v6843
        %v6873 = vpop.f32.mrf.mxu0
        %v6874 = vadd.f32 %v6854, %v6873
        %6875 = vmatmul.f32.gmra.mxu0 %v6850
        %v6876 = vpop.f32.mrf.mxu0
        %v6877 = vadd.f32 %v6854, %v6876
        %6878 = vdwg.mxu0
        %6879 = vmatpush.msra.mxu0 0.0
        %6880 = vmatpush.msra.mxu0 0.0
        %6881 = vmatpush.msra.mxu0 0.0
        %6882 = vmatpush.msra.mxu0 0.0
        %6883 = vmatpush.msra.mxu0 0.0
        %6884 = vmatpush.msra.mxu0 0.0
        %6885 = vmatpush.msra.mxu0 0.0
        %6886 = vmatpush.msra.mxu0 0.0
        %6887 = vmatpush.msra.mxu0 0.0
        %6888 = vmatpush.msra.mxu0 0.0
        %6889 = vmatpush.msra.mxu0 0.0
        %6890 = vmatpush.msra.mxu0 0.0
        %6891 = vmatpush.msra.mxu0 %v3794
        %6892 = vmatpush.msra.mxu0 %v3793
        %6893 = vmatpush.msra.mxu0 %v3792
        %6894 = vmatpush.msra.mxu0 %v3791
        %6895 = vmatmul.f32.gmra.mxu0 %v3825
        %v6896 = vpop.f32.mrf.mxu0
        %v6897 = vadd.f32 %v6874, %v6896
        %6898 = vmatmul.f32.gmra.mxu0 %v3828
        %v6899 = vpop.f32.mrf.mxu0
        %v6900 = vadd.f32 %v6877, %v6899
        %6901 = vdwg.mxu0
        %v6902 = vxor.u32 %v6897, 2147483648
        %v6903 = vxor.u32 %v6900, 2147483648
        %v6904 = vmul.f32 %v6902, 1.442695
        %v6905 = vpow.pop %v6904
        %v6906 = vmul.f32 %v6903, 1.442695
        %v6907 = vpow.pop %v6906
        %v6908 = vadd.f32 %v6905, 1.0
        %v6909 = vadd.f32 %v6907, 1.0
        %v6910 = vrcp.pop %v6908
        %v6911 = vmul.f32 %v6908, %v6910
        %v6912 = vsub.f32 1.0, %v6911
        %v6913 = vmul.f32 %v6910, %v6912
        %v6914 = vadd.f32 %v6910, %v6913
        %vm6915 = vweird.f32 %v6908
        %vm6916 = vweird.f32 %v6910
        %vm6917 = vmor %vm6915, %vm6916
        %v6918 = vsel %vm6917, %v6910, %v6914
        %v6919 = vand.u32 2147483647, %v6908
        %vm6920 = vcmp.eq.f32.partialorder %v6919, 8.507059e+37
        %v6921 = vand.u32 %v6908, 2147483648
        %v6922 = vor.u32 1.1754944e-38, %v6921
        %v6923 = vsel %vm6920, %v6922, %v6918
        %v6924 = vmul.f32 1.0, %v6923
        %v6925 = vrcp.pop %v6909
        %v6926 = vmul.f32 %v6909, %v6925
        %v6927 = vsub.f32 1.0, %v6926
        %v6928 = vmul.f32 %v6925, %v6927
        %v6929 = vadd.f32 %v6925, %v6928
        %vm6930 = vweird.f32 %v6909
        %vm6931 = vweird.f32 %v6925
        %vm6932 = vmor %vm6930, %vm6931
        %v6933 = vsel %vm6932, %v6925, %v6929
        %v6934 = vand.u32 2147483647, %v6909
        %vm6935 = vcmp.eq.f32.partialorder %v6934, 8.507059e+37
        %v6936 = vand.u32 %v6909, 2147483648
        %v6937 = vor.u32 1.1754944e-38, %v6936
        %v6938 = vsel %vm6935, %v6937, %v6933
        %v6939 = vmul.f32 1.0, %v6938
        %v6940 = vmul.f32 %v6897, %v6924
        %v6941 = vmul.f32 %v6900, %v6939
        %v6943 = vperm.slane %v3815, 0
        %6945 = vmatpush.msra.mxu0 %v3813
        %6946 = vmatpush.msra.mxu0 %v3812
        %6947 = vmatpush.msra.mxu0 %v3811
        %6948 = vmatpush.msra.mxu0 %v3810
        %6949 = vmatpush.msra.mxu0 %v3809
        %6950 = vmatpush.msra.mxu0 %v3808
        %6951 = vmatpush.msra.mxu0 %v3807
        %6952 = vmatpush.msra.mxu0 %v3806
        %6953 = vmatpush.msra.mxu0 %v3805
        %6954 = vmatpush.msra.mxu0 %v3804
        %6955 = vmatpush.msra.mxu0 %v3803
        %6956 = vmatpush.msra.mxu0 %v3802
        %6957 = vmatpush.msra.mxu0 %v3801
        %6958 = vmatpush.msra.mxu0 %v3800
        %6959 = vmatpush.msra.mxu0 %v3799
        %6960 = vmatpush.msra.mxu0 %v3798
        %6961 = vmatmul.f32.gmra.mxu0 %v6940
        %v6962 = vpop.f32.mrf.mxu0
        %v6963 = vadd.f32 %v6943, %v6962
        %6964 = vmatmul.f32.gmra.mxu0 %v6941
        %v6965 = vpop.f32.mrf.mxu0
        %v6966 = vadd.f32 %v6943, %v6965
        %6967 = vdwg.mxu0
        %v6968 = vadd.f32 %v6963, %v3716
        %v6969 = vadd.f32 %v6966, %v3717
        %6970 = vst.msk [vmem:[%s462] sm:$0xff] %vm556, %v6968
        %6971 = vst.msk [vmem:[%s462 + $0x8] sm:$0xff] %vm556, %v6969
        %s6972 = sand.u32 %s253, 1
        %s6973 = scalar_lea.sflag [#allocation4], %s6972
        %s6974 = sand.u32 %s253, 1
        %s6975 = smul.addr %s6974, 16
        %s6976 = scalar_lea.vmem [#allocation13], %s6975
        // Predicated region
        $region85: #{tpu_custom_call.1} parent=59 // pred_check
          %p6977 = pneg %p263
        $region86: #{tpu_custom_call.1} parent=59 // pred_check_branch
          %6979 = sbr.rel (%p6977) target = $region88
        $region87: #{tpu_custom_call.1} parent=59 // pred_region
          %6981 = vsyncadd %s6973, 0
          %s6982 = smul.addr %s30, 2
          %s6983 = smul.addr %s6982, 8
          %s6984 = scalar_lea.hbm %s10, %s6983
          %s6985 = sshll.u32 %s6976, 4
          %s6986 = int_to_ptr.vmem [resolvable:$true] %s6985
          %s6987 = sshll.u32 %s6984, 4
          %s6988 = int_to_ptr.hbm [resolvable:$true] %s6987
          %6993 = dma.vmem_to_hbm [thread:$0]  %s6986, 256, %s6988, %s6973, 128, 128, 8
        $region88: #{tpu_custom_call.1} parent=59 // pred_fallthru
          _
      $region60: #{tpu_custom_call.1} parent=5 // pred_fallthru
        _
      %p6994 = scmp.le.s32.totalorder 2, %s25
      // Predicated region
      $region89: #{tpu_custom_call.1} parent=5 // pred_check
        %p6995 = pneg %p6994
      $region90: #{tpu_custom_call.1} parent=5 // pred_check_branch
        %6997 = sbr.rel (%p6995) target = $region92
      $region91: #{tpu_custom_call.1} parent=5 // pred_region
        %s6998 = ssub.s32 %s25, 2
        // Predicated region
        $region93: #{tpu_custom_call.1} parent=91 // pred_check
          %p6999 = pneg %p269
        $region94: #{tpu_custom_call.1} parent=91 // pred_check_branch
          %7001 = sbr.rel (%p6999) target = $region96
        $region95: #{tpu_custom_call.1} parent=91 // pred_region
          %s7002 = sand.u32 %s254, 1
          %s7003 = scalar_lea.sflag [#allocation4], %s7002
          %s7004 = sand.u32 %s254, 1
          %s7005 = smul.addr %s7004, 16
          %s7006 = scalar_lea.vmem [#allocation13], %s7005
          %7008 = dma.done %s7003, 256
        $region96: #{tpu_custom_call.1} parent=91 // pred_fallthru
          _
      $region92: #{tpu_custom_call.1} parent=5 // pred_fallthru
        _
    $region6: #{tpu_custom_call.1} parent=1 // loop_footer
      %s29 = sadd.s32 1, %s25
    $region7: #{tpu_custom_call.1} parent=1 // loop_footer_branch
      %24 = sbr.rel target = $region3
    $region8: #{tpu_custom_call.1} parent=1 // loop_exit
      _
    %7009 = vsyncpa [#allocation3], 1
    %s7010 = scalar_lea.sflag [#allocation3], 1
    %7011 = vsyncpa %s7010, 1
    %7012 = vsyncpa [#allocation6], 1
    %7013 = vsyncpa [#allocation9], 1
    %7014 = vsyncpa [#allocation12], 1
    %7015 = vsyncpa [#allocation4], 1
    %s7016 = scalar_lea.sflag [#allocation4], 1
    %7017 = vsyncpa %s7016, 1

</llo_original>
